<compile_context>
chip_gen: v6e
topology: v6e:2x2x1
jax: 0.10.0
libtpu: 0.0.40
codegen_flags: <defaults>
</compile_context>

<pallas_src>
import functools

import jax
import jax.numpy as jnp
from jax.experimental import pallas as pl
from jax.experimental.pallas import tpu as pltpu


def _round_up(a: int, b: int) -> int:
    return ((a + b - 1) // b) * b


@functools.lru_cache(maxsize=1)
def _vmem_capacity_bytes() -> int:
    """Per-core VMEM capacity; conservative fallback if the query is unavailable."""
    try:
        cap = int(pltpu.get_tpu_info().vmem_capacity_bytes)
        if cap > 0:
            return cap
    except Exception:
        pass
    return 64 << 20  # v7x per-TensorCore VMEM (smallest of v5e/v6e/v7x)


def _snap_to_divisor(tk_target: int, middle_p: int) -> int:
    """Largest multiple of 128 that divides middle_p and is <= tk_target."""
    q = middle_p // 128
    d = max(1, min(tk_target // 128, q))
    while q % d:
        d -= 1
    return d * 128


# ---------------------------------------------------------------------------
# Kernels
# ---------------------------------------------------------------------------
def _ffn_kernel_acc_out(x_ref, w1_ref, b1_ref, w2_ref, b2_ref, o_ref):
    """fc1 -> relu -> fc2, accumulating partials directly into the f32 output tile."""
    k = pl.program_id(1)
    tk = w1_ref.shape[1]

    @pl.when(k == 0)
    def _():
        # Fold the fc2 bias into the accumulator init (the output tile itself).
        o_ref[...] = jnp.broadcast_to(b2_ref[...], o_ref.shape).astype(o_ref.dtype)

    off = pl.multiple_of(k * tk, 128)
    b1 = b1_ref[:, pl.ds(off, tk)]                      # resident b1, slice this chunk
    xb = x_ref[...].astype(w1_ref.dtype)                # in-kernel bf16 cast of x
    h = jnp.dot(xb, w1_ref[...], preferred_element_type=jnp.float32)
    h = jnp.maximum(h + b1, 0.0)                        # bias + ReLU in f32
    # TODO(synk): Dropout(p=0.1) is the eval-mode identity; training-mode mask omitted.
    o_ref[...] += jnp.dot(h.astype(w2_ref.dtype), w2_ref[...],
                          preferred_element_type=jnp.float32)


def _ffn_kernel_scratch(x_ref, w1_ref, b1_ref, w2_ref, b2_ref, o_ref, acc_ref):
    """Same as above but with an f32 scratch accumulator (non-f32 output dtypes)."""
    k = pl.program_id(1)
    tk = w1_ref.shape[1]

    @pl.when(k == 0)
    def _():
        acc_ref[...] = jnp.broadcast_to(b2_ref[...], acc_ref.shape).astype(jnp.float32)

    off = pl.multiple_of(k * tk, 128)
    b1 = b1_ref[:, pl.ds(off, tk)]
    xb = x_ref[...].astype(w1_ref.dtype)
    h = jnp.dot(xb, w1_ref[...], preferred_element_type=jnp.float32)
    h = jnp.maximum(h + b1, 0.0)
    # TODO(synk): Dropout(p=0.1) is the eval-mode identity; training-mode mask omitted.
    acc_ref[...] += jnp.dot(h.astype(w2_ref.dtype), w2_ref[...],
                            preferred_element_type=jnp.float32)

    @pl.when(k == pl.num_programs(1) - 1)
    def _():
        o_ref[...] = acc_ref[...].astype(o_ref.dtype)


# ---------------------------------------------------------------------------
# Tile planning (generation-aware)
# ---------------------------------------------------------------------------
def _plan_tiles(M, d_model, middle_p, x_bytes, out_bytes, tm, tk_mid, capacity):
    budget = int(capacity * 0.85)
    headroom = 4 << 20
    cb = 2  # bf16 weight bytes

    def footprint(tm_, tk_):
        return (2 * tm_ * d_model * x_bytes        # x tiles (double-buffered, orig dtype)
                + 2 * d_model * tk_ * cb           # W1 chunk(s)
                + 2 * tk_ * d_model * cb           # W2 chunk(s)
                + middle_p * 4 + d_model * 4       # resident biases (f32)
                + 2 * tm_ * d_model * out_bytes    # output tiles
                + tm_ * d_model * 4                # f32 accumulator
                + tm_ * tk_ * 4                    # hidden intermediate (f32)
                + tm_ * d_model * cb)              # in-kernel bf16 cast of x

    tm_eff = max(8, min(tm, _round_up(M, 8)))

    # Fast path: keep full W1/W2 resident in VMEM -> weights DMA'd once total.
    resident = footprint(tm_eff, middle_p) + headroom <= budget
    if resident:
        tk_eff = middle_p
    else:
        tk_eff = _snap_to_divisor(min(_round_up(tk_mid, 128), middle_p), middle_p)
        # Streamed weights: raise arithmetic intensity where VMEM allows (v5e/v6e).
        if capacity >= (100 << 20) and M >= 512:
            tm_eff = min(512, _round_up(M, 8))
        while footprint(tm_eff, tk_eff) + headroom > budget and tm_eff > 8:
            tm_eff = max(8, _round_up(tm_eff // 2, 8))
        while footprint(tm_eff, tk_eff) + headroom > budget and tk_eff > 128:
            tk_eff = _snap_to_divisor(max(128, tk_eff // 2), middle_p)

    # Give the "parallel" row axis >= 2 tiles so both v7x TensorCores get work.
    if -(-M // tm_eff) < 2 and tm_eff > 8:
        tm_eff = max(8, _round_up(-(-M // 2), 8))

    fp = footprint(tm_eff, tk_eff)
    vmem_limit = min(int(fp * 1.5) + headroom, budget)
    vmem_limit = max(vmem_limit, min(fp + (2 << 20), budget))
    return tm_eff, tk_eff, resident, vmem_limit, budget


# ---------------------------------------------------------------------------
# pallas_call wrapper
# ---------------------------------------------------------------------------
@functools.partial(jax.jit, static_argnames=("tm", "tk_mid"))
def _feed_forward_impl(x, w1_c, b1_2d, w2_c, b2_2d, *, tm, tk_mid):
    orig_shape = x.shape
    out_dtype = x.dtype
    d_model = orig_shape[-1]
    middle_p = w1_c.shape[1]

    x2d = x.reshape(-1, d_model)
    M = x2d.shape[0]

    capacity = _vmem_capacity_bytes()
    tm_eff, tk_eff, resident, vmem_limit, budget = _plan_tiles(
        M, d_model, middle_p,
        x_bytes=jnp.dtype(x.dtype).itemsize,
        out_bytes=jnp.dtype(out_dtype).itemsize,
        tm=tm, tk_mid=tk_mid, capacity=capacity)

    Mp = _round_up(M, tm_eff)
    if Mp != M:
        x2d = jnp.pad(x2d, ((0, Mp - M), (0, 0)))

    grid = (Mp // tm_eff, middle_p // tk_eff)

    # Deeper weight pipelining only when streaming on big-VMEM generations (v5e/v6e).
    use_buffered3 = (not resident) and capacity >= (100 << 20)
    if use_buffered3:
        w1_spec = pl.BlockSpec((d_model, tk_eff), lambda i, k: (0, k),
                               pipeline_mode=pl.Buffered(3))
        w2_spec = pl.BlockSpec((tk_eff, d_model), lambda i, k: (k, 0),
                               pipeline_mode=pl.Buffered(3))
        vmem_limit = min(vmem_limit + 2 * d_model * tk_eff * 2, budget)
    else:
        w1_spec = pl.BlockSpec((d_model, tk_eff), lambda i, k: (0, k))
        w2_spec = pl.BlockSpec((tk_eff, d_model), lambda i, k: (k, 0))

    if out_dtype == jnp.float32:
        kernel = _ffn_kernel_acc_out
        scratch_shapes = []
    else:
        kernel = _ffn_kernel_scratch
        scratch_shapes = [pltpu.VMEM((tm_eff, d_model), jnp.float32)]

    out = pl.pallas_call(
        kernel,
        out_shape=jax.ShapeDtypeStruct((Mp, d_model), out_dtype),
        grid_spec=pltpu.PrefetchScalarGridSpec(
            num_scalar_prefetch=0,
            grid=grid,
            in_specs=[
                pl.BlockSpec((tm_eff, d_model), lambda i, k: (i, 0)),  # x (orig dtype)
                w1_spec,                                               # W1 (resident/stream)
                pl.BlockSpec((1, middle_p), lambda i, k: (0, 0)),      # full b1, resident
                w2_spec,                                               # W2 (resident/stream)
                pl.BlockSpec((1, d_model), lambda i, k: (0, 0)),       # b2, resident
            ],
            out_specs=pl.BlockSpec((tm_eff, d_model), lambda i, k: (i, 0)),
            scratch_shapes=scratch_shapes,
        ),
        compiler_params=pltpu.CompilerParams(
            dimension_semantics=("parallel", "arbitrary"),
            vmem_limit_bytes=vmem_limit,
        ),
    )(x2d, w1_c, b1_2d, w2_c, b2_2d)

    if Mp != M:
        out = out[:M]
    return out.reshape(orig_shape)


def make_feed_forward(w1, b1, w2, b2, *, tm=256, tk_mid=512,
                      compute_dtype=jnp.bfloat16):
    """Pads/casts the weights ONCE (outside the per-call jit path) and returns apply(x)."""
    d_model, middle = w1.shape
    assert w2.shape == (middle, d_model)
    middle_p = _round_up(middle, 128)
    if middle_p != middle:
        # zero-padded hidden columns contribute relu(0 + 0) @ 0 == 0 -> exact
        w1 = jnp.pad(w1, ((0, 0), (0, middle_p - middle)))
        b1 = jnp.pad(b1, (0, middle_p - middle))
        w2 = jnp.pad(w2, ((0, middle_p - middle), (0, 0)))
    w1_c = jnp.asarray(w1, compute_dtype)
    w2_c = jnp.asarray(w2, compute_dtype)
    b1_2d = jnp.asarray(b1, jnp.float32).reshape(1, middle_p)
    b2_2d = jnp.asarray(b2, jnp.float32).reshape(1, d_model)

    def apply(x):
        return _feed_forward_impl(x, w1_c, b1_2d, w2_c, b2_2d, tm=tm, tk_mid=tk_mid)

    return apply


def init_params(key, d_model, middle_dim, dtype=jnp.float32):
    """Deterministic init matching nn.Linear's U(-1/sqrt(fan_in), 1/sqrt(fan_in))."""
    k1, k2, k3, k4 = jax.random.split(key, 4)
    bound1 = 1.0 / (d_model ** 0.5)
    bound2 = 1.0 / (middle_dim ** 0.5)
    # stored as (in_features, out_features) == PyTorch weight.T
    w1 = jax.random.uniform(k1, (d_model, middle_dim), dtype, -bound1, bound1)
    b1 = jax.random.uniform(k2, (middle_dim,), dtype, -bound1, bound1)
    w2 = jax.random.uniform(k3, (middle_dim, d_model), dtype, -bound2, bound2)
    b2 = jax.random.uniform(k4, (d_model,), dtype, -bound2, bound2)
    return w1, b1, w2, b2


if __name__ == "__main__":
    # Small shapes consistent with the module defaults: d_model=512, middle=2048
    batch, seq, dmodel, middle_dim = 2, 8, 512, 2048

    key = jax.random.PRNGKey(0)
    kx, kp = jax.random.split(key)
    x = jax.random.normal(kx, (batch, seq, dmodel), dtype=jnp.float32)
    w1, b1, w2, b2 = init_params(kp, dmodel, middle_dim)

    ffn = make_feed_forward(w1, b1, w2, b2)
    out = jax.block_until_ready(ffn(x))

    # Reference in plain JAX, matching the kernel's bf16 matmul operands.
    bf = jnp.bfloat16
    x2d = x.reshape(-1, dmodel)
    h_ref = jnp.dot(x2d.astype(bf), w1.astype(bf),
                    preferred_element_type=jnp.float32) + b1
    h_ref = jnp.maximum(h_ref, 0.0)
    ref = jnp.dot(h_ref.astype(bf), w2.astype(bf),
                  preferred_element_type=jnp.float32) + b2
    ref = ref.reshape(x.shape)

    assert out.shape == x.shape
    assert jnp.allclose(out, ref, atol=1e-2, rtol=1e-2), \
        float(jnp.max(jnp.abs(out - ref)))

    print("KERNEL_OK")
</pallas_src>

<mosaic_0001>
module attributes {stable_mosaic.version = 11 : i64} {
  func.func @_ffn_kernel_acc_out(%arg0: i32, %arg1: i32, %arg2: memref<8x512xf32, #tpu.memory_space<vmem>>, %arg3: memref<512x2048xbf16, #tpu.memory_space<vmem>>, %arg4: memref<1x2048xf32, #tpu.memory_space<vmem>>, %arg5: memref<2048x512xbf16, #tpu.memory_space<vmem>>, %arg6: memref<1x512xf32, #tpu.memory_space<vmem>>, %arg7: memref<8x512xf32, #tpu.memory_space<vmem>>) attributes {dimension_semantics = [#tpu.dimension_semantics<parallel>, #tpu.dimension_semantics<arbitrary>], iteration_bounds = array<i64: 2, 1>, scalar_prefetch = 0 : i64, scratch_operands = 0 : i64, tpu.core_type = #tpu.core_type<tc>, window_params = [{transform_indices = @transform_0, window_bounds = array<i64: 8, 512>}, {transform_indices = @transform_1, window_bounds = array<i64: 512, 2048>}, {pipeline_mode = #tpu.pipeline_mode<synchronous>, transform_indices = @transform_2, window_bounds = array<i64: 1, 2048>}, {transform_indices = @transform_3, window_bounds = array<i64: 2048, 512>}, {pipeline_mode = #tpu.pipeline_mode<synchronous>, transform_indices = @transform_4, window_bounds = array<i64: 1, 512>}, {transform_indices = @transform_5, window_bounds = array<i64: 8, 512>}]} {
    %c0_i32 = arith.constant 0 : i32
    %0 = arith.cmpi eq, %arg1, %c0_i32 : i32
    %1 = arith.extui %0 : i1 to i32
    %c0_i32_0 = arith.constant 0 : i32
    %2 = arith.cmpi ne, %1, %c0_i32_0 : i32
    scf.if %2 {
      %c0_13 = arith.constant 0 : index
      %c0_14 = arith.constant 0 : index
      %21 = vector.load %arg6[%c0_13, %c0_14] : memref<1x512xf32, #tpu.memory_space<vmem>>, vector<1x512xf32>
      %22 = vector.shape_cast %21 : vector<1x512xf32> to vector<1x512xf32>
      %23 = vector.broadcast %22 : vector<1x512xf32> to vector<8x512xf32>
      %c0_15 = arith.constant 0 : index
      %c0_16 = arith.constant 0 : index
      %24 = vector.load %arg7[%c0_15, %c0_16] : memref<8x512xf32, #tpu.memory_space<vmem>>, vector<8x512xf32>
      tpu.vector_store %arg7[%c0_15, %c0_16], %23 {strides = array<i32>} : memref<8x512xf32, #tpu.memory_space<vmem>>, vector<8x512xf32>,
    } else {
    }
    %c2048_i32 = arith.constant 2048 : i32
    %3 = arith.muli %arg1, %c2048_i32 : i32
    %4 = tpu.assume_multiple %3, 128 : i32
    %c0 = arith.constant 0 : index
    %5 = arith.index_cast %4 : i32 to index
    %6 = vector.load %arg4[%c0, %5] : memref<1x2048xf32, #tpu.memory_space<vmem>>, vector<1x2048xf32>
    %c0_1 = arith.constant 0 : index
    %c0_2 = arith.constant 0 : index
    %7 = vector.load %arg2[%c0_1, %c0_2] : memref<8x512xf32, #tpu.memory_space<vmem>>, vector<8x512xf32>
    %8 = arith.truncf %7 : vector<8x512xf32> to vector<8x512xbf16>
    %c0_3 = arith.constant 0 : index
    %c0_4 = arith.constant 0 : index
    %9 = vector.load %arg3[%c0_3, %c0_4] : memref<512x2048xbf16, #tpu.memory_space<vmem>>, vector<512x2048xbf16>
    %cst = arith.constant dense<0.000000e+00> : vector<8x2048xf32>
    %10 = tpu.matmul %8, %9, %cst {dimension_numbers = #tpu.dot_dimension_numbers<[1], [0], [0], [1], [0, 0, 1, 1], [], []>} : vector<8x512xbf16>, vector<512x2048xbf16>, vector<8x2048xf32> -> vector<8x2048xf32>
    %11 = vector.broadcast %6 : vector<1x2048xf32> to vector<8x2048xf32>
    %12 = arith.addf %10, %11 : vector<8x2048xf32>
    %cst_5 = arith.constant 0.000000e+00 : f32
    %13 = vector.broadcast %cst_5 : f32 to vector<8x2048xf32>
    %14 = arith.maximumf %12, %13 : vector<8x2048xf32>
    %c0_6 = arith.constant 0 : index
    %c0_7 = arith.constant 0 : index
    %15 = vector.load %arg7[%c0_6, %c0_7] : memref<8x512xf32, #tpu.memory_space<vmem>>, vector<8x512xf32>
    %16 = arith.truncf %14 : vector<8x2048xf32> to vector<8x2048xbf16>
    %c0_8 = arith.constant 0 : index
    %c0_9 = arith.constant 0 : index
    %17 = vector.load %arg5[%c0_8, %c0_9] : memref<2048x512xbf16, #tpu.memory_space<vmem>>, vector<2048x512xbf16>
    %cst_10 = arith.constant dense<0.000000e+00> : vector<8x512xf32>
    %18 = tpu.matmul %16, %17, %cst_10 {dimension_numbers = #tpu.dot_dimension_numbers<[1], [0], [0], [1], [0, 0, 1, 1], [], []>} : vector<8x2048xbf16>, vector<2048x512xbf16>, vector<8x512xf32> -> vector<8x512xf32>
    %19 = arith.addf %15, %18 : vector<8x512xf32>
    %c0_11 = arith.constant 0 : index
    %c0_12 = arith.constant 0 : index
    %20 = vector.load %arg7[%c0_11, %c0_12] : memref<8x512xf32, #tpu.memory_space<vmem>>, vector<8x512xf32>
    tpu.vector_store %arg7[%c0_11, %c0_12], %19 {strides = array<i32>} : memref<8x512xf32, #tpu.memory_space<vmem>>, vector<8x512xf32>,
    return
  }
  func.func @transform_0(%arg0: i32, %arg1: i32) -> (i32, i32) {
    %c0_i32 = arith.constant 0 : i32
    %c0_i32_0 = arith.constant 0 : i32
    return %arg0, %c0_i32 : i32, i32
  }
  func.func @transform_1(%arg0: i32, %arg1: i32) -> (i32, i32) {
    %c0_i32 = arith.constant 0 : i32
    %c0_i32_0 = arith.constant 0 : i32
    return %c0_i32, %arg1 : i32, i32
  }
  func.func @transform_2(%arg0: i32, %arg1: i32) -> (i32, i32) {
    %c0_i32 = arith.constant 0 : i32
    %c0_i32_0 = arith.constant 0 : i32
    %c0_i32_1 = arith.constant 0 : i32
    return %c0_i32, %c0_i32_0 : i32, i32
  }
  func.func @transform_3(%arg0: i32, %arg1: i32) -> (i32, i32) {
    %c0_i32 = arith.constant 0 : i32
    %c0_i32_0 = arith.constant 0 : i32
    return %arg1, %c0_i32 : i32, i32
  }
  func.func @transform_4(%arg0: i32, %arg1: i32) -> (i32, i32) {
    %c0_i32 = arith.constant 0 : i32
    %c0_i32_0 = arith.constant 0 : i32
    %c0_i32_1 = arith.constant 0 : i32
    return %c0_i32, %c0_i32_0 : i32, i32
  }
  func.func @transform_5(%arg0: i32, %arg1: i32) -> (i32, i32) {
    %c0_i32 = arith.constant 0 : i32
    %c0_i32_0 = arith.constant 0 : i32
    return %arg0, %c0_i32 : i32, i32
  }
}

</mosaic_0001>

<llo_original>
// kernel: _feed_forward_impl.1
$region0: #{_feed_forward_impl.1}
  #allocation0 [shape = 'u32[]', space=smem, size = 0x4, offset = 0x4, fixed_abs, tag = 'smem constant byte address 0x4 - core index']
  #allocation1 [shape = 'u32[144,128]{1,0:T(1,128)}', space=vmem, size = 0x12000, scoped, tag = 'internal scratch']
  %s0 = inlined_call_operand.hbm [shape: f32[16,512], index: 0, kind: input, shape index: {}]
  %s1 = inlined_call_operand.hbm [shape: bf16[512,2048], index: 1, kind: input, shape index: {}]
  %s2 = inlined_call_operand.hbm [shape: f32[1,2048], index: 2, kind: input, shape index: {}]
  %s3 = inlined_call_operand.hbm [shape: bf16[2048,512], index: 3, kind: input, shape index: {}]
  %s4 = inlined_call_operand.hbm [shape: f32[1,512], index: 4, kind: input, shape index: {}]
  %s5 = inlined_call_operand.hbm [shape: f32[16,512], index: 5, kind: output, shape index: {}]
  %s6 = sld [smem:[#allocation0]]
  $region77: #{_feed_forward_impl.1} parent=0
    _
  %s8 = ssub.s32 1, %s6
  %s9 = scalar_select 0, %s8, %s6
  $region1: #{_feed_forward_impl.1} parent=0
    #allocation2 [shape = 'u8[32768]{0}', space=vmem, size = 0x8000, scoped, tag = 'input window, operand 0']
    #allocation3 [shape = 's32[2]{0}', space=sflag, size = 0x8, scoped, tag = 'scoped memory for _feed_forward_impl.1']
    #allocation4 [shape = 's32[2]{0}', space=sflag, size = 0x8, scoped, tag = 'scoped memory for _feed_forward_impl.1']
    #allocation5 [shape = 'u8[2097152]{0}', space=vmem, size = 0x200000, scoped, tag = 'input window, operand 1, single buffered']
    #allocation6 [shape = 's32[1]{0}', space=sflag, size = 0x4, scoped, tag = 'scoped memory for _feed_forward_impl.1']
    #allocation7 [shape = 'u8[8192]{0}', space=vmem, size = 0x2000, scoped, tag = 'input window, operand 2, single buffered']
    #allocation8 [shape = 'u8[2097152]{0}', space=vmem, size = 0x200000, scoped, tag = 'input window, operand 3, single buffered']
    #allocation9 [shape = 's32[1]{0}', space=sflag, size = 0x4, scoped, tag = 'scoped memory for _feed_forward_impl.1']
    #allocation10 [shape = 'u8[2048]{0}', space=vmem, size = 0x800, scoped, tag = 'input window, operand 4, single buffered']
    #allocation11 [shape = 'u8[32768]{0}', space=vmem, size = 0x8000, scoped, tag = 'output window, operand 0']
    %10 = vsyncpa [#allocation3], 0
    %s11 = scalar_lea.sflag [#allocation3], 1
    %12 = vsyncpa %s11, 0
    %13 = vsyncpa [#allocation6], 0
    %14 = vsyncpa [#allocation9], 0
    %15 = vsyncpa [#allocation4], 0
    %s16 = scalar_lea.sflag [#allocation4], 1
    %17 = vsyncpa %s16, 0
    loop: start=0, step=1, limit=4
    $region2: #{_feed_forward_impl.1} parent=1 // loop_pre_header
      _
    $region3: #{_feed_forward_impl.1} parent=1 // loop_header
      %s19 = sphi 0, %s23
      %p20 = scmp.ge.s32.totalorder %s19, 4
      %s26 = sphi 0, %s38
      %s27 = sphi 0, %s34
      %s28 = sphi 0, %s26
      %s29 = sphi 0, %s27
      %s30 = sphi 0, %s28
      %s31 = sphi 0, %s29
      %s41 = sphi 0, %s43
      %s44 = sphi 0, %s41
      %s45 = sphi 0, %s44
      %s61 = sphi 0, %s45
      %s67 = sphi 0, %s69
      %s70 = sphi 0, %s67
      %s71 = sphi 0, %s70
      %s87 = sphi 0, %s71
      %s91 = sphi 0, %s91
      %s93 = sphi 0, %s91
      %s94 = sphi 0, %s93
      %s108 = sphi 0, %s94
      %s114 = sphi 0, %s116
      %s117 = sphi 0, %s114
      %s118 = sphi 0, %s117
      %s134 = sphi 0, %s118
      %s138 = sphi 0, %s138
      %s140 = sphi 0, %s138
      %s141 = sphi 0, %s140
      %s155 = sphi 0, %s141
      %s161 = sphi 0, %s163
      %s164 = sphi 0, %s161
      %s165 = sphi 0, %s164
      %s181 = sphi 0, %s165
    $region4: #{_feed_forward_impl.1} parent=1 // loop_header_branch
      %22 = sbr.rel (%p20) target = $region8
    $region5: #{_feed_forward_impl.1} parent=1 // loop_body
      %s24 = ssub.s32 %s19, 1
      %s25 = ssub.s32 %s19, 2
      %s32 = sadd.s32 1, %s27
      %p33 = scmp.ge.s32.totalorder %s32, 1
      %s34 = scalar_select %p33, 0, %s32
      %s35 = sadd.s32 1, %s26
      %s36 = scalar_select %p33, %s35, %s26
      %p37 = scmp.ge.s32.totalorder %s36, 2
      %s38 = scalar_select %p37, 0, %s36
      %s39 = ssub.s32 %s26, %s38
      %p40 = scmp.eq.s32.totalorder %s39, 0
      %s42 = sadd.s32 %s41, 1
      %s43 = scalar_select %p40, %s41, %s42
      %p46 = pneg %p40
      %p47 = scmp.eq.s32.totalorder %s19, 1
      %p48 = por %p46, %p47
      %p49 = scmp.ne.s32.totalorder %s41, %s44
      %p50 = scmp.eq.s32.totalorder %s19, 0
      %p51 = por %p49, %p50
      %p52 = scmp.ne.s32.totalorder %s41, %s44
      %p53 = scmp.eq.s32.totalorder %s24, 1
      %p54 = por %p52, %p53
      %p55 = scmp.ne.s32.totalorder %s44, %s45
      %p56 = scmp.eq.s32.totalorder %s24, 0
      %p57 = por %p55, %p56
      %p58 = scmp.ne.s32.totalorder %s44, %s45
      %p59 = scmp.eq.s32.totalorder %s25, 1
      %p60 = por %p58, %p59
      %p62 = scmp.ne.s32.totalorder %s45, %s61
      %p63 = scmp.eq.s32.totalorder %s25, 0
      %p64 = por %p62, %p63
      %s65 = ssub.s32 %s27, %s34
      %p66 = scmp.eq.s32.totalorder %s65, 0
      %s68 = sadd.s32 %s67, 1
      %s69 = scalar_select %p66, %s67, %s68
      %p72 = pneg %p66
      %p73 = scmp.eq.s32.totalorder %s19, 1
      %p74 = por %p72, %p73
      %p75 = scmp.ne.s32.totalorder %s67, %s70
      %p76 = scmp.eq.s32.totalorder %s19, 0
      %p77 = por %p75, %p76
      %p78 = scmp.ne.s32.totalorder %s67, %s70
      %p79 = scmp.eq.s32.totalorder %s24, 1
      %p80 = por %p78, %p79
      %p81 = scmp.ne.s32.totalorder %s70, %s71
      %p82 = scmp.eq.s32.totalorder %s24, 0
      %p83 = por %p81, %p82
      %p84 = scmp.ne.s32.totalorder %s70, %s71
      %p85 = scmp.eq.s32.totalorder %s25, 1
      %p86 = por %p84, %p85
      %p88 = scmp.ne.s32.totalorder %s71, %s87
      %p89 = scmp.eq.s32.totalorder %s25, 0
      %p90 = por %p88, %p89
      %s92 = sadd.s32 %s91, 1
      %p95 = scmp.eq.s32.totalorder %s19, 1
      %p96 = scmp.ne.s32.totalorder %s91, %s93
      %p97 = scmp.eq.s32.totalorder %s19, 0
      %p98 = por %p96, %p97
      %p99 = scmp.ne.s32.totalorder %s91, %s93
      %p100 = scmp.eq.s32.totalorder %s24, 1
      %p101 = por %p99, %p100
      %p102 = scmp.ne.s32.totalorder %s93, %s94
      %p103 = scmp.eq.s32.totalorder %s24, 0
      %p104 = por %p102, %p103
      %p105 = scmp.ne.s32.totalorder %s93, %s94
      %p106 = scmp.eq.s32.totalorder %s25, 1
      %p107 = por %p105, %p106
      %p109 = scmp.ne.s32.totalorder %s94, %s108
      %p110 = scmp.eq.s32.totalorder %s25, 0
      %p111 = por %p109, %p110
      %s112 = ssub.s32 %s27, %s34
      %p113 = scmp.eq.s32.totalorder %s112, 0
      %s115 = sadd.s32 %s114, 1
      %s116 = scalar_select %p113, %s114, %s115
      %p119 = pneg %p113
      %p120 = scmp.eq.s32.totalorder %s19, 1
      %p121 = por %p119, %p120
      %p122 = scmp.ne.s32.totalorder %s114, %s117
      %p123 = scmp.eq.s32.totalorder %s19, 0
      %p124 = por %p122, %p123
      %p125 = scmp.ne.s32.totalorder %s114, %s117
      %p126 = scmp.eq.s32.totalorder %s24, 1
      %p127 = por %p125, %p126
      %p128 = scmp.ne.s32.totalorder %s117, %s118
      %p129 = scmp.eq.s32.totalorder %s24, 0
      %p130 = por %p128, %p129
      %p131 = scmp.ne.s32.totalorder %s117, %s118
      %p132 = scmp.eq.s32.totalorder %s25, 1
      %p133 = por %p131, %p132
      %p135 = scmp.ne.s32.totalorder %s118, %s134
      %p136 = scmp.eq.s32.totalorder %s25, 0
      %p137 = por %p135, %p136
      %s139 = sadd.s32 %s138, 1
      %p142 = scmp.eq.s32.totalorder %s19, 1
      %p143 = scmp.ne.s32.totalorder %s138, %s140
      %p144 = scmp.eq.s32.totalorder %s19, 0
      %p145 = por %p143, %p144
      %p146 = scmp.ne.s32.totalorder %s138, %s140
      %p147 = scmp.eq.s32.totalorder %s24, 1
      %p148 = por %p146, %p147
      %p149 = scmp.ne.s32.totalorder %s140, %s141
      %p150 = scmp.eq.s32.totalorder %s24, 0
      %p151 = por %p149, %p150
      %p152 = scmp.ne.s32.totalorder %s140, %s141
      %p153 = scmp.eq.s32.totalorder %s25, 1
      %p154 = por %p152, %p153
      %p156 = scmp.ne.s32.totalorder %s141, %s155
      %p157 = scmp.eq.s32.totalorder %s25, 0
      %p158 = por %p156, %p157
      %s159 = ssub.s32 %s26, %s38
      %p160 = scmp.eq.s32.totalorder %s159, 0
      %s162 = sadd.s32 %s161, 1
      %s163 = scalar_select %p160, %s161, %s162
      %p166 = pneg %p160
      %p167 = scmp.eq.s32.totalorder %s19, 1
      %p168 = por %p166, %p167
      %p169 = scmp.ne.s32.totalorder %s161, %s164
      %p170 = scmp.eq.s32.totalorder %s19, 0
      %p171 = por %p169, %p170
      %p172 = scmp.ne.s32.totalorder %s161, %s164
      %p173 = scmp.eq.s32.totalorder %s24, 1
      %p174 = por %p172, %p173
      %p175 = scmp.ne.s32.totalorder %s164, %s165
      %p176 = scmp.eq.s32.totalorder %s24, 0
      %p177 = por %p175, %p176
      %p178 = scmp.ne.s32.totalorder %s164, %s165
      %p179 = scmp.eq.s32.totalorder %s25, 1
      %p180 = por %p178, %p179
      %p182 = scmp.ne.s32.totalorder %s165, %s181
      %p183 = scmp.eq.s32.totalorder %s25, 0
      %p184 = por %p182, %p183
      %p185 = scmp.le.s32.totalorder 1, %s19
      %p186 = scmp.lt.s32.totalorder %s19, 3
      %p187 = pnand %p185, %p186
      %p188 = pneg %p187
      // Predicated region
      $region9: #{_feed_forward_impl.1} parent=5 // pred_check
        _
      $region10: #{_feed_forward_impl.1} parent=5 // pred_check_branch
        %190 = sbr.rel (%p187) target = $region12
      $region11: #{_feed_forward_impl.1} parent=5 // pred_region
        %s191 = ssub.s32 %s19, 1
        // Predicated region
        $region13: #{_feed_forward_impl.1} parent=11 // pred_check
          %p192 = pneg %p83
        $region14: #{_feed_forward_impl.1} parent=11 // pred_check_branch
          %194 = sbr.rel (%p192) target = $region16
        $region15: #{_feed_forward_impl.1} parent=11 // pred_region
          %s195 = smul.u32 16, %s29
          %s197 = ssub.s32 65536, 65536
          %198 = vsyncadd [#allocation6], %s197
          %s199 = smul.addr %s195, 64
          %s200 = scalar_lea.hbm %s1, %s199
          %s201 = sshll.u32 [#allocation5], 4
          %s202 = int_to_ptr.vmem [resolvable:$true] %s201
          %207 = dma.hbm_to_vmem [thread:$0]  %s200, 65536, %s202, [#allocation6], 1024, 1024, 64
        $region16: #{_feed_forward_impl.1} parent=11 // pred_fallthru
          _
        // Predicated region
        $region17: #{_feed_forward_impl.1} parent=11 // pred_check
          %p208 = pneg %p104
        $region18: #{_feed_forward_impl.1} parent=11 // pred_check_branch
          %210 = sbr.rel (%p208) target = $region20
        $region19: #{_feed_forward_impl.1} parent=11 // pred_region
          %s212 = ssub.s32 256, 256
          %213 = vsyncadd [#allocation6], %s212
          %s215 = sshll.u32 [#allocation7], 4
          %s216 = int_to_ptr.vmem [resolvable:$true] %s215
          %218 = dma.hbm_to_vmem [thread:$0]  %s2, 256, %s216, [#allocation6]
        $region20: #{_feed_forward_impl.1} parent=11 // pred_fallthru
          _
        // Predicated region
        $region21: #{_feed_forward_impl.1} parent=11 // pred_check
          %p219 = pneg %p130
        $region22: #{_feed_forward_impl.1} parent=11 // pred_check_branch
          %221 = sbr.rel (%p219) target = $region24
        $region23: #{_feed_forward_impl.1} parent=11 // pred_region
          %s222 = smul.u32 256, %s29
          %s224 = ssub.s32 65536, 65536
          %225 = vsyncadd [#allocation9], %s224
          %s226 = smul.addr %s222, 4
          %s227 = smul.addr %s226, 64
          %s228 = scalar_lea.hbm %s3, %s227
          %s229 = sshll.u32 [#allocation8], 4
          %s230 = int_to_ptr.vmem [resolvable:$true] %s229
          %235 = dma.hbm_to_vmem [thread:$0]  %s228, 65536, %s230, [#allocation9], 256, 256, 16
        $region24: #{_feed_forward_impl.1} parent=11 // pred_fallthru
          _
        // Predicated region
        $region25: #{_feed_forward_impl.1} parent=11 // pred_check
          %p236 = pneg %p151
        $region26: #{_feed_forward_impl.1} parent=11 // pred_check_branch
          %238 = sbr.rel (%p236) target = $region28
        $region27: #{_feed_forward_impl.1} parent=11 // pred_region
          %s240 = ssub.s32 64, 64
          %241 = vsyncadd [#allocation9], %s240
          %s243 = sshll.u32 [#allocation10], 4
          %s244 = int_to_ptr.vmem [resolvable:$true] %s243
          %246 = dma.hbm_to_vmem [thread:$0]  %s4, 64, %s244, [#allocation9]
        $region28: #{_feed_forward_impl.1} parent=11 // pred_fallthru
          _
      $region12: #{_feed_forward_impl.1} parent=5 // pred_fallthru
        _
      %p247 = scmp.lt.s32.totalorder %s19, 2
      // Predicated region
      $region29: #{_feed_forward_impl.1} parent=5 // pred_check
        %p248 = pneg %p247
      $region30: #{_feed_forward_impl.1} parent=5 // pred_check_branch
        %250 = sbr.rel (%p248) target = $region32
      $region31: #{_feed_forward_impl.1} parent=5 // pred_region
        // Predicated region
        $region33: #{_feed_forward_impl.1} parent=31 // pred_check
          %p251 = pneg %p51
        $region34: #{_feed_forward_impl.1} parent=31 // pred_check_branch
          %253 = sbr.rel (%p251) target = $region36
        $region35: #{_feed_forward_impl.1} parent=31 // pred_region
          %s254 = sand.u32 %s41, 1
          %s255 = scalar_lea.sflag [#allocation3], %s254
          %s256 = sand.u32 %s41, 1
          %s257 = smul.addr %s256, 32
          %s258 = scalar_lea.vmem [#allocation2], %s257
          %s260 = ssub.s32 512, 512
          %261 = vsyncadd %s255, %s260
          %s262 = smul.addr %s26, 4
          %s263 = smul.addr %s262, 128
          %s264 = scalar_lea.hbm %s0, %s263
          %s266 = sshll.u32 %s258, 4
          %s267 = int_to_ptr.vmem [resolvable:$true] %s266
          %269 = dma.hbm_to_vmem [thread:$0]  %s264, 512, %s267, %s255
        $region36: #{_feed_forward_impl.1} parent=31 // pred_fallthru
          _
      $region32: #{_feed_forward_impl.1} parent=5 // pred_fallthru
        _
      %p270 = scmp.le.s32.totalorder 1, %s19
      %p271 = scmp.lt.s32.totalorder %s19, 3
      %p272 = pnand %p270, %p271
      %p273 = pneg %p272
      // Predicated region
      $region37: #{_feed_forward_impl.1} parent=5 // pred_check
        _
      $region38: #{_feed_forward_impl.1} parent=5 // pred_check_branch
        %275 = sbr.rel (%p272) target = $region40
      $region39: #{_feed_forward_impl.1} parent=5 // pred_region
        %s276 = ssub.s32 %s19, 1
        %s277 = sand.u32 %s44, 1
        %s278 = scalar_lea.sflag [#allocation3], %s277
        %s279 = sand.u32 %s44, 1
        %s280 = smul.addr %s279, 32
        %s281 = scalar_lea.vmem [#allocation2], %s280
        // Predicated region
        $region41: #{_feed_forward_impl.1} parent=39 // pred_check
          %p282 = pneg %p57
        $region42: #{_feed_forward_impl.1} parent=39 // pred_check_branch
          %284 = sbr.rel (%p282) target = $region44
        $region43: #{_feed_forward_impl.1} parent=39 // pred_region
          %285 = dma.done %s278, 512
        $region44: #{_feed_forward_impl.1} parent=39 // pred_fallthru
          _
        // Predicated region
        $region45: #{_feed_forward_impl.1} parent=39 // pred_check
          %p286 = pneg %p83
        $region46: #{_feed_forward_impl.1} parent=39 // pred_check_branch
          %288 = sbr.rel (%p286) target = $region48
        $region47: #{_feed_forward_impl.1} parent=39 // pred_region
          %289 = dma.done [#allocation6], 65536
        $region48: #{_feed_forward_impl.1} parent=39 // pred_fallthru
          _
        // Predicated region
        $region49: #{_feed_forward_impl.1} parent=39 // pred_check
          %p290 = pneg %p104
        $region50: #{_feed_forward_impl.1} parent=39 // pred_check_branch
          %292 = sbr.rel (%p290) target = $region52
        $region51: #{_feed_forward_impl.1} parent=39 // pred_region
          %293 = dma.done [#allocation6], 256
        $region52: #{_feed_forward_impl.1} parent=39 // pred_fallthru
          _
        // Predicated region
        $region53: #{_feed_forward_impl.1} parent=39 // pred_check
          %p294 = pneg %p130
        $region54: #{_feed_forward_impl.1} parent=39 // pred_check_branch
          %296 = sbr.rel (%p294) target = $region56
        $region55: #{_feed_forward_impl.1} parent=39 // pred_region
          %297 = dma.done [#allocation9], 65536
        $region56: #{_feed_forward_impl.1} parent=39 // pred_fallthru
          _
        // Predicated region
        $region57: #{_feed_forward_impl.1} parent=39 // pred_check
          %p298 = pneg %p151
        $region58: #{_feed_forward_impl.1} parent=39 // pred_check_branch
          %300 = sbr.rel (%p298) target = $region60
        $region59: #{_feed_forward_impl.1} parent=39 // pred_region
          %301 = dma.done [#allocation9], 64
        $region60: #{_feed_forward_impl.1} parent=39 // pred_fallthru
          _
        %s302 = sand.u32 %s44, 1
        %s303 = scalar_lea.sflag [#allocation3], %s302
        %s304 = sand.u32 %s44, 1
        %s305 = smul.addr %s304, 32
        %s306 = scalar_lea.vmem [#allocation2], %s305
        %p307 = pneg %p57
        %p308 = pneg %p54
        %p309 = pneg %p83
        %p310 = pneg %p80
        %p311 = pneg %p104
        %p312 = pneg %p101
        %p313 = pneg %p130
        %p314 = pneg %p127
        %p315 = pneg %p151
        %p316 = pneg %p148
        %p317 = pneg %p177
        %p318 = pneg %p174
        %s319 = sand.u32 %s164, 1
        %s320 = scalar_lea.sflag [#allocation4], %s319
        %s321 = sand.u32 %s164, 1
        %s322 = smul.addr %s321, 32
        %s323 = scalar_lea.vmem [#allocation11], %s322
        %s324 = smul.u32 16, %s29
        %s325 = smul.u32 256, %s29
        %p326 = scmp.eq.s32.totalorder %s29, 0
        // Predicated region
        $region61: #{_feed_forward_impl.1} parent=39 // pred_check
          %p327 = pneg %p326
        $region62: #{_feed_forward_impl.1} parent=39 // pred_check_branch
          %329 = sbr.rel (%p327) target = $region64
        $region63: #{_feed_forward_impl.1} parent=39 // pred_region
          %v330 = vld [vmem:[#allocation10] sm:$0xf]
          %v332 = vlaneseq
          %v333 = vshrl.u32 %v332, 7
          %v334 = vsub.s32 0, %v333
          %v335 = vrot.slane %v330, %v334
          %v336 = vlaneseq
          %v337 = vshrl.u32 %v336, 7
          %v338 = vsub.s32 1, %v337
          %v339 = vrot.slane %v330, %v338
          %v340 = vlaneseq
          %v341 = vshrl.u32 %v340, 7
          %v342 = vsub.s32 2, %v341
          %v343 = vrot.slane %v330, %v342
          %v344 = vlaneseq
          %v345 = vshrl.u32 %v344, 7
          %v346 = vsub.s32 3, %v345
          %v347 = vrot.slane %v330, %v346
          %352 = vst [vmem:[%s323] sm:$0xff] %v335
          %353 = vst [vmem:[%s323 + $0x8] sm:$0xff] %v339
          %354 = vst [vmem:[%s323 + $0x10] sm:$0xff] %v343
          %355 = vst [vmem:[%s323 + $0x18] sm:$0xff] %v347
        $region64: #{_feed_forward_impl.1} parent=39 // pred_fallthru
          _
        %s356 = smul.u32 %s29, 2048
        %s357 = sshra.s32 %s356, 7
        %s358 = sand.u32 %s356, 127
        %s359 = scalar_lea.vmem [#allocation7], %s357
        %v360 = vld [vmem:[%s359] sm:$0xff]
        %v361 = vld [vmem:[%s359 + $0x8] sm:$0xff]
        %v362 = vld [vmem:[%s281] sm:$0xff]
        %v363 = vld [vmem:[%s281 + $0x8] sm:$0xff]
        %v364 = vld [vmem:[%s281 + $0x10] sm:$0xff]
        %v365 = vld [vmem:[%s281 + $0x18] sm:$0xff]
        %v366 = vpack.c.bf16 %v362, %v362
        %v367 = vpack.c.bf16 %v363, %v363
        %v368 = vpack.c.bf16 %v364, %v364
        %v369 = vpack.c.bf16 %v365, %v365
        %v370 = vld [vmem:[#allocation5] sm:$0xff]
        %v371 = vld [vmem:[#allocation5 + $0x8] sm:$0xff]
        %v372 = vld [vmem:[#allocation5 + $0x10] sm:$0xff]
        %v373 = vld [vmem:[#allocation5 + $0x18] sm:$0xff]
        %v374 = vld [vmem:[#allocation5 + $0x20] sm:$0xff]
        %v375 = vld [vmem:[#allocation5 + $0x28] sm:$0xff]
        %v376 = vld [vmem:[#allocation5 + $0x30] sm:$0xff]
        %v377 = vld [vmem:[#allocation5 + $0x38] sm:$0xff]
        %v378 = vld [vmem:[#allocation5 + $0x40] sm:$0xff]
        %v379 = vld [vmem:[#allocation5 + $0x48] sm:$0xff]
        %v380 = vld [vmem:[#allocation5 + $0x50] sm:$0xff]
        %v381 = vld [vmem:[#allocation5 + $0x58] sm:$0xff]
        %v382 = vld [vmem:[#allocation5 + $0x60] sm:$0xff]
        %v383 = vld [vmem:[#allocation5 + $0x68] sm:$0xff]
        %v384 = vld [vmem:[#allocation5 + $0x70] sm:$0xff]
        %v385 = vld [vmem:[#allocation5 + $0x78] sm:$0xff]
        %v386 = vld [vmem:[#allocation5 + $0x80] sm:$0xff]
        %v387 = vld [vmem:[#allocation5 + $0x88] sm:$0xff]
        %v388 = vld [vmem:[#allocation5 + $0x90] sm:$0xff]
        %v389 = vld [vmem:[#allocation5 + $0x98] sm:$0xff]
        %v390 = vld [vmem:[#allocation5 + $0xa0] sm:$0xff]
        %v391 = vld [vmem:[#allocation5 + $0xa8] sm:$0xff]
        %v392 = vld [vmem:[#allocation5 + $0xb0] sm:$0xff]
        %v393 = vld [vmem:[#allocation5 + $0xb8] sm:$0xff]
        %v394 = vld [vmem:[#allocation5 + $0xc0] sm:$0xff]
        %v395 = vld [vmem:[#allocation5 + $0xc8] sm:$0xff]
        %v396 = vld [vmem:[#allocation5 + $0xd0] sm:$0xff]
        %v397 = vld [vmem:[#allocation5 + $0xd8] sm:$0xff]
        %v398 = vld [vmem:[#allocation5 + $0xe0] sm:$0xff]
        %v399 = vld [vmem:[#allocation5 + $0xe8] sm:$0xff]
        %v400 = vld [vmem:[#allocation5 + $0xf0] sm:$0xff]
        %v401 = vld [vmem:[#allocation5 + $0xf8] sm:$0xff]
        %v402 = vld [vmem:[#allocation5 + $0x100] sm:$0xff]
        %v403 = vld [vmem:[#allocation5 + $0x108] sm:$0xff]
        %v404 = vld [vmem:[#allocation5 + $0x110] sm:$0xff]
        %v405 = vld [vmem:[#allocation5 + $0x118] sm:$0xff]
        %v406 = vld [vmem:[#allocation5 + $0x120] sm:$0xff]
        %v407 = vld [vmem:[#allocation5 + $0x128] sm:$0xff]
        %v408 = vld [vmem:[#allocation5 + $0x130] sm:$0xff]
        %v409 = vld [vmem:[#allocation5 + $0x138] sm:$0xff]
        %v410 = vld [vmem:[#allocation5 + $0x140] sm:$0xff]
        %v411 = vld [vmem:[#allocation5 + $0x148] sm:$0xff]
        %v412 = vld [vmem:[#allocation5 + $0x150] sm:$0xff]
        %v413 = vld [vmem:[#allocation5 + $0x158] sm:$0xff]
        %v414 = vld [vmem:[#allocation5 + $0x160] sm:$0xff]
        %v415 = vld [vmem:[#allocation5 + $0x168] sm:$0xff]
        %v416 = vld [vmem:[#allocation5 + $0x170] sm:$0xff]
        %v417 = vld [vmem:[#allocation5 + $0x178] sm:$0xff]
        %v418 = vld [vmem:[#allocation5 + $0x180] sm:$0xff]
        %v419 = vld [vmem:[#allocation5 + $0x188] sm:$0xff]
        %v420 = vld [vmem:[#allocation5 + $0x190] sm:$0xff]
        %v421 = vld [vmem:[#allocation5 + $0x198] sm:$0xff]
        %v422 = vld [vmem:[#allocation5 + $0x1a0] sm:$0xff]
        %v423 = vld [vmem:[#allocation5 + $0x1a8] sm:$0xff]
        %v424 = vld [vmem:[#allocation5 + $0x1b0] sm:$0xff]
        %v425 = vld [vmem:[#allocation5 + $0x1b8] sm:$0xff]
        %v426 = vld [vmem:[#allocation5 + $0x1c0] sm:$0xff]
        %v427 = vld [vmem:[#allocation5 + $0x1c8] sm:$0xff]
        %v428 = vld [vmem:[#allocation5 + $0x1d0] sm:$0xff]
        %v429 = vld [vmem:[#allocation5 + $0x1d8] sm:$0xff]
        %v430 = vld [vmem:[#allocation5 + $0x1e0] sm:$0xff]
        %v431 = vld [vmem:[#allocation5 + $0x1e8] sm:$0xff]
        %v432 = vld [vmem:[#allocation5 + $0x1f0] sm:$0xff]
        %v433 = vld [vmem:[#allocation5 + $0x1f8] sm:$0xff]
        %v434 = vld [vmem:[#allocation5 + $0x200] sm:$0xff]
        %v435 = vld [vmem:[#allocation5 + $0x208] sm:$0xff]
        %v436 = vld [vmem:[#allocation5 + $0x210] sm:$0xff]
        %v437 = vld [vmem:[#allocation5 + $0x218] sm:$0xff]
        %v438 = vld [vmem:[#allocation5 + $0x220] sm:$0xff]
        %v439 = vld [vmem:[#allocation5 + $0x228] sm:$0xff]
        %v440 = vld [vmem:[#allocation5 + $0x230] sm:$0xff]
        %v441 = vld [vmem:[#allocation5 + $0x238] sm:$0xff]
        %v442 = vld [vmem:[#allocation5 + $0x240] sm:$0xff]
        %v443 = vld [vmem:[#allocation5 + $0x248] sm:$0xff]
        %v444 = vld [vmem:[#allocation5 + $0x250] sm:$0xff]
        %v445 = vld [vmem:[#allocation5 + $0x258] sm:$0xff]
        %v446 = vld [vmem:[#allocation5 + $0x260] sm:$0xff]
        %v447 = vld [vmem:[#allocation5 + $0x268] sm:$0xff]
        %v448 = vld [vmem:[#allocation5 + $0x270] sm:$0xff]
        %v449 = vld [vmem:[#allocation5 + $0x278] sm:$0xff]
        %v450 = vld [vmem:[#allocation5 + $0x280] sm:$0xff]
        %v451 = vld [vmem:[#allocation5 + $0x288] sm:$0xff]
        %v452 = vld [vmem:[#allocation5 + $0x290] sm:$0xff]
        %v453 = vld [vmem:[#allocation5 + $0x298] sm:$0xff]
        %v454 = vld [vmem:[#allocation5 + $0x2a0] sm:$0xff]
        %v455 = vld [vmem:[#allocation5 + $0x2a8] sm:$0xff]
        %v456 = vld [vmem:[#allocation5 + $0x2b0] sm:$0xff]
        %v457 = vld [vmem:[#allocation5 + $0x2b8] sm:$0xff]
        %v458 = vld [vmem:[#allocation5 + $0x2c0] sm:$0xff]
        %v459 = vld [vmem:[#allocation5 + $0x2c8] sm:$0xff]
        %v460 = vld [vmem:[#allocation5 + $0x2d0] sm:$0xff]
        %v461 = vld [vmem:[#allocation5 + $0x2d8] sm:$0xff]
        %v462 = vld [vmem:[#allocation5 + $0x2e0] sm:$0xff]
        %v463 = vld [vmem:[#allocation5 + $0x2e8] sm:$0xff]
        %v464 = vld [vmem:[#allocation5 + $0x2f0] sm:$0xff]
        %v465 = vld [vmem:[#allocation5 + $0x2f8] sm:$0xff]
        %v466 = vld [vmem:[#allocation5 + $0x300] sm:$0xff]
        %v467 = vld [vmem:[#allocation5 + $0x308] sm:$0xff]
        %v468 = vld [vmem:[#allocation5 + $0x310] sm:$0xff]
        %v469 = vld [vmem:[#allocation5 + $0x318] sm:$0xff]
        %v470 = vld [vmem:[#allocation5 + $0x320] sm:$0xff]
        %v471 = vld [vmem:[#allocation5 + $0x328] sm:$0xff]
        %v472 = vld [vmem:[#allocation5 + $0x330] sm:$0xff]
        %v473 = vld [vmem:[#allocation5 + $0x338] sm:$0xff]
        %v474 = vld [vmem:[#allocation5 + $0x340] sm:$0xff]
        %v475 = vld [vmem:[#allocation5 + $0x348] sm:$0xff]
        %v476 = vld [vmem:[#allocation5 + $0x350] sm:$0xff]
        %v477 = vld [vmem:[#allocation5 + $0x358] sm:$0xff]
        %v478 = vld [vmem:[#allocation5 + $0x360] sm:$0xff]
        %v479 = vld [vmem:[#allocation5 + $0x368] sm:$0xff]
        %v480 = vld [vmem:[#allocation5 + $0x370] sm:$0xff]
        %v481 = vld [vmem:[#allocation5 + $0x378] sm:$0xff]
        %v482 = vld [vmem:[#allocation5 + $0x380] sm:$0xff]
        %v483 = vld [vmem:[#allocation5 + $0x388] sm:$0xff]
        %v484 = vld [vmem:[#allocation5 + $0x390] sm:$0xff]
        %v485 = vld [vmem:[#allocation5 + $0x398] sm:$0xff]
        %v486 = vld [vmem:[#allocation5 + $0x3a0] sm:$0xff]
        %v487 = vld [vmem:[#allocation5 + $0x3a8] sm:$0xff]
        %v488 = vld [vmem:[#allocation5 + $0x3b0] sm:$0xff]
        %v489 = vld [vmem:[#allocation5 + $0x3b8] sm:$0xff]
        %v490 = vld [vmem:[#allocation5 + $0x3c0] sm:$0xff]
        %v491 = vld [vmem:[#allocation5 + $0x3c8] sm:$0xff]
        %v492 = vld [vmem:[#allocation5 + $0x3d0] sm:$0xff]
        %v493 = vld [vmem:[#allocation5 + $0x3d8] sm:$0xff]
        %v494 = vld [vmem:[#allocation5 + $0x3e0] sm:$0xff]
        %v495 = vld [vmem:[#allocation5 + $0x3e8] sm:$0xff]
        %v496 = vld [vmem:[#allocation5 + $0x3f0] sm:$0xff]
        %v497 = vld [vmem:[#allocation5 + $0x3f8] sm:$0xff]
        %v498 = vld [vmem:[#allocation5 + $0x400] sm:$0xff]
        %v499 = vld [vmem:[#allocation5 + $0x408] sm:$0xff]
        %v500 = vld [vmem:[#allocation5 + $0x410] sm:$0xff]
        %v501 = vld [vmem:[#allocation5 + $0x418] sm:$0xff]
        %v502 = vld [vmem:[#allocation5 + $0x420] sm:$0xff]
        %v503 = vld [vmem:[#allocation5 + $0x428] sm:$0xff]
        %v504 = vld [vmem:[#allocation5 + $0x430] sm:$0xff]
        %v505 = vld [vmem:[#allocation5 + $0x438] sm:$0xff]
        %v506 = vld [vmem:[#allocation5 + $0x440] sm:$0xff]
        %v507 = vld [vmem:[#allocation5 + $0x448] sm:$0xff]
        %v508 = vld [vmem:[#allocation5 + $0x450] sm:$0xff]
        %v509 = vld [vmem:[#allocation5 + $0x458] sm:$0xff]
        %v510 = vld [vmem:[#allocation5 + $0x460] sm:$0xff]
        %v511 = vld [vmem:[#allocation5 + $0x468] sm:$0xff]
        %v512 = vld [vmem:[#allocation5 + $0x470] sm:$0xff]
        %v513 = vld [vmem:[#allocation5 + $0x478] sm:$0xff]
        %v514 = vld [vmem:[#allocation5 + $0x480] sm:$0xff]
        %v515 = vld [vmem:[#allocation5 + $0x488] sm:$0xff]
        %v516 = vld [vmem:[#allocation5 + $0x490] sm:$0xff]
        %v517 = vld [vmem:[#allocation5 + $0x498] sm:$0xff]
        %v518 = vld [vmem:[#allocation5 + $0x4a0] sm:$0xff]
        %v519 = vld [vmem:[#allocation5 + $0x4a8] sm:$0xff]
        %v520 = vld [vmem:[#allocation5 + $0x4b0] sm:$0xff]
        %v521 = vld [vmem:[#allocation5 + $0x4b8] sm:$0xff]
        %v522 = vld [vmem:[#allocation5 + $0x4c0] sm:$0xff]
        %v523 = vld [vmem:[#allocation5 + $0x4c8] sm:$0xff]
        %v524 = vld [vmem:[#allocation5 + $0x4d0] sm:$0xff]
        %v525 = vld [vmem:[#allocation5 + $0x4d8] sm:$0xff]
        %v526 = vld [vmem:[#allocation5 + $0x4e0] sm:$0xff]
        %v527 = vld [vmem:[#allocation5 + $0x4e8] sm:$0xff]
        %v528 = vld [vmem:[#allocation5 + $0x4f0] sm:$0xff]
        %v529 = vld [vmem:[#allocation5 + $0x4f8] sm:$0xff]
        %v530 = vld [vmem:[#allocation5 + $0x500] sm:$0xff]
        %v531 = vld [vmem:[#allocation5 + $0x508] sm:$0xff]
        %v532 = vld [vmem:[#allocation5 + $0x510] sm:$0xff]
        %v533 = vld [vmem:[#allocation5 + $0x518] sm:$0xff]
        %v534 = vld [vmem:[#allocation5 + $0x520] sm:$0xff]
        %v535 = vld [vmem:[#allocation5 + $0x528] sm:$0xff]
        %v536 = vld [vmem:[#allocation5 + $0x530] sm:$0xff]
        %v537 = vld [vmem:[#allocation5 + $0x538] sm:$0xff]
        %v538 = vld [vmem:[#allocation5 + $0x540] sm:$0xff]
        %v539 = vld [vmem:[#allocation5 + $0x548] sm:$0xff]
        %v540 = vld [vmem:[#allocation5 + $0x550] sm:$0xff]
        %v541 = vld [vmem:[#allocation5 + $0x558] sm:$0xff]
        %v542 = vld [vmem:[#allocation5 + $0x560] sm:$0xff]
        %v543 = vld [vmem:[#allocation5 + $0x568] sm:$0xff]
        %v544 = vld [vmem:[#allocation5 + $0x570] sm:$0xff]
        %v545 = vld [vmem:[#allocation5 + $0x578] sm:$0xff]
        %v546 = vld [vmem:[#allocation5 + $0x580] sm:$0xff]
        %v547 = vld [vmem:[#allocation5 + $0x588] sm:$0xff]
        %v548 = vld [vmem:[#allocation5 + $0x590] sm:$0xff]
        %v549 = vld [vmem:[#allocation5 + $0x598] sm:$0xff]
        %v550 = vld [vmem:[#allocation5 + $0x5a0] sm:$0xff]
        %v551 = vld [vmem:[#allocation5 + $0x5a8] sm:$0xff]
        %v552 = vld [vmem:[#allocation5 + $0x5b0] sm:$0xff]
        %v553 = vld [vmem:[#allocation5 + $0x5b8] sm:$0xff]
        %v554 = vld [vmem:[#allocation5 + $0x5c0] sm:$0xff]
        %v555 = vld [vmem:[#allocation5 + $0x5c8] sm:$0xff]
        %v556 = vld [vmem:[#allocation5 + $0x5d0] sm:$0xff]
        %v557 = vld [vmem:[#allocation5 + $0x5d8] sm:$0xff]
        %v558 = vld [vmem:[#allocation5 + $0x5e0] sm:$0xff]
        %v559 = vld [vmem:[#allocation5 + $0x5e8] sm:$0xff]
        %v560 = vld [vmem:[#allocation5 + $0x5f0] sm:$0xff]
        %v561 = vld [vmem:[#allocation5 + $0x5f8] sm:$0xff]
        %v562 = vld [vmem:[#allocation5 + $0x600] sm:$0xff]
        %v563 = vld [vmem:[#allocation5 + $0x608] sm:$0xff]
        %v564 = vld [vmem:[#allocation5 + $0x610] sm:$0xff]
        %v565 = vld [vmem:[#allocation5 + $0x618] sm:$0xff]
        %v566 = vld [vmem:[#allocation5 + $0x620] sm:$0xff]
        %v567 = vld [vmem:[#allocation5 + $0x628] sm:$0xff]
        %v568 = vld [vmem:[#allocation5 + $0x630] sm:$0xff]
        %v569 = vld [vmem:[#allocation5 + $0x638] sm:$0xff]
        %v570 = vld [vmem:[#allocation5 + $0x640] sm:$0xff]
        %v571 = vld [vmem:[#allocation5 + $0x648] sm:$0xff]
        %v572 = vld [vmem:[#allocation5 + $0x650] sm:$0xff]
        %v573 = vld [vmem:[#allocation5 + $0x658] sm:$0xff]
        %v574 = vld [vmem:[#allocation5 + $0x660] sm:$0xff]
        %v575 = vld [vmem:[#allocation5 + $0x668] sm:$0xff]
        %v576 = vld [vmem:[#allocation5 + $0x670] sm:$0xff]
        %v577 = vld [vmem:[#allocation5 + $0x678] sm:$0xff]
        %v578 = vld [vmem:[#allocation5 + $0x680] sm:$0xff]
        %v579 = vld [vmem:[#allocation5 + $0x688] sm:$0xff]
        %v580 = vld [vmem:[#allocation5 + $0x690] sm:$0xff]
        %v581 = vld [vmem:[#allocation5 + $0x698] sm:$0xff]
        %v582 = vld [vmem:[#allocation5 + $0x6a0] sm:$0xff]
        %v583 = vld [vmem:[#allocation5 + $0x6a8] sm:$0xff]
        %v584 = vld [vmem:[#allocation5 + $0x6b0] sm:$0xff]
        %v585 = vld [vmem:[#allocation5 + $0x6b8] sm:$0xff]
        %v586 = vld [vmem:[#allocation5 + $0x6c0] sm:$0xff]
        %v587 = vld [vmem:[#allocation5 + $0x6c8] sm:$0xff]
        %v588 = vld [vmem:[#allocation5 + $0x6d0] sm:$0xff]
        %v589 = vld [vmem:[#allocation5 + $0x6d8] sm:$0xff]
        %v590 = vld [vmem:[#allocation5 + $0x6e0] sm:$0xff]
        %v591 = vld [vmem:[#allocation5 + $0x6e8] sm:$0xff]
        %v592 = vld [vmem:[#allocation5 + $0x6f0] sm:$0xff]
        %v593 = vld [vmem:[#allocation5 + $0x6f8] sm:$0xff]
        %v594 = vld [vmem:[#allocation5 + $0x700] sm:$0xff]
        %v595 = vld [vmem:[#allocation5 + $0x708] sm:$0xff]
        %v596 = vld [vmem:[#allocation5 + $0x710] sm:$0xff]
        %v597 = vld [vmem:[#allocation5 + $0x718] sm:$0xff]
        %v598 = vld [vmem:[#allocation5 + $0x720] sm:$0xff]
        %v599 = vld [vmem:[#allocation5 + $0x728] sm:$0xff]
        %v600 = vld [vmem:[#allocation5 + $0x730] sm:$0xff]
        %v601 = vld [vmem:[#allocation5 + $0x738] sm:$0xff]
        %v602 = vld [vmem:[#allocation5 + $0x740] sm:$0xff]
        %v603 = vld [vmem:[#allocation5 + $0x748] sm:$0xff]
        %v604 = vld [vmem:[#allocation5 + $0x750] sm:$0xff]
        %v605 = vld [vmem:[#allocation5 + $0x758] sm:$0xff]
        %v606 = vld [vmem:[#allocation5 + $0x760] sm:$0xff]
        %v607 = vld [vmem:[#allocation5 + $0x768] sm:$0xff]
        %v608 = vld [vmem:[#allocation5 + $0x770] sm:$0xff]
        %v609 = vld [vmem:[#allocation5 + $0x778] sm:$0xff]
        %v610 = vld [vmem:[#allocation5 + $0x780] sm:$0xff]
        %v611 = vld [vmem:[#allocation5 + $0x788] sm:$0xff]
        %v612 = vld [vmem:[#allocation5 + $0x790] sm:$0xff]
        %v613 = vld [vmem:[#allocation5 + $0x798] sm:$0xff]
        %v614 = vld [vmem:[#allocation5 + $0x7a0] sm:$0xff]
        %v615 = vld [vmem:[#allocation5 + $0x7a8] sm:$0xff]
        %v616 = vld [vmem:[#allocation5 + $0x7b0] sm:$0xff]
        %v617 = vld [vmem:[#allocation5 + $0x7b8] sm:$0xff]
        %v618 = vld [vmem:[#allocation5 + $0x7c0] sm:$0xff]
        %v619 = vld [vmem:[#allocation5 + $0x7c8] sm:$0xff]
        %v620 = vld [vmem:[#allocation5 + $0x7d0] sm:$0xff]
        %v621 = vld [vmem:[#allocation5 + $0x7d8] sm:$0xff]
        %v622 = vld [vmem:[#allocation5 + $0x7e0] sm:$0xff]
        %v623 = vld [vmem:[#allocation5 + $0x7e8] sm:$0xff]
        %v624 = vld [vmem:[#allocation5 + $0x7f0] sm:$0xff]
        %v625 = vld [vmem:[#allocation5 + $0x7f8] sm:$0xff]
        %v626 = vld [vmem:[#allocation5 + $0x800] sm:$0xff]
        %v627 = vld [vmem:[#allocation5 + $0x808] sm:$0xff]
        %v628 = vld [vmem:[#allocation5 + $0x810] sm:$0xff]
        %v629 = vld [vmem:[#allocation5 + $0x818] sm:$0xff]
        %v630 = vld [vmem:[#allocation5 + $0x820] sm:$0xff]
        %v631 = vld [vmem:[#allocation5 + $0x828] sm:$0xff]
        %v632 = vld [vmem:[#allocation5 + $0x830] sm:$0xff]
        %v633 = vld [vmem:[#allocation5 + $0x838] sm:$0xff]
        %v634 = vld [vmem:[#allocation5 + $0x840] sm:$0xff]
        %v635 = vld [vmem:[#allocation5 + $0x848] sm:$0xff]
        %v636 = vld [vmem:[#allocation5 + $0x850] sm:$0xff]
        %v637 = vld [vmem:[#allocation5 + $0x858] sm:$0xff]
        %v638 = vld [vmem:[#allocation5 + $0x860] sm:$0xff]
        %v639 = vld [vmem:[#allocation5 + $0x868] sm:$0xff]
        %v640 = vld [vmem:[#allocation5 + $0x870] sm:$0xff]
        %v641 = vld [vmem:[#allocation5 + $0x878] sm:$0xff]
        %v642 = vld [vmem:[#allocation5 + $0x880] sm:$0xff]
        %v643 = vld [vmem:[#allocation5 + $0x888] sm:$0xff]
        %v644 = vld [vmem:[#allocation5 + $0x890] sm:$0xff]
        %v645 = vld [vmem:[#allocation5 + $0x898] sm:$0xff]
        %v646 = vld [vmem:[#allocation5 + $0x8a0] sm:$0xff]
        %v647 = vld [vmem:[#allocation5 + $0x8a8] sm:$0xff]
        %v648 = vld [vmem:[#allocation5 + $0x8b0] sm:$0xff]
        %v649 = vld [vmem:[#allocation5 + $0x8b8] sm:$0xff]
        %v650 = vld [vmem:[#allocation5 + $0x8c0] sm:$0xff]
        %v651 = vld [vmem:[#allocation5 + $0x8c8] sm:$0xff]
        %v652 = vld [vmem:[#allocation5 + $0x8d0] sm:$0xff]
        %v653 = vld [vmem:[#allocation5 + $0x8d8] sm:$0xff]
        %v654 = vld [vmem:[#allocation5 + $0x8e0] sm:$0xff]
        %v655 = vld [vmem:[#allocation5 + $0x8e8] sm:$0xff]
        %v656 = vld [vmem:[#allocation5 + $0x8f0] sm:$0xff]
        %v657 = vld [vmem:[#allocation5 + $0x8f8] sm:$0xff]
        %v658 = vld [vmem:[#allocation5 + $0x900] sm:$0xff]
        %v659 = vld [vmem:[#allocation5 + $0x908] sm:$0xff]
        %v660 = vld [vmem:[#allocation5 + $0x910] sm:$0xff]
        %v661 = vld [vmem:[#allocation5 + $0x918] sm:$0xff]
        %v662 = vld [vmem:[#allocation5 + $0x920] sm:$0xff]
        %v663 = vld [vmem:[#allocation5 + $0x928] sm:$0xff]
        %v664 = vld [vmem:[#allocation5 + $0x930] sm:$0xff]
        %v665 = vld [vmem:[#allocation5 + $0x938] sm:$0xff]
        %v666 = vld [vmem:[#allocation5 + $0x940] sm:$0xff]
        %v667 = vld [vmem:[#allocation5 + $0x948] sm:$0xff]
        %v668 = vld [vmem:[#allocation5 + $0x950] sm:$0xff]
        %v669 = vld [vmem:[#allocation5 + $0x958] sm:$0xff]
        %v670 = vld [vmem:[#allocation5 + $0x960] sm:$0xff]
        %v671 = vld [vmem:[#allocation5 + $0x968] sm:$0xff]
        %v672 = vld [vmem:[#allocation5 + $0x970] sm:$0xff]
        %v673 = vld [vmem:[#allocation5 + $0x978] sm:$0xff]
        %v674 = vld [vmem:[#allocation5 + $0x980] sm:$0xff]
        %v675 = vld [vmem:[#allocation5 + $0x988] sm:$0xff]
        %v676 = vld [vmem:[#allocation5 + $0x990] sm:$0xff]
        %v677 = vld [vmem:[#allocation5 + $0x998] sm:$0xff]
        %v678 = vld [vmem:[#allocation5 + $0x9a0] sm:$0xff]
        %v679 = vld [vmem:[#allocation5 + $0x9a8] sm:$0xff]
        %v680 = vld [vmem:[#allocation5 + $0x9b0] sm:$0xff]
        %v681 = vld [vmem:[#allocation5 + $0x9b8] sm:$0xff]
        %v682 = vld [vmem:[#allocation5 + $0x9c0] sm:$0xff]
        %v683 = vld [vmem:[#allocation5 + $0x9c8] sm:$0xff]
        %v684 = vld [vmem:[#allocation5 + $0x9d0] sm:$0xff]
        %v685 = vld [vmem:[#allocation5 + $0x9d8] sm:$0xff]
        %v686 = vld [vmem:[#allocation5 + $0x9e0] sm:$0xff]
        %v687 = vld [vmem:[#allocation5 + $0x9e8] sm:$0xff]
        %v688 = vld [vmem:[#allocation5 + $0x9f0] sm:$0xff]
        %v689 = vld [vmem:[#allocation5 + $0x9f8] sm:$0xff]
        %v690 = vld [vmem:[#allocation5 + $0xa00] sm:$0xff]
        %v691 = vld [vmem:[#allocation5 + $0xa08] sm:$0xff]
        %v692 = vld [vmem:[#allocation5 + $0xa10] sm:$0xff]
        %v693 = vld [vmem:[#allocation5 + $0xa18] sm:$0xff]
        %v694 = vld [vmem:[#allocation5 + $0xa20] sm:$0xff]
        %v695 = vld [vmem:[#allocation5 + $0xa28] sm:$0xff]
        %v696 = vld [vmem:[#allocation5 + $0xa30] sm:$0xff]
        %v697 = vld [vmem:[#allocation5 + $0xa38] sm:$0xff]
        %v698 = vld [vmem:[#allocation5 + $0xa40] sm:$0xff]
        %v699 = vld [vmem:[#allocation5 + $0xa48] sm:$0xff]
        %v700 = vld [vmem:[#allocation5 + $0xa50] sm:$0xff]
        %v701 = vld [vmem:[#allocation5 + $0xa58] sm:$0xff]
        %v702 = vld [vmem:[#allocation5 + $0xa60] sm:$0xff]
        %v703 = vld [vmem:[#allocation5 + $0xa68] sm:$0xff]
        %v704 = vld [vmem:[#allocation5 + $0xa70] sm:$0xff]
        %v705 = vld [vmem:[#allocation5 + $0xa78] sm:$0xff]
        %v706 = vld [vmem:[#allocation5 + $0xa80] sm:$0xff]
        %v707 = vld [vmem:[#allocation5 + $0xa88] sm:$0xff]
        %v708 = vld [vmem:[#allocation5 + $0xa90] sm:$0xff]
        %v709 = vld [vmem:[#allocation5 + $0xa98] sm:$0xff]
        %v710 = vld [vmem:[#allocation5 + $0xaa0] sm:$0xff]
        %v711 = vld [vmem:[#allocation5 + $0xaa8] sm:$0xff]
        %v712 = vld [vmem:[#allocation5 + $0xab0] sm:$0xff]
        %v713 = vld [vmem:[#allocation5 + $0xab8] sm:$0xff]
        %v714 = vld [vmem:[#allocation5 + $0xac0] sm:$0xff]
        %v715 = vld [vmem:[#allocation5 + $0xac8] sm:$0xff]
        %v716 = vld [vmem:[#allocation5 + $0xad0] sm:$0xff]
        %v717 = vld [vmem:[#allocation5 + $0xad8] sm:$0xff]
        %v718 = vld [vmem:[#allocation5 + $0xae0] sm:$0xff]
        %v719 = vld [vmem:[#allocation5 + $0xae8] sm:$0xff]
        %v720 = vld [vmem:[#allocation5 + $0xaf0] sm:$0xff]
        %v721 = vld [vmem:[#allocation5 + $0xaf8] sm:$0xff]
        %v722 = vld [vmem:[#allocation5 + $0xb00] sm:$0xff]
        %v723 = vld [vmem:[#allocation5 + $0xb08] sm:$0xff]
        %v724 = vld [vmem:[#allocation5 + $0xb10] sm:$0xff]
        %v725 = vld [vmem:[#allocation5 + $0xb18] sm:$0xff]
        %v726 = vld [vmem:[#allocation5 + $0xb20] sm:$0xff]
        %v727 = vld [vmem:[#allocation5 + $0xb28] sm:$0xff]
        %v728 = vld [vmem:[#allocation5 + $0xb30] sm:$0xff]
        %v729 = vld [vmem:[#allocation5 + $0xb38] sm:$0xff]
        %v730 = vld [vmem:[#allocation5 + $0xb40] sm:$0xff]
        %v731 = vld [vmem:[#allocation5 + $0xb48] sm:$0xff]
        %v732 = vld [vmem:[#allocation5 + $0xb50] sm:$0xff]
        %v733 = vld [vmem:[#allocation5 + $0xb58] sm:$0xff]
        %v734 = vld [vmem:[#allocation5 + $0xb60] sm:$0xff]
        %v735 = vld [vmem:[#allocation5 + $0xb68] sm:$0xff]
        %v736 = vld [vmem:[#allocation5 + $0xb70] sm:$0xff]
        %v737 = vld [vmem:[#allocation5 + $0xb78] sm:$0xff]
        %v738 = vld [vmem:[#allocation5 + $0xb80] sm:$0xff]
        %v739 = vld [vmem:[#allocation5 + $0xb88] sm:$0xff]
        %v740 = vld [vmem:[#allocation5 + $0xb90] sm:$0xff]
        %v741 = vld [vmem:[#allocation5 + $0xb98] sm:$0xff]
        %v742 = vld [vmem:[#allocation5 + $0xba0] sm:$0xff]
        %v743 = vld [vmem:[#allocation5 + $0xba8] sm:$0xff]
        %v744 = vld [vmem:[#allocation5 + $0xbb0] sm:$0xff]
        %v745 = vld [vmem:[#allocation5 + $0xbb8] sm:$0xff]
        %v746 = vld [vmem:[#allocation5 + $0xbc0] sm:$0xff]
        %v747 = vld [vmem:[#allocation5 + $0xbc8] sm:$0xff]
        %v748 = vld [vmem:[#allocation5 + $0xbd0] sm:$0xff]
        %v749 = vld [vmem:[#allocation5 + $0xbd8] sm:$0xff]
        %v750 = vld [vmem:[#allocation5 + $0xbe0] sm:$0xff]
        %v751 = vld [vmem:[#allocation5 + $0xbe8] sm:$0xff]
        %v752 = vld [vmem:[#allocation5 + $0xbf0] sm:$0xff]
        %v753 = vld [vmem:[#allocation5 + $0xbf8] sm:$0xff]
        %v754 = vld [vmem:[#allocation5 + $0xc00] sm:$0xff]
        %v755 = vld [vmem:[#allocation5 + $0xc08] sm:$0xff]
        %v756 = vld [vmem:[#allocation5 + $0xc10] sm:$0xff]
        %v757 = vld [vmem:[#allocation5 + $0xc18] sm:$0xff]
        %v758 = vld [vmem:[#allocation5 + $0xc20] sm:$0xff]
        %v759 = vld [vmem:[#allocation5 + $0xc28] sm:$0xff]
        %v760 = vld [vmem:[#allocation5 + $0xc30] sm:$0xff]
        %v761 = vld [vmem:[#allocation5 + $0xc38] sm:$0xff]
        %v762 = vld [vmem:[#allocation5 + $0xc40] sm:$0xff]
        %v763 = vld [vmem:[#allocation5 + $0xc48] sm:$0xff]
        %v764 = vld [vmem:[#allocation5 + $0xc50] sm:$0xff]
        %v765 = vld [vmem:[#allocation5 + $0xc58] sm:$0xff]
        %v766 = vld [vmem:[#allocation5 + $0xc60] sm:$0xff]
        %v767 = vld [vmem:[#allocation5 + $0xc68] sm:$0xff]
        %v768 = vld [vmem:[#allocation5 + $0xc70] sm:$0xff]
        %v769 = vld [vmem:[#allocation5 + $0xc78] sm:$0xff]
        %v770 = vld [vmem:[#allocation5 + $0xc80] sm:$0xff]
        %v771 = vld [vmem:[#allocation5 + $0xc88] sm:$0xff]
        %v772 = vld [vmem:[#allocation5 + $0xc90] sm:$0xff]
        %v773 = vld [vmem:[#allocation5 + $0xc98] sm:$0xff]
        %v774 = vld [vmem:[#allocation5 + $0xca0] sm:$0xff]
        %v775 = vld [vmem:[#allocation5 + $0xca8] sm:$0xff]
        %v776 = vld [vmem:[#allocation5 + $0xcb0] sm:$0xff]
        %v777 = vld [vmem:[#allocation5 + $0xcb8] sm:$0xff]
        %v778 = vld [vmem:[#allocation5 + $0xcc0] sm:$0xff]
        %v779 = vld [vmem:[#allocation5 + $0xcc8] sm:$0xff]
        %v780 = vld [vmem:[#allocation5 + $0xcd0] sm:$0xff]
        %v781 = vld [vmem:[#allocation5 + $0xcd8] sm:$0xff]
        %v782 = vld [vmem:[#allocation5 + $0xce0] sm:$0xff]
        %v783 = vld [vmem:[#allocation5 + $0xce8] sm:$0xff]
        %v784 = vld [vmem:[#allocation5 + $0xcf0] sm:$0xff]
        %v785 = vld [vmem:[#allocation5 + $0xcf8] sm:$0xff]
        %v786 = vld [vmem:[#allocation5 + $0xd00] sm:$0xff]
        %v787 = vld [vmem:[#allocation5 + $0xd08] sm:$0xff]
        %v788 = vld [vmem:[#allocation5 + $0xd10] sm:$0xff]
        %v789 = vld [vmem:[#allocation5 + $0xd18] sm:$0xff]
        %v790 = vld [vmem:[#allocation5 + $0xd20] sm:$0xff]
        %v791 = vld [vmem:[#allocation5 + $0xd28] sm:$0xff]
        %v792 = vld [vmem:[#allocation5 + $0xd30] sm:$0xff]
        %v793 = vld [vmem:[#allocation5 + $0xd38] sm:$0xff]
        %v794 = vld [vmem:[#allocation5 + $0xd40] sm:$0xff]
        %v795 = vld [vmem:[#allocation5 + $0xd48] sm:$0xff]
        %v796 = vld [vmem:[#allocation5 + $0xd50] sm:$0xff]
        %v797 = vld [vmem:[#allocation5 + $0xd58] sm:$0xff]
        %v798 = vld [vmem:[#allocation5 + $0xd60] sm:$0xff]
        %v799 = vld [vmem:[#allocation5 + $0xd68] sm:$0xff]
        %v800 = vld [vmem:[#allocation5 + $0xd70] sm:$0xff]
        %v801 = vld [vmem:[#allocation5 + $0xd78] sm:$0xff]
        %v802 = vld [vmem:[#allocation5 + $0xd80] sm:$0xff]
        %v803 = vld [vmem:[#allocation5 + $0xd88] sm:$0xff]
        %v804 = vld [vmem:[#allocation5 + $0xd90] sm:$0xff]
        %v805 = vld [vmem:[#allocation5 + $0xd98] sm:$0xff]
        %v806 = vld [vmem:[#allocation5 + $0xda0] sm:$0xff]
        %v807 = vld [vmem:[#allocation5 + $0xda8] sm:$0xff]
        %v808 = vld [vmem:[#allocation5 + $0xdb0] sm:$0xff]
        %v809 = vld [vmem:[#allocation5 + $0xdb8] sm:$0xff]
        %v810 = vld [vmem:[#allocation5 + $0xdc0] sm:$0xff]
        %v811 = vld [vmem:[#allocation5 + $0xdc8] sm:$0xff]
        %v812 = vld [vmem:[#allocation5 + $0xdd0] sm:$0xff]
        %v813 = vld [vmem:[#allocation5 + $0xdd8] sm:$0xff]
        %v814 = vld [vmem:[#allocation5 + $0xde0] sm:$0xff]
        %v815 = vld [vmem:[#allocation5 + $0xde8] sm:$0xff]
        %v816 = vld [vmem:[#allocation5 + $0xdf0] sm:$0xff]
        %v817 = vld [vmem:[#allocation5 + $0xdf8] sm:$0xff]
        %v818 = vld [vmem:[#allocation5 + $0xe00] sm:$0xff]
        %v819 = vld [vmem:[#allocation5 + $0xe08] sm:$0xff]
        %v820 = vld [vmem:[#allocation5 + $0xe10] sm:$0xff]
        %v821 = vld [vmem:[#allocation5 + $0xe18] sm:$0xff]
        %v822 = vld [vmem:[#allocation5 + $0xe20] sm:$0xff]
        %v823 = vld [vmem:[#allocation5 + $0xe28] sm:$0xff]
        %v824 = vld [vmem:[#allocation5 + $0xe30] sm:$0xff]
        %v825 = vld [vmem:[#allocation5 + $0xe38] sm:$0xff]
        %v826 = vld [vmem:[#allocation5 + $0xe40] sm:$0xff]
        %v827 = vld [vmem:[#allocation5 + $0xe48] sm:$0xff]
        %v828 = vld [vmem:[#allocation5 + $0xe50] sm:$0xff]
        %v829 = vld [vmem:[#allocation5 + $0xe58] sm:$0xff]
        %v830 = vld [vmem:[#allocation5 + $0xe60] sm:$0xff]
        %v831 = vld [vmem:[#allocation5 + $0xe68] sm:$0xff]
        %v832 = vld [vmem:[#allocation5 + $0xe70] sm:$0xff]
        %v833 = vld [vmem:[#allocation5 + $0xe78] sm:$0xff]
        %v834 = vld [vmem:[#allocation5 + $0xe80] sm:$0xff]
        %v835 = vld [vmem:[#allocation5 + $0xe88] sm:$0xff]
        %v836 = vld [vmem:[#allocation5 + $0xe90] sm:$0xff]
        %v837 = vld [vmem:[#allocation5 + $0xe98] sm:$0xff]
        %v838 = vld [vmem:[#allocation5 + $0xea0] sm:$0xff]
        %v839 = vld [vmem:[#allocation5 + $0xea8] sm:$0xff]
        %v840 = vld [vmem:[#allocation5 + $0xeb0] sm:$0xff]
        %v841 = vld [vmem:[#allocation5 + $0xeb8] sm:$0xff]
        %v842 = vld [vmem:[#allocation5 + $0xec0] sm:$0xff]
        %v843 = vld [vmem:[#allocation5 + $0xec8] sm:$0xff]
        %v844 = vld [vmem:[#allocation5 + $0xed0] sm:$0xff]
        %v845 = vld [vmem:[#allocation5 + $0xed8] sm:$0xff]
        %v846 = vld [vmem:[#allocation5 + $0xee0] sm:$0xff]
        %v847 = vld [vmem:[#allocation5 + $0xee8] sm:$0xff]
        %v848 = vld [vmem:[#allocation5 + $0xef0] sm:$0xff]
        %v849 = vld [vmem:[#allocation5 + $0xef8] sm:$0xff]
        %v850 = vld [vmem:[#allocation5 + $0xf00] sm:$0xff]
        %v851 = vld [vmem:[#allocation5 + $0xf08] sm:$0xff]
        %v852 = vld [vmem:[#allocation5 + $0xf10] sm:$0xff]
        %v853 = vld [vmem:[#allocation5 + $0xf18] sm:$0xff]
        %v854 = vld [vmem:[#allocation5 + $0xf20] sm:$0xff]
        %v855 = vld [vmem:[#allocation5 + $0xf28] sm:$0xff]
        %v856 = vld [vmem:[#allocation5 + $0xf30] sm:$0xff]
        %v857 = vld [vmem:[#allocation5 + $0xf38] sm:$0xff]
        %v858 = vld [vmem:[#allocation5 + $0xf40] sm:$0xff]
        %v859 = vld [vmem:[#allocation5 + $0xf48] sm:$0xff]
        %v860 = vld [vmem:[#allocation5 + $0xf50] sm:$0xff]
        %v861 = vld [vmem:[#allocation5 + $0xf58] sm:$0xff]
        %v862 = vld [vmem:[#allocation5 + $0xf60] sm:$0xff]
        %v863 = vld [vmem:[#allocation5 + $0xf68] sm:$0xff]
        %v864 = vld [vmem:[#allocation5 + $0xf70] sm:$0xff]
        %v865 = vld [vmem:[#allocation5 + $0xf78] sm:$0xff]
        %v866 = vld [vmem:[#allocation5 + $0xf80] sm:$0xff]
        %v867 = vld [vmem:[#allocation5 + $0xf88] sm:$0xff]
        %v868 = vld [vmem:[#allocation5 + $0xf90] sm:$0xff]
        %v869 = vld [vmem:[#allocation5 + $0xf98] sm:$0xff]
        %v870 = vld [vmem:[#allocation5 + $0xfa0] sm:$0xff]
        %v871 = vld [vmem:[#allocation5 + $0xfa8] sm:$0xff]
        %v872 = vld [vmem:[#allocation5 + $0xfb0] sm:$0xff]
        %v873 = vld [vmem:[#allocation5 + $0xfb8] sm:$0xff]
        %v874 = vld [vmem:[#allocation5 + $0xfc0] sm:$0xff]
        %v875 = vld [vmem:[#allocation5 + $0xfc8] sm:$0xff]
        %v876 = vld [vmem:[#allocation5 + $0xfd0] sm:$0xff]
        %v877 = vld [vmem:[#allocation5 + $0xfd8] sm:$0xff]
        %v878 = vld [vmem:[#allocation5 + $0xfe0] sm:$0xff]
        %v879 = vld [vmem:[#allocation5 + $0xfe8] sm:$0xff]
        %v880 = vld [vmem:[#allocation5 + $0xff0] sm:$0xff]
        %v881 = vld [vmem:[#allocation5 + $0xff8] sm:$0xff]
        %v884 = vlaneseq
        %v885 = vshrl.u32 %v884, 7
        %v886 = vsub.s32 0, %v885
        %v887 = vrot.slane %v360, %v886
        %v888 = vlaneseq
        %v889 = vshrl.u32 %v888, 7
        %v890 = vsub.s32 1, %v889
        %v891 = vrot.slane %v360, %v890
        %v892 = vlaneseq
        %v893 = vshrl.u32 %v892, 7
        %v894 = vsub.s32 2, %v893
        %v895 = vrot.slane %v360, %v894
        %v896 = vlaneseq
        %v897 = vshrl.u32 %v896, 7
        %v898 = vsub.s32 3, %v897
        %v899 = vrot.slane %v360, %v898
        %v900 = vlaneseq
        %v901 = vshrl.u32 %v900, 7
        %v902 = vsub.s32 4, %v901
        %v903 = vrot.slane %v360, %v902
        %v904 = vlaneseq
        %v905 = vshrl.u32 %v904, 7
        %v906 = vsub.s32 5, %v905
        %v907 = vrot.slane %v360, %v906
        %v908 = vlaneseq
        %v909 = vshrl.u32 %v908, 7
        %v910 = vsub.s32 6, %v909
        %v911 = vrot.slane %v360, %v910
        %v912 = vlaneseq
        %v913 = vshrl.u32 %v912, 7
        %v914 = vsub.s32 7, %v913
        %v915 = vrot.slane %v360, %v914
        %v916 = vlaneseq
        %v917 = vshrl.u32 %v916, 7
        %v918 = vsub.s32 0, %v917
        %v919 = vrot.slane %v361, %v918
        %v920 = vlaneseq
        %v921 = vshrl.u32 %v920, 7
        %v922 = vsub.s32 1, %v921
        %v923 = vrot.slane %v361, %v922
        %v924 = vlaneseq
        %v925 = vshrl.u32 %v924, 7
        %v926 = vsub.s32 2, %v925
        %v927 = vrot.slane %v361, %v926
        %v928 = vlaneseq
        %v929 = vshrl.u32 %v928, 7
        %v930 = vsub.s32 3, %v929
        %v931 = vrot.slane %v361, %v930
        %v932 = vlaneseq
        %v933 = vshrl.u32 %v932, 7
        %v934 = vsub.s32 4, %v933
        %v935 = vrot.slane %v361, %v934
        %v936 = vlaneseq
        %v937 = vshrl.u32 %v936, 7
        %v938 = vsub.s32 5, %v937
        %v939 = vrot.slane %v361, %v938
        %v940 = vlaneseq
        %v941 = vshrl.u32 %v940, 7
        %v942 = vsub.s32 6, %v941
        %v943 = vrot.slane %v361, %v942
        %v944 = vlaneseq
        %v945 = vshrl.u32 %v944, 7
        %v946 = vsub.s32 7, %v945
        %v947 = vrot.slane %v361, %v946
        %v1476 = vunpack.c.l.b16 %v370
        %v1477 = vunpack.c.h.b16 %v370
        %v1478 = vunpack.c.l.b16 %v371
        %v1479 = vunpack.c.h.b16 %v371
        %v1480 = vunpack.c.l.b16 %v372
        %v1481 = vunpack.c.h.b16 %v372
        %v1482 = vunpack.c.l.b16 %v373
        %v1483 = vunpack.c.h.b16 %v373
        %v1484 = vunpack.c.l.b16 %v374
        %v1485 = vunpack.c.h.b16 %v374
        %v1486 = vunpack.c.l.b16 %v375
        %v1487 = vunpack.c.h.b16 %v375
        %v1488 = vunpack.c.l.b16 %v376
        %v1489 = vunpack.c.h.b16 %v376
        %v1490 = vunpack.c.l.b16 %v377
        %v1491 = vunpack.c.h.b16 %v377
        %v1492 = vunpack.c.l.b16 %v378
        %v1493 = vunpack.c.h.b16 %v378
        %v1494 = vunpack.c.l.b16 %v379
        %v1495 = vunpack.c.h.b16 %v379
        %v1496 = vunpack.c.l.b16 %v380
        %v1497 = vunpack.c.h.b16 %v380
        %v1498 = vunpack.c.l.b16 %v381
        %v1499 = vunpack.c.h.b16 %v381
        %v1500 = vunpack.c.l.b16 %v382
        %v1501 = vunpack.c.h.b16 %v382
        %v1502 = vunpack.c.l.b16 %v383
        %v1503 = vunpack.c.h.b16 %v383
        %v1504 = vunpack.c.l.b16 %v384
        %v1505 = vunpack.c.h.b16 %v384
        %v1506 = vunpack.c.l.b16 %v385
        %v1507 = vunpack.c.h.b16 %v385
        %v1508 = vunpack.c.l.b16 %v386
        %v1509 = vunpack.c.h.b16 %v386
        %v1510 = vunpack.c.l.b16 %v387
        %v1511 = vunpack.c.h.b16 %v387
        %v1512 = vunpack.c.l.b16 %v388
        %v1513 = vunpack.c.h.b16 %v388
        %v1514 = vunpack.c.l.b16 %v389
        %v1515 = vunpack.c.h.b16 %v389
        %v1516 = vunpack.c.l.b16 %v390
        %v1517 = vunpack.c.h.b16 %v390
        %v1518 = vunpack.c.l.b16 %v391
        %v1519 = vunpack.c.h.b16 %v391
        %v1520 = vunpack.c.l.b16 %v392
        %v1521 = vunpack.c.h.b16 %v392
        %v1522 = vunpack.c.l.b16 %v393
        %v1523 = vunpack.c.h.b16 %v393
        %v1524 = vunpack.c.l.b16 %v394
        %v1525 = vunpack.c.h.b16 %v394
        %v1526 = vunpack.c.l.b16 %v395
        %v1527 = vunpack.c.h.b16 %v395
        %v1528 = vunpack.c.l.b16 %v396
        %v1529 = vunpack.c.h.b16 %v396
        %v1530 = vunpack.c.l.b16 %v397
        %v1531 = vunpack.c.h.b16 %v397
        %v1532 = vunpack.c.l.b16 %v398
        %v1533 = vunpack.c.h.b16 %v398
        %v1534 = vunpack.c.l.b16 %v399
        %v1535 = vunpack.c.h.b16 %v399
        %v1536 = vunpack.c.l.b16 %v400
        %v1537 = vunpack.c.h.b16 %v400
        %v1538 = vunpack.c.l.b16 %v401
        %v1539 = vunpack.c.h.b16 %v401
        %v1540 = vunpack.c.l.b16 %v402
        %v1541 = vunpack.c.h.b16 %v402
        %v1542 = vunpack.c.l.b16 %v403
        %v1543 = vunpack.c.h.b16 %v403
        %v1544 = vunpack.c.l.b16 %v404
        %v1545 = vunpack.c.h.b16 %v404
        %v1546 = vunpack.c.l.b16 %v405
        %v1547 = vunpack.c.h.b16 %v405
        %v1548 = vunpack.c.l.b16 %v406
        %v1549 = vunpack.c.h.b16 %v406
        %v1550 = vunpack.c.l.b16 %v407
        %v1551 = vunpack.c.h.b16 %v407
        %v1552 = vunpack.c.l.b16 %v408
        %v1553 = vunpack.c.h.b16 %v408
        %v1554 = vunpack.c.l.b16 %v409
        %v1555 = vunpack.c.h.b16 %v409
        %v1556 = vunpack.c.l.b16 %v410
        %v1557 = vunpack.c.h.b16 %v410
        %v1558 = vunpack.c.l.b16 %v411
        %v1559 = vunpack.c.h.b16 %v411
        %v1560 = vunpack.c.l.b16 %v412
        %v1561 = vunpack.c.h.b16 %v412
        %v1562 = vunpack.c.l.b16 %v413
        %v1563 = vunpack.c.h.b16 %v413
        %v1564 = vunpack.c.l.b16 %v414
        %v1565 = vunpack.c.h.b16 %v414
        %v1566 = vunpack.c.l.b16 %v415
        %v1567 = vunpack.c.h.b16 %v415
        %v1568 = vunpack.c.l.b16 %v416
        %v1569 = vunpack.c.h.b16 %v416
        %v1570 = vunpack.c.l.b16 %v417
        %v1571 = vunpack.c.h.b16 %v417
        %v1572 = vunpack.c.l.b16 %v418
        %v1573 = vunpack.c.h.b16 %v418
        %v1574 = vunpack.c.l.b16 %v419
        %v1575 = vunpack.c.h.b16 %v419
        %v1576 = vunpack.c.l.b16 %v420
        %v1577 = vunpack.c.h.b16 %v420
        %v1578 = vunpack.c.l.b16 %v421
        %v1579 = vunpack.c.h.b16 %v421
        %v1580 = vunpack.c.l.b16 %v422
        %v1581 = vunpack.c.h.b16 %v422
        %v1582 = vunpack.c.l.b16 %v423
        %v1583 = vunpack.c.h.b16 %v423
        %v1584 = vunpack.c.l.b16 %v424
        %v1585 = vunpack.c.h.b16 %v424
        %v1586 = vunpack.c.l.b16 %v425
        %v1587 = vunpack.c.h.b16 %v425
        %v1588 = vunpack.c.l.b16 %v426
        %v1589 = vunpack.c.h.b16 %v426
        %v1590 = vunpack.c.l.b16 %v427
        %v1591 = vunpack.c.h.b16 %v427
        %v1592 = vunpack.c.l.b16 %v428
        %v1593 = vunpack.c.h.b16 %v428
        %v1594 = vunpack.c.l.b16 %v429
        %v1595 = vunpack.c.h.b16 %v429
        %v1596 = vunpack.c.l.b16 %v430
        %v1597 = vunpack.c.h.b16 %v430
        %v1598 = vunpack.c.l.b16 %v431
        %v1599 = vunpack.c.h.b16 %v431
        %v1600 = vunpack.c.l.b16 %v432
        %v1601 = vunpack.c.h.b16 %v432
        %v1602 = vunpack.c.l.b16 %v433
        %v1603 = vunpack.c.h.b16 %v433
        %v1604 = vunpack.c.l.b16 %v434
        %v1605 = vunpack.c.h.b16 %v434
        %v1606 = vunpack.c.l.b16 %v435
        %v1607 = vunpack.c.h.b16 %v435
        %v1608 = vunpack.c.l.b16 %v436
        %v1609 = vunpack.c.h.b16 %v436
        %v1610 = vunpack.c.l.b16 %v437
        %v1611 = vunpack.c.h.b16 %v437
        %v1612 = vunpack.c.l.b16 %v438
        %v1613 = vunpack.c.h.b16 %v438
        %v1614 = vunpack.c.l.b16 %v439
        %v1615 = vunpack.c.h.b16 %v439
        %v1616 = vunpack.c.l.b16 %v440
        %v1617 = vunpack.c.h.b16 %v440
        %v1618 = vunpack.c.l.b16 %v441
        %v1619 = vunpack.c.h.b16 %v441
        %v1620 = vunpack.c.l.b16 %v442
        %v1621 = vunpack.c.h.b16 %v442
        %v1622 = vunpack.c.l.b16 %v443
        %v1623 = vunpack.c.h.b16 %v443
        %v1624 = vunpack.c.l.b16 %v444
        %v1625 = vunpack.c.h.b16 %v444
        %v1626 = vunpack.c.l.b16 %v445
        %v1627 = vunpack.c.h.b16 %v445
        %v1628 = vunpack.c.l.b16 %v446
        %v1629 = vunpack.c.h.b16 %v446
        %v1630 = vunpack.c.l.b16 %v447
        %v1631 = vunpack.c.h.b16 %v447
        %v1632 = vunpack.c.l.b16 %v448
        %v1633 = vunpack.c.h.b16 %v448
        %v1634 = vunpack.c.l.b16 %v449
        %v1635 = vunpack.c.h.b16 %v449
        %v1636 = vunpack.c.l.b16 %v450
        %v1637 = vunpack.c.h.b16 %v450
        %v1638 = vunpack.c.l.b16 %v451
        %v1639 = vunpack.c.h.b16 %v451
        %v1640 = vunpack.c.l.b16 %v452
        %v1641 = vunpack.c.h.b16 %v452
        %v1642 = vunpack.c.l.b16 %v453
        %v1643 = vunpack.c.h.b16 %v453
        %v1644 = vunpack.c.l.b16 %v454
        %v1645 = vunpack.c.h.b16 %v454
        %v1646 = vunpack.c.l.b16 %v455
        %v1647 = vunpack.c.h.b16 %v455
        %v1648 = vunpack.c.l.b16 %v456
        %v1649 = vunpack.c.h.b16 %v456
        %v1650 = vunpack.c.l.b16 %v457
        %v1651 = vunpack.c.h.b16 %v457
        %v1652 = vunpack.c.l.b16 %v458
        %v1653 = vunpack.c.h.b16 %v458
        %v1654 = vunpack.c.l.b16 %v459
        %v1655 = vunpack.c.h.b16 %v459
        %v1656 = vunpack.c.l.b16 %v460
        %v1657 = vunpack.c.h.b16 %v460
        %v1658 = vunpack.c.l.b16 %v461
        %v1659 = vunpack.c.h.b16 %v461
        %v1660 = vunpack.c.l.b16 %v462
        %v1661 = vunpack.c.h.b16 %v462
        %v1662 = vunpack.c.l.b16 %v463
        %v1663 = vunpack.c.h.b16 %v463
        %v1664 = vunpack.c.l.b16 %v464
        %v1665 = vunpack.c.h.b16 %v464
        %v1666 = vunpack.c.l.b16 %v465
        %v1667 = vunpack.c.h.b16 %v465
        %v1668 = vunpack.c.l.b16 %v466
        %v1669 = vunpack.c.h.b16 %v466
        %v1670 = vunpack.c.l.b16 %v467
        %v1671 = vunpack.c.h.b16 %v467
        %v1672 = vunpack.c.l.b16 %v468
        %v1673 = vunpack.c.h.b16 %v468
        %v1674 = vunpack.c.l.b16 %v469
        %v1675 = vunpack.c.h.b16 %v469
        %v1676 = vunpack.c.l.b16 %v470
        %v1677 = vunpack.c.h.b16 %v470
        %v1678 = vunpack.c.l.b16 %v471
        %v1679 = vunpack.c.h.b16 %v471
        %v1680 = vunpack.c.l.b16 %v472
        %v1681 = vunpack.c.h.b16 %v472
        %v1682 = vunpack.c.l.b16 %v473
        %v1683 = vunpack.c.h.b16 %v473
        %v1684 = vunpack.c.l.b16 %v474
        %v1685 = vunpack.c.h.b16 %v474
        %v1686 = vunpack.c.l.b16 %v475
        %v1687 = vunpack.c.h.b16 %v475
        %v1688 = vunpack.c.l.b16 %v476
        %v1689 = vunpack.c.h.b16 %v476
        %v1690 = vunpack.c.l.b16 %v477
        %v1691 = vunpack.c.h.b16 %v477
        %v1692 = vunpack.c.l.b16 %v478
        %v1693 = vunpack.c.h.b16 %v478
        %v1694 = vunpack.c.l.b16 %v479
        %v1695 = vunpack.c.h.b16 %v479
        %v1696 = vunpack.c.l.b16 %v480
        %v1697 = vunpack.c.h.b16 %v480
        %v1698 = vunpack.c.l.b16 %v481
        %v1699 = vunpack.c.h.b16 %v481
        %v1700 = vunpack.c.l.b16 %v482
        %v1701 = vunpack.c.h.b16 %v482
        %v1702 = vunpack.c.l.b16 %v483
        %v1703 = vunpack.c.h.b16 %v483
        %v1704 = vunpack.c.l.b16 %v484
        %v1705 = vunpack.c.h.b16 %v484
        %v1706 = vunpack.c.l.b16 %v485
        %v1707 = vunpack.c.h.b16 %v485
        %v1708 = vunpack.c.l.b16 %v486
        %v1709 = vunpack.c.h.b16 %v486
        %v1710 = vunpack.c.l.b16 %v487
        %v1711 = vunpack.c.h.b16 %v487
        %v1712 = vunpack.c.l.b16 %v488
        %v1713 = vunpack.c.h.b16 %v488
        %v1714 = vunpack.c.l.b16 %v489
        %v1715 = vunpack.c.h.b16 %v489
        %v1716 = vunpack.c.l.b16 %v490
        %v1717 = vunpack.c.h.b16 %v490
        %v1718 = vunpack.c.l.b16 %v491
        %v1719 = vunpack.c.h.b16 %v491
        %v1720 = vunpack.c.l.b16 %v492
        %v1721 = vunpack.c.h.b16 %v492
        %v1722 = vunpack.c.l.b16 %v493
        %v1723 = vunpack.c.h.b16 %v493
        %v1724 = vunpack.c.l.b16 %v494
        %v1725 = vunpack.c.h.b16 %v494
        %v1726 = vunpack.c.l.b16 %v495
        %v1727 = vunpack.c.h.b16 %v495
        %v1728 = vunpack.c.l.b16 %v496
        %v1729 = vunpack.c.h.b16 %v496
        %v1730 = vunpack.c.l.b16 %v497
        %v1731 = vunpack.c.h.b16 %v497
        %v1732 = vunpack.c.l.b16 %v498
        %v1733 = vunpack.c.h.b16 %v498
        %v1734 = vunpack.c.l.b16 %v499
        %v1735 = vunpack.c.h.b16 %v499
        %v1736 = vunpack.c.l.b16 %v500
        %v1737 = vunpack.c.h.b16 %v500
        %v1738 = vunpack.c.l.b16 %v501
        %v1739 = vunpack.c.h.b16 %v501
        %v1740 = vunpack.c.l.b16 %v502
        %v1741 = vunpack.c.h.b16 %v502
        %v1742 = vunpack.c.l.b16 %v503
        %v1743 = vunpack.c.h.b16 %v503
        %v1744 = vunpack.c.l.b16 %v504
        %v1745 = vunpack.c.h.b16 %v504
        %v1746 = vunpack.c.l.b16 %v505
        %v1747 = vunpack.c.h.b16 %v505
        %v1748 = vunpack.c.l.b16 %v506
        %v1749 = vunpack.c.h.b16 %v506
        %v1750 = vunpack.c.l.b16 %v507
        %v1751 = vunpack.c.h.b16 %v507
        %v1752 = vunpack.c.l.b16 %v508
        %v1753 = vunpack.c.h.b16 %v508
        %v1754 = vunpack.c.l.b16 %v509
        %v1755 = vunpack.c.h.b16 %v509
        %v1756 = vunpack.c.l.b16 %v510
        %v1757 = vunpack.c.h.b16 %v510
        %v1758 = vunpack.c.l.b16 %v511
        %v1759 = vunpack.c.h.b16 %v511
        %v1760 = vunpack.c.l.b16 %v512
        %v1761 = vunpack.c.h.b16 %v512
        %v1762 = vunpack.c.l.b16 %v513
        %v1763 = vunpack.c.h.b16 %v513
        %v1764 = vunpack.c.l.b16 %v514
        %v1765 = vunpack.c.h.b16 %v514
        %v1766 = vunpack.c.l.b16 %v515
        %v1767 = vunpack.c.h.b16 %v515
        %v1768 = vunpack.c.l.b16 %v516
        %v1769 = vunpack.c.h.b16 %v516
        %v1770 = vunpack.c.l.b16 %v517
        %v1771 = vunpack.c.h.b16 %v517
        %v1772 = vunpack.c.l.b16 %v518
        %v1773 = vunpack.c.h.b16 %v518
        %v1774 = vunpack.c.l.b16 %v519
        %v1775 = vunpack.c.h.b16 %v519
        %v1776 = vunpack.c.l.b16 %v520
        %v1777 = vunpack.c.h.b16 %v520
        %v1778 = vunpack.c.l.b16 %v521
        %v1779 = vunpack.c.h.b16 %v521
        %v1780 = vunpack.c.l.b16 %v522
        %v1781 = vunpack.c.h.b16 %v522
        %v1782 = vunpack.c.l.b16 %v523
        %v1783 = vunpack.c.h.b16 %v523
        %v1784 = vunpack.c.l.b16 %v524
        %v1785 = vunpack.c.h.b16 %v524
        %v1786 = vunpack.c.l.b16 %v525
        %v1787 = vunpack.c.h.b16 %v525
        %v1788 = vunpack.c.l.b16 %v526
        %v1789 = vunpack.c.h.b16 %v526
        %v1790 = vunpack.c.l.b16 %v527
        %v1791 = vunpack.c.h.b16 %v527
        %v1792 = vunpack.c.l.b16 %v528
        %v1793 = vunpack.c.h.b16 %v528
        %v1794 = vunpack.c.l.b16 %v529
        %v1795 = vunpack.c.h.b16 %v529
        %v1796 = vunpack.c.l.b16 %v530
        %v1797 = vunpack.c.h.b16 %v530
        %v1798 = vunpack.c.l.b16 %v531
        %v1799 = vunpack.c.h.b16 %v531
        %v1800 = vunpack.c.l.b16 %v532
        %v1801 = vunpack.c.h.b16 %v532
        %v1802 = vunpack.c.l.b16 %v533
        %v1803 = vunpack.c.h.b16 %v533
        %v1804 = vunpack.c.l.b16 %v534
        %v1805 = vunpack.c.h.b16 %v534
        %v1806 = vunpack.c.l.b16 %v535
        %v1807 = vunpack.c.h.b16 %v535
        %v1808 = vunpack.c.l.b16 %v536
        %v1809 = vunpack.c.h.b16 %v536
        %v1810 = vunpack.c.l.b16 %v537
        %v1811 = vunpack.c.h.b16 %v537
        %v1812 = vunpack.c.l.b16 %v538
        %v1813 = vunpack.c.h.b16 %v538
        %v1814 = vunpack.c.l.b16 %v539
        %v1815 = vunpack.c.h.b16 %v539
        %v1816 = vunpack.c.l.b16 %v540
        %v1817 = vunpack.c.h.b16 %v540
        %v1818 = vunpack.c.l.b16 %v541
        %v1819 = vunpack.c.h.b16 %v541
        %v1820 = vunpack.c.l.b16 %v542
        %v1821 = vunpack.c.h.b16 %v542
        %v1822 = vunpack.c.l.b16 %v543
        %v1823 = vunpack.c.h.b16 %v543
        %v1824 = vunpack.c.l.b16 %v544
        %v1825 = vunpack.c.h.b16 %v544
        %v1826 = vunpack.c.l.b16 %v545
        %v1827 = vunpack.c.h.b16 %v545
        %v1828 = vunpack.c.l.b16 %v546
        %v1829 = vunpack.c.h.b16 %v546
        %v1830 = vunpack.c.l.b16 %v547
        %v1831 = vunpack.c.h.b16 %v547
        %v1832 = vunpack.c.l.b16 %v548
        %v1833 = vunpack.c.h.b16 %v548
        %v1834 = vunpack.c.l.b16 %v549
        %v1835 = vunpack.c.h.b16 %v549
        %v1836 = vunpack.c.l.b16 %v550
        %v1837 = vunpack.c.h.b16 %v550
        %v1838 = vunpack.c.l.b16 %v551
        %v1839 = vunpack.c.h.b16 %v551
        %v1840 = vunpack.c.l.b16 %v552
        %v1841 = vunpack.c.h.b16 %v552
        %v1842 = vunpack.c.l.b16 %v553
        %v1843 = vunpack.c.h.b16 %v553
        %v1844 = vunpack.c.l.b16 %v554
        %v1845 = vunpack.c.h.b16 %v554
        %v1846 = vunpack.c.l.b16 %v555
        %v1847 = vunpack.c.h.b16 %v555
        %v1848 = vunpack.c.l.b16 %v556
        %v1849 = vunpack.c.h.b16 %v556
        %v1850 = vunpack.c.l.b16 %v557
        %v1851 = vunpack.c.h.b16 %v557
        %v1852 = vunpack.c.l.b16 %v558
        %v1853 = vunpack.c.h.b16 %v558
        %v1854 = vunpack.c.l.b16 %v559
        %v1855 = vunpack.c.h.b16 %v559
        %v1856 = vunpack.c.l.b16 %v560
        %v1857 = vunpack.c.h.b16 %v560
        %v1858 = vunpack.c.l.b16 %v561
        %v1859 = vunpack.c.h.b16 %v561
        %v1860 = vunpack.c.l.b16 %v562
        %v1861 = vunpack.c.h.b16 %v562
        %v1862 = vunpack.c.l.b16 %v563
        %v1863 = vunpack.c.h.b16 %v563
        %v1864 = vunpack.c.l.b16 %v564
        %v1865 = vunpack.c.h.b16 %v564
        %v1866 = vunpack.c.l.b16 %v565
        %v1867 = vunpack.c.h.b16 %v565
        %v1868 = vunpack.c.l.b16 %v566
        %v1869 = vunpack.c.h.b16 %v566
        %v1870 = vunpack.c.l.b16 %v567
        %v1871 = vunpack.c.h.b16 %v567
        %v1872 = vunpack.c.l.b16 %v568
        %v1873 = vunpack.c.h.b16 %v568
        %v1874 = vunpack.c.l.b16 %v569
        %v1875 = vunpack.c.h.b16 %v569
        %v1876 = vunpack.c.l.b16 %v570
        %v1877 = vunpack.c.h.b16 %v570
        %v1878 = vunpack.c.l.b16 %v571
        %v1879 = vunpack.c.h.b16 %v571
        %v1880 = vunpack.c.l.b16 %v572
        %v1881 = vunpack.c.h.b16 %v572
        %v1882 = vunpack.c.l.b16 %v573
        %v1883 = vunpack.c.h.b16 %v573
        %v1884 = vunpack.c.l.b16 %v574
        %v1885 = vunpack.c.h.b16 %v574
        %v1886 = vunpack.c.l.b16 %v575
        %v1887 = vunpack.c.h.b16 %v575
        %v1888 = vunpack.c.l.b16 %v576
        %v1889 = vunpack.c.h.b16 %v576
        %v1890 = vunpack.c.l.b16 %v577
        %v1891 = vunpack.c.h.b16 %v577
        %v1892 = vunpack.c.l.b16 %v578
        %v1893 = vunpack.c.h.b16 %v578
        %v1894 = vunpack.c.l.b16 %v579
        %v1895 = vunpack.c.h.b16 %v579
        %v1896 = vunpack.c.l.b16 %v580
        %v1897 = vunpack.c.h.b16 %v580
        %v1898 = vunpack.c.l.b16 %v581
        %v1899 = vunpack.c.h.b16 %v581
        %v1900 = vunpack.c.l.b16 %v582
        %v1901 = vunpack.c.h.b16 %v582
        %v1902 = vunpack.c.l.b16 %v583
        %v1903 = vunpack.c.h.b16 %v583
        %v1904 = vunpack.c.l.b16 %v584
        %v1905 = vunpack.c.h.b16 %v584
        %v1906 = vunpack.c.l.b16 %v585
        %v1907 = vunpack.c.h.b16 %v585
        %v1908 = vunpack.c.l.b16 %v586
        %v1909 = vunpack.c.h.b16 %v586
        %v1910 = vunpack.c.l.b16 %v587
        %v1911 = vunpack.c.h.b16 %v587
        %v1912 = vunpack.c.l.b16 %v588
        %v1913 = vunpack.c.h.b16 %v588
        %v1914 = vunpack.c.l.b16 %v589
        %v1915 = vunpack.c.h.b16 %v589
        %v1916 = vunpack.c.l.b16 %v590
        %v1917 = vunpack.c.h.b16 %v590
        %v1918 = vunpack.c.l.b16 %v591
        %v1919 = vunpack.c.h.b16 %v591
        %v1920 = vunpack.c.l.b16 %v592
        %v1921 = vunpack.c.h.b16 %v592
        %v1922 = vunpack.c.l.b16 %v593
        %v1923 = vunpack.c.h.b16 %v593
        %v1924 = vunpack.c.l.b16 %v594
        %v1925 = vunpack.c.h.b16 %v594
        %v1926 = vunpack.c.l.b16 %v595
        %v1927 = vunpack.c.h.b16 %v595
        %v1928 = vunpack.c.l.b16 %v596
        %v1929 = vunpack.c.h.b16 %v596
        %v1930 = vunpack.c.l.b16 %v597
        %v1931 = vunpack.c.h.b16 %v597
        %v1932 = vunpack.c.l.b16 %v598
        %v1933 = vunpack.c.h.b16 %v598
        %v1934 = vunpack.c.l.b16 %v599
        %v1935 = vunpack.c.h.b16 %v599
        %v1936 = vunpack.c.l.b16 %v600
        %v1937 = vunpack.c.h.b16 %v600
        %v1938 = vunpack.c.l.b16 %v601
        %v1939 = vunpack.c.h.b16 %v601
        %v1940 = vunpack.c.l.b16 %v602
        %v1941 = vunpack.c.h.b16 %v602
        %v1942 = vunpack.c.l.b16 %v603
        %v1943 = vunpack.c.h.b16 %v603
        %v1944 = vunpack.c.l.b16 %v604
        %v1945 = vunpack.c.h.b16 %v604
        %v1946 = vunpack.c.l.b16 %v605
        %v1947 = vunpack.c.h.b16 %v605
        %v1948 = vunpack.c.l.b16 %v606
        %v1949 = vunpack.c.h.b16 %v606
        %v1950 = vunpack.c.l.b16 %v607
        %v1951 = vunpack.c.h.b16 %v607
        %v1952 = vunpack.c.l.b16 %v608
        %v1953 = vunpack.c.h.b16 %v608
        %v1954 = vunpack.c.l.b16 %v609
        %v1955 = vunpack.c.h.b16 %v609
        %v1956 = vunpack.c.l.b16 %v610
        %v1957 = vunpack.c.h.b16 %v610
        %v1958 = vunpack.c.l.b16 %v611
        %v1959 = vunpack.c.h.b16 %v611
        %v1960 = vunpack.c.l.b16 %v612
        %v1961 = vunpack.c.h.b16 %v612
        %v1962 = vunpack.c.l.b16 %v613
        %v1963 = vunpack.c.h.b16 %v613
        %v1964 = vunpack.c.l.b16 %v614
        %v1965 = vunpack.c.h.b16 %v614
        %v1966 = vunpack.c.l.b16 %v615
        %v1967 = vunpack.c.h.b16 %v615
        %v1968 = vunpack.c.l.b16 %v616
        %v1969 = vunpack.c.h.b16 %v616
        %v1970 = vunpack.c.l.b16 %v617
        %v1971 = vunpack.c.h.b16 %v617
        %v1972 = vunpack.c.l.b16 %v618
        %v1973 = vunpack.c.h.b16 %v618
        %v1974 = vunpack.c.l.b16 %v619
        %v1975 = vunpack.c.h.b16 %v619
        %v1976 = vunpack.c.l.b16 %v620
        %v1977 = vunpack.c.h.b16 %v620
        %v1978 = vunpack.c.l.b16 %v621
        %v1979 = vunpack.c.h.b16 %v621
        %v1980 = vunpack.c.l.b16 %v622
        %v1981 = vunpack.c.h.b16 %v622
        %v1982 = vunpack.c.l.b16 %v623
        %v1983 = vunpack.c.h.b16 %v623
        %v1984 = vunpack.c.l.b16 %v624
        %v1985 = vunpack.c.h.b16 %v624
        %v1986 = vunpack.c.l.b16 %v625
        %v1987 = vunpack.c.h.b16 %v625
        %v1988 = vunpack.c.l.b16 %v626
        %v1989 = vunpack.c.h.b16 %v626
        %v1990 = vunpack.c.l.b16 %v627
        %v1991 = vunpack.c.h.b16 %v627
        %v1992 = vunpack.c.l.b16 %v628
        %v1993 = vunpack.c.h.b16 %v628
        %v1994 = vunpack.c.l.b16 %v629
        %v1995 = vunpack.c.h.b16 %v629
        %v1996 = vunpack.c.l.b16 %v630
        %v1997 = vunpack.c.h.b16 %v630
        %v1998 = vunpack.c.l.b16 %v631
        %v1999 = vunpack.c.h.b16 %v631
        %v2000 = vunpack.c.l.b16 %v632
        %v2001 = vunpack.c.h.b16 %v632
        %v2002 = vunpack.c.l.b16 %v633
        %v2003 = vunpack.c.h.b16 %v633
        %v2004 = vunpack.c.l.b16 %v634
        %v2005 = vunpack.c.h.b16 %v634
        %v2006 = vunpack.c.l.b16 %v635
        %v2007 = vunpack.c.h.b16 %v635
        %v2008 = vunpack.c.l.b16 %v636
        %v2009 = vunpack.c.h.b16 %v636
        %v2010 = vunpack.c.l.b16 %v637
        %v2011 = vunpack.c.h.b16 %v637
        %v2012 = vunpack.c.l.b16 %v638
        %v2013 = vunpack.c.h.b16 %v638
        %v2014 = vunpack.c.l.b16 %v639
        %v2015 = vunpack.c.h.b16 %v639
        %v2016 = vunpack.c.l.b16 %v640
        %v2017 = vunpack.c.h.b16 %v640
        %v2018 = vunpack.c.l.b16 %v641
        %v2019 = vunpack.c.h.b16 %v641
        %v2020 = vunpack.c.l.b16 %v642
        %v2021 = vunpack.c.h.b16 %v642
        %v2022 = vunpack.c.l.b16 %v643
        %v2023 = vunpack.c.h.b16 %v643
        %v2024 = vunpack.c.l.b16 %v644
        %v2025 = vunpack.c.h.b16 %v644
        %v2026 = vunpack.c.l.b16 %v645
        %v2027 = vunpack.c.h.b16 %v645
        %v2028 = vunpack.c.l.b16 %v646
        %v2029 = vunpack.c.h.b16 %v646
        %v2030 = vunpack.c.l.b16 %v647
        %v2031 = vunpack.c.h.b16 %v647
        %v2032 = vunpack.c.l.b16 %v648
        %v2033 = vunpack.c.h.b16 %v648
        %v2034 = vunpack.c.l.b16 %v649
        %v2035 = vunpack.c.h.b16 %v649
        %v2036 = vunpack.c.l.b16 %v650
        %v2037 = vunpack.c.h.b16 %v650
        %v2038 = vunpack.c.l.b16 %v651
        %v2039 = vunpack.c.h.b16 %v651
        %v2040 = vunpack.c.l.b16 %v652
        %v2041 = vunpack.c.h.b16 %v652
        %v2042 = vunpack.c.l.b16 %v653
        %v2043 = vunpack.c.h.b16 %v653
        %v2044 = vunpack.c.l.b16 %v654
        %v2045 = vunpack.c.h.b16 %v654
        %v2046 = vunpack.c.l.b16 %v655
        %v2047 = vunpack.c.h.b16 %v655
        %v2048 = vunpack.c.l.b16 %v656
        %v2049 = vunpack.c.h.b16 %v656
        %v2050 = vunpack.c.l.b16 %v657
        %v2051 = vunpack.c.h.b16 %v657
        %v2052 = vunpack.c.l.b16 %v658
        %v2053 = vunpack.c.h.b16 %v658
        %v2054 = vunpack.c.l.b16 %v659
        %v2055 = vunpack.c.h.b16 %v659
        %v2056 = vunpack.c.l.b16 %v660
        %v2057 = vunpack.c.h.b16 %v660
        %v2058 = vunpack.c.l.b16 %v661
        %v2059 = vunpack.c.h.b16 %v661
        %v2060 = vunpack.c.l.b16 %v662
        %v2061 = vunpack.c.h.b16 %v662
        %v2062 = vunpack.c.l.b16 %v663
        %v2063 = vunpack.c.h.b16 %v663
        %v2064 = vunpack.c.l.b16 %v664
        %v2065 = vunpack.c.h.b16 %v664
        %v2066 = vunpack.c.l.b16 %v665
        %v2067 = vunpack.c.h.b16 %v665
        %v2068 = vunpack.c.l.b16 %v666
        %v2069 = vunpack.c.h.b16 %v666
        %v2070 = vunpack.c.l.b16 %v667
        %v2071 = vunpack.c.h.b16 %v667
        %v2072 = vunpack.c.l.b16 %v668
        %v2073 = vunpack.c.h.b16 %v668
        %v2074 = vunpack.c.l.b16 %v669
        %v2075 = vunpack.c.h.b16 %v669
        %v2076 = vunpack.c.l.b16 %v670
        %v2077 = vunpack.c.h.b16 %v670
        %v2078 = vunpack.c.l.b16 %v671
        %v2079 = vunpack.c.h.b16 %v671
        %v2080 = vunpack.c.l.b16 %v672
        %v2081 = vunpack.c.h.b16 %v672
        %v2082 = vunpack.c.l.b16 %v673
        %v2083 = vunpack.c.h.b16 %v673
        %v2084 = vunpack.c.l.b16 %v674
        %v2085 = vunpack.c.h.b16 %v674
        %v2086 = vunpack.c.l.b16 %v675
        %v2087 = vunpack.c.h.b16 %v675
        %v2088 = vunpack.c.l.b16 %v676
        %v2089 = vunpack.c.h.b16 %v676
        %v2090 = vunpack.c.l.b16 %v677
        %v2091 = vunpack.c.h.b16 %v677
        %v2092 = vunpack.c.l.b16 %v678
        %v2093 = vunpack.c.h.b16 %v678
        %v2094 = vunpack.c.l.b16 %v679
        %v2095 = vunpack.c.h.b16 %v679
        %v2096 = vunpack.c.l.b16 %v680
        %v2097 = vunpack.c.h.b16 %v680
        %v2098 = vunpack.c.l.b16 %v681
        %v2099 = vunpack.c.h.b16 %v681
        %v2100 = vunpack.c.l.b16 %v682
        %v2101 = vunpack.c.h.b16 %v682
        %v2102 = vunpack.c.l.b16 %v683
        %v2103 = vunpack.c.h.b16 %v683
        %v2104 = vunpack.c.l.b16 %v684
        %v2105 = vunpack.c.h.b16 %v684
        %v2106 = vunpack.c.l.b16 %v685
        %v2107 = vunpack.c.h.b16 %v685
        %v2108 = vunpack.c.l.b16 %v686
        %v2109 = vunpack.c.h.b16 %v686
        %v2110 = vunpack.c.l.b16 %v687
        %v2111 = vunpack.c.h.b16 %v687
        %v2112 = vunpack.c.l.b16 %v688
        %v2113 = vunpack.c.h.b16 %v688
        %v2114 = vunpack.c.l.b16 %v689
        %v2115 = vunpack.c.h.b16 %v689
        %v2116 = vunpack.c.l.b16 %v690
        %v2117 = vunpack.c.h.b16 %v690
        %v2118 = vunpack.c.l.b16 %v691
        %v2119 = vunpack.c.h.b16 %v691
        %v2120 = vunpack.c.l.b16 %v692
        %v2121 = vunpack.c.h.b16 %v692
        %v2122 = vunpack.c.l.b16 %v693
        %v2123 = vunpack.c.h.b16 %v693
        %v2124 = vunpack.c.l.b16 %v694
        %v2125 = vunpack.c.h.b16 %v694
        %v2126 = vunpack.c.l.b16 %v695
        %v2127 = vunpack.c.h.b16 %v695
        %v2128 = vunpack.c.l.b16 %v696
        %v2129 = vunpack.c.h.b16 %v696
        %v2130 = vunpack.c.l.b16 %v697
        %v2131 = vunpack.c.h.b16 %v697
        %v2132 = vunpack.c.l.b16 %v698
        %v2133 = vunpack.c.h.b16 %v698
        %v2134 = vunpack.c.l.b16 %v699
        %v2135 = vunpack.c.h.b16 %v699
        %v2136 = vunpack.c.l.b16 %v700
        %v2137 = vunpack.c.h.b16 %v700
        %v2138 = vunpack.c.l.b16 %v701
        %v2139 = vunpack.c.h.b16 %v701
        %v2140 = vunpack.c.l.b16 %v702
        %v2141 = vunpack.c.h.b16 %v702
        %v2142 = vunpack.c.l.b16 %v703
        %v2143 = vunpack.c.h.b16 %v703
        %v2144 = vunpack.c.l.b16 %v704
        %v2145 = vunpack.c.h.b16 %v704
        %v2146 = vunpack.c.l.b16 %v705
        %v2147 = vunpack.c.h.b16 %v705
        %v2148 = vunpack.c.l.b16 %v706
        %v2149 = vunpack.c.h.b16 %v706
        %v2150 = vunpack.c.l.b16 %v707
        %v2151 = vunpack.c.h.b16 %v707
        %v2152 = vunpack.c.l.b16 %v708
        %v2153 = vunpack.c.h.b16 %v708
        %v2154 = vunpack.c.l.b16 %v709
        %v2155 = vunpack.c.h.b16 %v709
        %v2156 = vunpack.c.l.b16 %v710
        %v2157 = vunpack.c.h.b16 %v710
        %v2158 = vunpack.c.l.b16 %v711
        %v2159 = vunpack.c.h.b16 %v711
        %v2160 = vunpack.c.l.b16 %v712
        %v2161 = vunpack.c.h.b16 %v712
        %v2162 = vunpack.c.l.b16 %v713
        %v2163 = vunpack.c.h.b16 %v713
        %v2164 = vunpack.c.l.b16 %v714
        %v2165 = vunpack.c.h.b16 %v714
        %v2166 = vunpack.c.l.b16 %v715
        %v2167 = vunpack.c.h.b16 %v715
        %v2168 = vunpack.c.l.b16 %v716
        %v2169 = vunpack.c.h.b16 %v716
        %v2170 = vunpack.c.l.b16 %v717
        %v2171 = vunpack.c.h.b16 %v717
        %v2172 = vunpack.c.l.b16 %v718
        %v2173 = vunpack.c.h.b16 %v718
        %v2174 = vunpack.c.l.b16 %v719
        %v2175 = vunpack.c.h.b16 %v719
        %v2176 = vunpack.c.l.b16 %v720
        %v2177 = vunpack.c.h.b16 %v720
        %v2178 = vunpack.c.l.b16 %v721
        %v2179 = vunpack.c.h.b16 %v721
        %v2180 = vunpack.c.l.b16 %v722
        %v2181 = vunpack.c.h.b16 %v722
        %v2182 = vunpack.c.l.b16 %v723
        %v2183 = vunpack.c.h.b16 %v723
        %v2184 = vunpack.c.l.b16 %v724
        %v2185 = vunpack.c.h.b16 %v724
        %v2186 = vunpack.c.l.b16 %v725
        %v2187 = vunpack.c.h.b16 %v725
        %v2188 = vunpack.c.l.b16 %v726
        %v2189 = vunpack.c.h.b16 %v726
        %v2190 = vunpack.c.l.b16 %v727
        %v2191 = vunpack.c.h.b16 %v727
        %v2192 = vunpack.c.l.b16 %v728
        %v2193 = vunpack.c.h.b16 %v728
        %v2194 = vunpack.c.l.b16 %v729
        %v2195 = vunpack.c.h.b16 %v729
        %v2196 = vunpack.c.l.b16 %v730
        %v2197 = vunpack.c.h.b16 %v730
        %v2198 = vunpack.c.l.b16 %v731
        %v2199 = vunpack.c.h.b16 %v731
        %v2200 = vunpack.c.l.b16 %v732
        %v2201 = vunpack.c.h.b16 %v732
        %v2202 = vunpack.c.l.b16 %v733
        %v2203 = vunpack.c.h.b16 %v733
        %v2204 = vunpack.c.l.b16 %v734
        %v2205 = vunpack.c.h.b16 %v734
        %v2206 = vunpack.c.l.b16 %v735
        %v2207 = vunpack.c.h.b16 %v735
        %v2208 = vunpack.c.l.b16 %v736
        %v2209 = vunpack.c.h.b16 %v736
        %v2210 = vunpack.c.l.b16 %v737
        %v2211 = vunpack.c.h.b16 %v737
        %v2212 = vunpack.c.l.b16 %v738
        %v2213 = vunpack.c.h.b16 %v738
        %v2214 = vunpack.c.l.b16 %v739
        %v2215 = vunpack.c.h.b16 %v739
        %v2216 = vunpack.c.l.b16 %v740
        %v2217 = vunpack.c.h.b16 %v740
        %v2218 = vunpack.c.l.b16 %v741
        %v2219 = vunpack.c.h.b16 %v741
        %v2220 = vunpack.c.l.b16 %v742
        %v2221 = vunpack.c.h.b16 %v742
        %v2222 = vunpack.c.l.b16 %v743
        %v2223 = vunpack.c.h.b16 %v743
        %v2224 = vunpack.c.l.b16 %v744
        %v2225 = vunpack.c.h.b16 %v744
        %v2226 = vunpack.c.l.b16 %v745
        %v2227 = vunpack.c.h.b16 %v745
        %v2228 = vunpack.c.l.b16 %v746
        %v2229 = vunpack.c.h.b16 %v746
        %v2230 = vunpack.c.l.b16 %v747
        %v2231 = vunpack.c.h.b16 %v747
        %v2232 = vunpack.c.l.b16 %v748
        %v2233 = vunpack.c.h.b16 %v748
        %v2234 = vunpack.c.l.b16 %v749
        %v2235 = vunpack.c.h.b16 %v749
        %v2236 = vunpack.c.l.b16 %v750
        %v2237 = vunpack.c.h.b16 %v750
        %v2238 = vunpack.c.l.b16 %v751
        %v2239 = vunpack.c.h.b16 %v751
        %v2240 = vunpack.c.l.b16 %v752
        %v2241 = vunpack.c.h.b16 %v752
        %v2242 = vunpack.c.l.b16 %v753
        %v2243 = vunpack.c.h.b16 %v753
        %v2244 = vunpack.c.l.b16 %v754
        %v2245 = vunpack.c.h.b16 %v754
        %v2246 = vunpack.c.l.b16 %v755
        %v2247 = vunpack.c.h.b16 %v755
        %v2248 = vunpack.c.l.b16 %v756
        %v2249 = vunpack.c.h.b16 %v756
        %v2250 = vunpack.c.l.b16 %v757
        %v2251 = vunpack.c.h.b16 %v757
        %v2252 = vunpack.c.l.b16 %v758
        %v2253 = vunpack.c.h.b16 %v758
        %v2254 = vunpack.c.l.b16 %v759
        %v2255 = vunpack.c.h.b16 %v759
        %v2256 = vunpack.c.l.b16 %v760
        %v2257 = vunpack.c.h.b16 %v760
        %v2258 = vunpack.c.l.b16 %v761
        %v2259 = vunpack.c.h.b16 %v761
        %v2260 = vunpack.c.l.b16 %v762
        %v2261 = vunpack.c.h.b16 %v762
        %v2262 = vunpack.c.l.b16 %v763
        %v2263 = vunpack.c.h.b16 %v763
        %v2264 = vunpack.c.l.b16 %v764
        %v2265 = vunpack.c.h.b16 %v764
        %v2266 = vunpack.c.l.b16 %v765
        %v2267 = vunpack.c.h.b16 %v765
        %v2268 = vunpack.c.l.b16 %v766
        %v2269 = vunpack.c.h.b16 %v766
        %v2270 = vunpack.c.l.b16 %v767
        %v2271 = vunpack.c.h.b16 %v767
        %v2272 = vunpack.c.l.b16 %v768
        %v2273 = vunpack.c.h.b16 %v768
        %v2274 = vunpack.c.l.b16 %v769
        %v2275 = vunpack.c.h.b16 %v769
        %v2276 = vunpack.c.l.b16 %v770
        %v2277 = vunpack.c.h.b16 %v770
        %v2278 = vunpack.c.l.b16 %v771
        %v2279 = vunpack.c.h.b16 %v771
        %v2280 = vunpack.c.l.b16 %v772
        %v2281 = vunpack.c.h.b16 %v772
        %v2282 = vunpack.c.l.b16 %v773
        %v2283 = vunpack.c.h.b16 %v773
        %v2284 = vunpack.c.l.b16 %v774
        %v2285 = vunpack.c.h.b16 %v774
        %v2286 = vunpack.c.l.b16 %v775
        %v2287 = vunpack.c.h.b16 %v775
        %v2288 = vunpack.c.l.b16 %v776
        %v2289 = vunpack.c.h.b16 %v776
        %v2290 = vunpack.c.l.b16 %v777
        %v2291 = vunpack.c.h.b16 %v777
        %v2292 = vunpack.c.l.b16 %v778
        %v2293 = vunpack.c.h.b16 %v778
        %v2294 = vunpack.c.l.b16 %v779
        %v2295 = vunpack.c.h.b16 %v779
        %v2296 = vunpack.c.l.b16 %v780
        %v2297 = vunpack.c.h.b16 %v780
        %v2298 = vunpack.c.l.b16 %v781
        %v2299 = vunpack.c.h.b16 %v781
        %v2300 = vunpack.c.l.b16 %v782
        %v2301 = vunpack.c.h.b16 %v782
        %v2302 = vunpack.c.l.b16 %v783
        %v2303 = vunpack.c.h.b16 %v783
        %v2304 = vunpack.c.l.b16 %v784
        %v2305 = vunpack.c.h.b16 %v784
        %v2306 = vunpack.c.l.b16 %v785
        %v2307 = vunpack.c.h.b16 %v785
        %v2308 = vunpack.c.l.b16 %v786
        %v2309 = vunpack.c.h.b16 %v786
        %v2310 = vunpack.c.l.b16 %v787
        %v2311 = vunpack.c.h.b16 %v787
        %v2312 = vunpack.c.l.b16 %v788
        %v2313 = vunpack.c.h.b16 %v788
        %v2314 = vunpack.c.l.b16 %v789
        %v2315 = vunpack.c.h.b16 %v789
        %v2316 = vunpack.c.l.b16 %v790
        %v2317 = vunpack.c.h.b16 %v790
        %v2318 = vunpack.c.l.b16 %v791
        %v2319 = vunpack.c.h.b16 %v791
        %v2320 = vunpack.c.l.b16 %v792
        %v2321 = vunpack.c.h.b16 %v792
        %v2322 = vunpack.c.l.b16 %v793
        %v2323 = vunpack.c.h.b16 %v793
        %v2324 = vunpack.c.l.b16 %v794
        %v2325 = vunpack.c.h.b16 %v794
        %v2326 = vunpack.c.l.b16 %v795
        %v2327 = vunpack.c.h.b16 %v795
        %v2328 = vunpack.c.l.b16 %v796
        %v2329 = vunpack.c.h.b16 %v796
        %v2330 = vunpack.c.l.b16 %v797
        %v2331 = vunpack.c.h.b16 %v797
        %v2332 = vunpack.c.l.b16 %v798
        %v2333 = vunpack.c.h.b16 %v798
        %v2334 = vunpack.c.l.b16 %v799
        %v2335 = vunpack.c.h.b16 %v799
        %v2336 = vunpack.c.l.b16 %v800
        %v2337 = vunpack.c.h.b16 %v800
        %v2338 = vunpack.c.l.b16 %v801
        %v2339 = vunpack.c.h.b16 %v801
        %v2340 = vunpack.c.l.b16 %v802
        %v2341 = vunpack.c.h.b16 %v802
        %v2342 = vunpack.c.l.b16 %v803
        %v2343 = vunpack.c.h.b16 %v803
        %v2344 = vunpack.c.l.b16 %v804
        %v2345 = vunpack.c.h.b16 %v804
        %v2346 = vunpack.c.l.b16 %v805
        %v2347 = vunpack.c.h.b16 %v805
        %v2348 = vunpack.c.l.b16 %v806
        %v2349 = vunpack.c.h.b16 %v806
        %v2350 = vunpack.c.l.b16 %v807
        %v2351 = vunpack.c.h.b16 %v807
        %v2352 = vunpack.c.l.b16 %v808
        %v2353 = vunpack.c.h.b16 %v808
        %v2354 = vunpack.c.l.b16 %v809
        %v2355 = vunpack.c.h.b16 %v809
        %v2356 = vunpack.c.l.b16 %v810
        %v2357 = vunpack.c.h.b16 %v810
        %v2358 = vunpack.c.l.b16 %v811
        %v2359 = vunpack.c.h.b16 %v811
        %v2360 = vunpack.c.l.b16 %v812
        %v2361 = vunpack.c.h.b16 %v812
        %v2362 = vunpack.c.l.b16 %v813
        %v2363 = vunpack.c.h.b16 %v813
        %v2364 = vunpack.c.l.b16 %v814
        %v2365 = vunpack.c.h.b16 %v814
        %v2366 = vunpack.c.l.b16 %v815
        %v2367 = vunpack.c.h.b16 %v815
        %v2368 = vunpack.c.l.b16 %v816
        %v2369 = vunpack.c.h.b16 %v816
        %v2370 = vunpack.c.l.b16 %v817
        %v2371 = vunpack.c.h.b16 %v817
        %v2372 = vunpack.c.l.b16 %v818
        %v2373 = vunpack.c.h.b16 %v818
        %v2374 = vunpack.c.l.b16 %v819
        %v2375 = vunpack.c.h.b16 %v819
        %v2376 = vunpack.c.l.b16 %v820
        %v2377 = vunpack.c.h.b16 %v820
        %v2378 = vunpack.c.l.b16 %v821
        %v2379 = vunpack.c.h.b16 %v821
        %v2380 = vunpack.c.l.b16 %v822
        %v2381 = vunpack.c.h.b16 %v822
        %v2382 = vunpack.c.l.b16 %v823
        %v2383 = vunpack.c.h.b16 %v823
        %v2384 = vunpack.c.l.b16 %v824
        %v2385 = vunpack.c.h.b16 %v824
        %v2386 = vunpack.c.l.b16 %v825
        %v2387 = vunpack.c.h.b16 %v825
        %v2388 = vunpack.c.l.b16 %v826
        %v2389 = vunpack.c.h.b16 %v826
        %v2390 = vunpack.c.l.b16 %v827
        %v2391 = vunpack.c.h.b16 %v827
        %v2392 = vunpack.c.l.b16 %v828
        %v2393 = vunpack.c.h.b16 %v828
        %v2394 = vunpack.c.l.b16 %v829
        %v2395 = vunpack.c.h.b16 %v829
        %v2396 = vunpack.c.l.b16 %v830
        %v2397 = vunpack.c.h.b16 %v830
        %v2398 = vunpack.c.l.b16 %v831
        %v2399 = vunpack.c.h.b16 %v831
        %v2400 = vunpack.c.l.b16 %v832
        %v2401 = vunpack.c.h.b16 %v832
        %v2402 = vunpack.c.l.b16 %v833
        %v2403 = vunpack.c.h.b16 %v833
        %v2404 = vunpack.c.l.b16 %v834
        %v2405 = vunpack.c.h.b16 %v834
        %v2406 = vunpack.c.l.b16 %v835
        %v2407 = vunpack.c.h.b16 %v835
        %v2408 = vunpack.c.l.b16 %v836
        %v2409 = vunpack.c.h.b16 %v836
        %v2410 = vunpack.c.l.b16 %v837
        %v2411 = vunpack.c.h.b16 %v837
        %v2412 = vunpack.c.l.b16 %v838
        %v2413 = vunpack.c.h.b16 %v838
        %v2414 = vunpack.c.l.b16 %v839
        %v2415 = vunpack.c.h.b16 %v839
        %v2416 = vunpack.c.l.b16 %v840
        %v2417 = vunpack.c.h.b16 %v840
        %v2418 = vunpack.c.l.b16 %v841
        %v2419 = vunpack.c.h.b16 %v841
        %v2420 = vunpack.c.l.b16 %v842
        %v2421 = vunpack.c.h.b16 %v842
        %v2422 = vunpack.c.l.b16 %v843
        %v2423 = vunpack.c.h.b16 %v843
        %v2424 = vunpack.c.l.b16 %v844
        %v2425 = vunpack.c.h.b16 %v844
        %v2426 = vunpack.c.l.b16 %v845
        %v2427 = vunpack.c.h.b16 %v845
        %v2428 = vunpack.c.l.b16 %v846
        %v2429 = vunpack.c.h.b16 %v846
        %v2430 = vunpack.c.l.b16 %v847
        %v2431 = vunpack.c.h.b16 %v847
        %v2432 = vunpack.c.l.b16 %v848
        %v2433 = vunpack.c.h.b16 %v848
        %v2434 = vunpack.c.l.b16 %v849
        %v2435 = vunpack.c.h.b16 %v849
        %v2436 = vunpack.c.l.b16 %v850
        %v2437 = vunpack.c.h.b16 %v850
        %v2438 = vunpack.c.l.b16 %v851
        %v2439 = vunpack.c.h.b16 %v851
        %v2440 = vunpack.c.l.b16 %v852
        %v2441 = vunpack.c.h.b16 %v852
        %v2442 = vunpack.c.l.b16 %v853
        %v2443 = vunpack.c.h.b16 %v853
        %v2444 = vunpack.c.l.b16 %v854
        %v2445 = vunpack.c.h.b16 %v854
        %v2446 = vunpack.c.l.b16 %v855
        %v2447 = vunpack.c.h.b16 %v855
        %v2448 = vunpack.c.l.b16 %v856
        %v2449 = vunpack.c.h.b16 %v856
        %v2450 = vunpack.c.l.b16 %v857
        %v2451 = vunpack.c.h.b16 %v857
        %v2452 = vunpack.c.l.b16 %v858
        %v2453 = vunpack.c.h.b16 %v858
        %v2454 = vunpack.c.l.b16 %v859
        %v2455 = vunpack.c.h.b16 %v859
        %v2456 = vunpack.c.l.b16 %v860
        %v2457 = vunpack.c.h.b16 %v860
        %v2458 = vunpack.c.l.b16 %v861
        %v2459 = vunpack.c.h.b16 %v861
        %v2460 = vunpack.c.l.b16 %v862
        %v2461 = vunpack.c.h.b16 %v862
        %v2462 = vunpack.c.l.b16 %v863
        %v2463 = vunpack.c.h.b16 %v863
        %v2464 = vunpack.c.l.b16 %v864
        %v2465 = vunpack.c.h.b16 %v864
        %v2466 = vunpack.c.l.b16 %v865
        %v2467 = vunpack.c.h.b16 %v865
        %v2468 = vunpack.c.l.b16 %v866
        %v2469 = vunpack.c.h.b16 %v866
        %v2470 = vunpack.c.l.b16 %v867
        %v2471 = vunpack.c.h.b16 %v867
        %v2472 = vunpack.c.l.b16 %v868
        %v2473 = vunpack.c.h.b16 %v868
        %v2474 = vunpack.c.l.b16 %v869
        %v2475 = vunpack.c.h.b16 %v869
        %v2476 = vunpack.c.l.b16 %v870
        %v2477 = vunpack.c.h.b16 %v870
        %v2478 = vunpack.c.l.b16 %v871
        %v2479 = vunpack.c.h.b16 %v871
        %v2480 = vunpack.c.l.b16 %v872
        %v2481 = vunpack.c.h.b16 %v872
        %v2482 = vunpack.c.l.b16 %v873
        %v2483 = vunpack.c.h.b16 %v873
        %v2484 = vunpack.c.l.b16 %v874
        %v2485 = vunpack.c.h.b16 %v874
        %v2486 = vunpack.c.l.b16 %v875
        %v2487 = vunpack.c.h.b16 %v875
        %v2488 = vunpack.c.l.b16 %v876
        %v2489 = vunpack.c.h.b16 %v876
        %v2490 = vunpack.c.l.b16 %v877
        %v2491 = vunpack.c.h.b16 %v877
        %v2492 = vunpack.c.l.b16 %v878
        %v2493 = vunpack.c.h.b16 %v878
        %v2494 = vunpack.c.l.b16 %v879
        %v2495 = vunpack.c.h.b16 %v879
        %v2496 = vunpack.c.l.b16 %v880
        %v2497 = vunpack.c.h.b16 %v880
        %v2498 = vunpack.c.l.b16 %v881
        %v2499 = vunpack.c.h.b16 %v881
        %v2500 = vpack.c.b16 %v1492, %v1476
        %v2501 = vpack.c.b16 %v1493, %v1477
        %v2502 = vpack.c.b16 %v1494, %v1478
        %v2503 = vpack.c.b16 %v1495, %v1479
        %v2504 = vpack.c.b16 %v1496, %v1480
        %v2505 = vpack.c.b16 %v1497, %v1481
        %v2506 = vpack.c.b16 %v1498, %v1482
        %v2507 = vpack.c.b16 %v1499, %v1483
        %v2508 = vpack.c.b16 %v1500, %v1484
        %v2509 = vpack.c.b16 %v1501, %v1485
        %v2510 = vpack.c.b16 %v1502, %v1486
        %v2511 = vpack.c.b16 %v1503, %v1487
        %v2512 = vpack.c.b16 %v1504, %v1488
        %v2513 = vpack.c.b16 %v1505, %v1489
        %v2514 = vpack.c.b16 %v1506, %v1490
        %v2515 = vpack.c.b16 %v1507, %v1491
        %v2516 = vpack.c.b16 %v1524, %v1508
        %v2517 = vpack.c.b16 %v1525, %v1509
        %v2518 = vpack.c.b16 %v1526, %v1510
        %v2519 = vpack.c.b16 %v1527, %v1511
        %v2520 = vpack.c.b16 %v1528, %v1512
        %v2521 = vpack.c.b16 %v1529, %v1513
        %v2522 = vpack.c.b16 %v1530, %v1514
        %v2523 = vpack.c.b16 %v1531, %v1515
        %v2524 = vpack.c.b16 %v1532, %v1516
        %v2525 = vpack.c.b16 %v1533, %v1517
        %v2526 = vpack.c.b16 %v1534, %v1518
        %v2527 = vpack.c.b16 %v1535, %v1519
        %v2528 = vpack.c.b16 %v1536, %v1520
        %v2529 = vpack.c.b16 %v1537, %v1521
        %v2530 = vpack.c.b16 %v1538, %v1522
        %v2531 = vpack.c.b16 %v1539, %v1523
        %v2532 = vpack.c.b16 %v1556, %v1540
        %v2533 = vpack.c.b16 %v1557, %v1541
        %v2534 = vpack.c.b16 %v1558, %v1542
        %v2535 = vpack.c.b16 %v1559, %v1543
        %v2536 = vpack.c.b16 %v1560, %v1544
        %v2537 = vpack.c.b16 %v1561, %v1545
        %v2538 = vpack.c.b16 %v1562, %v1546
        %v2539 = vpack.c.b16 %v1563, %v1547
        %v2540 = vpack.c.b16 %v1564, %v1548
        %v2541 = vpack.c.b16 %v1565, %v1549
        %v2542 = vpack.c.b16 %v1566, %v1550
        %v2543 = vpack.c.b16 %v1567, %v1551
        %v2544 = vpack.c.b16 %v1568, %v1552
        %v2545 = vpack.c.b16 %v1569, %v1553
        %v2546 = vpack.c.b16 %v1570, %v1554
        %v2547 = vpack.c.b16 %v1571, %v1555
        %v2548 = vpack.c.b16 %v1588, %v1572
        %v2549 = vpack.c.b16 %v1589, %v1573
        %v2550 = vpack.c.b16 %v1590, %v1574
        %v2551 = vpack.c.b16 %v1591, %v1575
        %v2552 = vpack.c.b16 %v1592, %v1576
        %v2553 = vpack.c.b16 %v1593, %v1577
        %v2554 = vpack.c.b16 %v1594, %v1578
        %v2555 = vpack.c.b16 %v1595, %v1579
        %v2556 = vpack.c.b16 %v1596, %v1580
        %v2557 = vpack.c.b16 %v1597, %v1581
        %v2558 = vpack.c.b16 %v1598, %v1582
        %v2559 = vpack.c.b16 %v1599, %v1583
        %v2560 = vpack.c.b16 %v1600, %v1584
        %v2561 = vpack.c.b16 %v1601, %v1585
        %v2562 = vpack.c.b16 %v1602, %v1586
        %v2563 = vpack.c.b16 %v1603, %v1587
        %v2564 = vpack.c.b16 %v1620, %v1604
        %v2565 = vpack.c.b16 %v1621, %v1605
        %v2566 = vpack.c.b16 %v1622, %v1606
        %v2567 = vpack.c.b16 %v1623, %v1607
        %v2568 = vpack.c.b16 %v1624, %v1608
        %v2569 = vpack.c.b16 %v1625, %v1609
        %v2570 = vpack.c.b16 %v1626, %v1610
        %v2571 = vpack.c.b16 %v1627, %v1611
        %v2572 = vpack.c.b16 %v1628, %v1612
        %v2573 = vpack.c.b16 %v1629, %v1613
        %v2574 = vpack.c.b16 %v1630, %v1614
        %v2575 = vpack.c.b16 %v1631, %v1615
        %v2576 = vpack.c.b16 %v1632, %v1616
        %v2577 = vpack.c.b16 %v1633, %v1617
        %v2578 = vpack.c.b16 %v1634, %v1618
        %v2579 = vpack.c.b16 %v1635, %v1619
        %v2580 = vpack.c.b16 %v1652, %v1636
        %v2581 = vpack.c.b16 %v1653, %v1637
        %v2582 = vpack.c.b16 %v1654, %v1638
        %v2583 = vpack.c.b16 %v1655, %v1639
        %v2584 = vpack.c.b16 %v1656, %v1640
        %v2585 = vpack.c.b16 %v1657, %v1641
        %v2586 = vpack.c.b16 %v1658, %v1642
        %v2587 = vpack.c.b16 %v1659, %v1643
        %v2588 = vpack.c.b16 %v1660, %v1644
        %v2589 = vpack.c.b16 %v1661, %v1645
        %v2590 = vpack.c.b16 %v1662, %v1646
        %v2591 = vpack.c.b16 %v1663, %v1647
        %v2592 = vpack.c.b16 %v1664, %v1648
        %v2593 = vpack.c.b16 %v1665, %v1649
        %v2594 = vpack.c.b16 %v1666, %v1650
        %v2595 = vpack.c.b16 %v1667, %v1651
        %v2596 = vpack.c.b16 %v1684, %v1668
        %v2597 = vpack.c.b16 %v1685, %v1669
        %v2598 = vpack.c.b16 %v1686, %v1670
        %v2599 = vpack.c.b16 %v1687, %v1671
        %v2600 = vpack.c.b16 %v1688, %v1672
        %v2601 = vpack.c.b16 %v1689, %v1673
        %v2602 = vpack.c.b16 %v1690, %v1674
        %v2603 = vpack.c.b16 %v1691, %v1675
        %v2604 = vpack.c.b16 %v1692, %v1676
        %v2605 = vpack.c.b16 %v1693, %v1677
        %v2606 = vpack.c.b16 %v1694, %v1678
        %v2607 = vpack.c.b16 %v1695, %v1679
        %v2608 = vpack.c.b16 %v1696, %v1680
        %v2609 = vpack.c.b16 %v1697, %v1681
        %v2610 = vpack.c.b16 %v1698, %v1682
        %v2611 = vpack.c.b16 %v1699, %v1683
        %v2612 = vpack.c.b16 %v1716, %v1700
        %v2613 = vpack.c.b16 %v1717, %v1701
        %v2614 = vpack.c.b16 %v1718, %v1702
        %v2615 = vpack.c.b16 %v1719, %v1703
        %v2616 = vpack.c.b16 %v1720, %v1704
        %v2617 = vpack.c.b16 %v1721, %v1705
        %v2618 = vpack.c.b16 %v1722, %v1706
        %v2619 = vpack.c.b16 %v1723, %v1707
        %v2620 = vpack.c.b16 %v1724, %v1708
        %v2621 = vpack.c.b16 %v1725, %v1709
        %v2622 = vpack.c.b16 %v1726, %v1710
        %v2623 = vpack.c.b16 %v1727, %v1711
        %v2624 = vpack.c.b16 %v1728, %v1712
        %v2625 = vpack.c.b16 %v1729, %v1713
        %v2626 = vpack.c.b16 %v1730, %v1714
        %v2627 = vpack.c.b16 %v1731, %v1715
        %v2628 = vpack.c.b16 %v1748, %v1732
        %v2629 = vpack.c.b16 %v1749, %v1733
        %v2630 = vpack.c.b16 %v1750, %v1734
        %v2631 = vpack.c.b16 %v1751, %v1735
        %v2632 = vpack.c.b16 %v1752, %v1736
        %v2633 = vpack.c.b16 %v1753, %v1737
        %v2634 = vpack.c.b16 %v1754, %v1738
        %v2635 = vpack.c.b16 %v1755, %v1739
        %v2636 = vpack.c.b16 %v1756, %v1740
        %v2637 = vpack.c.b16 %v1757, %v1741
        %v2638 = vpack.c.b16 %v1758, %v1742
        %v2639 = vpack.c.b16 %v1759, %v1743
        %v2640 = vpack.c.b16 %v1760, %v1744
        %v2641 = vpack.c.b16 %v1761, %v1745
        %v2642 = vpack.c.b16 %v1762, %v1746
        %v2643 = vpack.c.b16 %v1763, %v1747
        %v2644 = vpack.c.b16 %v1780, %v1764
        %v2645 = vpack.c.b16 %v1781, %v1765
        %v2646 = vpack.c.b16 %v1782, %v1766
        %v2647 = vpack.c.b16 %v1783, %v1767
        %v2648 = vpack.c.b16 %v1784, %v1768
        %v2649 = vpack.c.b16 %v1785, %v1769
        %v2650 = vpack.c.b16 %v1786, %v1770
        %v2651 = vpack.c.b16 %v1787, %v1771
        %v2652 = vpack.c.b16 %v1788, %v1772
        %v2653 = vpack.c.b16 %v1789, %v1773
        %v2654 = vpack.c.b16 %v1790, %v1774
        %v2655 = vpack.c.b16 %v1791, %v1775
        %v2656 = vpack.c.b16 %v1792, %v1776
        %v2657 = vpack.c.b16 %v1793, %v1777
        %v2658 = vpack.c.b16 %v1794, %v1778
        %v2659 = vpack.c.b16 %v1795, %v1779
        %v2660 = vpack.c.b16 %v1812, %v1796
        %v2661 = vpack.c.b16 %v1813, %v1797
        %v2662 = vpack.c.b16 %v1814, %v1798
        %v2663 = vpack.c.b16 %v1815, %v1799
        %v2664 = vpack.c.b16 %v1816, %v1800
        %v2665 = vpack.c.b16 %v1817, %v1801
        %v2666 = vpack.c.b16 %v1818, %v1802
        %v2667 = vpack.c.b16 %v1819, %v1803
        %v2668 = vpack.c.b16 %v1820, %v1804
        %v2669 = vpack.c.b16 %v1821, %v1805
        %v2670 = vpack.c.b16 %v1822, %v1806
        %v2671 = vpack.c.b16 %v1823, %v1807
        %v2672 = vpack.c.b16 %v1824, %v1808
        %v2673 = vpack.c.b16 %v1825, %v1809
        %v2674 = vpack.c.b16 %v1826, %v1810
        %v2675 = vpack.c.b16 %v1827, %v1811
        %v2676 = vpack.c.b16 %v1844, %v1828
        %v2677 = vpack.c.b16 %v1845, %v1829
        %v2678 = vpack.c.b16 %v1846, %v1830
        %v2679 = vpack.c.b16 %v1847, %v1831
        %v2680 = vpack.c.b16 %v1848, %v1832
        %v2681 = vpack.c.b16 %v1849, %v1833
        %v2682 = vpack.c.b16 %v1850, %v1834
        %v2683 = vpack.c.b16 %v1851, %v1835
        %v2684 = vpack.c.b16 %v1852, %v1836
        %v2685 = vpack.c.b16 %v1853, %v1837
        %v2686 = vpack.c.b16 %v1854, %v1838
        %v2687 = vpack.c.b16 %v1855, %v1839
        %v2688 = vpack.c.b16 %v1856, %v1840
        %v2689 = vpack.c.b16 %v1857, %v1841
        %v2690 = vpack.c.b16 %v1858, %v1842
        %v2691 = vpack.c.b16 %v1859, %v1843
        %v2692 = vpack.c.b16 %v1876, %v1860
        %v2693 = vpack.c.b16 %v1877, %v1861
        %v2694 = vpack.c.b16 %v1878, %v1862
        %v2695 = vpack.c.b16 %v1879, %v1863
        %v2696 = vpack.c.b16 %v1880, %v1864
        %v2697 = vpack.c.b16 %v1881, %v1865
        %v2698 = vpack.c.b16 %v1882, %v1866
        %v2699 = vpack.c.b16 %v1883, %v1867
        %v2700 = vpack.c.b16 %v1884, %v1868
        %v2701 = vpack.c.b16 %v1885, %v1869
        %v2702 = vpack.c.b16 %v1886, %v1870
        %v2703 = vpack.c.b16 %v1887, %v1871
        %v2704 = vpack.c.b16 %v1888, %v1872
        %v2705 = vpack.c.b16 %v1889, %v1873
        %v2706 = vpack.c.b16 %v1890, %v1874
        %v2707 = vpack.c.b16 %v1891, %v1875
        %v2708 = vpack.c.b16 %v1908, %v1892
        %v2709 = vpack.c.b16 %v1909, %v1893
        %v2710 = vpack.c.b16 %v1910, %v1894
        %v2711 = vpack.c.b16 %v1911, %v1895
        %v2712 = vpack.c.b16 %v1912, %v1896
        %v2713 = vpack.c.b16 %v1913, %v1897
        %v2714 = vpack.c.b16 %v1914, %v1898
        %v2715 = vpack.c.b16 %v1915, %v1899
        %v2716 = vpack.c.b16 %v1916, %v1900
        %v2717 = vpack.c.b16 %v1917, %v1901
        %v2718 = vpack.c.b16 %v1918, %v1902
        %v2719 = vpack.c.b16 %v1919, %v1903
        %v2720 = vpack.c.b16 %v1920, %v1904
        %v2721 = vpack.c.b16 %v1921, %v1905
        %v2722 = vpack.c.b16 %v1922, %v1906
        %v2723 = vpack.c.b16 %v1923, %v1907
        %v2724 = vpack.c.b16 %v1940, %v1924
        %v2725 = vpack.c.b16 %v1941, %v1925
        %v2726 = vpack.c.b16 %v1942, %v1926
        %v2727 = vpack.c.b16 %v1943, %v1927
        %v2728 = vpack.c.b16 %v1944, %v1928
        %v2729 = vpack.c.b16 %v1945, %v1929
        %v2730 = vpack.c.b16 %v1946, %v1930
        %v2731 = vpack.c.b16 %v1947, %v1931
        %v2732 = vpack.c.b16 %v1948, %v1932
        %v2733 = vpack.c.b16 %v1949, %v1933
        %v2734 = vpack.c.b16 %v1950, %v1934
        %v2735 = vpack.c.b16 %v1951, %v1935
        %v2736 = vpack.c.b16 %v1952, %v1936
        %v2737 = vpack.c.b16 %v1953, %v1937
        %v2738 = vpack.c.b16 %v1954, %v1938
        %v2739 = vpack.c.b16 %v1955, %v1939
        %v2740 = vpack.c.b16 %v1972, %v1956
        %v2741 = vpack.c.b16 %v1973, %v1957
        %v2742 = vpack.c.b16 %v1974, %v1958
        %v2743 = vpack.c.b16 %v1975, %v1959
        %v2744 = vpack.c.b16 %v1976, %v1960
        %v2745 = vpack.c.b16 %v1977, %v1961
        %v2746 = vpack.c.b16 %v1978, %v1962
        %v2747 = vpack.c.b16 %v1979, %v1963
        %v2748 = vpack.c.b16 %v1980, %v1964
        %v2749 = vpack.c.b16 %v1981, %v1965
        %v2750 = vpack.c.b16 %v1982, %v1966
        %v2751 = vpack.c.b16 %v1983, %v1967
        %v2752 = vpack.c.b16 %v1984, %v1968
        %v2753 = vpack.c.b16 %v1985, %v1969
        %v2754 = vpack.c.b16 %v1986, %v1970
        %v2755 = vpack.c.b16 %v1987, %v1971
        %v2756 = vpack.c.b16 %v2004, %v1988
        %v2757 = vpack.c.b16 %v2005, %v1989
        %v2758 = vpack.c.b16 %v2006, %v1990
        %v2759 = vpack.c.b16 %v2007, %v1991
        %v2760 = vpack.c.b16 %v2008, %v1992
        %v2761 = vpack.c.b16 %v2009, %v1993
        %v2762 = vpack.c.b16 %v2010, %v1994
        %v2763 = vpack.c.b16 %v2011, %v1995
        %v2764 = vpack.c.b16 %v2012, %v1996
        %v2765 = vpack.c.b16 %v2013, %v1997
        %v2766 = vpack.c.b16 %v2014, %v1998
        %v2767 = vpack.c.b16 %v2015, %v1999
        %v2768 = vpack.c.b16 %v2016, %v2000
        %v2769 = vpack.c.b16 %v2017, %v2001
        %v2770 = vpack.c.b16 %v2018, %v2002
        %v2771 = vpack.c.b16 %v2019, %v2003
        %v2772 = vpack.c.b16 %v2036, %v2020
        %v2773 = vpack.c.b16 %v2037, %v2021
        %v2774 = vpack.c.b16 %v2038, %v2022
        %v2775 = vpack.c.b16 %v2039, %v2023
        %v2776 = vpack.c.b16 %v2040, %v2024
        %v2777 = vpack.c.b16 %v2041, %v2025
        %v2778 = vpack.c.b16 %v2042, %v2026
        %v2779 = vpack.c.b16 %v2043, %v2027
        %v2780 = vpack.c.b16 %v2044, %v2028
        %v2781 = vpack.c.b16 %v2045, %v2029
        %v2782 = vpack.c.b16 %v2046, %v2030
        %v2783 = vpack.c.b16 %v2047, %v2031
        %v2784 = vpack.c.b16 %v2048, %v2032
        %v2785 = vpack.c.b16 %v2049, %v2033
        %v2786 = vpack.c.b16 %v2050, %v2034
        %v2787 = vpack.c.b16 %v2051, %v2035
        %v2788 = vpack.c.b16 %v2068, %v2052
        %v2789 = vpack.c.b16 %v2069, %v2053
        %v2790 = vpack.c.b16 %v2070, %v2054
        %v2791 = vpack.c.b16 %v2071, %v2055
        %v2792 = vpack.c.b16 %v2072, %v2056
        %v2793 = vpack.c.b16 %v2073, %v2057
        %v2794 = vpack.c.b16 %v2074, %v2058
        %v2795 = vpack.c.b16 %v2075, %v2059
        %v2796 = vpack.c.b16 %v2076, %v2060
        %v2797 = vpack.c.b16 %v2077, %v2061
        %v2798 = vpack.c.b16 %v2078, %v2062
        %v2799 = vpack.c.b16 %v2079, %v2063
        %v2800 = vpack.c.b16 %v2080, %v2064
        %v2801 = vpack.c.b16 %v2081, %v2065
        %v2802 = vpack.c.b16 %v2082, %v2066
        %v2803 = vpack.c.b16 %v2083, %v2067
        %v2804 = vpack.c.b16 %v2100, %v2084
        %v2805 = vpack.c.b16 %v2101, %v2085
        %v2806 = vpack.c.b16 %v2102, %v2086
        %v2807 = vpack.c.b16 %v2103, %v2087
        %v2808 = vpack.c.b16 %v2104, %v2088
        %v2809 = vpack.c.b16 %v2105, %v2089
        %v2810 = vpack.c.b16 %v2106, %v2090
        %v2811 = vpack.c.b16 %v2107, %v2091
        %v2812 = vpack.c.b16 %v2108, %v2092
        %v2813 = vpack.c.b16 %v2109, %v2093
        %v2814 = vpack.c.b16 %v2110, %v2094
        %v2815 = vpack.c.b16 %v2111, %v2095
        %v2816 = vpack.c.b16 %v2112, %v2096
        %v2817 = vpack.c.b16 %v2113, %v2097
        %v2818 = vpack.c.b16 %v2114, %v2098
        %v2819 = vpack.c.b16 %v2115, %v2099
        %v2820 = vpack.c.b16 %v2132, %v2116
        %v2821 = vpack.c.b16 %v2133, %v2117
        %v2822 = vpack.c.b16 %v2134, %v2118
        %v2823 = vpack.c.b16 %v2135, %v2119
        %v2824 = vpack.c.b16 %v2136, %v2120
        %v2825 = vpack.c.b16 %v2137, %v2121
        %v2826 = vpack.c.b16 %v2138, %v2122
        %v2827 = vpack.c.b16 %v2139, %v2123
        %v2828 = vpack.c.b16 %v2140, %v2124
        %v2829 = vpack.c.b16 %v2141, %v2125
        %v2830 = vpack.c.b16 %v2142, %v2126
        %v2831 = vpack.c.b16 %v2143, %v2127
        %v2832 = vpack.c.b16 %v2144, %v2128
        %v2833 = vpack.c.b16 %v2145, %v2129
        %v2834 = vpack.c.b16 %v2146, %v2130
        %v2835 = vpack.c.b16 %v2147, %v2131
        %v2836 = vpack.c.b16 %v2164, %v2148
        %v2837 = vpack.c.b16 %v2165, %v2149
        %v2838 = vpack.c.b16 %v2166, %v2150
        %v2839 = vpack.c.b16 %v2167, %v2151
        %v2840 = vpack.c.b16 %v2168, %v2152
        %v2841 = vpack.c.b16 %v2169, %v2153
        %v2842 = vpack.c.b16 %v2170, %v2154
        %v2843 = vpack.c.b16 %v2171, %v2155
        %v2844 = vpack.c.b16 %v2172, %v2156
        %v2845 = vpack.c.b16 %v2173, %v2157
        %v2846 = vpack.c.b16 %v2174, %v2158
        %v2847 = vpack.c.b16 %v2175, %v2159
        %v2848 = vpack.c.b16 %v2176, %v2160
        %v2849 = vpack.c.b16 %v2177, %v2161
        %v2850 = vpack.c.b16 %v2178, %v2162
        %v2851 = vpack.c.b16 %v2179, %v2163
        %v2852 = vpack.c.b16 %v2196, %v2180
        %v2853 = vpack.c.b16 %v2197, %v2181
        %v2854 = vpack.c.b16 %v2198, %v2182
        %v2855 = vpack.c.b16 %v2199, %v2183
        %v2856 = vpack.c.b16 %v2200, %v2184
        %v2857 = vpack.c.b16 %v2201, %v2185
        %v2858 = vpack.c.b16 %v2202, %v2186
        %v2859 = vpack.c.b16 %v2203, %v2187
        %v2860 = vpack.c.b16 %v2204, %v2188
        %v2861 = vpack.c.b16 %v2205, %v2189
        %v2862 = vpack.c.b16 %v2206, %v2190
        %v2863 = vpack.c.b16 %v2207, %v2191
        %v2864 = vpack.c.b16 %v2208, %v2192
        %v2865 = vpack.c.b16 %v2209, %v2193
        %v2866 = vpack.c.b16 %v2210, %v2194
        %v2867 = vpack.c.b16 %v2211, %v2195
        %v2868 = vpack.c.b16 %v2228, %v2212
        %v2869 = vpack.c.b16 %v2229, %v2213
        %v2870 = vpack.c.b16 %v2230, %v2214
        %v2871 = vpack.c.b16 %v2231, %v2215
        %v2872 = vpack.c.b16 %v2232, %v2216
        %v2873 = vpack.c.b16 %v2233, %v2217
        %v2874 = vpack.c.b16 %v2234, %v2218
        %v2875 = vpack.c.b16 %v2235, %v2219
        %v2876 = vpack.c.b16 %v2236, %v2220
        %v2877 = vpack.c.b16 %v2237, %v2221
        %v2878 = vpack.c.b16 %v2238, %v2222
        %v2879 = vpack.c.b16 %v2239, %v2223
        %v2880 = vpack.c.b16 %v2240, %v2224
        %v2881 = vpack.c.b16 %v2241, %v2225
        %v2882 = vpack.c.b16 %v2242, %v2226
        %v2883 = vpack.c.b16 %v2243, %v2227
        %v2884 = vpack.c.b16 %v2260, %v2244
        %v2885 = vpack.c.b16 %v2261, %v2245
        %v2886 = vpack.c.b16 %v2262, %v2246
        %v2887 = vpack.c.b16 %v2263, %v2247
        %v2888 = vpack.c.b16 %v2264, %v2248
        %v2889 = vpack.c.b16 %v2265, %v2249
        %v2890 = vpack.c.b16 %v2266, %v2250
        %v2891 = vpack.c.b16 %v2267, %v2251
        %v2892 = vpack.c.b16 %v2268, %v2252
        %v2893 = vpack.c.b16 %v2269, %v2253
        %v2894 = vpack.c.b16 %v2270, %v2254
        %v2895 = vpack.c.b16 %v2271, %v2255
        %v2896 = vpack.c.b16 %v2272, %v2256
        %v2897 = vpack.c.b16 %v2273, %v2257
        %v2898 = vpack.c.b16 %v2274, %v2258
        %v2899 = vpack.c.b16 %v2275, %v2259
        %v2900 = vpack.c.b16 %v2292, %v2276
        %v2901 = vpack.c.b16 %v2293, %v2277
        %v2902 = vpack.c.b16 %v2294, %v2278
        %v2903 = vpack.c.b16 %v2295, %v2279
        %v2904 = vpack.c.b16 %v2296, %v2280
        %v2905 = vpack.c.b16 %v2297, %v2281
        %v2906 = vpack.c.b16 %v2298, %v2282
        %v2907 = vpack.c.b16 %v2299, %v2283
        %v2908 = vpack.c.b16 %v2300, %v2284
        %v2909 = vpack.c.b16 %v2301, %v2285
        %v2910 = vpack.c.b16 %v2302, %v2286
        %v2911 = vpack.c.b16 %v2303, %v2287
        %v2912 = vpack.c.b16 %v2304, %v2288
        %v2913 = vpack.c.b16 %v2305, %v2289
        %v2914 = vpack.c.b16 %v2306, %v2290
        %v2915 = vpack.c.b16 %v2307, %v2291
        %v2916 = vpack.c.b16 %v2324, %v2308
        %v2917 = vpack.c.b16 %v2325, %v2309
        %v2918 = vpack.c.b16 %v2326, %v2310
        %v2919 = vpack.c.b16 %v2327, %v2311
        %v2920 = vpack.c.b16 %v2328, %v2312
        %v2921 = vpack.c.b16 %v2329, %v2313
        %v2922 = vpack.c.b16 %v2330, %v2314
        %v2923 = vpack.c.b16 %v2331, %v2315
        %v2924 = vpack.c.b16 %v2332, %v2316
        %v2925 = vpack.c.b16 %v2333, %v2317
        %v2926 = vpack.c.b16 %v2334, %v2318
        %v2927 = vpack.c.b16 %v2335, %v2319
        %v2928 = vpack.c.b16 %v2336, %v2320
        %v2929 = vpack.c.b16 %v2337, %v2321
        %v2930 = vpack.c.b16 %v2338, %v2322
        %v2931 = vpack.c.b16 %v2339, %v2323
        %v2932 = vpack.c.b16 %v2356, %v2340
        %v2933 = vpack.c.b16 %v2357, %v2341
        %v2934 = vpack.c.b16 %v2358, %v2342
        %v2935 = vpack.c.b16 %v2359, %v2343
        %v2936 = vpack.c.b16 %v2360, %v2344
        %v2937 = vpack.c.b16 %v2361, %v2345
        %v2938 = vpack.c.b16 %v2362, %v2346
        %v2939 = vpack.c.b16 %v2363, %v2347
        %v2940 = vpack.c.b16 %v2364, %v2348
        %v2941 = vpack.c.b16 %v2365, %v2349
        %v2942 = vpack.c.b16 %v2366, %v2350
        %v2943 = vpack.c.b16 %v2367, %v2351
        %v2944 = vpack.c.b16 %v2368, %v2352
        %v2945 = vpack.c.b16 %v2369, %v2353
        %v2946 = vpack.c.b16 %v2370, %v2354
        %v2947 = vpack.c.b16 %v2371, %v2355
        %v2948 = vpack.c.b16 %v2388, %v2372
        %v2949 = vpack.c.b16 %v2389, %v2373
        %v2950 = vpack.c.b16 %v2390, %v2374
        %v2951 = vpack.c.b16 %v2391, %v2375
        %v2952 = vpack.c.b16 %v2392, %v2376
        %v2953 = vpack.c.b16 %v2393, %v2377
        %v2954 = vpack.c.b16 %v2394, %v2378
        %v2955 = vpack.c.b16 %v2395, %v2379
        %v2956 = vpack.c.b16 %v2396, %v2380
        %v2957 = vpack.c.b16 %v2397, %v2381
        %v2958 = vpack.c.b16 %v2398, %v2382
        %v2959 = vpack.c.b16 %v2399, %v2383
        %v2960 = vpack.c.b16 %v2400, %v2384
        %v2961 = vpack.c.b16 %v2401, %v2385
        %v2962 = vpack.c.b16 %v2402, %v2386
        %v2963 = vpack.c.b16 %v2403, %v2387
        %v2964 = vpack.c.b16 %v2420, %v2404
        %v2965 = vpack.c.b16 %v2421, %v2405
        %v2966 = vpack.c.b16 %v2422, %v2406
        %v2967 = vpack.c.b16 %v2423, %v2407
        %v2968 = vpack.c.b16 %v2424, %v2408
        %v2969 = vpack.c.b16 %v2425, %v2409
        %v2970 = vpack.c.b16 %v2426, %v2410
        %v2971 = vpack.c.b16 %v2427, %v2411
        %v2972 = vpack.c.b16 %v2428, %v2412
        %v2973 = vpack.c.b16 %v2429, %v2413
        %v2974 = vpack.c.b16 %v2430, %v2414
        %v2975 = vpack.c.b16 %v2431, %v2415
        %v2976 = vpack.c.b16 %v2432, %v2416
        %v2977 = vpack.c.b16 %v2433, %v2417
        %v2978 = vpack.c.b16 %v2434, %v2418
        %v2979 = vpack.c.b16 %v2435, %v2419
        %v2980 = vpack.c.b16 %v2452, %v2436
        %v2981 = vpack.c.b16 %v2453, %v2437
        %v2982 = vpack.c.b16 %v2454, %v2438
        %v2983 = vpack.c.b16 %v2455, %v2439
        %v2984 = vpack.c.b16 %v2456, %v2440
        %v2985 = vpack.c.b16 %v2457, %v2441
        %v2986 = vpack.c.b16 %v2458, %v2442
        %v2987 = vpack.c.b16 %v2459, %v2443
        %v2988 = vpack.c.b16 %v2460, %v2444
        %v2989 = vpack.c.b16 %v2461, %v2445
        %v2990 = vpack.c.b16 %v2462, %v2446
        %v2991 = vpack.c.b16 %v2463, %v2447
        %v2992 = vpack.c.b16 %v2464, %v2448
        %v2993 = vpack.c.b16 %v2465, %v2449
        %v2994 = vpack.c.b16 %v2466, %v2450
        %v2995 = vpack.c.b16 %v2467, %v2451
        %v2996 = vpack.c.b16 %v2484, %v2468
        %v2997 = vpack.c.b16 %v2485, %v2469
        %v2998 = vpack.c.b16 %v2486, %v2470
        %v2999 = vpack.c.b16 %v2487, %v2471
        %v3000 = vpack.c.b16 %v2488, %v2472
        %v3001 = vpack.c.b16 %v2489, %v2473
        %v3002 = vpack.c.b16 %v2490, %v2474
        %v3003 = vpack.c.b16 %v2491, %v2475
        %v3004 = vpack.c.b16 %v2492, %v2476
        %v3005 = vpack.c.b16 %v2493, %v2477
        %v3006 = vpack.c.b16 %v2494, %v2478
        %v3007 = vpack.c.b16 %v2495, %v2479
        %v3008 = vpack.c.b16 %v2496, %v2480
        %v3009 = vpack.c.b16 %v2497, %v2481
        %v3010 = vpack.c.b16 %v2498, %v2482
        %v3011 = vpack.c.b16 %v2499, %v2483
        %3524 = vmatprep.subr.bf16.mxu0 %v2613
        %3525 = vmatpush1.bf16.msra.mxu0 %v2612
        %3526 = vmatprep.subr.bf16.mxu0 %v2597
        %3527 = vmatpush1.bf16.msra.mxu0 %v2596
        %3528 = vmatprep.subr.bf16.mxu0 %v2581
        %3529 = vmatpush1.bf16.msra.mxu0 %v2580
        %3530 = vmatprep.subr.bf16.mxu0 %v2565
        %3531 = vmatpush1.bf16.msra.mxu0 %v2564
        %3532 = vmatprep.subr.bf16.mxu0 %v2549
        %3533 = vmatpush1.bf16.msra.mxu0 %v2548
        %3534 = vmatprep.subr.bf16.mxu0 %v2533
        %3535 = vmatpush1.bf16.msra.mxu0 %v2532
        %3536 = vmatprep.subr.bf16.mxu0 %v2517
        %3537 = vmatpush1.bf16.msra.mxu0 %v2516
        %3538 = vmatprep.subr.bf16.mxu0 %v2501
        %3539 = vmatpush1.bf16.msra.mxu0 %v2500
        %3540 = vmatprep.subr.bf16.mxu0 %v2741
        %3541 = vmatpush2.bf16.msra.mxu0 %v2740
        %3542 = vmatprep.subr.bf16.mxu0 %v2725
        %3543 = vmatpush2.bf16.msra.mxu0 %v2724
        %3544 = vmatprep.subr.bf16.mxu0 %v2709
        %3545 = vmatpush2.bf16.msra.mxu0 %v2708
        %3546 = vmatprep.subr.bf16.mxu0 %v2693
        %3547 = vmatpush2.bf16.msra.mxu0 %v2692
        %3548 = vmatprep.subr.bf16.mxu0 %v2677
        %3549 = vmatpush2.bf16.msra.mxu0 %v2676
        %3550 = vmatprep.subr.bf16.mxu0 %v2661
        %3551 = vmatpush2.bf16.msra.mxu0 %v2660
        %3552 = vmatprep.subr.bf16.mxu0 %v2645
        %3553 = vmatpush2.bf16.msra.mxu0 %v2644
        %3554 = vmatprep.subr.bf16.mxu0 %v2629
        %3555 = vmatpush2.bf16.msra.mxu0 %v2628
        %3556 = vmatprep.mubr.bf16.mxu0 %v367
        %3557 = vmatmul.mubr.bf16.gmra.mxu0 %v366
        %v3558 = vpop.f32.mrf.mxu0
        %v3559 = vadd.f32 %v887, %v3558
        %v3560 = vpop.f32.mrf.mxu0
        %v3561 = vadd.f32 %v891, %v3560
        %v3562 = vpop.f32.mrf.mxu0
        %v3563 = vpop.f32.mrf.mxu0
        %3564 = vdwg.mxu0
        %3565 = vmatprep.subr.bf16.mxu0 %v2869
        %3566 = vmatpush1.bf16.msra.mxu0 %v2868
        %3567 = vmatprep.subr.bf16.mxu0 %v2853
        %3568 = vmatpush1.bf16.msra.mxu0 %v2852
        %3569 = vmatprep.subr.bf16.mxu0 %v2837
        %3570 = vmatpush1.bf16.msra.mxu0 %v2836
        %3571 = vmatprep.subr.bf16.mxu0 %v2821
        %3572 = vmatpush1.bf16.msra.mxu0 %v2820
        %3573 = vmatprep.subr.bf16.mxu0 %v2805
        %3574 = vmatpush1.bf16.msra.mxu0 %v2804
        %3575 = vmatprep.subr.bf16.mxu0 %v2789
        %3576 = vmatpush1.bf16.msra.mxu0 %v2788
        %3577 = vmatprep.subr.bf16.mxu0 %v2773
        %3578 = vmatpush1.bf16.msra.mxu0 %v2772
        %3579 = vmatprep.subr.bf16.mxu0 %v2757
        %3580 = vmatpush1.bf16.msra.mxu0 %v2756
        %3581 = vmatprep.subr.bf16.mxu0 %v2997
        %3582 = vmatpush2.bf16.msra.mxu0 %v2996
        %3583 = vmatprep.subr.bf16.mxu0 %v2981
        %3584 = vmatpush2.bf16.msra.mxu0 %v2980
        %3585 = vmatprep.subr.bf16.mxu0 %v2965
        %3586 = vmatpush2.bf16.msra.mxu0 %v2964
        %3587 = vmatprep.subr.bf16.mxu0 %v2949
        %3588 = vmatpush2.bf16.msra.mxu0 %v2948
        %3589 = vmatprep.subr.bf16.mxu0 %v2933
        %3590 = vmatpush2.bf16.msra.mxu0 %v2932
        %3591 = vmatprep.subr.bf16.mxu0 %v2917
        %3592 = vmatpush2.bf16.msra.mxu0 %v2916
        %3593 = vmatprep.subr.bf16.mxu0 %v2901
        %3594 = vmatpush2.bf16.msra.mxu0 %v2900
        %3595 = vmatprep.subr.bf16.mxu0 %v2885
        %3596 = vmatpush2.bf16.msra.mxu0 %v2884
        %3597 = vmatprep.mubr.bf16.mxu0 %v369
        %3598 = vmatmul.mubr.bf16.gmra.mxu0 %v368
        %v3599 = vpop.f32.mrf.mxu0
        %v3600 = vadd.f32 %v3559, %v3599
        %v3601 = vpop.f32.mrf.mxu0
        %v3602 = vadd.f32 %v3561, %v3601
        %v3603 = vpop.f32.mrf.mxu0
        %v3604 = vpop.f32.mrf.mxu0
        %3605 = vdwg.mxu0
        %3606 = vmatprep.subr.bf16.mxu0 %v2615
        %3607 = vmatpush1.bf16.msra.mxu0 %v2614
        %3608 = vmatprep.subr.bf16.mxu0 %v2599
        %3609 = vmatpush1.bf16.msra.mxu0 %v2598
        %3610 = vmatprep.subr.bf16.mxu0 %v2583
        %3611 = vmatpush1.bf16.msra.mxu0 %v2582
        %3612 = vmatprep.subr.bf16.mxu0 %v2567
        %3613 = vmatpush1.bf16.msra.mxu0 %v2566
        %3614 = vmatprep.subr.bf16.mxu0 %v2551
        %3615 = vmatpush1.bf16.msra.mxu0 %v2550
        %3616 = vmatprep.subr.bf16.mxu0 %v2535
        %3617 = vmatpush1.bf16.msra.mxu0 %v2534
        %3618 = vmatprep.subr.bf16.mxu0 %v2519
        %3619 = vmatpush1.bf16.msra.mxu0 %v2518
        %3620 = vmatprep.subr.bf16.mxu0 %v2503
        %3621 = vmatpush1.bf16.msra.mxu0 %v2502
        %3622 = vmatprep.subr.bf16.mxu0 %v2743
        %3623 = vmatpush2.bf16.msra.mxu0 %v2742
        %3624 = vmatprep.subr.bf16.mxu0 %v2727
        %3625 = vmatpush2.bf16.msra.mxu0 %v2726
        %3626 = vmatprep.subr.bf16.mxu0 %v2711
        %3627 = vmatpush2.bf16.msra.mxu0 %v2710
        %3628 = vmatprep.subr.bf16.mxu0 %v2695
        %3629 = vmatpush2.bf16.msra.mxu0 %v2694
        %3630 = vmatprep.subr.bf16.mxu0 %v2679
        %3631 = vmatpush2.bf16.msra.mxu0 %v2678
        %3632 = vmatprep.subr.bf16.mxu0 %v2663
        %3633 = vmatpush2.bf16.msra.mxu0 %v2662
        %3634 = vmatprep.subr.bf16.mxu0 %v2647
        %3635 = vmatpush2.bf16.msra.mxu0 %v2646
        %3636 = vmatprep.subr.bf16.mxu0 %v2631
        %3637 = vmatpush2.bf16.msra.mxu0 %v2630
        %3638 = vmatprep.mubr.bf16.mxu0 %v367
        %3639 = vmatmul.mubr.bf16.gmra.mxu0 %v366
        %v3640 = vpop.f32.mrf.mxu0
        %v3641 = vadd.f32 %v895, %v3640
        %v3642 = vpop.f32.mrf.mxu0
        %v3643 = vadd.f32 %v899, %v3642
        %v3644 = vpop.f32.mrf.mxu0
        %v3645 = vpop.f32.mrf.mxu0
        %3646 = vdwg.mxu0
        %3647 = vmatprep.subr.bf16.mxu0 %v2871
        %3648 = vmatpush1.bf16.msra.mxu0 %v2870
        %3649 = vmatprep.subr.bf16.mxu0 %v2855
        %3650 = vmatpush1.bf16.msra.mxu0 %v2854
        %3651 = vmatprep.subr.bf16.mxu0 %v2839
        %3652 = vmatpush1.bf16.msra.mxu0 %v2838
        %3653 = vmatprep.subr.bf16.mxu0 %v2823
        %3654 = vmatpush1.bf16.msra.mxu0 %v2822
        %3655 = vmatprep.subr.bf16.mxu0 %v2807
        %3656 = vmatpush1.bf16.msra.mxu0 %v2806
        %3657 = vmatprep.subr.bf16.mxu0 %v2791
        %3658 = vmatpush1.bf16.msra.mxu0 %v2790
        %3659 = vmatprep.subr.bf16.mxu0 %v2775
        %3660 = vmatpush1.bf16.msra.mxu0 %v2774
        %3661 = vmatprep.subr.bf16.mxu0 %v2759
        %3662 = vmatpush1.bf16.msra.mxu0 %v2758
        %3663 = vmatprep.subr.bf16.mxu0 %v2999
        %3664 = vmatpush2.bf16.msra.mxu0 %v2998
        %3665 = vmatprep.subr.bf16.mxu0 %v2983
        %3666 = vmatpush2.bf16.msra.mxu0 %v2982
        %3667 = vmatprep.subr.bf16.mxu0 %v2967
        %3668 = vmatpush2.bf16.msra.mxu0 %v2966
        %3669 = vmatprep.subr.bf16.mxu0 %v2951
        %3670 = vmatpush2.bf16.msra.mxu0 %v2950
        %3671 = vmatprep.subr.bf16.mxu0 %v2935
        %3672 = vmatpush2.bf16.msra.mxu0 %v2934
        %3673 = vmatprep.subr.bf16.mxu0 %v2919
        %3674 = vmatpush2.bf16.msra.mxu0 %v2918
        %3675 = vmatprep.subr.bf16.mxu0 %v2903
        %3676 = vmatpush2.bf16.msra.mxu0 %v2902
        %3677 = vmatprep.subr.bf16.mxu0 %v2887
        %3678 = vmatpush2.bf16.msra.mxu0 %v2886
        %3679 = vmatprep.mubr.bf16.mxu0 %v369
        %3680 = vmatmul.mubr.bf16.gmra.mxu0 %v368
        %v3681 = vpop.f32.mrf.mxu0
        %v3682 = vadd.f32 %v3641, %v3681
        %v3683 = vpop.f32.mrf.mxu0
        %v3684 = vadd.f32 %v3643, %v3683
        %v3685 = vpop.f32.mrf.mxu0
        %v3686 = vpop.f32.mrf.mxu0
        %3687 = vdwg.mxu0
        %3688 = vmatprep.subr.bf16.mxu0 %v2617
        %3689 = vmatpush1.bf16.msra.mxu0 %v2616
        %3690 = vmatprep.subr.bf16.mxu0 %v2601
        %3691 = vmatpush1.bf16.msra.mxu0 %v2600
        %3692 = vmatprep.subr.bf16.mxu0 %v2585
        %3693 = vmatpush1.bf16.msra.mxu0 %v2584
        %3694 = vmatprep.subr.bf16.mxu0 %v2569
        %3695 = vmatpush1.bf16.msra.mxu0 %v2568
        %3696 = vmatprep.subr.bf16.mxu0 %v2553
        %3697 = vmatpush1.bf16.msra.mxu0 %v2552
        %3698 = vmatprep.subr.bf16.mxu0 %v2537
        %3699 = vmatpush1.bf16.msra.mxu0 %v2536
        %3700 = vmatprep.subr.bf16.mxu0 %v2521
        %3701 = vmatpush1.bf16.msra.mxu0 %v2520
        %3702 = vmatprep.subr.bf16.mxu0 %v2505
        %3703 = vmatpush1.bf16.msra.mxu0 %v2504
        %3704 = vmatprep.subr.bf16.mxu0 %v2745
        %3705 = vmatpush2.bf16.msra.mxu0 %v2744
        %3706 = vmatprep.subr.bf16.mxu0 %v2729
        %3707 = vmatpush2.bf16.msra.mxu0 %v2728
        %3708 = vmatprep.subr.bf16.mxu0 %v2713
        %3709 = vmatpush2.bf16.msra.mxu0 %v2712
        %3710 = vmatprep.subr.bf16.mxu0 %v2697
        %3711 = vmatpush2.bf16.msra.mxu0 %v2696
        %3712 = vmatprep.subr.bf16.mxu0 %v2681
        %3713 = vmatpush2.bf16.msra.mxu0 %v2680
        %3714 = vmatprep.subr.bf16.mxu0 %v2665
        %3715 = vmatpush2.bf16.msra.mxu0 %v2664
        %3716 = vmatprep.subr.bf16.mxu0 %v2649
        %3717 = vmatpush2.bf16.msra.mxu0 %v2648
        %3718 = vmatprep.subr.bf16.mxu0 %v2633
        %3719 = vmatpush2.bf16.msra.mxu0 %v2632
        %3720 = vmatprep.mubr.bf16.mxu0 %v367
        %3721 = vmatmul.mubr.bf16.gmra.mxu0 %v366
        %v3722 = vpop.f32.mrf.mxu0
        %v3723 = vadd.f32 %v903, %v3722
        %v3724 = vpop.f32.mrf.mxu0
        %v3725 = vadd.f32 %v907, %v3724
        %v3726 = vpop.f32.mrf.mxu0
        %v3727 = vpop.f32.mrf.mxu0
        %3728 = vdwg.mxu0
        %3729 = vmatprep.subr.bf16.mxu0 %v2873
        %3730 = vmatpush1.bf16.msra.mxu0 %v2872
        %3731 = vmatprep.subr.bf16.mxu0 %v2857
        %3732 = vmatpush1.bf16.msra.mxu0 %v2856
        %3733 = vmatprep.subr.bf16.mxu0 %v2841
        %3734 = vmatpush1.bf16.msra.mxu0 %v2840
        %3735 = vmatprep.subr.bf16.mxu0 %v2825
        %3736 = vmatpush1.bf16.msra.mxu0 %v2824
        %3737 = vmatprep.subr.bf16.mxu0 %v2809
        %3738 = vmatpush1.bf16.msra.mxu0 %v2808
        %3739 = vmatprep.subr.bf16.mxu0 %v2793
        %3740 = vmatpush1.bf16.msra.mxu0 %v2792
        %3741 = vmatprep.subr.bf16.mxu0 %v2777
        %3742 = vmatpush1.bf16.msra.mxu0 %v2776
        %3743 = vmatprep.subr.bf16.mxu0 %v2761
        %3744 = vmatpush1.bf16.msra.mxu0 %v2760
        %3745 = vmatprep.subr.bf16.mxu0 %v3001
        %3746 = vmatpush2.bf16.msra.mxu0 %v3000
        %3747 = vmatprep.subr.bf16.mxu0 %v2985
        %3748 = vmatpush2.bf16.msra.mxu0 %v2984
        %3749 = vmatprep.subr.bf16.mxu0 %v2969
        %3750 = vmatpush2.bf16.msra.mxu0 %v2968
        %3751 = vmatprep.subr.bf16.mxu0 %v2953
        %3752 = vmatpush2.bf16.msra.mxu0 %v2952
        %3753 = vmatprep.subr.bf16.mxu0 %v2937
        %3754 = vmatpush2.bf16.msra.mxu0 %v2936
        %3755 = vmatprep.subr.bf16.mxu0 %v2921
        %3756 = vmatpush2.bf16.msra.mxu0 %v2920
        %3757 = vmatprep.subr.bf16.mxu0 %v2905
        %3758 = vmatpush2.bf16.msra.mxu0 %v2904
        %3759 = vmatprep.subr.bf16.mxu0 %v2889
        %3760 = vmatpush2.bf16.msra.mxu0 %v2888
        %3761 = vmatprep.mubr.bf16.mxu0 %v369
        %3762 = vmatmul.mubr.bf16.gmra.mxu0 %v368
        %v3763 = vpop.f32.mrf.mxu0
        %v3764 = vadd.f32 %v3723, %v3763
        %v3765 = vpop.f32.mrf.mxu0
        %v3766 = vadd.f32 %v3725, %v3765
        %v3767 = vpop.f32.mrf.mxu0
        %v3768 = vpop.f32.mrf.mxu0
        %3769 = vdwg.mxu0
        %3770 = vmatprep.subr.bf16.mxu0 %v2619
        %3771 = vmatpush1.bf16.msra.mxu0 %v2618
        %3772 = vmatprep.subr.bf16.mxu0 %v2603
        %3773 = vmatpush1.bf16.msra.mxu0 %v2602
        %3774 = vmatprep.subr.bf16.mxu0 %v2587
        %3775 = vmatpush1.bf16.msra.mxu0 %v2586
        %3776 = vmatprep.subr.bf16.mxu0 %v2571
        %3777 = vmatpush1.bf16.msra.mxu0 %v2570
        %3778 = vmatprep.subr.bf16.mxu0 %v2555
        %3779 = vmatpush1.bf16.msra.mxu0 %v2554
        %3780 = vmatprep.subr.bf16.mxu0 %v2539
        %3781 = vmatpush1.bf16.msra.mxu0 %v2538
        %3782 = vmatprep.subr.bf16.mxu0 %v2523
        %3783 = vmatpush1.bf16.msra.mxu0 %v2522
        %3784 = vmatprep.subr.bf16.mxu0 %v2507
        %3785 = vmatpush1.bf16.msra.mxu0 %v2506
        %3786 = vmatprep.subr.bf16.mxu0 %v2747
        %3787 = vmatpush2.bf16.msra.mxu0 %v2746
        %3788 = vmatprep.subr.bf16.mxu0 %v2731
        %3789 = vmatpush2.bf16.msra.mxu0 %v2730
        %3790 = vmatprep.subr.bf16.mxu0 %v2715
        %3791 = vmatpush2.bf16.msra.mxu0 %v2714
        %3792 = vmatprep.subr.bf16.mxu0 %v2699
        %3793 = vmatpush2.bf16.msra.mxu0 %v2698
        %3794 = vmatprep.subr.bf16.mxu0 %v2683
        %3795 = vmatpush2.bf16.msra.mxu0 %v2682
        %3796 = vmatprep.subr.bf16.mxu0 %v2667
        %3797 = vmatpush2.bf16.msra.mxu0 %v2666
        %3798 = vmatprep.subr.bf16.mxu0 %v2651
        %3799 = vmatpush2.bf16.msra.mxu0 %v2650
        %3800 = vmatprep.subr.bf16.mxu0 %v2635
        %3801 = vmatpush2.bf16.msra.mxu0 %v2634
        %3802 = vmatprep.mubr.bf16.mxu0 %v367
        %3803 = vmatmul.mubr.bf16.gmra.mxu0 %v366
        %v3804 = vpop.f32.mrf.mxu0
        %v3805 = vadd.f32 %v911, %v3804
        %v3806 = vpop.f32.mrf.mxu0
        %v3807 = vadd.f32 %v915, %v3806
        %v3808 = vpop.f32.mrf.mxu0
        %v3809 = vpop.f32.mrf.mxu0
        %3810 = vdwg.mxu0
        %3811 = vmatprep.subr.bf16.mxu0 %v2875
        %3812 = vmatpush1.bf16.msra.mxu0 %v2874
        %3813 = vmatprep.subr.bf16.mxu0 %v2859
        %3814 = vmatpush1.bf16.msra.mxu0 %v2858
        %3815 = vmatprep.subr.bf16.mxu0 %v2843
        %3816 = vmatpush1.bf16.msra.mxu0 %v2842
        %3817 = vmatprep.subr.bf16.mxu0 %v2827
        %3818 = vmatpush1.bf16.msra.mxu0 %v2826
        %3819 = vmatprep.subr.bf16.mxu0 %v2811
        %3820 = vmatpush1.bf16.msra.mxu0 %v2810
        %3821 = vmatprep.subr.bf16.mxu0 %v2795
        %3822 = vmatpush1.bf16.msra.mxu0 %v2794
        %3823 = vmatprep.subr.bf16.mxu0 %v2779
        %3824 = vmatpush1.bf16.msra.mxu0 %v2778
        %3825 = vmatprep.subr.bf16.mxu0 %v2763
        %3826 = vmatpush1.bf16.msra.mxu0 %v2762
        %3827 = vmatprep.subr.bf16.mxu0 %v3003
        %3828 = vmatpush2.bf16.msra.mxu0 %v3002
        %3829 = vmatprep.subr.bf16.mxu0 %v2987
        %3830 = vmatpush2.bf16.msra.mxu0 %v2986
        %3831 = vmatprep.subr.bf16.mxu0 %v2971
        %3832 = vmatpush2.bf16.msra.mxu0 %v2970
        %3833 = vmatprep.subr.bf16.mxu0 %v2955
        %3834 = vmatpush2.bf16.msra.mxu0 %v2954
        %3835 = vmatprep.subr.bf16.mxu0 %v2939
        %3836 = vmatpush2.bf16.msra.mxu0 %v2938
        %3837 = vmatprep.subr.bf16.mxu0 %v2923
        %3838 = vmatpush2.bf16.msra.mxu0 %v2922
        %3839 = vmatprep.subr.bf16.mxu0 %v2907
        %3840 = vmatpush2.bf16.msra.mxu0 %v2906
        %3841 = vmatprep.subr.bf16.mxu0 %v2891
        %3842 = vmatpush2.bf16.msra.mxu0 %v2890
        %3843 = vmatprep.mubr.bf16.mxu0 %v369
        %3844 = vmatmul.mubr.bf16.gmra.mxu0 %v368
        %v3845 = vpop.f32.mrf.mxu0
        %v3846 = vadd.f32 %v3805, %v3845
        %v3847 = vpop.f32.mrf.mxu0
        %v3848 = vadd.f32 %v3807, %v3847
        %v3849 = vpop.f32.mrf.mxu0
        %v3850 = vpop.f32.mrf.mxu0
        %3851 = vdwg.mxu0
        %3852 = vmatprep.subr.bf16.mxu0 %v2621
        %3853 = vmatpush1.bf16.msra.mxu0 %v2620
        %3854 = vmatprep.subr.bf16.mxu0 %v2605
        %3855 = vmatpush1.bf16.msra.mxu0 %v2604
        %3856 = vmatprep.subr.bf16.mxu0 %v2589
        %3857 = vmatpush1.bf16.msra.mxu0 %v2588
        %3858 = vmatprep.subr.bf16.mxu0 %v2573
        %3859 = vmatpush1.bf16.msra.mxu0 %v2572
        %3860 = vmatprep.subr.bf16.mxu0 %v2557
        %3861 = vmatpush1.bf16.msra.mxu0 %v2556
        %3862 = vmatprep.subr.bf16.mxu0 %v2541
        %3863 = vmatpush1.bf16.msra.mxu0 %v2540
        %3864 = vmatprep.subr.bf16.mxu0 %v2525
        %3865 = vmatpush1.bf16.msra.mxu0 %v2524
        %3866 = vmatprep.subr.bf16.mxu0 %v2509
        %3867 = vmatpush1.bf16.msra.mxu0 %v2508
        %3868 = vmatprep.subr.bf16.mxu0 %v2749
        %3869 = vmatpush2.bf16.msra.mxu0 %v2748
        %3870 = vmatprep.subr.bf16.mxu0 %v2733
        %3871 = vmatpush2.bf16.msra.mxu0 %v2732
        %3872 = vmatprep.subr.bf16.mxu0 %v2717
        %3873 = vmatpush2.bf16.msra.mxu0 %v2716
        %3874 = vmatprep.subr.bf16.mxu0 %v2701
        %3875 = vmatpush2.bf16.msra.mxu0 %v2700
        %3876 = vmatprep.subr.bf16.mxu0 %v2685
        %3877 = vmatpush2.bf16.msra.mxu0 %v2684
        %3878 = vmatprep.subr.bf16.mxu0 %v2669
        %3879 = vmatpush2.bf16.msra.mxu0 %v2668
        %3880 = vmatprep.subr.bf16.mxu0 %v2653
        %3881 = vmatpush2.bf16.msra.mxu0 %v2652
        %3882 = vmatprep.subr.bf16.mxu0 %v2637
        %3883 = vmatpush2.bf16.msra.mxu0 %v2636
        %3884 = vmatprep.mubr.bf16.mxu0 %v367
        %3885 = vmatmul.mubr.bf16.gmra.mxu0 %v366
        %v3886 = vpop.f32.mrf.mxu0
        %v3887 = vadd.f32 %v919, %v3886
        %v3888 = vpop.f32.mrf.mxu0
        %v3889 = vadd.f32 %v923, %v3888
        %v3890 = vpop.f32.mrf.mxu0
        %v3891 = vpop.f32.mrf.mxu0
        %3892 = vdwg.mxu0
        %3893 = vmatprep.subr.bf16.mxu0 %v2877
        %3894 = vmatpush1.bf16.msra.mxu0 %v2876
        %3895 = vmatprep.subr.bf16.mxu0 %v2861
        %3896 = vmatpush1.bf16.msra.mxu0 %v2860
        %3897 = vmatprep.subr.bf16.mxu0 %v2845
        %3898 = vmatpush1.bf16.msra.mxu0 %v2844
        %3899 = vmatprep.subr.bf16.mxu0 %v2829
        %3900 = vmatpush1.bf16.msra.mxu0 %v2828
        %3901 = vmatprep.subr.bf16.mxu0 %v2813
        %3902 = vmatpush1.bf16.msra.mxu0 %v2812
        %3903 = vmatprep.subr.bf16.mxu0 %v2797
        %3904 = vmatpush1.bf16.msra.mxu0 %v2796
        %3905 = vmatprep.subr.bf16.mxu0 %v2781
        %3906 = vmatpush1.bf16.msra.mxu0 %v2780
        %3907 = vmatprep.subr.bf16.mxu0 %v2765
        %3908 = vmatpush1.bf16.msra.mxu0 %v2764
        %3909 = vmatprep.subr.bf16.mxu0 %v3005
        %3910 = vmatpush2.bf16.msra.mxu0 %v3004
        %3911 = vmatprep.subr.bf16.mxu0 %v2989
        %3912 = vmatpush2.bf16.msra.mxu0 %v2988
        %3913 = vmatprep.subr.bf16.mxu0 %v2973
        %3914 = vmatpush2.bf16.msra.mxu0 %v2972
        %3915 = vmatprep.subr.bf16.mxu0 %v2957
        %3916 = vmatpush2.bf16.msra.mxu0 %v2956
        %3917 = vmatprep.subr.bf16.mxu0 %v2941
        %3918 = vmatpush2.bf16.msra.mxu0 %v2940
        %3919 = vmatprep.subr.bf16.mxu0 %v2925
        %3920 = vmatpush2.bf16.msra.mxu0 %v2924
        %3921 = vmatprep.subr.bf16.mxu0 %v2909
        %3922 = vmatpush2.bf16.msra.mxu0 %v2908
        %3923 = vmatprep.subr.bf16.mxu0 %v2893
        %3924 = vmatpush2.bf16.msra.mxu0 %v2892
        %3925 = vmatprep.mubr.bf16.mxu0 %v369
        %3926 = vmatmul.mubr.bf16.gmra.mxu0 %v368
        %v3927 = vpop.f32.mrf.mxu0
        %v3928 = vadd.f32 %v3887, %v3927
        %v3929 = vpop.f32.mrf.mxu0
        %v3930 = vadd.f32 %v3889, %v3929
        %v3931 = vpop.f32.mrf.mxu0
        %v3932 = vpop.f32.mrf.mxu0
        %3933 = vdwg.mxu0
        %3934 = vmatprep.subr.bf16.mxu0 %v2623
        %3935 = vmatpush1.bf16.msra.mxu0 %v2622
        %3936 = vmatprep.subr.bf16.mxu0 %v2607
        %3937 = vmatpush1.bf16.msra.mxu0 %v2606
        %3938 = vmatprep.subr.bf16.mxu0 %v2591
        %3939 = vmatpush1.bf16.msra.mxu0 %v2590
        %3940 = vmatprep.subr.bf16.mxu0 %v2575
        %3941 = vmatpush1.bf16.msra.mxu0 %v2574
        %3942 = vmatprep.subr.bf16.mxu0 %v2559
        %3943 = vmatpush1.bf16.msra.mxu0 %v2558
        %3944 = vmatprep.subr.bf16.mxu0 %v2543
        %3945 = vmatpush1.bf16.msra.mxu0 %v2542
        %3946 = vmatprep.subr.bf16.mxu0 %v2527
        %3947 = vmatpush1.bf16.msra.mxu0 %v2526
        %3948 = vmatprep.subr.bf16.mxu0 %v2511
        %3949 = vmatpush1.bf16.msra.mxu0 %v2510
        %3950 = vmatprep.subr.bf16.mxu0 %v2751
        %3951 = vmatpush2.bf16.msra.mxu0 %v2750
        %3952 = vmatprep.subr.bf16.mxu0 %v2735
        %3953 = vmatpush2.bf16.msra.mxu0 %v2734
        %3954 = vmatprep.subr.bf16.mxu0 %v2719
        %3955 = vmatpush2.bf16.msra.mxu0 %v2718
        %3956 = vmatprep.subr.bf16.mxu0 %v2703
        %3957 = vmatpush2.bf16.msra.mxu0 %v2702
        %3958 = vmatprep.subr.bf16.mxu0 %v2687
        %3959 = vmatpush2.bf16.msra.mxu0 %v2686
        %3960 = vmatprep.subr.bf16.mxu0 %v2671
        %3961 = vmatpush2.bf16.msra.mxu0 %v2670
        %3962 = vmatprep.subr.bf16.mxu0 %v2655
        %3963 = vmatpush2.bf16.msra.mxu0 %v2654
        %3964 = vmatprep.subr.bf16.mxu0 %v2639
        %3965 = vmatpush2.bf16.msra.mxu0 %v2638
        %3966 = vmatprep.mubr.bf16.mxu0 %v367
        %3967 = vmatmul.mubr.bf16.gmra.mxu0 %v366
        %v3968 = vpop.f32.mrf.mxu0
        %v3969 = vadd.f32 %v927, %v3968
        %v3970 = vpop.f32.mrf.mxu0
        %v3971 = vadd.f32 %v931, %v3970
        %v3972 = vpop.f32.mrf.mxu0
        %v3973 = vpop.f32.mrf.mxu0
        %3974 = vdwg.mxu0
        %3975 = vmatprep.subr.bf16.mxu0 %v2879
        %3976 = vmatpush1.bf16.msra.mxu0 %v2878
        %3977 = vmatprep.subr.bf16.mxu0 %v2863
        %3978 = vmatpush1.bf16.msra.mxu0 %v2862
        %3979 = vmatprep.subr.bf16.mxu0 %v2847
        %3980 = vmatpush1.bf16.msra.mxu0 %v2846
        %3981 = vmatprep.subr.bf16.mxu0 %v2831
        %3982 = vmatpush1.bf16.msra.mxu0 %v2830
        %3983 = vmatprep.subr.bf16.mxu0 %v2815
        %3984 = vmatpush1.bf16.msra.mxu0 %v2814
        %3985 = vmatprep.subr.bf16.mxu0 %v2799
        %3986 = vmatpush1.bf16.msra.mxu0 %v2798
        %3987 = vmatprep.subr.bf16.mxu0 %v2783
        %3988 = vmatpush1.bf16.msra.mxu0 %v2782
        %3989 = vmatprep.subr.bf16.mxu0 %v2767
        %3990 = vmatpush1.bf16.msra.mxu0 %v2766
        %3991 = vmatprep.subr.bf16.mxu0 %v3007
        %3992 = vmatpush2.bf16.msra.mxu0 %v3006
        %3993 = vmatprep.subr.bf16.mxu0 %v2991
        %3994 = vmatpush2.bf16.msra.mxu0 %v2990
        %3995 = vmatprep.subr.bf16.mxu0 %v2975
        %3996 = vmatpush2.bf16.msra.mxu0 %v2974
        %3997 = vmatprep.subr.bf16.mxu0 %v2959
        %3998 = vmatpush2.bf16.msra.mxu0 %v2958
        %3999 = vmatprep.subr.bf16.mxu0 %v2943
        %4000 = vmatpush2.bf16.msra.mxu0 %v2942
        %4001 = vmatprep.subr.bf16.mxu0 %v2927
        %4002 = vmatpush2.bf16.msra.mxu0 %v2926
        %4003 = vmatprep.subr.bf16.mxu0 %v2911
        %4004 = vmatpush2.bf16.msra.mxu0 %v2910
        %4005 = vmatprep.subr.bf16.mxu0 %v2895
        %4006 = vmatpush2.bf16.msra.mxu0 %v2894
        %4007 = vmatprep.mubr.bf16.mxu0 %v369
        %4008 = vmatmul.mubr.bf16.gmra.mxu0 %v368
        %v4009 = vpop.f32.mrf.mxu0
        %v4010 = vadd.f32 %v3969, %v4009
        %v4011 = vpop.f32.mrf.mxu0
        %v4012 = vadd.f32 %v3971, %v4011
        %v4013 = vpop.f32.mrf.mxu0
        %v4014 = vpop.f32.mrf.mxu0
        %4015 = vdwg.mxu0
        %4016 = vmatprep.subr.bf16.mxu0 %v2625
        %4017 = vmatpush1.bf16.msra.mxu0 %v2624
        %4018 = vmatprep.subr.bf16.mxu0 %v2609
        %4019 = vmatpush1.bf16.msra.mxu0 %v2608
        %4020 = vmatprep.subr.bf16.mxu0 %v2593
        %4021 = vmatpush1.bf16.msra.mxu0 %v2592
        %4022 = vmatprep.subr.bf16.mxu0 %v2577
        %4023 = vmatpush1.bf16.msra.mxu0 %v2576
        %4024 = vmatprep.subr.bf16.mxu0 %v2561
        %4025 = vmatpush1.bf16.msra.mxu0 %v2560
        %4026 = vmatprep.subr.bf16.mxu0 %v2545
        %4027 = vmatpush1.bf16.msra.mxu0 %v2544
        %4028 = vmatprep.subr.bf16.mxu0 %v2529
        %4029 = vmatpush1.bf16.msra.mxu0 %v2528
        %4030 = vmatprep.subr.bf16.mxu0 %v2513
        %4031 = vmatpush1.bf16.msra.mxu0 %v2512
        %4032 = vmatprep.subr.bf16.mxu0 %v2753
        %4033 = vmatpush2.bf16.msra.mxu0 %v2752
        %4034 = vmatprep.subr.bf16.mxu0 %v2737
        %4035 = vmatpush2.bf16.msra.mxu0 %v2736
        %4036 = vmatprep.subr.bf16.mxu0 %v2721
        %4037 = vmatpush2.bf16.msra.mxu0 %v2720
        %4038 = vmatprep.subr.bf16.mxu0 %v2705
        %4039 = vmatpush2.bf16.msra.mxu0 %v2704
        %4040 = vmatprep.subr.bf16.mxu0 %v2689
        %4041 = vmatpush2.bf16.msra.mxu0 %v2688
        %4042 = vmatprep.subr.bf16.mxu0 %v2673
        %4043 = vmatpush2.bf16.msra.mxu0 %v2672
        %4044 = vmatprep.subr.bf16.mxu0 %v2657
        %4045 = vmatpush2.bf16.msra.mxu0 %v2656
        %4046 = vmatprep.subr.bf16.mxu0 %v2641
        %4047 = vmatpush2.bf16.msra.mxu0 %v2640
        %4048 = vmatprep.mubr.bf16.mxu0 %v367
        %4049 = vmatmul.mubr.bf16.gmra.mxu0 %v366
        %v4050 = vpop.f32.mrf.mxu0
        %v4051 = vadd.f32 %v935, %v4050
        %v4052 = vpop.f32.mrf.mxu0
        %v4053 = vadd.f32 %v939, %v4052
        %v4054 = vpop.f32.mrf.mxu0
        %v4055 = vpop.f32.mrf.mxu0
        %4056 = vdwg.mxu0
        %4057 = vmatprep.subr.bf16.mxu0 %v2881
        %4058 = vmatpush1.bf16.msra.mxu0 %v2880
        %4059 = vmatprep.subr.bf16.mxu0 %v2865
        %4060 = vmatpush1.bf16.msra.mxu0 %v2864
        %4061 = vmatprep.subr.bf16.mxu0 %v2849
        %4062 = vmatpush1.bf16.msra.mxu0 %v2848
        %4063 = vmatprep.subr.bf16.mxu0 %v2833
        %4064 = vmatpush1.bf16.msra.mxu0 %v2832
        %4065 = vmatprep.subr.bf16.mxu0 %v2817
        %4066 = vmatpush1.bf16.msra.mxu0 %v2816
        %4067 = vmatprep.subr.bf16.mxu0 %v2801
        %4068 = vmatpush1.bf16.msra.mxu0 %v2800
        %4069 = vmatprep.subr.bf16.mxu0 %v2785
        %4070 = vmatpush1.bf16.msra.mxu0 %v2784
        %4071 = vmatprep.subr.bf16.mxu0 %v2769
        %4072 = vmatpush1.bf16.msra.mxu0 %v2768
        %4073 = vmatprep.subr.bf16.mxu0 %v3009
        %4074 = vmatpush2.bf16.msra.mxu0 %v3008
        %4075 = vmatprep.subr.bf16.mxu0 %v2993
        %4076 = vmatpush2.bf16.msra.mxu0 %v2992
        %4077 = vmatprep.subr.bf16.mxu0 %v2977
        %4078 = vmatpush2.bf16.msra.mxu0 %v2976
        %4079 = vmatprep.subr.bf16.mxu0 %v2961
        %4080 = vmatpush2.bf16.msra.mxu0 %v2960
        %4081 = vmatprep.subr.bf16.mxu0 %v2945
        %4082 = vmatpush2.bf16.msra.mxu0 %v2944
        %4083 = vmatprep.subr.bf16.mxu0 %v2929
        %4084 = vmatpush2.bf16.msra.mxu0 %v2928
        %4085 = vmatprep.subr.bf16.mxu0 %v2913
        %4086 = vmatpush2.bf16.msra.mxu0 %v2912
        %4087 = vmatprep.subr.bf16.mxu0 %v2897
        %4088 = vmatpush2.bf16.msra.mxu0 %v2896
        %4089 = vmatprep.mubr.bf16.mxu0 %v369
        %4090 = vmatmul.mubr.bf16.gmra.mxu0 %v368
        %v4091 = vpop.f32.mrf.mxu0
        %v4092 = vadd.f32 %v4051, %v4091
        %v4093 = vpop.f32.mrf.mxu0
        %v4094 = vadd.f32 %v4053, %v4093
        %v4095 = vpop.f32.mrf.mxu0
        %v4096 = vpop.f32.mrf.mxu0
        %4097 = vdwg.mxu0
        %4098 = vmatprep.subr.bf16.mxu0 %v2627
        %4099 = vmatpush1.bf16.msra.mxu0 %v2626
        %4100 = vmatprep.subr.bf16.mxu0 %v2611
        %4101 = vmatpush1.bf16.msra.mxu0 %v2610
        %4102 = vmatprep.subr.bf16.mxu0 %v2595
        %4103 = vmatpush1.bf16.msra.mxu0 %v2594
        %4104 = vmatprep.subr.bf16.mxu0 %v2579
        %4105 = vmatpush1.bf16.msra.mxu0 %v2578
        %4106 = vmatprep.subr.bf16.mxu0 %v2563
        %4107 = vmatpush1.bf16.msra.mxu0 %v2562
        %4108 = vmatprep.subr.bf16.mxu0 %v2547
        %4109 = vmatpush1.bf16.msra.mxu0 %v2546
        %4110 = vmatprep.subr.bf16.mxu0 %v2531
        %4111 = vmatpush1.bf16.msra.mxu0 %v2530
        %4112 = vmatprep.subr.bf16.mxu0 %v2515
        %4113 = vmatpush1.bf16.msra.mxu0 %v2514
        %4114 = vmatprep.subr.bf16.mxu0 %v2755
        %4115 = vmatpush2.bf16.msra.mxu0 %v2754
        %4116 = vmatprep.subr.bf16.mxu0 %v2739
        %4117 = vmatpush2.bf16.msra.mxu0 %v2738
        %4118 = vmatprep.subr.bf16.mxu0 %v2723
        %4119 = vmatpush2.bf16.msra.mxu0 %v2722
        %4120 = vmatprep.subr.bf16.mxu0 %v2707
        %4121 = vmatpush2.bf16.msra.mxu0 %v2706
        %4122 = vmatprep.subr.bf16.mxu0 %v2691
        %4123 = vmatpush2.bf16.msra.mxu0 %v2690
        %4124 = vmatprep.subr.bf16.mxu0 %v2675
        %4125 = vmatpush2.bf16.msra.mxu0 %v2674
        %4126 = vmatprep.subr.bf16.mxu0 %v2659
        %4127 = vmatpush2.bf16.msra.mxu0 %v2658
        %4128 = vmatprep.subr.bf16.mxu0 %v2643
        %4129 = vmatpush2.bf16.msra.mxu0 %v2642
        %4130 = vmatprep.mubr.bf16.mxu0 %v367
        %4131 = vmatmul.mubr.bf16.gmra.mxu0 %v366
        %v4132 = vpop.f32.mrf.mxu0
        %v4133 = vadd.f32 %v943, %v4132
        %v4134 = vpop.f32.mrf.mxu0
        %v4135 = vadd.f32 %v947, %v4134
        %v4136 = vpop.f32.mrf.mxu0
        %v4137 = vpop.f32.mrf.mxu0
        %4138 = vdwg.mxu0
        %4139 = vmatprep.subr.bf16.mxu0 %v2883
        %4140 = vmatpush1.bf16.msra.mxu0 %v2882
        %4141 = vmatprep.subr.bf16.mxu0 %v2867
        %4142 = vmatpush1.bf16.msra.mxu0 %v2866
        %4143 = vmatprep.subr.bf16.mxu0 %v2851
        %4144 = vmatpush1.bf16.msra.mxu0 %v2850
        %4145 = vmatprep.subr.bf16.mxu0 %v2835
        %4146 = vmatpush1.bf16.msra.mxu0 %v2834
        %4147 = vmatprep.subr.bf16.mxu0 %v2819
        %4148 = vmatpush1.bf16.msra.mxu0 %v2818
        %4149 = vmatprep.subr.bf16.mxu0 %v2803
        %4150 = vmatpush1.bf16.msra.mxu0 %v2802
        %4151 = vmatprep.subr.bf16.mxu0 %v2787
        %4152 = vmatpush1.bf16.msra.mxu0 %v2786
        %4153 = vmatprep.subr.bf16.mxu0 %v2771
        %4154 = vmatpush1.bf16.msra.mxu0 %v2770
        %4155 = vmatprep.subr.bf16.mxu0 %v3011
        %4156 = vmatpush2.bf16.msra.mxu0 %v3010
        %4157 = vmatprep.subr.bf16.mxu0 %v2995
        %4158 = vmatpush2.bf16.msra.mxu0 %v2994
        %4159 = vmatprep.subr.bf16.mxu0 %v2979
        %4160 = vmatpush2.bf16.msra.mxu0 %v2978
        %4161 = vmatprep.subr.bf16.mxu0 %v2963
        %4162 = vmatpush2.bf16.msra.mxu0 %v2962
        %4163 = vmatprep.subr.bf16.mxu0 %v2947
        %4164 = vmatpush2.bf16.msra.mxu0 %v2946
        %4165 = vmatprep.subr.bf16.mxu0 %v2931
        %4166 = vmatpush2.bf16.msra.mxu0 %v2930
        %4167 = vmatprep.subr.bf16.mxu0 %v2915
        %4168 = vmatpush2.bf16.msra.mxu0 %v2914
        %4169 = vmatprep.subr.bf16.mxu0 %v2899
        %4170 = vmatpush2.bf16.msra.mxu0 %v2898
        %4171 = vmatprep.mubr.bf16.mxu0 %v369
        %4172 = vmatmul.mubr.bf16.gmra.mxu0 %v368
        %v4173 = vpop.f32.mrf.mxu0
        %v4174 = vadd.f32 %v4133, %v4173
        %v4175 = vpop.f32.mrf.mxu0
        %v4176 = vadd.f32 %v4135, %v4175
        %v4177 = vpop.f32.mrf.mxu0
        %v4178 = vpop.f32.mrf.mxu0
        %4179 = vdwg.mxu0
        %v4180 = vmax.f32 %v3600, 0.0
        %v4181 = vmax.f32 %v3602, 0.0
        %v4182 = vmax.f32 %v3682, 0.0
        %v4183 = vmax.f32 %v3684, 0.0
        %v4184 = vmax.f32 %v3764, 0.0
        %v4185 = vmax.f32 %v3766, 0.0
        %v4186 = vmax.f32 %v3846, 0.0
        %v4187 = vmax.f32 %v3848, 0.0
        %v4188 = vmax.f32 %v3928, 0.0
        %v4189 = vmax.f32 %v3930, 0.0
        %v4190 = vmax.f32 %v4010, 0.0
        %v4191 = vmax.f32 %v4012, 0.0
        %v4192 = vmax.f32 %v4092, 0.0
        %v4193 = vmax.f32 %v4094, 0.0
        %v4194 = vmax.f32 %v4174, 0.0
        %v4195 = vmax.f32 %v4176, 0.0
        %v4196 = vld [vmem:[%s323] sm:$0xff]
        %v4197 = vld [vmem:[%s323 + $0x8] sm:$0xff]
        %v4198 = vld [vmem:[%s323 + $0x10] sm:$0xff]
        %v4199 = vld [vmem:[%s323 + $0x18] sm:$0xff]
        %v4200 = vpack.c.bf16 %v4180, %v4180
        %v4201 = vpack.c.bf16 %v4181, %v4181
        %v4202 = vpack.c.bf16 %v4182, %v4182
        %v4203 = vpack.c.bf16 %v4183, %v4183
        %v4204 = vpack.c.bf16 %v4184, %v4184
        %v4205 = vpack.c.bf16 %v4185, %v4185
        %v4206 = vpack.c.bf16 %v4186, %v4186
        %v4207 = vpack.c.bf16 %v4187, %v4187
        %v4208 = vpack.c.bf16 %v4188, %v4188
        %v4209 = vpack.c.bf16 %v4189, %v4189
        %v4210 = vpack.c.bf16 %v4190, %v4190
        %v4211 = vpack.c.bf16 %v4191, %v4191
        %v4212 = vpack.c.bf16 %v4192, %v4192
        %v4213 = vpack.c.bf16 %v4193, %v4193
        %v4214 = vpack.c.bf16 %v4194, %v4194
        %v4215 = vpack.c.bf16 %v4195, %v4195
        %v4216 = vld [vmem:[#allocation8] sm:$0xff]
        %v4217 = vld [vmem:[#allocation8 + $0x8] sm:$0xff]
        %v4218 = vld [vmem:[#allocation8 + $0x10] sm:$0xff]
        %v4219 = vld [vmem:[#allocation8 + $0x18] sm:$0xff]
        %v4220 = vld [vmem:[#allocation8 + $0x20] sm:$0xff]
        %v4221 = vld [vmem:[#allocation8 + $0x28] sm:$0xff]
        %v4222 = vld [vmem:[#allocation8 + $0x30] sm:$0xff]
        %v4223 = vld [vmem:[#allocation8 + $0x38] sm:$0xff]
        %v4224 = vld [vmem:[#allocation8 + $0x40] sm:$0xff]
        %v4225 = vld [vmem:[#allocation8 + $0x48] sm:$0xff]
        %v4226 = vld [vmem:[#allocation8 + $0x50] sm:$0xff]
        %v4227 = vld [vmem:[#allocation8 + $0x58] sm:$0xff]
        %v4228 = vld [vmem:[#allocation8 + $0x60] sm:$0xff]
        %v4229 = vld [vmem:[#allocation8 + $0x68] sm:$0xff]
        %v4230 = vld [vmem:[#allocation8 + $0x70] sm:$0xff]
        %v4231 = vld [vmem:[#allocation8 + $0x78] sm:$0xff]
        %v4232 = vld [vmem:[#allocation8 + $0x80] sm:$0xff]
        %v4233 = vld [vmem:[#allocation8 + $0x88] sm:$0xff]
        %v4234 = vld [vmem:[#allocation8 + $0x90] sm:$0xff]
        %v4235 = vld [vmem:[#allocation8 + $0x98] sm:$0xff]
        %v4236 = vld [vmem:[#allocation8 + $0xa0] sm:$0xff]
        %v4237 = vld [vmem:[#allocation8 + $0xa8] sm:$0xff]
        %v4238 = vld [vmem:[#allocation8 + $0xb0] sm:$0xff]
        %v4239 = vld [vmem:[#allocation8 + $0xb8] sm:$0xff]
        %v4240 = vld [vmem:[#allocation8 + $0xc0] sm:$0xff]
        %v4241 = vld [vmem:[#allocation8 + $0xc8] sm:$0xff]
        %v4242 = vld [vmem:[#allocation8 + $0xd0] sm:$0xff]
        %v4243 = vld [vmem:[#allocation8 + $0xd8] sm:$0xff]
        %v4244 = vld [vmem:[#allocation8 + $0xe0] sm:$0xff]
        %v4245 = vld [vmem:[#allocation8 + $0xe8] sm:$0xff]
        %v4246 = vld [vmem:[#allocation8 + $0xf0] sm:$0xff]
        %v4247 = vld [vmem:[#allocation8 + $0xf8] sm:$0xff]
        %v4248 = vld [vmem:[#allocation8 + $0x100] sm:$0xff]
        %v4249 = vld [vmem:[#allocation8 + $0x108] sm:$0xff]
        %v4250 = vld [vmem:[#allocation8 + $0x110] sm:$0xff]
        %v4251 = vld [vmem:[#allocation8 + $0x118] sm:$0xff]
        %v4252 = vld [vmem:[#allocation8 + $0x120] sm:$0xff]
        %v4253 = vld [vmem:[#allocation8 + $0x128] sm:$0xff]
        %v4254 = vld [vmem:[#allocation8 + $0x130] sm:$0xff]
        %v4255 = vld [vmem:[#allocation8 + $0x138] sm:$0xff]
        %v4256 = vld [vmem:[#allocation8 + $0x140] sm:$0xff]
        %v4257 = vld [vmem:[#allocation8 + $0x148] sm:$0xff]
        %v4258 = vld [vmem:[#allocation8 + $0x150] sm:$0xff]
        %v4259 = vld [vmem:[#allocation8 + $0x158] sm:$0xff]
        %v4260 = vld [vmem:[#allocation8 + $0x160] sm:$0xff]
        %v4261 = vld [vmem:[#allocation8 + $0x168] sm:$0xff]
        %v4262 = vld [vmem:[#allocation8 + $0x170] sm:$0xff]
        %v4263 = vld [vmem:[#allocation8 + $0x178] sm:$0xff]
        %v4264 = vld [vmem:[#allocation8 + $0x180] sm:$0xff]
        %v4265 = vld [vmem:[#allocation8 + $0x188] sm:$0xff]
        %v4266 = vld [vmem:[#allocation8 + $0x190] sm:$0xff]
        %v4267 = vld [vmem:[#allocation8 + $0x198] sm:$0xff]
        %v4268 = vld [vmem:[#allocation8 + $0x1a0] sm:$0xff]
        %v4269 = vld [vmem:[#allocation8 + $0x1a8] sm:$0xff]
        %v4270 = vld [vmem:[#allocation8 + $0x1b0] sm:$0xff]
        %v4271 = vld [vmem:[#allocation8 + $0x1b8] sm:$0xff]
        %v4272 = vld [vmem:[#allocation8 + $0x1c0] sm:$0xff]
        %v4273 = vld [vmem:[#allocation8 + $0x1c8] sm:$0xff]
        %v4274 = vld [vmem:[#allocation8 + $0x1d0] sm:$0xff]
        %v4275 = vld [vmem:[#allocation8 + $0x1d8] sm:$0xff]
        %v4276 = vld [vmem:[#allocation8 + $0x1e0] sm:$0xff]
        %v4277 = vld [vmem:[#allocation8 + $0x1e8] sm:$0xff]
        %v4278 = vld [vmem:[#allocation8 + $0x1f0] sm:$0xff]
        %v4279 = vld [vmem:[#allocation8 + $0x1f8] sm:$0xff]
        %v4280 = vld [vmem:[#allocation8 + $0x200] sm:$0xff]
        %v4281 = vld [vmem:[#allocation8 + $0x208] sm:$0xff]
        %v4282 = vld [vmem:[#allocation8 + $0x210] sm:$0xff]
        %v4283 = vld [vmem:[#allocation8 + $0x218] sm:$0xff]
        %v4284 = vld [vmem:[#allocation8 + $0x220] sm:$0xff]
        %v4285 = vld [vmem:[#allocation8 + $0x228] sm:$0xff]
        %v4286 = vld [vmem:[#allocation8 + $0x230] sm:$0xff]
        %v4287 = vld [vmem:[#allocation8 + $0x238] sm:$0xff]
        %v4288 = vld [vmem:[#allocation8 + $0x240] sm:$0xff]
        %v4289 = vld [vmem:[#allocation8 + $0x248] sm:$0xff]
        %v4290 = vld [vmem:[#allocation8 + $0x250] sm:$0xff]
        %v4291 = vld [vmem:[#allocation8 + $0x258] sm:$0xff]
        %v4292 = vld [vmem:[#allocation8 + $0x260] sm:$0xff]
        %v4293 = vld [vmem:[#allocation8 + $0x268] sm:$0xff]
        %v4294 = vld [vmem:[#allocation8 + $0x270] sm:$0xff]
        %v4295 = vld [vmem:[#allocation8 + $0x278] sm:$0xff]
        %v4296 = vld [vmem:[#allocation8 + $0x280] sm:$0xff]
        %v4297 = vld [vmem:[#allocation8 + $0x288] sm:$0xff]
        %v4298 = vld [vmem:[#allocation8 + $0x290] sm:$0xff]
        %v4299 = vld [vmem:[#allocation8 + $0x298] sm:$0xff]
        %v4300 = vld [vmem:[#allocation8 + $0x2a0] sm:$0xff]
        %v4301 = vld [vmem:[#allocation8 + $0x2a8] sm:$0xff]
        %v4302 = vld [vmem:[#allocation8 + $0x2b0] sm:$0xff]
        %v4303 = vld [vmem:[#allocation8 + $0x2b8] sm:$0xff]
        %v4304 = vld [vmem:[#allocation8 + $0x2c0] sm:$0xff]
        %v4305 = vld [vmem:[#allocation8 + $0x2c8] sm:$0xff]
        %v4306 = vld [vmem:[#allocation8 + $0x2d0] sm:$0xff]
        %v4307 = vld [vmem:[#allocation8 + $0x2d8] sm:$0xff]
        %v4308 = vld [vmem:[#allocation8 + $0x2e0] sm:$0xff]
        %v4309 = vld [vmem:[#allocation8 + $0x2e8] sm:$0xff]
        %v4310 = vld [vmem:[#allocation8 + $0x2f0] sm:$0xff]
        %v4311 = vld [vmem:[#allocation8 + $0x2f8] sm:$0xff]
        %v4312 = vld [vmem:[#allocation8 + $0x300] sm:$0xff]
        %v4313 = vld [vmem:[#allocation8 + $0x308] sm:$0xff]
        %v4314 = vld [vmem:[#allocation8 + $0x310] sm:$0xff]
        %v4315 = vld [vmem:[#allocation8 + $0x318] sm:$0xff]
        %v4316 = vld [vmem:[#allocation8 + $0x320] sm:$0xff]
        %v4317 = vld [vmem:[#allocation8 + $0x328] sm:$0xff]
        %v4318 = vld [vmem:[#allocation8 + $0x330] sm:$0xff]
        %v4319 = vld [vmem:[#allocation8 + $0x338] sm:$0xff]
        %v4320 = vld [vmem:[#allocation8 + $0x340] sm:$0xff]
        %v4321 = vld [vmem:[#allocation8 + $0x348] sm:$0xff]
        %v4322 = vld [vmem:[#allocation8 + $0x350] sm:$0xff]
        %v4323 = vld [vmem:[#allocation8 + $0x358] sm:$0xff]
        %v4324 = vld [vmem:[#allocation8 + $0x360] sm:$0xff]
        %v4325 = vld [vmem:[#allocation8 + $0x368] sm:$0xff]
        %v4326 = vld [vmem:[#allocation8 + $0x370] sm:$0xff]
        %v4327 = vld [vmem:[#allocation8 + $0x378] sm:$0xff]
        %v4328 = vld [vmem:[#allocation8 + $0x380] sm:$0xff]
        %v4329 = vld [vmem:[#allocation8 + $0x388] sm:$0xff]
        %v4330 = vld [vmem:[#allocation8 + $0x390] sm:$0xff]
        %v4331 = vld [vmem:[#allocation8 + $0x398] sm:$0xff]
        %v4332 = vld [vmem:[#allocation8 + $0x3a0] sm:$0xff]
        %v4333 = vld [vmem:[#allocation8 + $0x3a8] sm:$0xff]
        %v4334 = vld [vmem:[#allocation8 + $0x3b0] sm:$0xff]
        %v4335 = vld [vmem:[#allocation8 + $0x3b8] sm:$0xff]
        %v4336 = vld [vmem:[#allocation8 + $0x3c0] sm:$0xff]
        %v4337 = vld [vmem:[#allocation8 + $0x3c8] sm:$0xff]
        %v4338 = vld [vmem:[#allocation8 + $0x3d0] sm:$0xff]
        %v4339 = vld [vmem:[#allocation8 + $0x3d8] sm:$0xff]
        %v4340 = vld [vmem:[#allocation8 + $0x3e0] sm:$0xff]
        %v4341 = vld [vmem:[#allocation8 + $0x3e8] sm:$0xff]
        %v4342 = vld [vmem:[#allocation8 + $0x3f0] sm:$0xff]
        %v4343 = vld [vmem:[#allocation8 + $0x3f8] sm:$0xff]
        %v4344 = vld [vmem:[#allocation8 + $0x400] sm:$0xff]
        %v4345 = vld [vmem:[#allocation8 + $0x408] sm:$0xff]
        %v4346 = vld [vmem:[#allocation8 + $0x410] sm:$0xff]
        %v4347 = vld [vmem:[#allocation8 + $0x418] sm:$0xff]
        %v4348 = vld [vmem:[#allocation8 + $0x420] sm:$0xff]
        %v4349 = vld [vmem:[#allocation8 + $0x428] sm:$0xff]
        %v4350 = vld [vmem:[#allocation8 + $0x430] sm:$0xff]
        %v4351 = vld [vmem:[#allocation8 + $0x438] sm:$0xff]
        %v4352 = vld [vmem:[#allocation8 + $0x440] sm:$0xff]
        %v4353 = vld [vmem:[#allocation8 + $0x448] sm:$0xff]
        %v4354 = vld [vmem:[#allocation8 + $0x450] sm:$0xff]
        %v4355 = vld [vmem:[#allocation8 + $0x458] sm:$0xff]
        %v4356 = vld [vmem:[#allocation8 + $0x460] sm:$0xff]
        %v4357 = vld [vmem:[#allocation8 + $0x468] sm:$0xff]
        %v4358 = vld [vmem:[#allocation8 + $0x470] sm:$0xff]
        %v4359 = vld [vmem:[#allocation8 + $0x478] sm:$0xff]
        %v4360 = vld [vmem:[#allocation8 + $0x480] sm:$0xff]
        %v4361 = vld [vmem:[#allocation8 + $0x488] sm:$0xff]
        %v4362 = vld [vmem:[#allocation8 + $0x490] sm:$0xff]
        %v4363 = vld [vmem:[#allocation8 + $0x498] sm:$0xff]
        %v4364 = vld [vmem:[#allocation8 + $0x4a0] sm:$0xff]
        %v4365 = vld [vmem:[#allocation8 + $0x4a8] sm:$0xff]
        %v4366 = vld [vmem:[#allocation8 + $0x4b0] sm:$0xff]
        %v4367 = vld [vmem:[#allocation8 + $0x4b8] sm:$0xff]
        %v4368 = vld [vmem:[#allocation8 + $0x4c0] sm:$0xff]
        %v4369 = vld [vmem:[#allocation8 + $0x4c8] sm:$0xff]
        %v4370 = vld [vmem:[#allocation8 + $0x4d0] sm:$0xff]
        %v4371 = vld [vmem:[#allocation8 + $0x4d8] sm:$0xff]
        %v4372 = vld [vmem:[#allocation8 + $0x4e0] sm:$0xff]
        %v4373 = vld [vmem:[#allocation8 + $0x4e8] sm:$0xff]
        %v4374 = vld [vmem:[#allocation8 + $0x4f0] sm:$0xff]
        %v4375 = vld [vmem:[#allocation8 + $0x4f8] sm:$0xff]
        %v4376 = vld [vmem:[#allocation8 + $0x500] sm:$0xff]
        %v4377 = vld [vmem:[#allocation8 + $0x508] sm:$0xff]
        %v4378 = vld [vmem:[#allocation8 + $0x510] sm:$0xff]
        %v4379 = vld [vmem:[#allocation8 + $0x518] sm:$0xff]
        %v4380 = vld [vmem:[#allocation8 + $0x520] sm:$0xff]
        %v4381 = vld [vmem:[#allocation8 + $0x528] sm:$0xff]
        %v4382 = vld [vmem:[#allocation8 + $0x530] sm:$0xff]
        %v4383 = vld [vmem:[#allocation8 + $0x538] sm:$0xff]
        %v4384 = vld [vmem:[#allocation8 + $0x540] sm:$0xff]
        %v4385 = vld [vmem:[#allocation8 + $0x548] sm:$0xff]
        %v4386 = vld [vmem:[#allocation8 + $0x550] sm:$0xff]
        %v4387 = vld [vmem:[#allocation8 + $0x558] sm:$0xff]
        %v4388 = vld [vmem:[#allocation8 + $0x560] sm:$0xff]
        %v4389 = vld [vmem:[#allocation8 + $0x568] sm:$0xff]
        %v4390 = vld [vmem:[#allocation8 + $0x570] sm:$0xff]
        %v4391 = vld [vmem:[#allocation8 + $0x578] sm:$0xff]
        %v4392 = vld [vmem:[#allocation8 + $0x580] sm:$0xff]
        %v4393 = vld [vmem:[#allocation8 + $0x588] sm:$0xff]
        %v4394 = vld [vmem:[#allocation8 + $0x590] sm:$0xff]
        %v4395 = vld [vmem:[#allocation8 + $0x598] sm:$0xff]
        %v4396 = vld [vmem:[#allocation8 + $0x5a0] sm:$0xff]
        %v4397 = vld [vmem:[#allocation8 + $0x5a8] sm:$0xff]
        %v4398 = vld [vmem:[#allocation8 + $0x5b0] sm:$0xff]
        %v4399 = vld [vmem:[#allocation8 + $0x5b8] sm:$0xff]
        %v4400 = vld [vmem:[#allocation8 + $0x5c0] sm:$0xff]
        %v4401 = vld [vmem:[#allocation8 + $0x5c8] sm:$0xff]
        %v4402 = vld [vmem:[#allocation8 + $0x5d0] sm:$0xff]
        %v4403 = vld [vmem:[#allocation8 + $0x5d8] sm:$0xff]
        %v4404 = vld [vmem:[#allocation8 + $0x5e0] sm:$0xff]
        %v4405 = vld [vmem:[#allocation8 + $0x5e8] sm:$0xff]
        %v4406 = vld [vmem:[#allocation8 + $0x5f0] sm:$0xff]
        %v4407 = vld [vmem:[#allocation8 + $0x5f8] sm:$0xff]
        %v4408 = vld [vmem:[#allocation8 + $0x600] sm:$0xff]
        %v4409 = vld [vmem:[#allocation8 + $0x608] sm:$0xff]
        %v4410 = vld [vmem:[#allocation8 + $0x610] sm:$0xff]
        %v4411 = vld [vmem:[#allocation8 + $0x618] sm:$0xff]
        %v4412 = vld [vmem:[#allocation8 + $0x620] sm:$0xff]
        %v4413 = vld [vmem:[#allocation8 + $0x628] sm:$0xff]
        %v4414 = vld [vmem:[#allocation8 + $0x630] sm:$0xff]
        %v4415 = vld [vmem:[#allocation8 + $0x638] sm:$0xff]
        %v4416 = vld [vmem:[#allocation8 + $0x640] sm:$0xff]
        %v4417 = vld [vmem:[#allocation8 + $0x648] sm:$0xff]
        %v4418 = vld [vmem:[#allocation8 + $0x650] sm:$0xff]
        %v4419 = vld [vmem:[#allocation8 + $0x658] sm:$0xff]
        %v4420 = vld [vmem:[#allocation8 + $0x660] sm:$0xff]
        %v4421 = vld [vmem:[#allocation8 + $0x668] sm:$0xff]
        %v4422 = vld [vmem:[#allocation8 + $0x670] sm:$0xff]
        %v4423 = vld [vmem:[#allocation8 + $0x678] sm:$0xff]
        %v4424 = vld [vmem:[#allocation8 + $0x680] sm:$0xff]
        %v4425 = vld [vmem:[#allocation8 + $0x688] sm:$0xff]
        %v4426 = vld [vmem:[#allocation8 + $0x690] sm:$0xff]
        %v4427 = vld [vmem:[#allocation8 + $0x698] sm:$0xff]
        %v4428 = vld [vmem:[#allocation8 + $0x6a0] sm:$0xff]
        %v4429 = vld [vmem:[#allocation8 + $0x6a8] sm:$0xff]
        %v4430 = vld [vmem:[#allocation8 + $0x6b0] sm:$0xff]
        %v4431 = vld [vmem:[#allocation8 + $0x6b8] sm:$0xff]
        %v4432 = vld [vmem:[#allocation8 + $0x6c0] sm:$0xff]
        %v4433 = vld [vmem:[#allocation8 + $0x6c8] sm:$0xff]
        %v4434 = vld [vmem:[#allocation8 + $0x6d0] sm:$0xff]
        %v4435 = vld [vmem:[#allocation8 + $0x6d8] sm:$0xff]
        %v4436 = vld [vmem:[#allocation8 + $0x6e0] sm:$0xff]
        %v4437 = vld [vmem:[#allocation8 + $0x6e8] sm:$0xff]
        %v4438 = vld [vmem:[#allocation8 + $0x6f0] sm:$0xff]
        %v4439 = vld [vmem:[#allocation8 + $0x6f8] sm:$0xff]
        %v4440 = vld [vmem:[#allocation8 + $0x700] sm:$0xff]
        %v4441 = vld [vmem:[#allocation8 + $0x708] sm:$0xff]
        %v4442 = vld [vmem:[#allocation8 + $0x710] sm:$0xff]
        %v4443 = vld [vmem:[#allocation8 + $0x718] sm:$0xff]
        %v4444 = vld [vmem:[#allocation8 + $0x720] sm:$0xff]
        %v4445 = vld [vmem:[#allocation8 + $0x728] sm:$0xff]
        %v4446 = vld [vmem:[#allocation8 + $0x730] sm:$0xff]
        %v4447 = vld [vmem:[#allocation8 + $0x738] sm:$0xff]
        %v4448 = vld [vmem:[#allocation8 + $0x740] sm:$0xff]
        %v4449 = vld [vmem:[#allocation8 + $0x748] sm:$0xff]
        %v4450 = vld [vmem:[#allocation8 + $0x750] sm:$0xff]
        %v4451 = vld [vmem:[#allocation8 + $0x758] sm:$0xff]
        %v4452 = vld [vmem:[#allocation8 + $0x760] sm:$0xff]
        %v4453 = vld [vmem:[#allocation8 + $0x768] sm:$0xff]
        %v4454 = vld [vmem:[#allocation8 + $0x770] sm:$0xff]
        %v4455 = vld [vmem:[#allocation8 + $0x778] sm:$0xff]
        %v4456 = vld [vmem:[#allocation8 + $0x780] sm:$0xff]
        %v4457 = vld [vmem:[#allocation8 + $0x788] sm:$0xff]
        %v4458 = vld [vmem:[#allocation8 + $0x790] sm:$0xff]
        %v4459 = vld [vmem:[#allocation8 + $0x798] sm:$0xff]
        %v4460 = vld [vmem:[#allocation8 + $0x7a0] sm:$0xff]
        %v4461 = vld [vmem:[#allocation8 + $0x7a8] sm:$0xff]
        %v4462 = vld [vmem:[#allocation8 + $0x7b0] sm:$0xff]
        %v4463 = vld [vmem:[#allocation8 + $0x7b8] sm:$0xff]
        %v4464 = vld [vmem:[#allocation8 + $0x7c0] sm:$0xff]
        %v4465 = vld [vmem:[#allocation8 + $0x7c8] sm:$0xff]
        %v4466 = vld [vmem:[#allocation8 + $0x7d0] sm:$0xff]
        %v4467 = vld [vmem:[#allocation8 + $0x7d8] sm:$0xff]
        %v4468 = vld [vmem:[#allocation8 + $0x7e0] sm:$0xff]
        %v4469 = vld [vmem:[#allocation8 + $0x7e8] sm:$0xff]
        %v4470 = vld [vmem:[#allocation8 + $0x7f0] sm:$0xff]
        %v4471 = vld [vmem:[#allocation8 + $0x7f8] sm:$0xff]
        %v4472 = vld [vmem:[#allocation8 + $0x800] sm:$0xff]
        %v4473 = vld [vmem:[#allocation8 + $0x808] sm:$0xff]
        %v4474 = vld [vmem:[#allocation8 + $0x810] sm:$0xff]
        %v4475 = vld [vmem:[#allocation8 + $0x818] sm:$0xff]
        %v4476 = vld [vmem:[#allocation8 + $0x820] sm:$0xff]
        %v4477 = vld [vmem:[#allocation8 + $0x828] sm:$0xff]
        %v4478 = vld [vmem:[#allocation8 + $0x830] sm:$0xff]
        %v4479 = vld [vmem:[#allocation8 + $0x838] sm:$0xff]
        %v4480 = vld [vmem:[#allocation8 + $0x840] sm:$0xff]
        %v4481 = vld [vmem:[#allocation8 + $0x848] sm:$0xff]
        %v4482 = vld [vmem:[#allocation8 + $0x850] sm:$0xff]
        %v4483 = vld [vmem:[#allocation8 + $0x858] sm:$0xff]
        %v4484 = vld [vmem:[#allocation8 + $0x860] sm:$0xff]
        %v4485 = vld [vmem:[#allocation8 + $0x868] sm:$0xff]
        %v4486 = vld [vmem:[#allocation8 + $0x870] sm:$0xff]
        %v4487 = vld [vmem:[#allocation8 + $0x878] sm:$0xff]
        %v4488 = vld [vmem:[#allocation8 + $0x880] sm:$0xff]
        %v4489 = vld [vmem:[#allocation8 + $0x888] sm:$0xff]
        %v4490 = vld [vmem:[#allocation8 + $0x890] sm:$0xff]
        %v4491 = vld [vmem:[#allocation8 + $0x898] sm:$0xff]
        %v4492 = vld [vmem:[#allocation8 + $0x8a0] sm:$0xff]
        %v4493 = vld [vmem:[#allocation8 + $0x8a8] sm:$0xff]
        %v4494 = vld [vmem:[#allocation8 + $0x8b0] sm:$0xff]
        %v4495 = vld [vmem:[#allocation8 + $0x8b8] sm:$0xff]
        %v4496 = vld [vmem:[#allocation8 + $0x8c0] sm:$0xff]
        %v4497 = vld [vmem:[#allocation8 + $0x8c8] sm:$0xff]
        %v4498 = vld [vmem:[#allocation8 + $0x8d0] sm:$0xff]
        %v4499 = vld [vmem:[#allocation8 + $0x8d8] sm:$0xff]
        %v4500 = vld [vmem:[#allocation8 + $0x8e0] sm:$0xff]
        %v4501 = vld [vmem:[#allocation8 + $0x8e8] sm:$0xff]
        %v4502 = vld [vmem:[#allocation8 + $0x8f0] sm:$0xff]
        %v4503 = vld [vmem:[#allocation8 + $0x8f8] sm:$0xff]
        %v4504 = vld [vmem:[#allocation8 + $0x900] sm:$0xff]
        %v4505 = vld [vmem:[#allocation8 + $0x908] sm:$0xff]
        %v4506 = vld [vmem:[#allocation8 + $0x910] sm:$0xff]
        %v4507 = vld [vmem:[#allocation8 + $0x918] sm:$0xff]
        %v4508 = vld [vmem:[#allocation8 + $0x920] sm:$0xff]
        %v4509 = vld [vmem:[#allocation8 + $0x928] sm:$0xff]
        %v4510 = vld [vmem:[#allocation8 + $0x930] sm:$0xff]
        %v4511 = vld [vmem:[#allocation8 + $0x938] sm:$0xff]
        %v4512 = vld [vmem:[#allocation8 + $0x940] sm:$0xff]
        %v4513 = vld [vmem:[#allocation8 + $0x948] sm:$0xff]
        %v4514 = vld [vmem:[#allocation8 + $0x950] sm:$0xff]
        %v4515 = vld [vmem:[#allocation8 + $0x958] sm:$0xff]
        %v4516 = vld [vmem:[#allocation8 + $0x960] sm:$0xff]
        %v4517 = vld [vmem:[#allocation8 + $0x968] sm:$0xff]
        %v4518 = vld [vmem:[#allocation8 + $0x970] sm:$0xff]
        %v4519 = vld [vmem:[#allocation8 + $0x978] sm:$0xff]
        %v4520 = vld [vmem:[#allocation8 + $0x980] sm:$0xff]
        %v4521 = vld [vmem:[#allocation8 + $0x988] sm:$0xff]
        %v4522 = vld [vmem:[#allocation8 + $0x990] sm:$0xff]
        %v4523 = vld [vmem:[#allocation8 + $0x998] sm:$0xff]
        %v4524 = vld [vmem:[#allocation8 + $0x9a0] sm:$0xff]
        %v4525 = vld [vmem:[#allocation8 + $0x9a8] sm:$0xff]
        %v4526 = vld [vmem:[#allocation8 + $0x9b0] sm:$0xff]
        %v4527 = vld [vmem:[#allocation8 + $0x9b8] sm:$0xff]
        %v4528 = vld [vmem:[#allocation8 + $0x9c0] sm:$0xff]
        %v4529 = vld [vmem:[#allocation8 + $0x9c8] sm:$0xff]
        %v4530 = vld [vmem:[#allocation8 + $0x9d0] sm:$0xff]
        %v4531 = vld [vmem:[#allocation8 + $0x9d8] sm:$0xff]
        %v4532 = vld [vmem:[#allocation8 + $0x9e0] sm:$0xff]
        %v4533 = vld [vmem:[#allocation8 + $0x9e8] sm:$0xff]
        %v4534 = vld [vmem:[#allocation8 + $0x9f0] sm:$0xff]
        %v4535 = vld [vmem:[#allocation8 + $0x9f8] sm:$0xff]
        %v4536 = vld [vmem:[#allocation8 + $0xa00] sm:$0xff]
        %v4537 = vld [vmem:[#allocation8 + $0xa08] sm:$0xff]
        %v4538 = vld [vmem:[#allocation8 + $0xa10] sm:$0xff]
        %v4539 = vld [vmem:[#allocation8 + $0xa18] sm:$0xff]
        %v4540 = vld [vmem:[#allocation8 + $0xa20] sm:$0xff]
        %v4541 = vld [vmem:[#allocation8 + $0xa28] sm:$0xff]
        %v4542 = vld [vmem:[#allocation8 + $0xa30] sm:$0xff]
        %v4543 = vld [vmem:[#allocation8 + $0xa38] sm:$0xff]
        %v4544 = vld [vmem:[#allocation8 + $0xa40] sm:$0xff]
        %v4545 = vld [vmem:[#allocation8 + $0xa48] sm:$0xff]
        %v4546 = vld [vmem:[#allocation8 + $0xa50] sm:$0xff]
        %v4547 = vld [vmem:[#allocation8 + $0xa58] sm:$0xff]
        %v4548 = vld [vmem:[#allocation8 + $0xa60] sm:$0xff]
        %v4549 = vld [vmem:[#allocation8 + $0xa68] sm:$0xff]
        %v4550 = vld [vmem:[#allocation8 + $0xa70] sm:$0xff]
        %v4551 = vld [vmem:[#allocation8 + $0xa78] sm:$0xff]
        %v4552 = vld [vmem:[#allocation8 + $0xa80] sm:$0xff]
        %v4553 = vld [vmem:[#allocation8 + $0xa88] sm:$0xff]
        %v4554 = vld [vmem:[#allocation8 + $0xa90] sm:$0xff]
        %v4555 = vld [vmem:[#allocation8 + $0xa98] sm:$0xff]
        %v4556 = vld [vmem:[#allocation8 + $0xaa0] sm:$0xff]
        %v4557 = vld [vmem:[#allocation8 + $0xaa8] sm:$0xff]
        %v4558 = vld [vmem:[#allocation8 + $0xab0] sm:$0xff]
        %v4559 = vld [vmem:[#allocation8 + $0xab8] sm:$0xff]
        %v4560 = vld [vmem:[#allocation8 + $0xac0] sm:$0xff]
        %v4561 = vld [vmem:[#allocation8 + $0xac8] sm:$0xff]
        %v4562 = vld [vmem:[#allocation8 + $0xad0] sm:$0xff]
        %v4563 = vld [vmem:[#allocation8 + $0xad8] sm:$0xff]
        %v4564 = vld [vmem:[#allocation8 + $0xae0] sm:$0xff]
        %v4565 = vld [vmem:[#allocation8 + $0xae8] sm:$0xff]
        %v4566 = vld [vmem:[#allocation8 + $0xaf0] sm:$0xff]
        %v4567 = vld [vmem:[#allocation8 + $0xaf8] sm:$0xff]
        %v4568 = vld [vmem:[#allocation8 + $0xb00] sm:$0xff]
        %v4569 = vld [vmem:[#allocation8 + $0xb08] sm:$0xff]
        %v4570 = vld [vmem:[#allocation8 + $0xb10] sm:$0xff]
        %v4571 = vld [vmem:[#allocation8 + $0xb18] sm:$0xff]
        %v4572 = vld [vmem:[#allocation8 + $0xb20] sm:$0xff]
        %v4573 = vld [vmem:[#allocation8 + $0xb28] sm:$0xff]
        %v4574 = vld [vmem:[#allocation8 + $0xb30] sm:$0xff]
        %v4575 = vld [vmem:[#allocation8 + $0xb38] sm:$0xff]
        %v4576 = vld [vmem:[#allocation8 + $0xb40] sm:$0xff]
        %v4577 = vld [vmem:[#allocation8 + $0xb48] sm:$0xff]
        %v4578 = vld [vmem:[#allocation8 + $0xb50] sm:$0xff]
        %v4579 = vld [vmem:[#allocation8 + $0xb58] sm:$0xff]
        %v4580 = vld [vmem:[#allocation8 + $0xb60] sm:$0xff]
        %v4581 = vld [vmem:[#allocation8 + $0xb68] sm:$0xff]
        %v4582 = vld [vmem:[#allocation8 + $0xb70] sm:$0xff]
        %v4583 = vld [vmem:[#allocation8 + $0xb78] sm:$0xff]
        %v4584 = vld [vmem:[#allocation8 + $0xb80] sm:$0xff]
        %v4585 = vld [vmem:[#allocation8 + $0xb88] sm:$0xff]
        %v4586 = vld [vmem:[#allocation8 + $0xb90] sm:$0xff]
        %v4587 = vld [vmem:[#allocation8 + $0xb98] sm:$0xff]
        %v4588 = vld [vmem:[#allocation8 + $0xba0] sm:$0xff]
        %v4589 = vld [vmem:[#allocation8 + $0xba8] sm:$0xff]
        %v4590 = vld [vmem:[#allocation8 + $0xbb0] sm:$0xff]
        %v4591 = vld [vmem:[#allocation8 + $0xbb8] sm:$0xff]
        %v4592 = vld [vmem:[#allocation8 + $0xbc0] sm:$0xff]
        %v4593 = vld [vmem:[#allocation8 + $0xbc8] sm:$0xff]
        %v4594 = vld [vmem:[#allocation8 + $0xbd0] sm:$0xff]
        %v4595 = vld [vmem:[#allocation8 + $0xbd8] sm:$0xff]
        %v4596 = vld [vmem:[#allocation8 + $0xbe0] sm:$0xff]
        %v4597 = vld [vmem:[#allocation8 + $0xbe8] sm:$0xff]
        %v4598 = vld [vmem:[#allocation8 + $0xbf0] sm:$0xff]
        %v4599 = vld [vmem:[#allocation8 + $0xbf8] sm:$0xff]
        %v4600 = vld [vmem:[#allocation8 + $0xc00] sm:$0xff]
        %v4601 = vld [vmem:[#allocation8 + $0xc08] sm:$0xff]
        %v4602 = vld [vmem:[#allocation8 + $0xc10] sm:$0xff]
        %v4603 = vld [vmem:[#allocation8 + $0xc18] sm:$0xff]
        %v4604 = vld [vmem:[#allocation8 + $0xc20] sm:$0xff]
        %v4605 = vld [vmem:[#allocation8 + $0xc28] sm:$0xff]
        %v4606 = vld [vmem:[#allocation8 + $0xc30] sm:$0xff]
        %v4607 = vld [vmem:[#allocation8 + $0xc38] sm:$0xff]
        %v4608 = vld [vmem:[#allocation8 + $0xc40] sm:$0xff]
        %v4609 = vld [vmem:[#allocation8 + $0xc48] sm:$0xff]
        %v4610 = vld [vmem:[#allocation8 + $0xc50] sm:$0xff]
        %v4611 = vld [vmem:[#allocation8 + $0xc58] sm:$0xff]
        %v4612 = vld [vmem:[#allocation8 + $0xc60] sm:$0xff]
        %v4613 = vld [vmem:[#allocation8 + $0xc68] sm:$0xff]
        %v4614 = vld [vmem:[#allocation8 + $0xc70] sm:$0xff]
        %v4615 = vld [vmem:[#allocation8 + $0xc78] sm:$0xff]
        %v4616 = vld [vmem:[#allocation8 + $0xc80] sm:$0xff]
        %v4617 = vld [vmem:[#allocation8 + $0xc88] sm:$0xff]
        %v4618 = vld [vmem:[#allocation8 + $0xc90] sm:$0xff]
        %v4619 = vld [vmem:[#allocation8 + $0xc98] sm:$0xff]
        %v4620 = vld [vmem:[#allocation8 + $0xca0] sm:$0xff]
        %v4621 = vld [vmem:[#allocation8 + $0xca8] sm:$0xff]
        %v4622 = vld [vmem:[#allocation8 + $0xcb0] sm:$0xff]
        %v4623 = vld [vmem:[#allocation8 + $0xcb8] sm:$0xff]
        %v4624 = vld [vmem:[#allocation8 + $0xcc0] sm:$0xff]
        %v4625 = vld [vmem:[#allocation8 + $0xcc8] sm:$0xff]
        %v4626 = vld [vmem:[#allocation8 + $0xcd0] sm:$0xff]
        %v4627 = vld [vmem:[#allocation8 + $0xcd8] sm:$0xff]
        %v4628 = vld [vmem:[#allocation8 + $0xce0] sm:$0xff]
        %v4629 = vld [vmem:[#allocation8 + $0xce8] sm:$0xff]
        %v4630 = vld [vmem:[#allocation8 + $0xcf0] sm:$0xff]
        %v4631 = vld [vmem:[#allocation8 + $0xcf8] sm:$0xff]
        %v4632 = vld [vmem:[#allocation8 + $0xd00] sm:$0xff]
        %v4633 = vld [vmem:[#allocation8 + $0xd08] sm:$0xff]
        %v4634 = vld [vmem:[#allocation8 + $0xd10] sm:$0xff]
        %v4635 = vld [vmem:[#allocation8 + $0xd18] sm:$0xff]
        %v4636 = vld [vmem:[#allocation8 + $0xd20] sm:$0xff]
        %v4637 = vld [vmem:[#allocation8 + $0xd28] sm:$0xff]
        %v4638 = vld [vmem:[#allocation8 + $0xd30] sm:$0xff]
        %v4639 = vld [vmem:[#allocation8 + $0xd38] sm:$0xff]
        %v4640 = vld [vmem:[#allocation8 + $0xd40] sm:$0xff]
        %v4641 = vld [vmem:[#allocation8 + $0xd48] sm:$0xff]
        %v4642 = vld [vmem:[#allocation8 + $0xd50] sm:$0xff]
        %v4643 = vld [vmem:[#allocation8 + $0xd58] sm:$0xff]
        %v4644 = vld [vmem:[#allocation8 + $0xd60] sm:$0xff]
        %v4645 = vld [vmem:[#allocation8 + $0xd68] sm:$0xff]
        %v4646 = vld [vmem:[#allocation8 + $0xd70] sm:$0xff]
        %v4647 = vld [vmem:[#allocation8 + $0xd78] sm:$0xff]
        %v4648 = vld [vmem:[#allocation8 + $0xd80] sm:$0xff]
        %v4649 = vld [vmem:[#allocation8 + $0xd88] sm:$0xff]
        %v4650 = vld [vmem:[#allocation8 + $0xd90] sm:$0xff]
        %v4651 = vld [vmem:[#allocation8 + $0xd98] sm:$0xff]
        %v4652 = vld [vmem:[#allocation8 + $0xda0] sm:$0xff]
        %v4653 = vld [vmem:[#allocation8 + $0xda8] sm:$0xff]
        %v4654 = vld [vmem:[#allocation8 + $0xdb0] sm:$0xff]
        %v4655 = vld [vmem:[#allocation8 + $0xdb8] sm:$0xff]
        %v4656 = vld [vmem:[#allocation8 + $0xdc0] sm:$0xff]
        %v4657 = vld [vmem:[#allocation8 + $0xdc8] sm:$0xff]
        %v4658 = vld [vmem:[#allocation8 + $0xdd0] sm:$0xff]
        %v4659 = vld [vmem:[#allocation8 + $0xdd8] sm:$0xff]
        %v4660 = vld [vmem:[#allocation8 + $0xde0] sm:$0xff]
        %v4661 = vld [vmem:[#allocation8 + $0xde8] sm:$0xff]
        %v4662 = vld [vmem:[#allocation8 + $0xdf0] sm:$0xff]
        %v4663 = vld [vmem:[#allocation8 + $0xdf8] sm:$0xff]
        %v4664 = vld [vmem:[#allocation8 + $0xe00] sm:$0xff]
        %v4665 = vld [vmem:[#allocation8 + $0xe08] sm:$0xff]
        %v4666 = vld [vmem:[#allocation8 + $0xe10] sm:$0xff]
        %v4667 = vld [vmem:[#allocation8 + $0xe18] sm:$0xff]
        %v4668 = vld [vmem:[#allocation8 + $0xe20] sm:$0xff]
        %v4669 = vld [vmem:[#allocation8 + $0xe28] sm:$0xff]
        %v4670 = vld [vmem:[#allocation8 + $0xe30] sm:$0xff]
        %v4671 = vld [vmem:[#allocation8 + $0xe38] sm:$0xff]
        %v4672 = vld [vmem:[#allocation8 + $0xe40] sm:$0xff]
        %v4673 = vld [vmem:[#allocation8 + $0xe48] sm:$0xff]
        %v4674 = vld [vmem:[#allocation8 + $0xe50] sm:$0xff]
        %v4675 = vld [vmem:[#allocation8 + $0xe58] sm:$0xff]
        %v4676 = vld [vmem:[#allocation8 + $0xe60] sm:$0xff]
        %v4677 = vld [vmem:[#allocation8 + $0xe68] sm:$0xff]
        %v4678 = vld [vmem:[#allocation8 + $0xe70] sm:$0xff]
        %v4679 = vld [vmem:[#allocation8 + $0xe78] sm:$0xff]
        %v4680 = vld [vmem:[#allocation8 + $0xe80] sm:$0xff]
        %v4681 = vld [vmem:[#allocation8 + $0xe88] sm:$0xff]
        %v4682 = vld [vmem:[#allocation8 + $0xe90] sm:$0xff]
        %v4683 = vld [vmem:[#allocation8 + $0xe98] sm:$0xff]
        %v4684 = vld [vmem:[#allocation8 + $0xea0] sm:$0xff]
        %v4685 = vld [vmem:[#allocation8 + $0xea8] sm:$0xff]
        %v4686 = vld [vmem:[#allocation8 + $0xeb0] sm:$0xff]
        %v4687 = vld [vmem:[#allocation8 + $0xeb8] sm:$0xff]
        %v4688 = vld [vmem:[#allocation8 + $0xec0] sm:$0xff]
        %v4689 = vld [vmem:[#allocation8 + $0xec8] sm:$0xff]
        %v4690 = vld [vmem:[#allocation8 + $0xed0] sm:$0xff]
        %v4691 = vld [vmem:[#allocation8 + $0xed8] sm:$0xff]
        %v4692 = vld [vmem:[#allocation8 + $0xee0] sm:$0xff]
        %v4693 = vld [vmem:[#allocation8 + $0xee8] sm:$0xff]
        %v4694 = vld [vmem:[#allocation8 + $0xef0] sm:$0xff]
        %v4695 = vld [vmem:[#allocation8 + $0xef8] sm:$0xff]
        %v4696 = vld [vmem:[#allocation8 + $0xf00] sm:$0xff]
        %v4697 = vld [vmem:[#allocation8 + $0xf08] sm:$0xff]
        %v4698 = vld [vmem:[#allocation8 + $0xf10] sm:$0xff]
        %v4699 = vld [vmem:[#allocation8 + $0xf18] sm:$0xff]
        %v4700 = vld [vmem:[#allocation8 + $0xf20] sm:$0xff]
        %v4701 = vld [vmem:[#allocation8 + $0xf28] sm:$0xff]
        %v4702 = vld [vmem:[#allocation8 + $0xf30] sm:$0xff]
        %v4703 = vld [vmem:[#allocation8 + $0xf38] sm:$0xff]
        %v4704 = vld [vmem:[#allocation8 + $0xf40] sm:$0xff]
        %v4705 = vld [vmem:[#allocation8 + $0xf48] sm:$0xff]
        %v4706 = vld [vmem:[#allocation8 + $0xf50] sm:$0xff]
        %v4707 = vld [vmem:[#allocation8 + $0xf58] sm:$0xff]
        %v4708 = vld [vmem:[#allocation8 + $0xf60] sm:$0xff]
        %v4709 = vld [vmem:[#allocation8 + $0xf68] sm:$0xff]
        %v4710 = vld [vmem:[#allocation8 + $0xf70] sm:$0xff]
        %v4711 = vld [vmem:[#allocation8 + $0xf78] sm:$0xff]
        %v4712 = vld [vmem:[#allocation8 + $0xf80] sm:$0xff]
        %v4713 = vld [vmem:[#allocation8 + $0xf88] sm:$0xff]
        %v4714 = vld [vmem:[#allocation8 + $0xf90] sm:$0xff]
        %v4715 = vld [vmem:[#allocation8 + $0xf98] sm:$0xff]
        %v4716 = vld [vmem:[#allocation8 + $0xfa0] sm:$0xff]
        %v4717 = vld [vmem:[#allocation8 + $0xfa8] sm:$0xff]
        %v4718 = vld [vmem:[#allocation8 + $0xfb0] sm:$0xff]
        %v4719 = vld [vmem:[#allocation8 + $0xfb8] sm:$0xff]
        %v4720 = vld [vmem:[#allocation8 + $0xfc0] sm:$0xff]
        %v4721 = vld [vmem:[#allocation8 + $0xfc8] sm:$0xff]
        %v4722 = vld [vmem:[#allocation8 + $0xfd0] sm:$0xff]
        %v4723 = vld [vmem:[#allocation8 + $0xfd8] sm:$0xff]
        %v4724 = vld [vmem:[#allocation8 + $0xfe0] sm:$0xff]
        %v4725 = vld [vmem:[#allocation8 + $0xfe8] sm:$0xff]
        %v4726 = vld [vmem:[#allocation8 + $0xff0] sm:$0xff]
        %v4727 = vld [vmem:[#allocation8 + $0xff8] sm:$0xff]
        %v5240 = vunpack.c.l.b16 %v4216
        %v5241 = vunpack.c.h.b16 %v4216
        %v5242 = vunpack.c.l.b16 %v4217
        %v5243 = vunpack.c.h.b16 %v4217
        %v5244 = vunpack.c.l.b16 %v4218
        %v5245 = vunpack.c.h.b16 %v4218
        %v5246 = vunpack.c.l.b16 %v4219
        %v5247 = vunpack.c.h.b16 %v4219
        %v5248 = vunpack.c.l.b16 %v4220
        %v5249 = vunpack.c.h.b16 %v4220
        %v5250 = vunpack.c.l.b16 %v4221
        %v5251 = vunpack.c.h.b16 %v4221
        %v5252 = vunpack.c.l.b16 %v4222
        %v5253 = vunpack.c.h.b16 %v4222
        %v5254 = vunpack.c.l.b16 %v4223
        %v5255 = vunpack.c.h.b16 %v4223
        %v5256 = vunpack.c.l.b16 %v4224
        %v5257 = vunpack.c.h.b16 %v4224
        %v5258 = vunpack.c.l.b16 %v4225
        %v5259 = vunpack.c.h.b16 %v4225
        %v5260 = vunpack.c.l.b16 %v4226
        %v5261 = vunpack.c.h.b16 %v4226
        %v5262 = vunpack.c.l.b16 %v4227
        %v5263 = vunpack.c.h.b16 %v4227
        %v5264 = vunpack.c.l.b16 %v4228
        %v5265 = vunpack.c.h.b16 %v4228
        %v5266 = vunpack.c.l.b16 %v4229
        %v5267 = vunpack.c.h.b16 %v4229
        %v5268 = vunpack.c.l.b16 %v4230
        %v5269 = vunpack.c.h.b16 %v4230
        %v5270 = vunpack.c.l.b16 %v4231
        %v5271 = vunpack.c.h.b16 %v4231
        %v5272 = vunpack.c.l.b16 %v4232
        %v5273 = vunpack.c.h.b16 %v4232
        %v5274 = vunpack.c.l.b16 %v4233
        %v5275 = vunpack.c.h.b16 %v4233
        %v5276 = vunpack.c.l.b16 %v4234
        %v5277 = vunpack.c.h.b16 %v4234
        %v5278 = vunpack.c.l.b16 %v4235
        %v5279 = vunpack.c.h.b16 %v4235
        %v5280 = vunpack.c.l.b16 %v4236
        %v5281 = vunpack.c.h.b16 %v4236
        %v5282 = vunpack.c.l.b16 %v4237
        %v5283 = vunpack.c.h.b16 %v4237
        %v5284 = vunpack.c.l.b16 %v4238
        %v5285 = vunpack.c.h.b16 %v4238
        %v5286 = vunpack.c.l.b16 %v4239
        %v5287 = vunpack.c.h.b16 %v4239
        %v5288 = vunpack.c.l.b16 %v4240
        %v5289 = vunpack.c.h.b16 %v4240
        %v5290 = vunpack.c.l.b16 %v4241
        %v5291 = vunpack.c.h.b16 %v4241
        %v5292 = vunpack.c.l.b16 %v4242
        %v5293 = vunpack.c.h.b16 %v4242
        %v5294 = vunpack.c.l.b16 %v4243
        %v5295 = vunpack.c.h.b16 %v4243
        %v5296 = vunpack.c.l.b16 %v4244
        %v5297 = vunpack.c.h.b16 %v4244
        %v5298 = vunpack.c.l.b16 %v4245
        %v5299 = vunpack.c.h.b16 %v4245
        %v5300 = vunpack.c.l.b16 %v4246
        %v5301 = vunpack.c.h.b16 %v4246
        %v5302 = vunpack.c.l.b16 %v4247
        %v5303 = vunpack.c.h.b16 %v4247
        %v5304 = vunpack.c.l.b16 %v4248
        %v5305 = vunpack.c.h.b16 %v4248
        %v5306 = vunpack.c.l.b16 %v4249
        %v5307 = vunpack.c.h.b16 %v4249
        %v5308 = vunpack.c.l.b16 %v4250
        %v5309 = vunpack.c.h.b16 %v4250
        %v5310 = vunpack.c.l.b16 %v4251
        %v5311 = vunpack.c.h.b16 %v4251
        %v5312 = vunpack.c.l.b16 %v4252
        %v5313 = vunpack.c.h.b16 %v4252
        %v5314 = vunpack.c.l.b16 %v4253
        %v5315 = vunpack.c.h.b16 %v4253
        %v5316 = vunpack.c.l.b16 %v4254
        %v5317 = vunpack.c.h.b16 %v4254
        %v5318 = vunpack.c.l.b16 %v4255
        %v5319 = vunpack.c.h.b16 %v4255
        %v5320 = vunpack.c.l.b16 %v4256
        %v5321 = vunpack.c.h.b16 %v4256
        %v5322 = vunpack.c.l.b16 %v4257
        %v5323 = vunpack.c.h.b16 %v4257
        %v5324 = vunpack.c.l.b16 %v4258
        %v5325 = vunpack.c.h.b16 %v4258
        %v5326 = vunpack.c.l.b16 %v4259
        %v5327 = vunpack.c.h.b16 %v4259
        %v5328 = vunpack.c.l.b16 %v4260
        %v5329 = vunpack.c.h.b16 %v4260
        %v5330 = vunpack.c.l.b16 %v4261
        %v5331 = vunpack.c.h.b16 %v4261
        %v5332 = vunpack.c.l.b16 %v4262
        %v5333 = vunpack.c.h.b16 %v4262
        %v5334 = vunpack.c.l.b16 %v4263
        %v5335 = vunpack.c.h.b16 %v4263
        %v5336 = vunpack.c.l.b16 %v4264
        %v5337 = vunpack.c.h.b16 %v4264
        %v5338 = vunpack.c.l.b16 %v4265
        %v5339 = vunpack.c.h.b16 %v4265
        %v5340 = vunpack.c.l.b16 %v4266
        %v5341 = vunpack.c.h.b16 %v4266
        %v5342 = vunpack.c.l.b16 %v4267
        %v5343 = vunpack.c.h.b16 %v4267
        %v5344 = vunpack.c.l.b16 %v4268
        %v5345 = vunpack.c.h.b16 %v4268
        %v5346 = vunpack.c.l.b16 %v4269
        %v5347 = vunpack.c.h.b16 %v4269
        %v5348 = vunpack.c.l.b16 %v4270
        %v5349 = vunpack.c.h.b16 %v4270
        %v5350 = vunpack.c.l.b16 %v4271
        %v5351 = vunpack.c.h.b16 %v4271
        %v5352 = vunpack.c.l.b16 %v4272
        %v5353 = vunpack.c.h.b16 %v4272
        %v5354 = vunpack.c.l.b16 %v4273
        %v5355 = vunpack.c.h.b16 %v4273
        %v5356 = vunpack.c.l.b16 %v4274
        %v5357 = vunpack.c.h.b16 %v4274
        %v5358 = vunpack.c.l.b16 %v4275
        %v5359 = vunpack.c.h.b16 %v4275
        %v5360 = vunpack.c.l.b16 %v4276
        %v5361 = vunpack.c.h.b16 %v4276
        %v5362 = vunpack.c.l.b16 %v4277
        %v5363 = vunpack.c.h.b16 %v4277
        %v5364 = vunpack.c.l.b16 %v4278
        %v5365 = vunpack.c.h.b16 %v4278
        %v5366 = vunpack.c.l.b16 %v4279
        %v5367 = vunpack.c.h.b16 %v4279
        %v5368 = vunpack.c.l.b16 %v4280
        %v5369 = vunpack.c.h.b16 %v4280
        %v5370 = vunpack.c.l.b16 %v4281
        %v5371 = vunpack.c.h.b16 %v4281
        %v5372 = vunpack.c.l.b16 %v4282
        %v5373 = vunpack.c.h.b16 %v4282
        %v5374 = vunpack.c.l.b16 %v4283
        %v5375 = vunpack.c.h.b16 %v4283
        %v5376 = vunpack.c.l.b16 %v4284
        %v5377 = vunpack.c.h.b16 %v4284
        %v5378 = vunpack.c.l.b16 %v4285
        %v5379 = vunpack.c.h.b16 %v4285
        %v5380 = vunpack.c.l.b16 %v4286
        %v5381 = vunpack.c.h.b16 %v4286
        %v5382 = vunpack.c.l.b16 %v4287
        %v5383 = vunpack.c.h.b16 %v4287
        %v5384 = vunpack.c.l.b16 %v4288
        %v5385 = vunpack.c.h.b16 %v4288
        %v5386 = vunpack.c.l.b16 %v4289
        %v5387 = vunpack.c.h.b16 %v4289
        %v5388 = vunpack.c.l.b16 %v4290
        %v5389 = vunpack.c.h.b16 %v4290
        %v5390 = vunpack.c.l.b16 %v4291
        %v5391 = vunpack.c.h.b16 %v4291
        %v5392 = vunpack.c.l.b16 %v4292
        %v5393 = vunpack.c.h.b16 %v4292
        %v5394 = vunpack.c.l.b16 %v4293
        %v5395 = vunpack.c.h.b16 %v4293
        %v5396 = vunpack.c.l.b16 %v4294
        %v5397 = vunpack.c.h.b16 %v4294
        %v5398 = vunpack.c.l.b16 %v4295
        %v5399 = vunpack.c.h.b16 %v4295
        %v5400 = vunpack.c.l.b16 %v4296
        %v5401 = vunpack.c.h.b16 %v4296
        %v5402 = vunpack.c.l.b16 %v4297
        %v5403 = vunpack.c.h.b16 %v4297
        %v5404 = vunpack.c.l.b16 %v4298
        %v5405 = vunpack.c.h.b16 %v4298
        %v5406 = vunpack.c.l.b16 %v4299
        %v5407 = vunpack.c.h.b16 %v4299
        %v5408 = vunpack.c.l.b16 %v4300
        %v5409 = vunpack.c.h.b16 %v4300
        %v5410 = vunpack.c.l.b16 %v4301
        %v5411 = vunpack.c.h.b16 %v4301
        %v5412 = vunpack.c.l.b16 %v4302
        %v5413 = vunpack.c.h.b16 %v4302
        %v5414 = vunpack.c.l.b16 %v4303
        %v5415 = vunpack.c.h.b16 %v4303
        %v5416 = vunpack.c.l.b16 %v4304
        %v5417 = vunpack.c.h.b16 %v4304
        %v5418 = vunpack.c.l.b16 %v4305
        %v5419 = vunpack.c.h.b16 %v4305
        %v5420 = vunpack.c.l.b16 %v4306
        %v5421 = vunpack.c.h.b16 %v4306
        %v5422 = vunpack.c.l.b16 %v4307
        %v5423 = vunpack.c.h.b16 %v4307
        %v5424 = vunpack.c.l.b16 %v4308
        %v5425 = vunpack.c.h.b16 %v4308
        %v5426 = vunpack.c.l.b16 %v4309
        %v5427 = vunpack.c.h.b16 %v4309
        %v5428 = vunpack.c.l.b16 %v4310
        %v5429 = vunpack.c.h.b16 %v4310
        %v5430 = vunpack.c.l.b16 %v4311
        %v5431 = vunpack.c.h.b16 %v4311
        %v5432 = vunpack.c.l.b16 %v4312
        %v5433 = vunpack.c.h.b16 %v4312
        %v5434 = vunpack.c.l.b16 %v4313
        %v5435 = vunpack.c.h.b16 %v4313
        %v5436 = vunpack.c.l.b16 %v4314
        %v5437 = vunpack.c.h.b16 %v4314
        %v5438 = vunpack.c.l.b16 %v4315
        %v5439 = vunpack.c.h.b16 %v4315
        %v5440 = vunpack.c.l.b16 %v4316
        %v5441 = vunpack.c.h.b16 %v4316
        %v5442 = vunpack.c.l.b16 %v4317
        %v5443 = vunpack.c.h.b16 %v4317
        %v5444 = vunpack.c.l.b16 %v4318
        %v5445 = vunpack.c.h.b16 %v4318
        %v5446 = vunpack.c.l.b16 %v4319
        %v5447 = vunpack.c.h.b16 %v4319
        %v5448 = vunpack.c.l.b16 %v4320
        %v5449 = vunpack.c.h.b16 %v4320
        %v5450 = vunpack.c.l.b16 %v4321
        %v5451 = vunpack.c.h.b16 %v4321
        %v5452 = vunpack.c.l.b16 %v4322
        %v5453 = vunpack.c.h.b16 %v4322
        %v5454 = vunpack.c.l.b16 %v4323
        %v5455 = vunpack.c.h.b16 %v4323
        %v5456 = vunpack.c.l.b16 %v4324
        %v5457 = vunpack.c.h.b16 %v4324
        %v5458 = vunpack.c.l.b16 %v4325
        %v5459 = vunpack.c.h.b16 %v4325
        %v5460 = vunpack.c.l.b16 %v4326
        %v5461 = vunpack.c.h.b16 %v4326
        %v5462 = vunpack.c.l.b16 %v4327
        %v5463 = vunpack.c.h.b16 %v4327
        %v5464 = vunpack.c.l.b16 %v4328
        %v5465 = vunpack.c.h.b16 %v4328
        %v5466 = vunpack.c.l.b16 %v4329
        %v5467 = vunpack.c.h.b16 %v4329
        %v5468 = vunpack.c.l.b16 %v4330
        %v5469 = vunpack.c.h.b16 %v4330
        %v5470 = vunpack.c.l.b16 %v4331
        %v5471 = vunpack.c.h.b16 %v4331
        %v5472 = vunpack.c.l.b16 %v4332
        %v5473 = vunpack.c.h.b16 %v4332
        %v5474 = vunpack.c.l.b16 %v4333
        %v5475 = vunpack.c.h.b16 %v4333
        %v5476 = vunpack.c.l.b16 %v4334
        %v5477 = vunpack.c.h.b16 %v4334
        %v5478 = vunpack.c.l.b16 %v4335
        %v5479 = vunpack.c.h.b16 %v4335
        %v5480 = vunpack.c.l.b16 %v4336
        %v5481 = vunpack.c.h.b16 %v4336
        %v5482 = vunpack.c.l.b16 %v4337
        %v5483 = vunpack.c.h.b16 %v4337
        %v5484 = vunpack.c.l.b16 %v4338
        %v5485 = vunpack.c.h.b16 %v4338
        %v5486 = vunpack.c.l.b16 %v4339
        %v5487 = vunpack.c.h.b16 %v4339
        %v5488 = vunpack.c.l.b16 %v4340
        %v5489 = vunpack.c.h.b16 %v4340
        %v5490 = vunpack.c.l.b16 %v4341
        %v5491 = vunpack.c.h.b16 %v4341
        %v5492 = vunpack.c.l.b16 %v4342
        %v5493 = vunpack.c.h.b16 %v4342
        %v5494 = vunpack.c.l.b16 %v4343
        %v5495 = vunpack.c.h.b16 %v4343
        %v5496 = vunpack.c.l.b16 %v4344
        %v5497 = vunpack.c.h.b16 %v4344
        %v5498 = vunpack.c.l.b16 %v4345
        %v5499 = vunpack.c.h.b16 %v4345
        %v5500 = vunpack.c.l.b16 %v4346
        %v5501 = vunpack.c.h.b16 %v4346
        %v5502 = vunpack.c.l.b16 %v4347
        %v5503 = vunpack.c.h.b16 %v4347
        %v5504 = vunpack.c.l.b16 %v4348
        %v5505 = vunpack.c.h.b16 %v4348
        %v5506 = vunpack.c.l.b16 %v4349
        %v5507 = vunpack.c.h.b16 %v4349
        %v5508 = vunpack.c.l.b16 %v4350
        %v5509 = vunpack.c.h.b16 %v4350
        %v5510 = vunpack.c.l.b16 %v4351
        %v5511 = vunpack.c.h.b16 %v4351
        %v5512 = vunpack.c.l.b16 %v4352
        %v5513 = vunpack.c.h.b16 %v4352
        %v5514 = vunpack.c.l.b16 %v4353
        %v5515 = vunpack.c.h.b16 %v4353
        %v5516 = vunpack.c.l.b16 %v4354
        %v5517 = vunpack.c.h.b16 %v4354
        %v5518 = vunpack.c.l.b16 %v4355
        %v5519 = vunpack.c.h.b16 %v4355
        %v5520 = vunpack.c.l.b16 %v4356
        %v5521 = vunpack.c.h.b16 %v4356
        %v5522 = vunpack.c.l.b16 %v4357
        %v5523 = vunpack.c.h.b16 %v4357
        %v5524 = vunpack.c.l.b16 %v4358
        %v5525 = vunpack.c.h.b16 %v4358
        %v5526 = vunpack.c.l.b16 %v4359
        %v5527 = vunpack.c.h.b16 %v4359
        %v5528 = vunpack.c.l.b16 %v4360
        %v5529 = vunpack.c.h.b16 %v4360
        %v5530 = vunpack.c.l.b16 %v4361
        %v5531 = vunpack.c.h.b16 %v4361
        %v5532 = vunpack.c.l.b16 %v4362
        %v5533 = vunpack.c.h.b16 %v4362
        %v5534 = vunpack.c.l.b16 %v4363
        %v5535 = vunpack.c.h.b16 %v4363
        %v5536 = vunpack.c.l.b16 %v4364
        %v5537 = vunpack.c.h.b16 %v4364
        %v5538 = vunpack.c.l.b16 %v4365
        %v5539 = vunpack.c.h.b16 %v4365
        %v5540 = vunpack.c.l.b16 %v4366
        %v5541 = vunpack.c.h.b16 %v4366
        %v5542 = vunpack.c.l.b16 %v4367
        %v5543 = vunpack.c.h.b16 %v4367
        %v5544 = vunpack.c.l.b16 %v4368
        %v5545 = vunpack.c.h.b16 %v4368
        %v5546 = vunpack.c.l.b16 %v4369
        %v5547 = vunpack.c.h.b16 %v4369
        %v5548 = vunpack.c.l.b16 %v4370
        %v5549 = vunpack.c.h.b16 %v4370
        %v5550 = vunpack.c.l.b16 %v4371
        %v5551 = vunpack.c.h.b16 %v4371
        %v5552 = vunpack.c.l.b16 %v4372
        %v5553 = vunpack.c.h.b16 %v4372
        %v5554 = vunpack.c.l.b16 %v4373
        %v5555 = vunpack.c.h.b16 %v4373
        %v5556 = vunpack.c.l.b16 %v4374
        %v5557 = vunpack.c.h.b16 %v4374
        %v5558 = vunpack.c.l.b16 %v4375
        %v5559 = vunpack.c.h.b16 %v4375
        %v5560 = vunpack.c.l.b16 %v4376
        %v5561 = vunpack.c.h.b16 %v4376
        %v5562 = vunpack.c.l.b16 %v4377
        %v5563 = vunpack.c.h.b16 %v4377
        %v5564 = vunpack.c.l.b16 %v4378
        %v5565 = vunpack.c.h.b16 %v4378
        %v5566 = vunpack.c.l.b16 %v4379
        %v5567 = vunpack.c.h.b16 %v4379
        %v5568 = vunpack.c.l.b16 %v4380
        %v5569 = vunpack.c.h.b16 %v4380
        %v5570 = vunpack.c.l.b16 %v4381
        %v5571 = vunpack.c.h.b16 %v4381
        %v5572 = vunpack.c.l.b16 %v4382
        %v5573 = vunpack.c.h.b16 %v4382
        %v5574 = vunpack.c.l.b16 %v4383
        %v5575 = vunpack.c.h.b16 %v4383
        %v5576 = vunpack.c.l.b16 %v4384
        %v5577 = vunpack.c.h.b16 %v4384
        %v5578 = vunpack.c.l.b16 %v4385
        %v5579 = vunpack.c.h.b16 %v4385
        %v5580 = vunpack.c.l.b16 %v4386
        %v5581 = vunpack.c.h.b16 %v4386
        %v5582 = vunpack.c.l.b16 %v4387
        %v5583 = vunpack.c.h.b16 %v4387
        %v5584 = vunpack.c.l.b16 %v4388
        %v5585 = vunpack.c.h.b16 %v4388
        %v5586 = vunpack.c.l.b16 %v4389
        %v5587 = vunpack.c.h.b16 %v4389
        %v5588 = vunpack.c.l.b16 %v4390
        %v5589 = vunpack.c.h.b16 %v4390
        %v5590 = vunpack.c.l.b16 %v4391
        %v5591 = vunpack.c.h.b16 %v4391
        %v5592 = vunpack.c.l.b16 %v4392
        %v5593 = vunpack.c.h.b16 %v4392
        %v5594 = vunpack.c.l.b16 %v4393
        %v5595 = vunpack.c.h.b16 %v4393
        %v5596 = vunpack.c.l.b16 %v4394
        %v5597 = vunpack.c.h.b16 %v4394
        %v5598 = vunpack.c.l.b16 %v4395
        %v5599 = vunpack.c.h.b16 %v4395
        %v5600 = vunpack.c.l.b16 %v4396
        %v5601 = vunpack.c.h.b16 %v4396
        %v5602 = vunpack.c.l.b16 %v4397
        %v5603 = vunpack.c.h.b16 %v4397
        %v5604 = vunpack.c.l.b16 %v4398
        %v5605 = vunpack.c.h.b16 %v4398
        %v5606 = vunpack.c.l.b16 %v4399
        %v5607 = vunpack.c.h.b16 %v4399
        %v5608 = vunpack.c.l.b16 %v4400
        %v5609 = vunpack.c.h.b16 %v4400
        %v5610 = vunpack.c.l.b16 %v4401
        %v5611 = vunpack.c.h.b16 %v4401
        %v5612 = vunpack.c.l.b16 %v4402
        %v5613 = vunpack.c.h.b16 %v4402
        %v5614 = vunpack.c.l.b16 %v4403
        %v5615 = vunpack.c.h.b16 %v4403
        %v5616 = vunpack.c.l.b16 %v4404
        %v5617 = vunpack.c.h.b16 %v4404
        %v5618 = vunpack.c.l.b16 %v4405
        %v5619 = vunpack.c.h.b16 %v4405
        %v5620 = vunpack.c.l.b16 %v4406
        %v5621 = vunpack.c.h.b16 %v4406
        %v5622 = vunpack.c.l.b16 %v4407
        %v5623 = vunpack.c.h.b16 %v4407
        %v5624 = vunpack.c.l.b16 %v4408
        %v5625 = vunpack.c.h.b16 %v4408
        %v5626 = vunpack.c.l.b16 %v4409
        %v5627 = vunpack.c.h.b16 %v4409
        %v5628 = vunpack.c.l.b16 %v4410
        %v5629 = vunpack.c.h.b16 %v4410
        %v5630 = vunpack.c.l.b16 %v4411
        %v5631 = vunpack.c.h.b16 %v4411
        %v5632 = vunpack.c.l.b16 %v4412
        %v5633 = vunpack.c.h.b16 %v4412
        %v5634 = vunpack.c.l.b16 %v4413
        %v5635 = vunpack.c.h.b16 %v4413
        %v5636 = vunpack.c.l.b16 %v4414
        %v5637 = vunpack.c.h.b16 %v4414
        %v5638 = vunpack.c.l.b16 %v4415
        %v5639 = vunpack.c.h.b16 %v4415
        %v5640 = vunpack.c.l.b16 %v4416
        %v5641 = vunpack.c.h.b16 %v4416
        %v5642 = vunpack.c.l.b16 %v4417
        %v5643 = vunpack.c.h.b16 %v4417
        %v5644 = vunpack.c.l.b16 %v4418
        %v5645 = vunpack.c.h.b16 %v4418
        %v5646 = vunpack.c.l.b16 %v4419
        %v5647 = vunpack.c.h.b16 %v4419
        %v5648 = vunpack.c.l.b16 %v4420
        %v5649 = vunpack.c.h.b16 %v4420
        %v5650 = vunpack.c.l.b16 %v4421
        %v5651 = vunpack.c.h.b16 %v4421
        %v5652 = vunpack.c.l.b16 %v4422
        %v5653 = vunpack.c.h.b16 %v4422
        %v5654 = vunpack.c.l.b16 %v4423
        %v5655 = vunpack.c.h.b16 %v4423
        %v5656 = vunpack.c.l.b16 %v4424
        %v5657 = vunpack.c.h.b16 %v4424
        %v5658 = vunpack.c.l.b16 %v4425
        %v5659 = vunpack.c.h.b16 %v4425
        %v5660 = vunpack.c.l.b16 %v4426
        %v5661 = vunpack.c.h.b16 %v4426
        %v5662 = vunpack.c.l.b16 %v4427
        %v5663 = vunpack.c.h.b16 %v4427
        %v5664 = vunpack.c.l.b16 %v4428
        %v5665 = vunpack.c.h.b16 %v4428
        %v5666 = vunpack.c.l.b16 %v4429
        %v5667 = vunpack.c.h.b16 %v4429
        %v5668 = vunpack.c.l.b16 %v4430
        %v5669 = vunpack.c.h.b16 %v4430
        %v5670 = vunpack.c.l.b16 %v4431
        %v5671 = vunpack.c.h.b16 %v4431
        %v5672 = vunpack.c.l.b16 %v4432
        %v5673 = vunpack.c.h.b16 %v4432
        %v5674 = vunpack.c.l.b16 %v4433
        %v5675 = vunpack.c.h.b16 %v4433
        %v5676 = vunpack.c.l.b16 %v4434
        %v5677 = vunpack.c.h.b16 %v4434
        %v5678 = vunpack.c.l.b16 %v4435
        %v5679 = vunpack.c.h.b16 %v4435
        %v5680 = vunpack.c.l.b16 %v4436
        %v5681 = vunpack.c.h.b16 %v4436
        %v5682 = vunpack.c.l.b16 %v4437
        %v5683 = vunpack.c.h.b16 %v4437
        %v5684 = vunpack.c.l.b16 %v4438
        %v5685 = vunpack.c.h.b16 %v4438
        %v5686 = vunpack.c.l.b16 %v4439
        %v5687 = vunpack.c.h.b16 %v4439
        %v5688 = vunpack.c.l.b16 %v4440
        %v5689 = vunpack.c.h.b16 %v4440
        %v5690 = vunpack.c.l.b16 %v4441
        %v5691 = vunpack.c.h.b16 %v4441
        %v5692 = vunpack.c.l.b16 %v4442
        %v5693 = vunpack.c.h.b16 %v4442
        %v5694 = vunpack.c.l.b16 %v4443
        %v5695 = vunpack.c.h.b16 %v4443
        %v5696 = vunpack.c.l.b16 %v4444
        %v5697 = vunpack.c.h.b16 %v4444
        %v5698 = vunpack.c.l.b16 %v4445
        %v5699 = vunpack.c.h.b16 %v4445
        %v5700 = vunpack.c.l.b16 %v4446
        %v5701 = vunpack.c.h.b16 %v4446
        %v5702 = vunpack.c.l.b16 %v4447
        %v5703 = vunpack.c.h.b16 %v4447
        %v5704 = vunpack.c.l.b16 %v4448
        %v5705 = vunpack.c.h.b16 %v4448
        %v5706 = vunpack.c.l.b16 %v4449
        %v5707 = vunpack.c.h.b16 %v4449
        %v5708 = vunpack.c.l.b16 %v4450
        %v5709 = vunpack.c.h.b16 %v4450
        %v5710 = vunpack.c.l.b16 %v4451
        %v5711 = vunpack.c.h.b16 %v4451
        %v5712 = vunpack.c.l.b16 %v4452
        %v5713 = vunpack.c.h.b16 %v4452
        %v5714 = vunpack.c.l.b16 %v4453
        %v5715 = vunpack.c.h.b16 %v4453
        %v5716 = vunpack.c.l.b16 %v4454
        %v5717 = vunpack.c.h.b16 %v4454
        %v5718 = vunpack.c.l.b16 %v4455
        %v5719 = vunpack.c.h.b16 %v4455
        %v5720 = vunpack.c.l.b16 %v4456
        %v5721 = vunpack.c.h.b16 %v4456
        %v5722 = vunpack.c.l.b16 %v4457
        %v5723 = vunpack.c.h.b16 %v4457
        %v5724 = vunpack.c.l.b16 %v4458
        %v5725 = vunpack.c.h.b16 %v4458
        %v5726 = vunpack.c.l.b16 %v4459
        %v5727 = vunpack.c.h.b16 %v4459
        %v5728 = vunpack.c.l.b16 %v4460
        %v5729 = vunpack.c.h.b16 %v4460
        %v5730 = vunpack.c.l.b16 %v4461
        %v5731 = vunpack.c.h.b16 %v4461
        %v5732 = vunpack.c.l.b16 %v4462
        %v5733 = vunpack.c.h.b16 %v4462
        %v5734 = vunpack.c.l.b16 %v4463
        %v5735 = vunpack.c.h.b16 %v4463
        %v5736 = vunpack.c.l.b16 %v4464
        %v5737 = vunpack.c.h.b16 %v4464
        %v5738 = vunpack.c.l.b16 %v4465
        %v5739 = vunpack.c.h.b16 %v4465
        %v5740 = vunpack.c.l.b16 %v4466
        %v5741 = vunpack.c.h.b16 %v4466
        %v5742 = vunpack.c.l.b16 %v4467
        %v5743 = vunpack.c.h.b16 %v4467
        %v5744 = vunpack.c.l.b16 %v4468
        %v5745 = vunpack.c.h.b16 %v4468
        %v5746 = vunpack.c.l.b16 %v4469
        %v5747 = vunpack.c.h.b16 %v4469
        %v5748 = vunpack.c.l.b16 %v4470
        %v5749 = vunpack.c.h.b16 %v4470
        %v5750 = vunpack.c.l.b16 %v4471
        %v5751 = vunpack.c.h.b16 %v4471
        %v5752 = vunpack.c.l.b16 %v4472
        %v5753 = vunpack.c.h.b16 %v4472
        %v5754 = vunpack.c.l.b16 %v4473
        %v5755 = vunpack.c.h.b16 %v4473
        %v5756 = vunpack.c.l.b16 %v4474
        %v5757 = vunpack.c.h.b16 %v4474
        %v5758 = vunpack.c.l.b16 %v4475
        %v5759 = vunpack.c.h.b16 %v4475
        %v5760 = vunpack.c.l.b16 %v4476
        %v5761 = vunpack.c.h.b16 %v4476
        %v5762 = vunpack.c.l.b16 %v4477
        %v5763 = vunpack.c.h.b16 %v4477
        %v5764 = vunpack.c.l.b16 %v4478
        %v5765 = vunpack.c.h.b16 %v4478
        %v5766 = vunpack.c.l.b16 %v4479
        %v5767 = vunpack.c.h.b16 %v4479
        %v5768 = vunpack.c.l.b16 %v4480
        %v5769 = vunpack.c.h.b16 %v4480
        %v5770 = vunpack.c.l.b16 %v4481
        %v5771 = vunpack.c.h.b16 %v4481
        %v5772 = vunpack.c.l.b16 %v4482
        %v5773 = vunpack.c.h.b16 %v4482
        %v5774 = vunpack.c.l.b16 %v4483
        %v5775 = vunpack.c.h.b16 %v4483
        %v5776 = vunpack.c.l.b16 %v4484
        %v5777 = vunpack.c.h.b16 %v4484
        %v5778 = vunpack.c.l.b16 %v4485
        %v5779 = vunpack.c.h.b16 %v4485
        %v5780 = vunpack.c.l.b16 %v4486
        %v5781 = vunpack.c.h.b16 %v4486
        %v5782 = vunpack.c.l.b16 %v4487
        %v5783 = vunpack.c.h.b16 %v4487
        %v5784 = vunpack.c.l.b16 %v4488
        %v5785 = vunpack.c.h.b16 %v4488
        %v5786 = vunpack.c.l.b16 %v4489
        %v5787 = vunpack.c.h.b16 %v4489
        %v5788 = vunpack.c.l.b16 %v4490
        %v5789 = vunpack.c.h.b16 %v4490
        %v5790 = vunpack.c.l.b16 %v4491
        %v5791 = vunpack.c.h.b16 %v4491
        %v5792 = vunpack.c.l.b16 %v4492
        %v5793 = vunpack.c.h.b16 %v4492
        %v5794 = vunpack.c.l.b16 %v4493
        %v5795 = vunpack.c.h.b16 %v4493
        %v5796 = vunpack.c.l.b16 %v4494
        %v5797 = vunpack.c.h.b16 %v4494
        %v5798 = vunpack.c.l.b16 %v4495
        %v5799 = vunpack.c.h.b16 %v4495
        %v5800 = vunpack.c.l.b16 %v4496
        %v5801 = vunpack.c.h.b16 %v4496
        %v5802 = vunpack.c.l.b16 %v4497
        %v5803 = vunpack.c.h.b16 %v4497
        %v5804 = vunpack.c.l.b16 %v4498
        %v5805 = vunpack.c.h.b16 %v4498
        %v5806 = vunpack.c.l.b16 %v4499
        %v5807 = vunpack.c.h.b16 %v4499
        %v5808 = vunpack.c.l.b16 %v4500
        %v5809 = vunpack.c.h.b16 %v4500
        %v5810 = vunpack.c.l.b16 %v4501
        %v5811 = vunpack.c.h.b16 %v4501
        %v5812 = vunpack.c.l.b16 %v4502
        %v5813 = vunpack.c.h.b16 %v4502
        %v5814 = vunpack.c.l.b16 %v4503
        %v5815 = vunpack.c.h.b16 %v4503
        %v5816 = vunpack.c.l.b16 %v4504
        %v5817 = vunpack.c.h.b16 %v4504
        %v5818 = vunpack.c.l.b16 %v4505
        %v5819 = vunpack.c.h.b16 %v4505
        %v5820 = vunpack.c.l.b16 %v4506
        %v5821 = vunpack.c.h.b16 %v4506
        %v5822 = vunpack.c.l.b16 %v4507
        %v5823 = vunpack.c.h.b16 %v4507
        %v5824 = vunpack.c.l.b16 %v4508
        %v5825 = vunpack.c.h.b16 %v4508
        %v5826 = vunpack.c.l.b16 %v4509
        %v5827 = vunpack.c.h.b16 %v4509
        %v5828 = vunpack.c.l.b16 %v4510
        %v5829 = vunpack.c.h.b16 %v4510
        %v5830 = vunpack.c.l.b16 %v4511
        %v5831 = vunpack.c.h.b16 %v4511
        %v5832 = vunpack.c.l.b16 %v4512
        %v5833 = vunpack.c.h.b16 %v4512
        %v5834 = vunpack.c.l.b16 %v4513
        %v5835 = vunpack.c.h.b16 %v4513
        %v5836 = vunpack.c.l.b16 %v4514
        %v5837 = vunpack.c.h.b16 %v4514
        %v5838 = vunpack.c.l.b16 %v4515
        %v5839 = vunpack.c.h.b16 %v4515
        %v5840 = vunpack.c.l.b16 %v4516
        %v5841 = vunpack.c.h.b16 %v4516
        %v5842 = vunpack.c.l.b16 %v4517
        %v5843 = vunpack.c.h.b16 %v4517
        %v5844 = vunpack.c.l.b16 %v4518
        %v5845 = vunpack.c.h.b16 %v4518
        %v5846 = vunpack.c.l.b16 %v4519
        %v5847 = vunpack.c.h.b16 %v4519
        %v5848 = vunpack.c.l.b16 %v4520
        %v5849 = vunpack.c.h.b16 %v4520
        %v5850 = vunpack.c.l.b16 %v4521
        %v5851 = vunpack.c.h.b16 %v4521
        %v5852 = vunpack.c.l.b16 %v4522
        %v5853 = vunpack.c.h.b16 %v4522
        %v5854 = vunpack.c.l.b16 %v4523
        %v5855 = vunpack.c.h.b16 %v4523
        %v5856 = vunpack.c.l.b16 %v4524
        %v5857 = vunpack.c.h.b16 %v4524
        %v5858 = vunpack.c.l.b16 %v4525
        %v5859 = vunpack.c.h.b16 %v4525
        %v5860 = vunpack.c.l.b16 %v4526
        %v5861 = vunpack.c.h.b16 %v4526
        %v5862 = vunpack.c.l.b16 %v4527
        %v5863 = vunpack.c.h.b16 %v4527
        %v5864 = vunpack.c.l.b16 %v4528
        %v5865 = vunpack.c.h.b16 %v4528
        %v5866 = vunpack.c.l.b16 %v4529
        %v5867 = vunpack.c.h.b16 %v4529
        %v5868 = vunpack.c.l.b16 %v4530
        %v5869 = vunpack.c.h.b16 %v4530
        %v5870 = vunpack.c.l.b16 %v4531
        %v5871 = vunpack.c.h.b16 %v4531
        %v5872 = vunpack.c.l.b16 %v4532
        %v5873 = vunpack.c.h.b16 %v4532
        %v5874 = vunpack.c.l.b16 %v4533
        %v5875 = vunpack.c.h.b16 %v4533
        %v5876 = vunpack.c.l.b16 %v4534
        %v5877 = vunpack.c.h.b16 %v4534
        %v5878 = vunpack.c.l.b16 %v4535
        %v5879 = vunpack.c.h.b16 %v4535
        %v5880 = vunpack.c.l.b16 %v4536
        %v5881 = vunpack.c.h.b16 %v4536
        %v5882 = vunpack.c.l.b16 %v4537
        %v5883 = vunpack.c.h.b16 %v4537
        %v5884 = vunpack.c.l.b16 %v4538
        %v5885 = vunpack.c.h.b16 %v4538
        %v5886 = vunpack.c.l.b16 %v4539
        %v5887 = vunpack.c.h.b16 %v4539
        %v5888 = vunpack.c.l.b16 %v4540
        %v5889 = vunpack.c.h.b16 %v4540
        %v5890 = vunpack.c.l.b16 %v4541
        %v5891 = vunpack.c.h.b16 %v4541
        %v5892 = vunpack.c.l.b16 %v4542
        %v5893 = vunpack.c.h.b16 %v4542
        %v5894 = vunpack.c.l.b16 %v4543
        %v5895 = vunpack.c.h.b16 %v4543
        %v5896 = vunpack.c.l.b16 %v4544
        %v5897 = vunpack.c.h.b16 %v4544
        %v5898 = vunpack.c.l.b16 %v4545
        %v5899 = vunpack.c.h.b16 %v4545
        %v5900 = vunpack.c.l.b16 %v4546
        %v5901 = vunpack.c.h.b16 %v4546
        %v5902 = vunpack.c.l.b16 %v4547
        %v5903 = vunpack.c.h.b16 %v4547
        %v5904 = vunpack.c.l.b16 %v4548
        %v5905 = vunpack.c.h.b16 %v4548
        %v5906 = vunpack.c.l.b16 %v4549
        %v5907 = vunpack.c.h.b16 %v4549
        %v5908 = vunpack.c.l.b16 %v4550
        %v5909 = vunpack.c.h.b16 %v4550
        %v5910 = vunpack.c.l.b16 %v4551
        %v5911 = vunpack.c.h.b16 %v4551
        %v5912 = vunpack.c.l.b16 %v4552
        %v5913 = vunpack.c.h.b16 %v4552
        %v5914 = vunpack.c.l.b16 %v4553
        %v5915 = vunpack.c.h.b16 %v4553
        %v5916 = vunpack.c.l.b16 %v4554
        %v5917 = vunpack.c.h.b16 %v4554
        %v5918 = vunpack.c.l.b16 %v4555
        %v5919 = vunpack.c.h.b16 %v4555
        %v5920 = vunpack.c.l.b16 %v4556
        %v5921 = vunpack.c.h.b16 %v4556
        %v5922 = vunpack.c.l.b16 %v4557
        %v5923 = vunpack.c.h.b16 %v4557
        %v5924 = vunpack.c.l.b16 %v4558
        %v5925 = vunpack.c.h.b16 %v4558
        %v5926 = vunpack.c.l.b16 %v4559
        %v5927 = vunpack.c.h.b16 %v4559
        %v5928 = vunpack.c.l.b16 %v4560
        %v5929 = vunpack.c.h.b16 %v4560
        %v5930 = vunpack.c.l.b16 %v4561
        %v5931 = vunpack.c.h.b16 %v4561
        %v5932 = vunpack.c.l.b16 %v4562
        %v5933 = vunpack.c.h.b16 %v4562
        %v5934 = vunpack.c.l.b16 %v4563
        %v5935 = vunpack.c.h.b16 %v4563
        %v5936 = vunpack.c.l.b16 %v4564
        %v5937 = vunpack.c.h.b16 %v4564
        %v5938 = vunpack.c.l.b16 %v4565
        %v5939 = vunpack.c.h.b16 %v4565
        %v5940 = vunpack.c.l.b16 %v4566
        %v5941 = vunpack.c.h.b16 %v4566
        %v5942 = vunpack.c.l.b16 %v4567
        %v5943 = vunpack.c.h.b16 %v4567
        %v5944 = vunpack.c.l.b16 %v4568
        %v5945 = vunpack.c.h.b16 %v4568
        %v5946 = vunpack.c.l.b16 %v4569
        %v5947 = vunpack.c.h.b16 %v4569
        %v5948 = vunpack.c.l.b16 %v4570
        %v5949 = vunpack.c.h.b16 %v4570
        %v5950 = vunpack.c.l.b16 %v4571
        %v5951 = vunpack.c.h.b16 %v4571
        %v5952 = vunpack.c.l.b16 %v4572
        %v5953 = vunpack.c.h.b16 %v4572
        %v5954 = vunpack.c.l.b16 %v4573
        %v5955 = vunpack.c.h.b16 %v4573
        %v5956 = vunpack.c.l.b16 %v4574
        %v5957 = vunpack.c.h.b16 %v4574
        %v5958 = vunpack.c.l.b16 %v4575
        %v5959 = vunpack.c.h.b16 %v4575
        %v5960 = vunpack.c.l.b16 %v4576
        %v5961 = vunpack.c.h.b16 %v4576
        %v5962 = vunpack.c.l.b16 %v4577
        %v5963 = vunpack.c.h.b16 %v4577
        %v5964 = vunpack.c.l.b16 %v4578
        %v5965 = vunpack.c.h.b16 %v4578
        %v5966 = vunpack.c.l.b16 %v4579
        %v5967 = vunpack.c.h.b16 %v4579
        %v5968 = vunpack.c.l.b16 %v4580
        %v5969 = vunpack.c.h.b16 %v4580
        %v5970 = vunpack.c.l.b16 %v4581
        %v5971 = vunpack.c.h.b16 %v4581
        %v5972 = vunpack.c.l.b16 %v4582
        %v5973 = vunpack.c.h.b16 %v4582
        %v5974 = vunpack.c.l.b16 %v4583
        %v5975 = vunpack.c.h.b16 %v4583
        %v5976 = vunpack.c.l.b16 %v4584
        %v5977 = vunpack.c.h.b16 %v4584
        %v5978 = vunpack.c.l.b16 %v4585
        %v5979 = vunpack.c.h.b16 %v4585
        %v5980 = vunpack.c.l.b16 %v4586
        %v5981 = vunpack.c.h.b16 %v4586
        %v5982 = vunpack.c.l.b16 %v4587
        %v5983 = vunpack.c.h.b16 %v4587
        %v5984 = vunpack.c.l.b16 %v4588
        %v5985 = vunpack.c.h.b16 %v4588
        %v5986 = vunpack.c.l.b16 %v4589
        %v5987 = vunpack.c.h.b16 %v4589
        %v5988 = vunpack.c.l.b16 %v4590
        %v5989 = vunpack.c.h.b16 %v4590
        %v5990 = vunpack.c.l.b16 %v4591
        %v5991 = vunpack.c.h.b16 %v4591
        %v5992 = vunpack.c.l.b16 %v4592
        %v5993 = vunpack.c.h.b16 %v4592
        %v5994 = vunpack.c.l.b16 %v4593
        %v5995 = vunpack.c.h.b16 %v4593
        %v5996 = vunpack.c.l.b16 %v4594
        %v5997 = vunpack.c.h.b16 %v4594
        %v5998 = vunpack.c.l.b16 %v4595
        %v5999 = vunpack.c.h.b16 %v4595
        %v6000 = vunpack.c.l.b16 %v4596
        %v6001 = vunpack.c.h.b16 %v4596
        %v6002 = vunpack.c.l.b16 %v4597
        %v6003 = vunpack.c.h.b16 %v4597
        %v6004 = vunpack.c.l.b16 %v4598
        %v6005 = vunpack.c.h.b16 %v4598
        %v6006 = vunpack.c.l.b16 %v4599
        %v6007 = vunpack.c.h.b16 %v4599
        %v6008 = vunpack.c.l.b16 %v4600
        %v6009 = vunpack.c.h.b16 %v4600
        %v6010 = vunpack.c.l.b16 %v4601
        %v6011 = vunpack.c.h.b16 %v4601
        %v6012 = vunpack.c.l.b16 %v4602
        %v6013 = vunpack.c.h.b16 %v4602
        %v6014 = vunpack.c.l.b16 %v4603
        %v6015 = vunpack.c.h.b16 %v4603
        %v6016 = vunpack.c.l.b16 %v4604
        %v6017 = vunpack.c.h.b16 %v4604
        %v6018 = vunpack.c.l.b16 %v4605
        %v6019 = vunpack.c.h.b16 %v4605
        %v6020 = vunpack.c.l.b16 %v4606
        %v6021 = vunpack.c.h.b16 %v4606
        %v6022 = vunpack.c.l.b16 %v4607
        %v6023 = vunpack.c.h.b16 %v4607
        %v6024 = vunpack.c.l.b16 %v4608
        %v6025 = vunpack.c.h.b16 %v4608
        %v6026 = vunpack.c.l.b16 %v4609
        %v6027 = vunpack.c.h.b16 %v4609
        %v6028 = vunpack.c.l.b16 %v4610
        %v6029 = vunpack.c.h.b16 %v4610
        %v6030 = vunpack.c.l.b16 %v4611
        %v6031 = vunpack.c.h.b16 %v4611
        %v6032 = vunpack.c.l.b16 %v4612
        %v6033 = vunpack.c.h.b16 %v4612
        %v6034 = vunpack.c.l.b16 %v4613
        %v6035 = vunpack.c.h.b16 %v4613
        %v6036 = vunpack.c.l.b16 %v4614
        %v6037 = vunpack.c.h.b16 %v4614
        %v6038 = vunpack.c.l.b16 %v4615
        %v6039 = vunpack.c.h.b16 %v4615
        %v6040 = vunpack.c.l.b16 %v4616
        %v6041 = vunpack.c.h.b16 %v4616
        %v6042 = vunpack.c.l.b16 %v4617
        %v6043 = vunpack.c.h.b16 %v4617
        %v6044 = vunpack.c.l.b16 %v4618
        %v6045 = vunpack.c.h.b16 %v4618
        %v6046 = vunpack.c.l.b16 %v4619
        %v6047 = vunpack.c.h.b16 %v4619
        %v6048 = vunpack.c.l.b16 %v4620
        %v6049 = vunpack.c.h.b16 %v4620
        %v6050 = vunpack.c.l.b16 %v4621
        %v6051 = vunpack.c.h.b16 %v4621
        %v6052 = vunpack.c.l.b16 %v4622
        %v6053 = vunpack.c.h.b16 %v4622
        %v6054 = vunpack.c.l.b16 %v4623
        %v6055 = vunpack.c.h.b16 %v4623
        %v6056 = vunpack.c.l.b16 %v4624
        %v6057 = vunpack.c.h.b16 %v4624
        %v6058 = vunpack.c.l.b16 %v4625
        %v6059 = vunpack.c.h.b16 %v4625
        %v6060 = vunpack.c.l.b16 %v4626
        %v6061 = vunpack.c.h.b16 %v4626
        %v6062 = vunpack.c.l.b16 %v4627
        %v6063 = vunpack.c.h.b16 %v4627
        %v6064 = vunpack.c.l.b16 %v4628
        %v6065 = vunpack.c.h.b16 %v4628
        %v6066 = vunpack.c.l.b16 %v4629
        %v6067 = vunpack.c.h.b16 %v4629
        %v6068 = vunpack.c.l.b16 %v4630
        %v6069 = vunpack.c.h.b16 %v4630
        %v6070 = vunpack.c.l.b16 %v4631
        %v6071 = vunpack.c.h.b16 %v4631
        %v6072 = vunpack.c.l.b16 %v4632
        %v6073 = vunpack.c.h.b16 %v4632
        %v6074 = vunpack.c.l.b16 %v4633
        %v6075 = vunpack.c.h.b16 %v4633
        %v6076 = vunpack.c.l.b16 %v4634
        %v6077 = vunpack.c.h.b16 %v4634
        %v6078 = vunpack.c.l.b16 %v4635
        %v6079 = vunpack.c.h.b16 %v4635
        %v6080 = vunpack.c.l.b16 %v4636
        %v6081 = vunpack.c.h.b16 %v4636
        %v6082 = vunpack.c.l.b16 %v4637
        %v6083 = vunpack.c.h.b16 %v4637
        %v6084 = vunpack.c.l.b16 %v4638
        %v6085 = vunpack.c.h.b16 %v4638
        %v6086 = vunpack.c.l.b16 %v4639
        %v6087 = vunpack.c.h.b16 %v4639
        %v6088 = vunpack.c.l.b16 %v4640
        %v6089 = vunpack.c.h.b16 %v4640
        %v6090 = vunpack.c.l.b16 %v4641
        %v6091 = vunpack.c.h.b16 %v4641
        %v6092 = vunpack.c.l.b16 %v4642
        %v6093 = vunpack.c.h.b16 %v4642
        %v6094 = vunpack.c.l.b16 %v4643
        %v6095 = vunpack.c.h.b16 %v4643
        %v6096 = vunpack.c.l.b16 %v4644
        %v6097 = vunpack.c.h.b16 %v4644
        %v6098 = vunpack.c.l.b16 %v4645
        %v6099 = vunpack.c.h.b16 %v4645
        %v6100 = vunpack.c.l.b16 %v4646
        %v6101 = vunpack.c.h.b16 %v4646
        %v6102 = vunpack.c.l.b16 %v4647
        %v6103 = vunpack.c.h.b16 %v4647
        %v6104 = vunpack.c.l.b16 %v4648
        %v6105 = vunpack.c.h.b16 %v4648
        %v6106 = vunpack.c.l.b16 %v4649
        %v6107 = vunpack.c.h.b16 %v4649
        %v6108 = vunpack.c.l.b16 %v4650
        %v6109 = vunpack.c.h.b16 %v4650
        %v6110 = vunpack.c.l.b16 %v4651
        %v6111 = vunpack.c.h.b16 %v4651
        %v6112 = vunpack.c.l.b16 %v4652
        %v6113 = vunpack.c.h.b16 %v4652
        %v6114 = vunpack.c.l.b16 %v4653
        %v6115 = vunpack.c.h.b16 %v4653
        %v6116 = vunpack.c.l.b16 %v4654
        %v6117 = vunpack.c.h.b16 %v4654
        %v6118 = vunpack.c.l.b16 %v4655
        %v6119 = vunpack.c.h.b16 %v4655
        %v6120 = vunpack.c.l.b16 %v4656
        %v6121 = vunpack.c.h.b16 %v4656
        %v6122 = vunpack.c.l.b16 %v4657
        %v6123 = vunpack.c.h.b16 %v4657
        %v6124 = vunpack.c.l.b16 %v4658
        %v6125 = vunpack.c.h.b16 %v4658
        %v6126 = vunpack.c.l.b16 %v4659
        %v6127 = vunpack.c.h.b16 %v4659
        %v6128 = vunpack.c.l.b16 %v4660
        %v6129 = vunpack.c.h.b16 %v4660
        %v6130 = vunpack.c.l.b16 %v4661
        %v6131 = vunpack.c.h.b16 %v4661
        %v6132 = vunpack.c.l.b16 %v4662
        %v6133 = vunpack.c.h.b16 %v4662
        %v6134 = vunpack.c.l.b16 %v4663
        %v6135 = vunpack.c.h.b16 %v4663
        %v6136 = vunpack.c.l.b16 %v4664
        %v6137 = vunpack.c.h.b16 %v4664
        %v6138 = vunpack.c.l.b16 %v4665
        %v6139 = vunpack.c.h.b16 %v4665
        %v6140 = vunpack.c.l.b16 %v4666
        %v6141 = vunpack.c.h.b16 %v4666
        %v6142 = vunpack.c.l.b16 %v4667
        %v6143 = vunpack.c.h.b16 %v4667
        %v6144 = vunpack.c.l.b16 %v4668
        %v6145 = vunpack.c.h.b16 %v4668
        %v6146 = vunpack.c.l.b16 %v4669
        %v6147 = vunpack.c.h.b16 %v4669
        %v6148 = vunpack.c.l.b16 %v4670
        %v6149 = vunpack.c.h.b16 %v4670
        %v6150 = vunpack.c.l.b16 %v4671
        %v6151 = vunpack.c.h.b16 %v4671
        %v6152 = vunpack.c.l.b16 %v4672
        %v6153 = vunpack.c.h.b16 %v4672
        %v6154 = vunpack.c.l.b16 %v4673
        %v6155 = vunpack.c.h.b16 %v4673
        %v6156 = vunpack.c.l.b16 %v4674
        %v6157 = vunpack.c.h.b16 %v4674
        %v6158 = vunpack.c.l.b16 %v4675
        %v6159 = vunpack.c.h.b16 %v4675
        %v6160 = vunpack.c.l.b16 %v4676
        %v6161 = vunpack.c.h.b16 %v4676
        %v6162 = vunpack.c.l.b16 %v4677
        %v6163 = vunpack.c.h.b16 %v4677
        %v6164 = vunpack.c.l.b16 %v4678
        %v6165 = vunpack.c.h.b16 %v4678
        %v6166 = vunpack.c.l.b16 %v4679
        %v6167 = vunpack.c.h.b16 %v4679
        %v6168 = vunpack.c.l.b16 %v4680
        %v6169 = vunpack.c.h.b16 %v4680
        %v6170 = vunpack.c.l.b16 %v4681
        %v6171 = vunpack.c.h.b16 %v4681
        %v6172 = vunpack.c.l.b16 %v4682
        %v6173 = vunpack.c.h.b16 %v4682
        %v6174 = vunpack.c.l.b16 %v4683
        %v6175 = vunpack.c.h.b16 %v4683
        %v6176 = vunpack.c.l.b16 %v4684
        %v6177 = vunpack.c.h.b16 %v4684
        %v6178 = vunpack.c.l.b16 %v4685
        %v6179 = vunpack.c.h.b16 %v4685
        %v6180 = vunpack.c.l.b16 %v4686
        %v6181 = vunpack.c.h.b16 %v4686
        %v6182 = vunpack.c.l.b16 %v4687
        %v6183 = vunpack.c.h.b16 %v4687
        %v6184 = vunpack.c.l.b16 %v4688
        %v6185 = vunpack.c.h.b16 %v4688
        %v6186 = vunpack.c.l.b16 %v4689
        %v6187 = vunpack.c.h.b16 %v4689
        %v6188 = vunpack.c.l.b16 %v4690
        %v6189 = vunpack.c.h.b16 %v4690
        %v6190 = vunpack.c.l.b16 %v4691
        %v6191 = vunpack.c.h.b16 %v4691
        %v6192 = vunpack.c.l.b16 %v4692
        %v6193 = vunpack.c.h.b16 %v4692
        %v6194 = vunpack.c.l.b16 %v4693
        %v6195 = vunpack.c.h.b16 %v4693
        %v6196 = vunpack.c.l.b16 %v4694
        %v6197 = vunpack.c.h.b16 %v4694
        %v6198 = vunpack.c.l.b16 %v4695
        %v6199 = vunpack.c.h.b16 %v4695
        %v6200 = vunpack.c.l.b16 %v4696
        %v6201 = vunpack.c.h.b16 %v4696
        %v6202 = vunpack.c.l.b16 %v4697
        %v6203 = vunpack.c.h.b16 %v4697
        %v6204 = vunpack.c.l.b16 %v4698
        %v6205 = vunpack.c.h.b16 %v4698
        %v6206 = vunpack.c.l.b16 %v4699
        %v6207 = vunpack.c.h.b16 %v4699
        %v6208 = vunpack.c.l.b16 %v4700
        %v6209 = vunpack.c.h.b16 %v4700
        %v6210 = vunpack.c.l.b16 %v4701
        %v6211 = vunpack.c.h.b16 %v4701
        %v6212 = vunpack.c.l.b16 %v4702
        %v6213 = vunpack.c.h.b16 %v4702
        %v6214 = vunpack.c.l.b16 %v4703
        %v6215 = vunpack.c.h.b16 %v4703
        %v6216 = vunpack.c.l.b16 %v4704
        %v6217 = vunpack.c.h.b16 %v4704
        %v6218 = vunpack.c.l.b16 %v4705
        %v6219 = vunpack.c.h.b16 %v4705
        %v6220 = vunpack.c.l.b16 %v4706
        %v6221 = vunpack.c.h.b16 %v4706
        %v6222 = vunpack.c.l.b16 %v4707
        %v6223 = vunpack.c.h.b16 %v4707
        %v6224 = vunpack.c.l.b16 %v4708
        %v6225 = vunpack.c.h.b16 %v4708
        %v6226 = vunpack.c.l.b16 %v4709
        %v6227 = vunpack.c.h.b16 %v4709
        %v6228 = vunpack.c.l.b16 %v4710
        %v6229 = vunpack.c.h.b16 %v4710
        %v6230 = vunpack.c.l.b16 %v4711
        %v6231 = vunpack.c.h.b16 %v4711
        %v6232 = vunpack.c.l.b16 %v4712
        %v6233 = vunpack.c.h.b16 %v4712
        %v6234 = vunpack.c.l.b16 %v4713
        %v6235 = vunpack.c.h.b16 %v4713
        %v6236 = vunpack.c.l.b16 %v4714
        %v6237 = vunpack.c.h.b16 %v4714
        %v6238 = vunpack.c.l.b16 %v4715
        %v6239 = vunpack.c.h.b16 %v4715
        %v6240 = vunpack.c.l.b16 %v4716
        %v6241 = vunpack.c.h.b16 %v4716
        %v6242 = vunpack.c.l.b16 %v4717
        %v6243 = vunpack.c.h.b16 %v4717
        %v6244 = vunpack.c.l.b16 %v4718
        %v6245 = vunpack.c.h.b16 %v4718
        %v6246 = vunpack.c.l.b16 %v4719
        %v6247 = vunpack.c.h.b16 %v4719
        %v6248 = vunpack.c.l.b16 %v4720
        %v6249 = vunpack.c.h.b16 %v4720
        %v6250 = vunpack.c.l.b16 %v4721
        %v6251 = vunpack.c.h.b16 %v4721
        %v6252 = vunpack.c.l.b16 %v4722
        %v6253 = vunpack.c.h.b16 %v4722
        %v6254 = vunpack.c.l.b16 %v4723
        %v6255 = vunpack.c.h.b16 %v4723
        %v6256 = vunpack.c.l.b16 %v4724
        %v6257 = vunpack.c.h.b16 %v4724
        %v6258 = vunpack.c.l.b16 %v4725
        %v6259 = vunpack.c.h.b16 %v4725
        %v6260 = vunpack.c.l.b16 %v4726
        %v6261 = vunpack.c.h.b16 %v4726
        %v6262 = vunpack.c.l.b16 %v4727
        %v6263 = vunpack.c.h.b16 %v4727
        %v6264 = vpack.c.b16 %v5244, %v5240
        %v6265 = vpack.c.b16 %v5245, %v5241
        %v6266 = vpack.c.b16 %v5246, %v5242
        %v6267 = vpack.c.b16 %v5247, %v5243
        %v6268 = vpack.c.b16 %v5252, %v5248
        %v6269 = vpack.c.b16 %v5253, %v5249
        %v6270 = vpack.c.b16 %v5254, %v5250
        %v6271 = vpack.c.b16 %v5255, %v5251
        %v6272 = vpack.c.b16 %v5260, %v5256
        %v6273 = vpack.c.b16 %v5261, %v5257
        %v6274 = vpack.c.b16 %v5262, %v5258
        %v6275 = vpack.c.b16 %v5263, %v5259
        %v6276 = vpack.c.b16 %v5268, %v5264
        %v6277 = vpack.c.b16 %v5269, %v5265
        %v6278 = vpack.c.b16 %v5270, %v5266
        %v6279 = vpack.c.b16 %v5271, %v5267
        %v6280 = vpack.c.b16 %v5276, %v5272
        %v6281 = vpack.c.b16 %v5277, %v5273
        %v6282 = vpack.c.b16 %v5278, %v5274
        %v6283 = vpack.c.b16 %v5279, %v5275
        %v6284 = vpack.c.b16 %v5284, %v5280
        %v6285 = vpack.c.b16 %v5285, %v5281
        %v6286 = vpack.c.b16 %v5286, %v5282
        %v6287 = vpack.c.b16 %v5287, %v5283
        %v6288 = vpack.c.b16 %v5292, %v5288
        %v6289 = vpack.c.b16 %v5293, %v5289
        %v6290 = vpack.c.b16 %v5294, %v5290
        %v6291 = vpack.c.b16 %v5295, %v5291
        %v6292 = vpack.c.b16 %v5300, %v5296
        %v6293 = vpack.c.b16 %v5301, %v5297
        %v6294 = vpack.c.b16 %v5302, %v5298
        %v6295 = vpack.c.b16 %v5303, %v5299
        %v6296 = vpack.c.b16 %v5308, %v5304
        %v6297 = vpack.c.b16 %v5309, %v5305
        %v6298 = vpack.c.b16 %v5310, %v5306
        %v6299 = vpack.c.b16 %v5311, %v5307
        %v6300 = vpack.c.b16 %v5316, %v5312
        %v6301 = vpack.c.b16 %v5317, %v5313
        %v6302 = vpack.c.b16 %v5318, %v5314
        %v6303 = vpack.c.b16 %v5319, %v5315
        %v6304 = vpack.c.b16 %v5324, %v5320
        %v6305 = vpack.c.b16 %v5325, %v5321
        %v6306 = vpack.c.b16 %v5326, %v5322
        %v6307 = vpack.c.b16 %v5327, %v5323
        %v6308 = vpack.c.b16 %v5332, %v5328
        %v6309 = vpack.c.b16 %v5333, %v5329
        %v6310 = vpack.c.b16 %v5334, %v5330
        %v6311 = vpack.c.b16 %v5335, %v5331
        %v6312 = vpack.c.b16 %v5340, %v5336
        %v6313 = vpack.c.b16 %v5341, %v5337
        %v6314 = vpack.c.b16 %v5342, %v5338
        %v6315 = vpack.c.b16 %v5343, %v5339
        %v6316 = vpack.c.b16 %v5348, %v5344
        %v6317 = vpack.c.b16 %v5349, %v5345
        %v6318 = vpack.c.b16 %v5350, %v5346
        %v6319 = vpack.c.b16 %v5351, %v5347
        %v6320 = vpack.c.b16 %v5356, %v5352
        %v6321 = vpack.c.b16 %v5357, %v5353
        %v6322 = vpack.c.b16 %v5358, %v5354
        %v6323 = vpack.c.b16 %v5359, %v5355
        %v6324 = vpack.c.b16 %v5364, %v5360
        %v6325 = vpack.c.b16 %v5365, %v5361
        %v6326 = vpack.c.b16 %v5366, %v5362
        %v6327 = vpack.c.b16 %v5367, %v5363
        %v6328 = vpack.c.b16 %v5372, %v5368
        %v6329 = vpack.c.b16 %v5373, %v5369
        %v6330 = vpack.c.b16 %v5374, %v5370
        %v6331 = vpack.c.b16 %v5375, %v5371
        %v6332 = vpack.c.b16 %v5380, %v5376
        %v6333 = vpack.c.b16 %v5381, %v5377
        %v6334 = vpack.c.b16 %v5382, %v5378
        %v6335 = vpack.c.b16 %v5383, %v5379
        %v6336 = vpack.c.b16 %v5388, %v5384
        %v6337 = vpack.c.b16 %v5389, %v5385
        %v6338 = vpack.c.b16 %v5390, %v5386
        %v6339 = vpack.c.b16 %v5391, %v5387
        %v6340 = vpack.c.b16 %v5396, %v5392
        %v6341 = vpack.c.b16 %v5397, %v5393
        %v6342 = vpack.c.b16 %v5398, %v5394
        %v6343 = vpack.c.b16 %v5399, %v5395
        %v6344 = vpack.c.b16 %v5404, %v5400
        %v6345 = vpack.c.b16 %v5405, %v5401
        %v6346 = vpack.c.b16 %v5406, %v5402
        %v6347 = vpack.c.b16 %v5407, %v5403
        %v6348 = vpack.c.b16 %v5412, %v5408
        %v6349 = vpack.c.b16 %v5413, %v5409
        %v6350 = vpack.c.b16 %v5414, %v5410
        %v6351 = vpack.c.b16 %v5415, %v5411
        %v6352 = vpack.c.b16 %v5420, %v5416
        %v6353 = vpack.c.b16 %v5421, %v5417
        %v6354 = vpack.c.b16 %v5422, %v5418
        %v6355 = vpack.c.b16 %v5423, %v5419
        %v6356 = vpack.c.b16 %v5428, %v5424
        %v6357 = vpack.c.b16 %v5429, %v5425
        %v6358 = vpack.c.b16 %v5430, %v5426
        %v6359 = vpack.c.b16 %v5431, %v5427
        %v6360 = vpack.c.b16 %v5436, %v5432
        %v6361 = vpack.c.b16 %v5437, %v5433
        %v6362 = vpack.c.b16 %v5438, %v5434
        %v6363 = vpack.c.b16 %v5439, %v5435
        %v6364 = vpack.c.b16 %v5444, %v5440
        %v6365 = vpack.c.b16 %v5445, %v5441
        %v6366 = vpack.c.b16 %v5446, %v5442
        %v6367 = vpack.c.b16 %v5447, %v5443
        %v6368 = vpack.c.b16 %v5452, %v5448
        %v6369 = vpack.c.b16 %v5453, %v5449
        %v6370 = vpack.c.b16 %v5454, %v5450
        %v6371 = vpack.c.b16 %v5455, %v5451
        %v6372 = vpack.c.b16 %v5460, %v5456
        %v6373 = vpack.c.b16 %v5461, %v5457
        %v6374 = vpack.c.b16 %v5462, %v5458
        %v6375 = vpack.c.b16 %v5463, %v5459
        %v6376 = vpack.c.b16 %v5468, %v5464
        %v6377 = vpack.c.b16 %v5469, %v5465
        %v6378 = vpack.c.b16 %v5470, %v5466
        %v6379 = vpack.c.b16 %v5471, %v5467
        %v6380 = vpack.c.b16 %v5476, %v5472
        %v6381 = vpack.c.b16 %v5477, %v5473
        %v6382 = vpack.c.b16 %v5478, %v5474
        %v6383 = vpack.c.b16 %v5479, %v5475
        %v6384 = vpack.c.b16 %v5484, %v5480
        %v6385 = vpack.c.b16 %v5485, %v5481
        %v6386 = vpack.c.b16 %v5486, %v5482
        %v6387 = vpack.c.b16 %v5487, %v5483
        %v6388 = vpack.c.b16 %v5492, %v5488
        %v6389 = vpack.c.b16 %v5493, %v5489
        %v6390 = vpack.c.b16 %v5494, %v5490
        %v6391 = vpack.c.b16 %v5495, %v5491
        %v6392 = vpack.c.b16 %v5500, %v5496
        %v6393 = vpack.c.b16 %v5501, %v5497
        %v6394 = vpack.c.b16 %v5502, %v5498
        %v6395 = vpack.c.b16 %v5503, %v5499
        %v6396 = vpack.c.b16 %v5508, %v5504
        %v6397 = vpack.c.b16 %v5509, %v5505
        %v6398 = vpack.c.b16 %v5510, %v5506
        %v6399 = vpack.c.b16 %v5511, %v5507
        %v6400 = vpack.c.b16 %v5516, %v5512
        %v6401 = vpack.c.b16 %v5517, %v5513
        %v6402 = vpack.c.b16 %v5518, %v5514
        %v6403 = vpack.c.b16 %v5519, %v5515
        %v6404 = vpack.c.b16 %v5524, %v5520
        %v6405 = vpack.c.b16 %v5525, %v5521
        %v6406 = vpack.c.b16 %v5526, %v5522
        %v6407 = vpack.c.b16 %v5527, %v5523
        %v6408 = vpack.c.b16 %v5532, %v5528
        %v6409 = vpack.c.b16 %v5533, %v5529
        %v6410 = vpack.c.b16 %v5534, %v5530
        %v6411 = vpack.c.b16 %v5535, %v5531
        %v6412 = vpack.c.b16 %v5540, %v5536
        %v6413 = vpack.c.b16 %v5541, %v5537
        %v6414 = vpack.c.b16 %v5542, %v5538
        %v6415 = vpack.c.b16 %v5543, %v5539
        %v6416 = vpack.c.b16 %v5548, %v5544
        %v6417 = vpack.c.b16 %v5549, %v5545
        %v6418 = vpack.c.b16 %v5550, %v5546
        %v6419 = vpack.c.b16 %v5551, %v5547
        %v6420 = vpack.c.b16 %v5556, %v5552
        %v6421 = vpack.c.b16 %v5557, %v5553
        %v6422 = vpack.c.b16 %v5558, %v5554
        %v6423 = vpack.c.b16 %v5559, %v5555
        %v6424 = vpack.c.b16 %v5564, %v5560
        %v6425 = vpack.c.b16 %v5565, %v5561
        %v6426 = vpack.c.b16 %v5566, %v5562
        %v6427 = vpack.c.b16 %v5567, %v5563
        %v6428 = vpack.c.b16 %v5572, %v5568
        %v6429 = vpack.c.b16 %v5573, %v5569
        %v6430 = vpack.c.b16 %v5574, %v5570
        %v6431 = vpack.c.b16 %v5575, %v5571
        %v6432 = vpack.c.b16 %v5580, %v5576
        %v6433 = vpack.c.b16 %v5581, %v5577
        %v6434 = vpack.c.b16 %v5582, %v5578
        %v6435 = vpack.c.b16 %v5583, %v5579
        %v6436 = vpack.c.b16 %v5588, %v5584
        %v6437 = vpack.c.b16 %v5589, %v5585
        %v6438 = vpack.c.b16 %v5590, %v5586
        %v6439 = vpack.c.b16 %v5591, %v5587
        %v6440 = vpack.c.b16 %v5596, %v5592
        %v6441 = vpack.c.b16 %v5597, %v5593
        %v6442 = vpack.c.b16 %v5598, %v5594
        %v6443 = vpack.c.b16 %v5599, %v5595
        %v6444 = vpack.c.b16 %v5604, %v5600
        %v6445 = vpack.c.b16 %v5605, %v5601
        %v6446 = vpack.c.b16 %v5606, %v5602
        %v6447 = vpack.c.b16 %v5607, %v5603
        %v6448 = vpack.c.b16 %v5612, %v5608
        %v6449 = vpack.c.b16 %v5613, %v5609
        %v6450 = vpack.c.b16 %v5614, %v5610
        %v6451 = vpack.c.b16 %v5615, %v5611
        %v6452 = vpack.c.b16 %v5620, %v5616
        %v6453 = vpack.c.b16 %v5621, %v5617
        %v6454 = vpack.c.b16 %v5622, %v5618
        %v6455 = vpack.c.b16 %v5623, %v5619
        %v6456 = vpack.c.b16 %v5628, %v5624
        %v6457 = vpack.c.b16 %v5629, %v5625
        %v6458 = vpack.c.b16 %v5630, %v5626
        %v6459 = vpack.c.b16 %v5631, %v5627
        %v6460 = vpack.c.b16 %v5636, %v5632
        %v6461 = vpack.c.b16 %v5637, %v5633
        %v6462 = vpack.c.b16 %v5638, %v5634
        %v6463 = vpack.c.b16 %v5639, %v5635
        %v6464 = vpack.c.b16 %v5644, %v5640
        %v6465 = vpack.c.b16 %v5645, %v5641
        %v6466 = vpack.c.b16 %v5646, %v5642
        %v6467 = vpack.c.b16 %v5647, %v5643
        %v6468 = vpack.c.b16 %v5652, %v5648
        %v6469 = vpack.c.b16 %v5653, %v5649
        %v6470 = vpack.c.b16 %v5654, %v5650
        %v6471 = vpack.c.b16 %v5655, %v5651
        %v6472 = vpack.c.b16 %v5660, %v5656
        %v6473 = vpack.c.b16 %v5661, %v5657
        %v6474 = vpack.c.b16 %v5662, %v5658
        %v6475 = vpack.c.b16 %v5663, %v5659
        %v6476 = vpack.c.b16 %v5668, %v5664
        %v6477 = vpack.c.b16 %v5669, %v5665
        %v6478 = vpack.c.b16 %v5670, %v5666
        %v6479 = vpack.c.b16 %v5671, %v5667
        %v6480 = vpack.c.b16 %v5676, %v5672
        %v6481 = vpack.c.b16 %v5677, %v5673
        %v6482 = vpack.c.b16 %v5678, %v5674
        %v6483 = vpack.c.b16 %v5679, %v5675
        %v6484 = vpack.c.b16 %v5684, %v5680
        %v6485 = vpack.c.b16 %v5685, %v5681
        %v6486 = vpack.c.b16 %v5686, %v5682
        %v6487 = vpack.c.b16 %v5687, %v5683
        %v6488 = vpack.c.b16 %v5692, %v5688
        %v6489 = vpack.c.b16 %v5693, %v5689
        %v6490 = vpack.c.b16 %v5694, %v5690
        %v6491 = vpack.c.b16 %v5695, %v5691
        %v6492 = vpack.c.b16 %v5700, %v5696
        %v6493 = vpack.c.b16 %v5701, %v5697
        %v6494 = vpack.c.b16 %v5702, %v5698
        %v6495 = vpack.c.b16 %v5703, %v5699
        %v6496 = vpack.c.b16 %v5708, %v5704
        %v6497 = vpack.c.b16 %v5709, %v5705
        %v6498 = vpack.c.b16 %v5710, %v5706
        %v6499 = vpack.c.b16 %v5711, %v5707
        %v6500 = vpack.c.b16 %v5716, %v5712
        %v6501 = vpack.c.b16 %v5717, %v5713
        %v6502 = vpack.c.b16 %v5718, %v5714
        %v6503 = vpack.c.b16 %v5719, %v5715
        %v6504 = vpack.c.b16 %v5724, %v5720
        %v6505 = vpack.c.b16 %v5725, %v5721
        %v6506 = vpack.c.b16 %v5726, %v5722
        %v6507 = vpack.c.b16 %v5727, %v5723
        %v6508 = vpack.c.b16 %v5732, %v5728
        %v6509 = vpack.c.b16 %v5733, %v5729
        %v6510 = vpack.c.b16 %v5734, %v5730
        %v6511 = vpack.c.b16 %v5735, %v5731
        %v6512 = vpack.c.b16 %v5740, %v5736
        %v6513 = vpack.c.b16 %v5741, %v5737
        %v6514 = vpack.c.b16 %v5742, %v5738
        %v6515 = vpack.c.b16 %v5743, %v5739
        %v6516 = vpack.c.b16 %v5748, %v5744
        %v6517 = vpack.c.b16 %v5749, %v5745
        %v6518 = vpack.c.b16 %v5750, %v5746
        %v6519 = vpack.c.b16 %v5751, %v5747
        %v6520 = vpack.c.b16 %v5756, %v5752
        %v6521 = vpack.c.b16 %v5757, %v5753
        %v6522 = vpack.c.b16 %v5758, %v5754
        %v6523 = vpack.c.b16 %v5759, %v5755
        %v6524 = vpack.c.b16 %v5764, %v5760
        %v6525 = vpack.c.b16 %v5765, %v5761
        %v6526 = vpack.c.b16 %v5766, %v5762
        %v6527 = vpack.c.b16 %v5767, %v5763
        %v6528 = vpack.c.b16 %v5772, %v5768
        %v6529 = vpack.c.b16 %v5773, %v5769
        %v6530 = vpack.c.b16 %v5774, %v5770
        %v6531 = vpack.c.b16 %v5775, %v5771
        %v6532 = vpack.c.b16 %v5780, %v5776
        %v6533 = vpack.c.b16 %v5781, %v5777
        %v6534 = vpack.c.b16 %v5782, %v5778
        %v6535 = vpack.c.b16 %v5783, %v5779
        %v6536 = vpack.c.b16 %v5788, %v5784
        %v6537 = vpack.c.b16 %v5789, %v5785
        %v6538 = vpack.c.b16 %v5790, %v5786
        %v6539 = vpack.c.b16 %v5791, %v5787
        %v6540 = vpack.c.b16 %v5796, %v5792
        %v6541 = vpack.c.b16 %v5797, %v5793
        %v6542 = vpack.c.b16 %v5798, %v5794
        %v6543 = vpack.c.b16 %v5799, %v5795
        %v6544 = vpack.c.b16 %v5804, %v5800
        %v6545 = vpack.c.b16 %v5805, %v5801
        %v6546 = vpack.c.b16 %v5806, %v5802
        %v6547 = vpack.c.b16 %v5807, %v5803
        %v6548 = vpack.c.b16 %v5812, %v5808
        %v6549 = vpack.c.b16 %v5813, %v5809
        %v6550 = vpack.c.b16 %v5814, %v5810
        %v6551 = vpack.c.b16 %v5815, %v5811
        %v6552 = vpack.c.b16 %v5820, %v5816
        %v6553 = vpack.c.b16 %v5821, %v5817
        %v6554 = vpack.c.b16 %v5822, %v5818
        %v6555 = vpack.c.b16 %v5823, %v5819
        %v6556 = vpack.c.b16 %v5828, %v5824
        %v6557 = vpack.c.b16 %v5829, %v5825
        %v6558 = vpack.c.b16 %v5830, %v5826
        %v6559 = vpack.c.b16 %v5831, %v5827
        %v6560 = vpack.c.b16 %v5836, %v5832
        %v6561 = vpack.c.b16 %v5837, %v5833
        %v6562 = vpack.c.b16 %v5838, %v5834
        %v6563 = vpack.c.b16 %v5839, %v5835
        %v6564 = vpack.c.b16 %v5844, %v5840
        %v6565 = vpack.c.b16 %v5845, %v5841
        %v6566 = vpack.c.b16 %v5846, %v5842
        %v6567 = vpack.c.b16 %v5847, %v5843
        %v6568 = vpack.c.b16 %v5852, %v5848
        %v6569 = vpack.c.b16 %v5853, %v5849
        %v6570 = vpack.c.b16 %v5854, %v5850
        %v6571 = vpack.c.b16 %v5855, %v5851
        %v6572 = vpack.c.b16 %v5860, %v5856
        %v6573 = vpack.c.b16 %v5861, %v5857
        %v6574 = vpack.c.b16 %v5862, %v5858
        %v6575 = vpack.c.b16 %v5863, %v5859
        %v6576 = vpack.c.b16 %v5868, %v5864
        %v6577 = vpack.c.b16 %v5869, %v5865
        %v6578 = vpack.c.b16 %v5870, %v5866
        %v6579 = vpack.c.b16 %v5871, %v5867
        %v6580 = vpack.c.b16 %v5876, %v5872
        %v6581 = vpack.c.b16 %v5877, %v5873
        %v6582 = vpack.c.b16 %v5878, %v5874
        %v6583 = vpack.c.b16 %v5879, %v5875
        %v6584 = vpack.c.b16 %v5884, %v5880
        %v6585 = vpack.c.b16 %v5885, %v5881
        %v6586 = vpack.c.b16 %v5886, %v5882
        %v6587 = vpack.c.b16 %v5887, %v5883
        %v6588 = vpack.c.b16 %v5892, %v5888
        %v6589 = vpack.c.b16 %v5893, %v5889
        %v6590 = vpack.c.b16 %v5894, %v5890
        %v6591 = vpack.c.b16 %v5895, %v5891
        %v6592 = vpack.c.b16 %v5900, %v5896
        %v6593 = vpack.c.b16 %v5901, %v5897
        %v6594 = vpack.c.b16 %v5902, %v5898
        %v6595 = vpack.c.b16 %v5903, %v5899
        %v6596 = vpack.c.b16 %v5908, %v5904
        %v6597 = vpack.c.b16 %v5909, %v5905
        %v6598 = vpack.c.b16 %v5910, %v5906
        %v6599 = vpack.c.b16 %v5911, %v5907
        %v6600 = vpack.c.b16 %v5916, %v5912
        %v6601 = vpack.c.b16 %v5917, %v5913
        %v6602 = vpack.c.b16 %v5918, %v5914
        %v6603 = vpack.c.b16 %v5919, %v5915
        %v6604 = vpack.c.b16 %v5924, %v5920
        %v6605 = vpack.c.b16 %v5925, %v5921
        %v6606 = vpack.c.b16 %v5926, %v5922
        %v6607 = vpack.c.b16 %v5927, %v5923
        %v6608 = vpack.c.b16 %v5932, %v5928
        %v6609 = vpack.c.b16 %v5933, %v5929
        %v6610 = vpack.c.b16 %v5934, %v5930
        %v6611 = vpack.c.b16 %v5935, %v5931
        %v6612 = vpack.c.b16 %v5940, %v5936
        %v6613 = vpack.c.b16 %v5941, %v5937
        %v6614 = vpack.c.b16 %v5942, %v5938
        %v6615 = vpack.c.b16 %v5943, %v5939
        %v6616 = vpack.c.b16 %v5948, %v5944
        %v6617 = vpack.c.b16 %v5949, %v5945
        %v6618 = vpack.c.b16 %v5950, %v5946
        %v6619 = vpack.c.b16 %v5951, %v5947
        %v6620 = vpack.c.b16 %v5956, %v5952
        %v6621 = vpack.c.b16 %v5957, %v5953
        %v6622 = vpack.c.b16 %v5958, %v5954
        %v6623 = vpack.c.b16 %v5959, %v5955
        %v6624 = vpack.c.b16 %v5964, %v5960
        %v6625 = vpack.c.b16 %v5965, %v5961
        %v6626 = vpack.c.b16 %v5966, %v5962
        %v6627 = vpack.c.b16 %v5967, %v5963
        %v6628 = vpack.c.b16 %v5972, %v5968
        %v6629 = vpack.c.b16 %v5973, %v5969
        %v6630 = vpack.c.b16 %v5974, %v5970
        %v6631 = vpack.c.b16 %v5975, %v5971
        %v6632 = vpack.c.b16 %v5980, %v5976
        %v6633 = vpack.c.b16 %v5981, %v5977
        %v6634 = vpack.c.b16 %v5982, %v5978
        %v6635 = vpack.c.b16 %v5983, %v5979
        %v6636 = vpack.c.b16 %v5988, %v5984
        %v6637 = vpack.c.b16 %v5989, %v5985
        %v6638 = vpack.c.b16 %v5990, %v5986
        %v6639 = vpack.c.b16 %v5991, %v5987
        %v6640 = vpack.c.b16 %v5996, %v5992
        %v6641 = vpack.c.b16 %v5997, %v5993
        %v6642 = vpack.c.b16 %v5998, %v5994
        %v6643 = vpack.c.b16 %v5999, %v5995
        %v6644 = vpack.c.b16 %v6004, %v6000
        %v6645 = vpack.c.b16 %v6005, %v6001
        %v6646 = vpack.c.b16 %v6006, %v6002
        %v6647 = vpack.c.b16 %v6007, %v6003
        %v6648 = vpack.c.b16 %v6012, %v6008
        %v6649 = vpack.c.b16 %v6013, %v6009
        %v6650 = vpack.c.b16 %v6014, %v6010
        %v6651 = vpack.c.b16 %v6015, %v6011
        %v6652 = vpack.c.b16 %v6020, %v6016
        %v6653 = vpack.c.b16 %v6021, %v6017
        %v6654 = vpack.c.b16 %v6022, %v6018
        %v6655 = vpack.c.b16 %v6023, %v6019
        %v6656 = vpack.c.b16 %v6028, %v6024
        %v6657 = vpack.c.b16 %v6029, %v6025
        %v6658 = vpack.c.b16 %v6030, %v6026
        %v6659 = vpack.c.b16 %v6031, %v6027
        %v6660 = vpack.c.b16 %v6036, %v6032
        %v6661 = vpack.c.b16 %v6037, %v6033
        %v6662 = vpack.c.b16 %v6038, %v6034
        %v6663 = vpack.c.b16 %v6039, %v6035
        %v6664 = vpack.c.b16 %v6044, %v6040
        %v6665 = vpack.c.b16 %v6045, %v6041
        %v6666 = vpack.c.b16 %v6046, %v6042
        %v6667 = vpack.c.b16 %v6047, %v6043
        %v6668 = vpack.c.b16 %v6052, %v6048
        %v6669 = vpack.c.b16 %v6053, %v6049
        %v6670 = vpack.c.b16 %v6054, %v6050
        %v6671 = vpack.c.b16 %v6055, %v6051
        %v6672 = vpack.c.b16 %v6060, %v6056
        %v6673 = vpack.c.b16 %v6061, %v6057
        %v6674 = vpack.c.b16 %v6062, %v6058
        %v6675 = vpack.c.b16 %v6063, %v6059
        %v6676 = vpack.c.b16 %v6068, %v6064
        %v6677 = vpack.c.b16 %v6069, %v6065
        %v6678 = vpack.c.b16 %v6070, %v6066
        %v6679 = vpack.c.b16 %v6071, %v6067
        %v6680 = vpack.c.b16 %v6076, %v6072
        %v6681 = vpack.c.b16 %v6077, %v6073
        %v6682 = vpack.c.b16 %v6078, %v6074
        %v6683 = vpack.c.b16 %v6079, %v6075
        %v6684 = vpack.c.b16 %v6084, %v6080
        %v6685 = vpack.c.b16 %v6085, %v6081
        %v6686 = vpack.c.b16 %v6086, %v6082
        %v6687 = vpack.c.b16 %v6087, %v6083
        %v6688 = vpack.c.b16 %v6092, %v6088
        %v6689 = vpack.c.b16 %v6093, %v6089
        %v6690 = vpack.c.b16 %v6094, %v6090
        %v6691 = vpack.c.b16 %v6095, %v6091
        %v6692 = vpack.c.b16 %v6100, %v6096
        %v6693 = vpack.c.b16 %v6101, %v6097
        %v6694 = vpack.c.b16 %v6102, %v6098
        %v6695 = vpack.c.b16 %v6103, %v6099
        %v6696 = vpack.c.b16 %v6108, %v6104
        %v6697 = vpack.c.b16 %v6109, %v6105
        %v6698 = vpack.c.b16 %v6110, %v6106
        %v6699 = vpack.c.b16 %v6111, %v6107
        %v6700 = vpack.c.b16 %v6116, %v6112
        %v6701 = vpack.c.b16 %v6117, %v6113
        %v6702 = vpack.c.b16 %v6118, %v6114
        %v6703 = vpack.c.b16 %v6119, %v6115
        %v6704 = vpack.c.b16 %v6124, %v6120
        %v6705 = vpack.c.b16 %v6125, %v6121
        %v6706 = vpack.c.b16 %v6126, %v6122
        %v6707 = vpack.c.b16 %v6127, %v6123
        %v6708 = vpack.c.b16 %v6132, %v6128
        %v6709 = vpack.c.b16 %v6133, %v6129
        %v6710 = vpack.c.b16 %v6134, %v6130
        %v6711 = vpack.c.b16 %v6135, %v6131
        %v6712 = vpack.c.b16 %v6140, %v6136
        %v6713 = vpack.c.b16 %v6141, %v6137
        %v6714 = vpack.c.b16 %v6142, %v6138
        %v6715 = vpack.c.b16 %v6143, %v6139
        %v6716 = vpack.c.b16 %v6148, %v6144
        %v6717 = vpack.c.b16 %v6149, %v6145
        %v6718 = vpack.c.b16 %v6150, %v6146
        %v6719 = vpack.c.b16 %v6151, %v6147
        %v6720 = vpack.c.b16 %v6156, %v6152
        %v6721 = vpack.c.b16 %v6157, %v6153
        %v6722 = vpack.c.b16 %v6158, %v6154
        %v6723 = vpack.c.b16 %v6159, %v6155
        %v6724 = vpack.c.b16 %v6164, %v6160
        %v6725 = vpack.c.b16 %v6165, %v6161
        %v6726 = vpack.c.b16 %v6166, %v6162
        %v6727 = vpack.c.b16 %v6167, %v6163
        %v6728 = vpack.c.b16 %v6172, %v6168
        %v6729 = vpack.c.b16 %v6173, %v6169
        %v6730 = vpack.c.b16 %v6174, %v6170
        %v6731 = vpack.c.b16 %v6175, %v6171
        %v6732 = vpack.c.b16 %v6180, %v6176
        %v6733 = vpack.c.b16 %v6181, %v6177
        %v6734 = vpack.c.b16 %v6182, %v6178
        %v6735 = vpack.c.b16 %v6183, %v6179
        %v6736 = vpack.c.b16 %v6188, %v6184
        %v6737 = vpack.c.b16 %v6189, %v6185
        %v6738 = vpack.c.b16 %v6190, %v6186
        %v6739 = vpack.c.b16 %v6191, %v6187
        %v6740 = vpack.c.b16 %v6196, %v6192
        %v6741 = vpack.c.b16 %v6197, %v6193
        %v6742 = vpack.c.b16 %v6198, %v6194
        %v6743 = vpack.c.b16 %v6199, %v6195
        %v6744 = vpack.c.b16 %v6204, %v6200
        %v6745 = vpack.c.b16 %v6205, %v6201
        %v6746 = vpack.c.b16 %v6206, %v6202
        %v6747 = vpack.c.b16 %v6207, %v6203
        %v6748 = vpack.c.b16 %v6212, %v6208
        %v6749 = vpack.c.b16 %v6213, %v6209
        %v6750 = vpack.c.b16 %v6214, %v6210
        %v6751 = vpack.c.b16 %v6215, %v6211
        %v6752 = vpack.c.b16 %v6220, %v6216
        %v6753 = vpack.c.b16 %v6221, %v6217
        %v6754 = vpack.c.b16 %v6222, %v6218
        %v6755 = vpack.c.b16 %v6223, %v6219
        %v6756 = vpack.c.b16 %v6228, %v6224
        %v6757 = vpack.c.b16 %v6229, %v6225
        %v6758 = vpack.c.b16 %v6230, %v6226
        %v6759 = vpack.c.b16 %v6231, %v6227
        %v6760 = vpack.c.b16 %v6236, %v6232
        %v6761 = vpack.c.b16 %v6237, %v6233
        %v6762 = vpack.c.b16 %v6238, %v6234
        %v6763 = vpack.c.b16 %v6239, %v6235
        %v6764 = vpack.c.b16 %v6244, %v6240
        %v6765 = vpack.c.b16 %v6245, %v6241
        %v6766 = vpack.c.b16 %v6246, %v6242
        %v6767 = vpack.c.b16 %v6247, %v6243
        %v6768 = vpack.c.b16 %v6252, %v6248
        %v6769 = vpack.c.b16 %v6253, %v6249
        %v6770 = vpack.c.b16 %v6254, %v6250
        %v6771 = vpack.c.b16 %v6255, %v6251
        %v6772 = vpack.c.b16 %v6260, %v6256
        %v6773 = vpack.c.b16 %v6261, %v6257
        %v6774 = vpack.c.b16 %v6262, %v6258
        %v6775 = vpack.c.b16 %v6263, %v6259
        %7288 = vmatprep.subr.bf16.mxu0 %v6293
        %7289 = vmatpush1.bf16.msra.mxu0 %v6292
        %7290 = vmatprep.subr.bf16.mxu0 %v6289
        %7291 = vmatpush1.bf16.msra.mxu0 %v6288
        %7292 = vmatprep.subr.bf16.mxu0 %v6285
        %7293 = vmatpush1.bf16.msra.mxu0 %v6284
        %7294 = vmatprep.subr.bf16.mxu0 %v6281
        %7295 = vmatpush1.bf16.msra.mxu0 %v6280
        %7296 = vmatprep.subr.bf16.mxu0 %v6277
        %7297 = vmatpush1.bf16.msra.mxu0 %v6276
        %7298 = vmatprep.subr.bf16.mxu0 %v6273
        %7299 = vmatpush1.bf16.msra.mxu0 %v6272
        %7300 = vmatprep.subr.bf16.mxu0 %v6269
        %7301 = vmatpush1.bf16.msra.mxu0 %v6268
        %7302 = vmatprep.subr.bf16.mxu0 %v6265
        %7303 = vmatpush1.bf16.msra.mxu0 %v6264
        %7304 = vmatprep.subr.bf16.mxu0 %v6325
        %7305 = vmatpush2.bf16.msra.mxu0 %v6324
        %7306 = vmatprep.subr.bf16.mxu0 %v6321
        %7307 = vmatpush2.bf16.msra.mxu0 %v6320
        %7308 = vmatprep.subr.bf16.mxu0 %v6317
        %7309 = vmatpush2.bf16.msra.mxu0 %v6316
        %7310 = vmatprep.subr.bf16.mxu0 %v6313
        %7311 = vmatpush2.bf16.msra.mxu0 %v6312
        %7312 = vmatprep.subr.bf16.mxu0 %v6309
        %7313 = vmatpush2.bf16.msra.mxu0 %v6308
        %7314 = vmatprep.subr.bf16.mxu0 %v6305
        %7315 = vmatpush2.bf16.msra.mxu0 %v6304
        %7316 = vmatprep.subr.bf16.mxu0 %v6301
        %7317 = vmatpush2.bf16.msra.mxu0 %v6300
        %7318 = vmatprep.subr.bf16.mxu0 %v6297
        %7319 = vmatpush2.bf16.msra.mxu0 %v6296
        %7320 = vmatprep.mubr.bf16.mxu0 %v4201
        %7321 = vmatmul.mubr.bf16.gmra.mxu0 %v4200
        %v7322 = vpop.f32.mrf.mxu0
        %v7323 = vadd.f32 0.0, %v7322
        %v7324 = vpop.f32.mrf.mxu0
        %v7325 = vadd.f32 0.0, %v7324
        %v7326 = vpop.f32.mrf.mxu0
        %v7327 = vpop.f32.mrf.mxu0
        %7328 = vdwg.mxu0
        %7329 = vmatprep.subr.bf16.mxu0 %v6357
        %7330 = vmatpush1.bf16.msra.mxu0 %v6356
        %7331 = vmatprep.subr.bf16.mxu0 %v6353
        %7332 = vmatpush1.bf16.msra.mxu0 %v6352
        %7333 = vmatprep.subr.bf16.mxu0 %v6349
        %7334 = vmatpush1.bf16.msra.mxu0 %v6348
        %7335 = vmatprep.subr.bf16.mxu0 %v6345
        %7336 = vmatpush1.bf16.msra.mxu0 %v6344
        %7337 = vmatprep.subr.bf16.mxu0 %v6341
        %7338 = vmatpush1.bf16.msra.mxu0 %v6340
        %7339 = vmatprep.subr.bf16.mxu0 %v6337
        %7340 = vmatpush1.bf16.msra.mxu0 %v6336
        %7341 = vmatprep.subr.bf16.mxu0 %v6333
        %7342 = vmatpush1.bf16.msra.mxu0 %v6332
        %7343 = vmatprep.subr.bf16.mxu0 %v6329
        %7344 = vmatpush1.bf16.msra.mxu0 %v6328
        %7345 = vmatprep.subr.bf16.mxu0 %v6389
        %7346 = vmatpush2.bf16.msra.mxu0 %v6388
        %7347 = vmatprep.subr.bf16.mxu0 %v6385
        %7348 = vmatpush2.bf16.msra.mxu0 %v6384
        %7349 = vmatprep.subr.bf16.mxu0 %v6381
        %7350 = vmatpush2.bf16.msra.mxu0 %v6380
        %7351 = vmatprep.subr.bf16.mxu0 %v6377
        %7352 = vmatpush2.bf16.msra.mxu0 %v6376
        %7353 = vmatprep.subr.bf16.mxu0 %v6373
        %7354 = vmatpush2.bf16.msra.mxu0 %v6372
        %7355 = vmatprep.subr.bf16.mxu0 %v6369
        %7356 = vmatpush2.bf16.msra.mxu0 %v6368
        %7357 = vmatprep.subr.bf16.mxu0 %v6365
        %7358 = vmatpush2.bf16.msra.mxu0 %v6364
        %7359 = vmatprep.subr.bf16.mxu0 %v6361
        %7360 = vmatpush2.bf16.msra.mxu0 %v6360
        %7361 = vmatprep.mubr.bf16.mxu0 %v4203
        %7362 = vmatmul.mubr.bf16.gmra.mxu0 %v4202
        %v7363 = vpop.f32.mrf.mxu0
        %v7364 = vadd.f32 %v7323, %v7363
        %v7365 = vpop.f32.mrf.mxu0
        %v7366 = vadd.f32 %v7325, %v7365
        %v7367 = vpop.f32.mrf.mxu0
        %v7368 = vpop.f32.mrf.mxu0
        %7369 = vdwg.mxu0
        %7370 = vmatprep.subr.bf16.mxu0 %v6421
        %7371 = vmatpush1.bf16.msra.mxu0 %v6420
        %7372 = vmatprep.subr.bf16.mxu0 %v6417
        %7373 = vmatpush1.bf16.msra.mxu0 %v6416
        %7374 = vmatprep.subr.bf16.mxu0 %v6413
        %7375 = vmatpush1.bf16.msra.mxu0 %v6412
        %7376 = vmatprep.subr.bf16.mxu0 %v6409
        %7377 = vmatpush1.bf16.msra.mxu0 %v6408
        %7378 = vmatprep.subr.bf16.mxu0 %v6405
        %7379 = vmatpush1.bf16.msra.mxu0 %v6404
        %7380 = vmatprep.subr.bf16.mxu0 %v6401
        %7381 = vmatpush1.bf16.msra.mxu0 %v6400
        %7382 = vmatprep.subr.bf16.mxu0 %v6397
        %7383 = vmatpush1.bf16.msra.mxu0 %v6396
        %7384 = vmatprep.subr.bf16.mxu0 %v6393
        %7385 = vmatpush1.bf16.msra.mxu0 %v6392
        %7386 = vmatprep.subr.bf16.mxu0 %v6453
        %7387 = vmatpush2.bf16.msra.mxu0 %v6452
        %7388 = vmatprep.subr.bf16.mxu0 %v6449
        %7389 = vmatpush2.bf16.msra.mxu0 %v6448
        %7390 = vmatprep.subr.bf16.mxu0 %v6445
        %7391 = vmatpush2.bf16.msra.mxu0 %v6444
        %7392 = vmatprep.subr.bf16.mxu0 %v6441
        %7393 = vmatpush2.bf16.msra.mxu0 %v6440
        %7394 = vmatprep.subr.bf16.mxu0 %v6437
        %7395 = vmatpush2.bf16.msra.mxu0 %v6436
        %7396 = vmatprep.subr.bf16.mxu0 %v6433
        %7397 = vmatpush2.bf16.msra.mxu0 %v6432
        %7398 = vmatprep.subr.bf16.mxu0 %v6429
        %7399 = vmatpush2.bf16.msra.mxu0 %v6428
        %7400 = vmatprep.subr.bf16.mxu0 %v6425
        %7401 = vmatpush2.bf16.msra.mxu0 %v6424
        %7402 = vmatprep.mubr.bf16.mxu0 %v4205
        %7403 = vmatmul.mubr.bf16.gmra.mxu0 %v4204
        %v7404 = vpop.f32.mrf.mxu0
        %v7405 = vadd.f32 %v7364, %v7404
        %v7406 = vpop.f32.mrf.mxu0
        %v7407 = vadd.f32 %v7366, %v7406
        %v7408 = vpop.f32.mrf.mxu0
        %v7409 = vpop.f32.mrf.mxu0
        %7410 = vdwg.mxu0
        %7411 = vmatprep.subr.bf16.mxu0 %v6485
        %7412 = vmatpush1.bf16.msra.mxu0 %v6484
        %7413 = vmatprep.subr.bf16.mxu0 %v6481
        %7414 = vmatpush1.bf16.msra.mxu0 %v6480
        %7415 = vmatprep.subr.bf16.mxu0 %v6477
        %7416 = vmatpush1.bf16.msra.mxu0 %v6476
        %7417 = vmatprep.subr.bf16.mxu0 %v6473
        %7418 = vmatpush1.bf16.msra.mxu0 %v6472
        %7419 = vmatprep.subr.bf16.mxu0 %v6469
        %7420 = vmatpush1.bf16.msra.mxu0 %v6468
        %7421 = vmatprep.subr.bf16.mxu0 %v6465
        %7422 = vmatpush1.bf16.msra.mxu0 %v6464
        %7423 = vmatprep.subr.bf16.mxu0 %v6461
        %7424 = vmatpush1.bf16.msra.mxu0 %v6460
        %7425 = vmatprep.subr.bf16.mxu0 %v6457
        %7426 = vmatpush1.bf16.msra.mxu0 %v6456
        %7427 = vmatprep.subr.bf16.mxu0 %v6517
        %7428 = vmatpush2.bf16.msra.mxu0 %v6516
        %7429 = vmatprep.subr.bf16.mxu0 %v6513
        %7430 = vmatpush2.bf16.msra.mxu0 %v6512
        %7431 = vmatprep.subr.bf16.mxu0 %v6509
        %7432 = vmatpush2.bf16.msra.mxu0 %v6508
        %7433 = vmatprep.subr.bf16.mxu0 %v6505
        %7434 = vmatpush2.bf16.msra.mxu0 %v6504
        %7435 = vmatprep.subr.bf16.mxu0 %v6501
        %7436 = vmatpush2.bf16.msra.mxu0 %v6500
        %7437 = vmatprep.subr.bf16.mxu0 %v6497
        %7438 = vmatpush2.bf16.msra.mxu0 %v6496
        %7439 = vmatprep.subr.bf16.mxu0 %v6493
        %7440 = vmatpush2.bf16.msra.mxu0 %v6492
        %7441 = vmatprep.subr.bf16.mxu0 %v6489
        %7442 = vmatpush2.bf16.msra.mxu0 %v6488
        %7443 = vmatprep.mubr.bf16.mxu0 %v4207
        %7444 = vmatmul.mubr.bf16.gmra.mxu0 %v4206
        %v7445 = vpop.f32.mrf.mxu0
        %v7446 = vadd.f32 %v7405, %v7445
        %v7447 = vpop.f32.mrf.mxu0
        %v7448 = vadd.f32 %v7407, %v7447
        %v7449 = vpop.f32.mrf.mxu0
        %v7450 = vpop.f32.mrf.mxu0
        %7451 = vdwg.mxu0
        %7452 = vmatprep.subr.bf16.mxu0 %v6549
        %7453 = vmatpush1.bf16.msra.mxu0 %v6548
        %7454 = vmatprep.subr.bf16.mxu0 %v6545
        %7455 = vmatpush1.bf16.msra.mxu0 %v6544
        %7456 = vmatprep.subr.bf16.mxu0 %v6541
        %7457 = vmatpush1.bf16.msra.mxu0 %v6540
        %7458 = vmatprep.subr.bf16.mxu0 %v6537
        %7459 = vmatpush1.bf16.msra.mxu0 %v6536
        %7460 = vmatprep.subr.bf16.mxu0 %v6533
        %7461 = vmatpush1.bf16.msra.mxu0 %v6532
        %7462 = vmatprep.subr.bf16.mxu0 %v6529
        %7463 = vmatpush1.bf16.msra.mxu0 %v6528
        %7464 = vmatprep.subr.bf16.mxu0 %v6525
        %7465 = vmatpush1.bf16.msra.mxu0 %v6524
        %7466 = vmatprep.subr.bf16.mxu0 %v6521
        %7467 = vmatpush1.bf16.msra.mxu0 %v6520
        %7468 = vmatprep.subr.bf16.mxu0 %v6581
        %7469 = vmatpush2.bf16.msra.mxu0 %v6580
        %7470 = vmatprep.subr.bf16.mxu0 %v6577
        %7471 = vmatpush2.bf16.msra.mxu0 %v6576
        %7472 = vmatprep.subr.bf16.mxu0 %v6573
        %7473 = vmatpush2.bf16.msra.mxu0 %v6572
        %7474 = vmatprep.subr.bf16.mxu0 %v6569
        %7475 = vmatpush2.bf16.msra.mxu0 %v6568
        %7476 = vmatprep.subr.bf16.mxu0 %v6565
        %7477 = vmatpush2.bf16.msra.mxu0 %v6564
        %7478 = vmatprep.subr.bf16.mxu0 %v6561
        %7479 = vmatpush2.bf16.msra.mxu0 %v6560
        %7480 = vmatprep.subr.bf16.mxu0 %v6557
        %7481 = vmatpush2.bf16.msra.mxu0 %v6556
        %7482 = vmatprep.subr.bf16.mxu0 %v6553
        %7483 = vmatpush2.bf16.msra.mxu0 %v6552
        %7484 = vmatprep.mubr.bf16.mxu0 %v4209
        %7485 = vmatmul.mubr.bf16.gmra.mxu0 %v4208
        %v7486 = vpop.f32.mrf.mxu0
        %v7487 = vadd.f32 %v7446, %v7486
        %v7488 = vpop.f32.mrf.mxu0
        %v7489 = vadd.f32 %v7448, %v7488
        %v7490 = vpop.f32.mrf.mxu0
        %v7491 = vpop.f32.mrf.mxu0
        %7492 = vdwg.mxu0
        %7493 = vmatprep.subr.bf16.mxu0 %v6613
        %7494 = vmatpush1.bf16.msra.mxu0 %v6612
        %7495 = vmatprep.subr.bf16.mxu0 %v6609
        %7496 = vmatpush1.bf16.msra.mxu0 %v6608
        %7497 = vmatprep.subr.bf16.mxu0 %v6605
        %7498 = vmatpush1.bf16.msra.mxu0 %v6604
        %7499 = vmatprep.subr.bf16.mxu0 %v6601
        %7500 = vmatpush1.bf16.msra.mxu0 %v6600
        %7501 = vmatprep.subr.bf16.mxu0 %v6597
        %7502 = vmatpush1.bf16.msra.mxu0 %v6596
        %7503 = vmatprep.subr.bf16.mxu0 %v6593
        %7504 = vmatpush1.bf16.msra.mxu0 %v6592
        %7505 = vmatprep.subr.bf16.mxu0 %v6589
        %7506 = vmatpush1.bf16.msra.mxu0 %v6588
        %7507 = vmatprep.subr.bf16.mxu0 %v6585
        %7508 = vmatpush1.bf16.msra.mxu0 %v6584
        %7509 = vmatprep.subr.bf16.mxu0 %v6645
        %7510 = vmatpush2.bf16.msra.mxu0 %v6644
        %7511 = vmatprep.subr.bf16.mxu0 %v6641
        %7512 = vmatpush2.bf16.msra.mxu0 %v6640
        %7513 = vmatprep.subr.bf16.mxu0 %v6637
        %7514 = vmatpush2.bf16.msra.mxu0 %v6636
        %7515 = vmatprep.subr.bf16.mxu0 %v6633
        %7516 = vmatpush2.bf16.msra.mxu0 %v6632
        %7517 = vmatprep.subr.bf16.mxu0 %v6629
        %7518 = vmatpush2.bf16.msra.mxu0 %v6628
        %7519 = vmatprep.subr.bf16.mxu0 %v6625
        %7520 = vmatpush2.bf16.msra.mxu0 %v6624
        %7521 = vmatprep.subr.bf16.mxu0 %v6621
        %7522 = vmatpush2.bf16.msra.mxu0 %v6620
        %7523 = vmatprep.subr.bf16.mxu0 %v6617
        %7524 = vmatpush2.bf16.msra.mxu0 %v6616
        %7525 = vmatprep.mubr.bf16.mxu0 %v4211
        %7526 = vmatmul.mubr.bf16.gmra.mxu0 %v4210
        %v7527 = vpop.f32.mrf.mxu0
        %v7528 = vadd.f32 %v7487, %v7527
        %v7529 = vpop.f32.mrf.mxu0
        %v7530 = vadd.f32 %v7489, %v7529
        %v7531 = vpop.f32.mrf.mxu0
        %v7532 = vpop.f32.mrf.mxu0
        %7533 = vdwg.mxu0
        %7534 = vmatprep.subr.bf16.mxu0 %v6677
        %7535 = vmatpush1.bf16.msra.mxu0 %v6676
        %7536 = vmatprep.subr.bf16.mxu0 %v6673
        %7537 = vmatpush1.bf16.msra.mxu0 %v6672
        %7538 = vmatprep.subr.bf16.mxu0 %v6669
        %7539 = vmatpush1.bf16.msra.mxu0 %v6668
        %7540 = vmatprep.subr.bf16.mxu0 %v6665
        %7541 = vmatpush1.bf16.msra.mxu0 %v6664
        %7542 = vmatprep.subr.bf16.mxu0 %v6661
        %7543 = vmatpush1.bf16.msra.mxu0 %v6660
        %7544 = vmatprep.subr.bf16.mxu0 %v6657
        %7545 = vmatpush1.bf16.msra.mxu0 %v6656
        %7546 = vmatprep.subr.bf16.mxu0 %v6653
        %7547 = vmatpush1.bf16.msra.mxu0 %v6652
        %7548 = vmatprep.subr.bf16.mxu0 %v6649
        %7549 = vmatpush1.bf16.msra.mxu0 %v6648
        %7550 = vmatprep.subr.bf16.mxu0 %v6709
        %7551 = vmatpush2.bf16.msra.mxu0 %v6708
        %7552 = vmatprep.subr.bf16.mxu0 %v6705
        %7553 = vmatpush2.bf16.msra.mxu0 %v6704
        %7554 = vmatprep.subr.bf16.mxu0 %v6701
        %7555 = vmatpush2.bf16.msra.mxu0 %v6700
        %7556 = vmatprep.subr.bf16.mxu0 %v6697
        %7557 = vmatpush2.bf16.msra.mxu0 %v6696
        %7558 = vmatprep.subr.bf16.mxu0 %v6693
        %7559 = vmatpush2.bf16.msra.mxu0 %v6692
        %7560 = vmatprep.subr.bf16.mxu0 %v6689
        %7561 = vmatpush2.bf16.msra.mxu0 %v6688
        %7562 = vmatprep.subr.bf16.mxu0 %v6685
        %7563 = vmatpush2.bf16.msra.mxu0 %v6684
        %7564 = vmatprep.subr.bf16.mxu0 %v6681
        %7565 = vmatpush2.bf16.msra.mxu0 %v6680
        %7566 = vmatprep.mubr.bf16.mxu0 %v4213
        %7567 = vmatmul.mubr.bf16.gmra.mxu0 %v4212
        %v7568 = vpop.f32.mrf.mxu0
        %v7569 = vadd.f32 %v7528, %v7568
        %v7570 = vpop.f32.mrf.mxu0
        %v7571 = vadd.f32 %v7530, %v7570
        %v7572 = vpop.f32.mrf.mxu0
        %v7573 = vpop.f32.mrf.mxu0
        %7574 = vdwg.mxu0
        %7575 = vmatprep.subr.bf16.mxu0 %v6741
        %7576 = vmatpush1.bf16.msra.mxu0 %v6740
        %7577 = vmatprep.subr.bf16.mxu0 %v6737
        %7578 = vmatpush1.bf16.msra.mxu0 %v6736
        %7579 = vmatprep.subr.bf16.mxu0 %v6733
        %7580 = vmatpush1.bf16.msra.mxu0 %v6732
        %7581 = vmatprep.subr.bf16.mxu0 %v6729
        %7582 = vmatpush1.bf16.msra.mxu0 %v6728
        %7583 = vmatprep.subr.bf16.mxu0 %v6725
        %7584 = vmatpush1.bf16.msra.mxu0 %v6724
        %7585 = vmatprep.subr.bf16.mxu0 %v6721
        %7586 = vmatpush1.bf16.msra.mxu0 %v6720
        %7587 = vmatprep.subr.bf16.mxu0 %v6717
        %7588 = vmatpush1.bf16.msra.mxu0 %v6716
        %7589 = vmatprep.subr.bf16.mxu0 %v6713
        %7590 = vmatpush1.bf16.msra.mxu0 %v6712
        %7591 = vmatprep.subr.bf16.mxu0 %v6773
        %7592 = vmatpush2.bf16.msra.mxu0 %v6772
        %7593 = vmatprep.subr.bf16.mxu0 %v6769
        %7594 = vmatpush2.bf16.msra.mxu0 %v6768
        %7595 = vmatprep.subr.bf16.mxu0 %v6765
        %7596 = vmatpush2.bf16.msra.mxu0 %v6764
        %7597 = vmatprep.subr.bf16.mxu0 %v6761
        %7598 = vmatpush2.bf16.msra.mxu0 %v6760
        %7599 = vmatprep.subr.bf16.mxu0 %v6757
        %7600 = vmatpush2.bf16.msra.mxu0 %v6756
        %7601 = vmatprep.subr.bf16.mxu0 %v6753
        %7602 = vmatpush2.bf16.msra.mxu0 %v6752
        %7603 = vmatprep.subr.bf16.mxu0 %v6749
        %7604 = vmatpush2.bf16.msra.mxu0 %v6748
        %7605 = vmatprep.subr.bf16.mxu0 %v6745
        %7606 = vmatpush2.bf16.msra.mxu0 %v6744
        %7607 = vmatprep.mubr.bf16.mxu0 %v4215
        %7608 = vmatmul.mubr.bf16.gmra.mxu0 %v4214
        %v7609 = vpop.f32.mrf.mxu0
        %v7610 = vadd.f32 %v7569, %v7609
        %v7611 = vpop.f32.mrf.mxu0
        %v7612 = vadd.f32 %v7571, %v7611
        %v7613 = vpop.f32.mrf.mxu0
        %v7614 = vpop.f32.mrf.mxu0
        %7615 = vdwg.mxu0
        %7616 = vmatprep.subr.bf16.mxu0 %v6295
        %7617 = vmatpush1.bf16.msra.mxu0 %v6294
        %7618 = vmatprep.subr.bf16.mxu0 %v6291
        %7619 = vmatpush1.bf16.msra.mxu0 %v6290
        %7620 = vmatprep.subr.bf16.mxu0 %v6287
        %7621 = vmatpush1.bf16.msra.mxu0 %v6286
        %7622 = vmatprep.subr.bf16.mxu0 %v6283
        %7623 = vmatpush1.bf16.msra.mxu0 %v6282
        %7624 = vmatprep.subr.bf16.mxu0 %v6279
        %7625 = vmatpush1.bf16.msra.mxu0 %v6278
        %7626 = vmatprep.subr.bf16.mxu0 %v6275
        %7627 = vmatpush1.bf16.msra.mxu0 %v6274
        %7628 = vmatprep.subr.bf16.mxu0 %v6271
        %7629 = vmatpush1.bf16.msra.mxu0 %v6270
        %7630 = vmatprep.subr.bf16.mxu0 %v6267
        %7631 = vmatpush1.bf16.msra.mxu0 %v6266
        %7632 = vmatprep.subr.bf16.mxu0 %v6327
        %7633 = vmatpush2.bf16.msra.mxu0 %v6326
        %7634 = vmatprep.subr.bf16.mxu0 %v6323
        %7635 = vmatpush2.bf16.msra.mxu0 %v6322
        %7636 = vmatprep.subr.bf16.mxu0 %v6319
        %7637 = vmatpush2.bf16.msra.mxu0 %v6318
        %7638 = vmatprep.subr.bf16.mxu0 %v6315
        %7639 = vmatpush2.bf16.msra.mxu0 %v6314
        %7640 = vmatprep.subr.bf16.mxu0 %v6311
        %7641 = vmatpush2.bf16.msra.mxu0 %v6310
        %7642 = vmatprep.subr.bf16.mxu0 %v6307
        %7643 = vmatpush2.bf16.msra.mxu0 %v6306
        %7644 = vmatprep.subr.bf16.mxu0 %v6303
        %7645 = vmatpush2.bf16.msra.mxu0 %v6302
        %7646 = vmatprep.subr.bf16.mxu0 %v6299
        %7647 = vmatpush2.bf16.msra.mxu0 %v6298
        %7648 = vmatprep.mubr.bf16.mxu0 %v4201
        %7649 = vmatmul.mubr.bf16.gmra.mxu0 %v4200
        %v7650 = vpop.f32.mrf.mxu0
        %v7651 = vadd.f32 0.0, %v7650
        %v7652 = vpop.f32.mrf.mxu0
        %v7653 = vadd.f32 0.0, %v7652
        %v7654 = vpop.f32.mrf.mxu0
        %v7655 = vpop.f32.mrf.mxu0
        %7656 = vdwg.mxu0
        %7657 = vmatprep.subr.bf16.mxu0 %v6359
        %7658 = vmatpush1.bf16.msra.mxu0 %v6358
        %7659 = vmatprep.subr.bf16.mxu0 %v6355
        %7660 = vmatpush1.bf16.msra.mxu0 %v6354
        %7661 = vmatprep.subr.bf16.mxu0 %v6351
        %7662 = vmatpush1.bf16.msra.mxu0 %v6350
        %7663 = vmatprep.subr.bf16.mxu0 %v6347
        %7664 = vmatpush1.bf16.msra.mxu0 %v6346
        %7665 = vmatprep.subr.bf16.mxu0 %v6343
        %7666 = vmatpush1.bf16.msra.mxu0 %v6342
        %7667 = vmatprep.subr.bf16.mxu0 %v6339
        %7668 = vmatpush1.bf16.msra.mxu0 %v6338
        %7669 = vmatprep.subr.bf16.mxu0 %v6335
        %7670 = vmatpush1.bf16.msra.mxu0 %v6334
        %7671 = vmatprep.subr.bf16.mxu0 %v6331
        %7672 = vmatpush1.bf16.msra.mxu0 %v6330
        %7673 = vmatprep.subr.bf16.mxu0 %v6391
        %7674 = vmatpush2.bf16.msra.mxu0 %v6390
        %7675 = vmatprep.subr.bf16.mxu0 %v6387
        %7676 = vmatpush2.bf16.msra.mxu0 %v6386
        %7677 = vmatprep.subr.bf16.mxu0 %v6383
        %7678 = vmatpush2.bf16.msra.mxu0 %v6382
        %7679 = vmatprep.subr.bf16.mxu0 %v6379
        %7680 = vmatpush2.bf16.msra.mxu0 %v6378
        %7681 = vmatprep.subr.bf16.mxu0 %v6375
        %7682 = vmatpush2.bf16.msra.mxu0 %v6374
        %7683 = vmatprep.subr.bf16.mxu0 %v6371
        %7684 = vmatpush2.bf16.msra.mxu0 %v6370
        %7685 = vmatprep.subr.bf16.mxu0 %v6367
        %7686 = vmatpush2.bf16.msra.mxu0 %v6366
        %7687 = vmatprep.subr.bf16.mxu0 %v6363
        %7688 = vmatpush2.bf16.msra.mxu0 %v6362
        %7689 = vmatprep.mubr.bf16.mxu0 %v4203
        %7690 = vmatmul.mubr.bf16.gmra.mxu0 %v4202
        %v7691 = vpop.f32.mrf.mxu0
        %v7692 = vadd.f32 %v7651, %v7691
        %v7693 = vpop.f32.mrf.mxu0
        %v7694 = vadd.f32 %v7653, %v7693
        %v7695 = vpop.f32.mrf.mxu0
        %v7696 = vpop.f32.mrf.mxu0
        %7697 = vdwg.mxu0
        %7698 = vmatprep.subr.bf16.mxu0 %v6423
        %7699 = vmatpush1.bf16.msra.mxu0 %v6422
        %7700 = vmatprep.subr.bf16.mxu0 %v6419
        %7701 = vmatpush1.bf16.msra.mxu0 %v6418
        %7702 = vmatprep.subr.bf16.mxu0 %v6415
        %7703 = vmatpush1.bf16.msra.mxu0 %v6414
        %7704 = vmatprep.subr.bf16.mxu0 %v6411
        %7705 = vmatpush1.bf16.msra.mxu0 %v6410
        %7706 = vmatprep.subr.bf16.mxu0 %v6407
        %7707 = vmatpush1.bf16.msra.mxu0 %v6406
        %7708 = vmatprep.subr.bf16.mxu0 %v6403
        %7709 = vmatpush1.bf16.msra.mxu0 %v6402
        %7710 = vmatprep.subr.bf16.mxu0 %v6399
        %7711 = vmatpush1.bf16.msra.mxu0 %v6398
        %7712 = vmatprep.subr.bf16.mxu0 %v6395
        %7713 = vmatpush1.bf16.msra.mxu0 %v6394
        %7714 = vmatprep.subr.bf16.mxu0 %v6455
        %7715 = vmatpush2.bf16.msra.mxu0 %v6454
        %7716 = vmatprep.subr.bf16.mxu0 %v6451
        %7717 = vmatpush2.bf16.msra.mxu0 %v6450
        %7718 = vmatprep.subr.bf16.mxu0 %v6447
        %7719 = vmatpush2.bf16.msra.mxu0 %v6446
        %7720 = vmatprep.subr.bf16.mxu0 %v6443
        %7721 = vmatpush2.bf16.msra.mxu0 %v6442
        %7722 = vmatprep.subr.bf16.mxu0 %v6439
        %7723 = vmatpush2.bf16.msra.mxu0 %v6438
        %7724 = vmatprep.subr.bf16.mxu0 %v6435
        %7725 = vmatpush2.bf16.msra.mxu0 %v6434
        %7726 = vmatprep.subr.bf16.mxu0 %v6431
        %7727 = vmatpush2.bf16.msra.mxu0 %v6430
        %7728 = vmatprep.subr.bf16.mxu0 %v6427
        %7729 = vmatpush2.bf16.msra.mxu0 %v6426
        %7730 = vmatprep.mubr.bf16.mxu0 %v4205
        %7731 = vmatmul.mubr.bf16.gmra.mxu0 %v4204
        %v7732 = vpop.f32.mrf.mxu0
        %v7733 = vadd.f32 %v7692, %v7732
        %v7734 = vpop.f32.mrf.mxu0
        %v7735 = vadd.f32 %v7694, %v7734
        %v7736 = vpop.f32.mrf.mxu0
        %v7737 = vpop.f32.mrf.mxu0
        %7738 = vdwg.mxu0
        %7739 = vmatprep.subr.bf16.mxu0 %v6487
        %7740 = vmatpush1.bf16.msra.mxu0 %v6486
        %7741 = vmatprep.subr.bf16.mxu0 %v6483
        %7742 = vmatpush1.bf16.msra.mxu0 %v6482
        %7743 = vmatprep.subr.bf16.mxu0 %v6479
        %7744 = vmatpush1.bf16.msra.mxu0 %v6478
        %7745 = vmatprep.subr.bf16.mxu0 %v6475
        %7746 = vmatpush1.bf16.msra.mxu0 %v6474
        %7747 = vmatprep.subr.bf16.mxu0 %v6471
        %7748 = vmatpush1.bf16.msra.mxu0 %v6470
        %7749 = vmatprep.subr.bf16.mxu0 %v6467
        %7750 = vmatpush1.bf16.msra.mxu0 %v6466
        %7751 = vmatprep.subr.bf16.mxu0 %v6463
        %7752 = vmatpush1.bf16.msra.mxu0 %v6462
        %7753 = vmatprep.subr.bf16.mxu0 %v6459
        %7754 = vmatpush1.bf16.msra.mxu0 %v6458
        %7755 = vmatprep.subr.bf16.mxu0 %v6519
        %7756 = vmatpush2.bf16.msra.mxu0 %v6518
        %7757 = vmatprep.subr.bf16.mxu0 %v6515
        %7758 = vmatpush2.bf16.msra.mxu0 %v6514
        %7759 = vmatprep.subr.bf16.mxu0 %v6511
        %7760 = vmatpush2.bf16.msra.mxu0 %v6510
        %7761 = vmatprep.subr.bf16.mxu0 %v6507
        %7762 = vmatpush2.bf16.msra.mxu0 %v6506
        %7763 = vmatprep.subr.bf16.mxu0 %v6503
        %7764 = vmatpush2.bf16.msra.mxu0 %v6502
        %7765 = vmatprep.subr.bf16.mxu0 %v6499
        %7766 = vmatpush2.bf16.msra.mxu0 %v6498
        %7767 = vmatprep.subr.bf16.mxu0 %v6495
        %7768 = vmatpush2.bf16.msra.mxu0 %v6494
        %7769 = vmatprep.subr.bf16.mxu0 %v6491
        %7770 = vmatpush2.bf16.msra.mxu0 %v6490
        %7771 = vmatprep.mubr.bf16.mxu0 %v4207
        %7772 = vmatmul.mubr.bf16.gmra.mxu0 %v4206
        %v7773 = vpop.f32.mrf.mxu0
        %v7774 = vadd.f32 %v7733, %v7773
        %v7775 = vpop.f32.mrf.mxu0
        %v7776 = vadd.f32 %v7735, %v7775
        %v7777 = vpop.f32.mrf.mxu0
        %v7778 = vpop.f32.mrf.mxu0
        %7779 = vdwg.mxu0
        %7780 = vmatprep.subr.bf16.mxu0 %v6551
        %7781 = vmatpush1.bf16.msra.mxu0 %v6550
        %7782 = vmatprep.subr.bf16.mxu0 %v6547
        %7783 = vmatpush1.bf16.msra.mxu0 %v6546
        %7784 = vmatprep.subr.bf16.mxu0 %v6543
        %7785 = vmatpush1.bf16.msra.mxu0 %v6542
        %7786 = vmatprep.subr.bf16.mxu0 %v6539
        %7787 = vmatpush1.bf16.msra.mxu0 %v6538
        %7788 = vmatprep.subr.bf16.mxu0 %v6535
        %7789 = vmatpush1.bf16.msra.mxu0 %v6534
        %7790 = vmatprep.subr.bf16.mxu0 %v6531
        %7791 = vmatpush1.bf16.msra.mxu0 %v6530
        %7792 = vmatprep.subr.bf16.mxu0 %v6527
        %7793 = vmatpush1.bf16.msra.mxu0 %v6526
        %7794 = vmatprep.subr.bf16.mxu0 %v6523
        %7795 = vmatpush1.bf16.msra.mxu0 %v6522
        %7796 = vmatprep.subr.bf16.mxu0 %v6583
        %7797 = vmatpush2.bf16.msra.mxu0 %v6582
        %7798 = vmatprep.subr.bf16.mxu0 %v6579
        %7799 = vmatpush2.bf16.msra.mxu0 %v6578
        %7800 = vmatprep.subr.bf16.mxu0 %v6575
        %7801 = vmatpush2.bf16.msra.mxu0 %v6574
        %7802 = vmatprep.subr.bf16.mxu0 %v6571
        %7803 = vmatpush2.bf16.msra.mxu0 %v6570
        %7804 = vmatprep.subr.bf16.mxu0 %v6567
        %7805 = vmatpush2.bf16.msra.mxu0 %v6566
        %7806 = vmatprep.subr.bf16.mxu0 %v6563
        %7807 = vmatpush2.bf16.msra.mxu0 %v6562
        %7808 = vmatprep.subr.bf16.mxu0 %v6559
        %7809 = vmatpush2.bf16.msra.mxu0 %v6558
        %7810 = vmatprep.subr.bf16.mxu0 %v6555
        %7811 = vmatpush2.bf16.msra.mxu0 %v6554
        %7812 = vmatprep.mubr.bf16.mxu0 %v4209
        %7813 = vmatmul.mubr.bf16.gmra.mxu0 %v4208
        %v7814 = vpop.f32.mrf.mxu0
        %v7815 = vadd.f32 %v7774, %v7814
        %v7816 = vpop.f32.mrf.mxu0
        %v7817 = vadd.f32 %v7776, %v7816
        %v7818 = vpop.f32.mrf.mxu0
        %v7819 = vpop.f32.mrf.mxu0
        %7820 = vdwg.mxu0
        %7821 = vmatprep.subr.bf16.mxu0 %v6615
        %7822 = vmatpush1.bf16.msra.mxu0 %v6614
        %7823 = vmatprep.subr.bf16.mxu0 %v6611
        %7824 = vmatpush1.bf16.msra.mxu0 %v6610
        %7825 = vmatprep.subr.bf16.mxu0 %v6607
        %7826 = vmatpush1.bf16.msra.mxu0 %v6606
        %7827 = vmatprep.subr.bf16.mxu0 %v6603
        %7828 = vmatpush1.bf16.msra.mxu0 %v6602
        %7829 = vmatprep.subr.bf16.mxu0 %v6599
        %7830 = vmatpush1.bf16.msra.mxu0 %v6598
        %7831 = vmatprep.subr.bf16.mxu0 %v6595
        %7832 = vmatpush1.bf16.msra.mxu0 %v6594
        %7833 = vmatprep.subr.bf16.mxu0 %v6591
        %7834 = vmatpush1.bf16.msra.mxu0 %v6590
        %7835 = vmatprep.subr.bf16.mxu0 %v6587
        %7836 = vmatpush1.bf16.msra.mxu0 %v6586
        %7837 = vmatprep.subr.bf16.mxu0 %v6647
        %7838 = vmatpush2.bf16.msra.mxu0 %v6646
        %7839 = vmatprep.subr.bf16.mxu0 %v6643
        %7840 = vmatpush2.bf16.msra.mxu0 %v6642
        %7841 = vmatprep.subr.bf16.mxu0 %v6639
        %7842 = vmatpush2.bf16.msra.mxu0 %v6638
        %7843 = vmatprep.subr.bf16.mxu0 %v6635
        %7844 = vmatpush2.bf16.msra.mxu0 %v6634
        %7845 = vmatprep.subr.bf16.mxu0 %v6631
        %7846 = vmatpush2.bf16.msra.mxu0 %v6630
        %7847 = vmatprep.subr.bf16.mxu0 %v6627
        %7848 = vmatpush2.bf16.msra.mxu0 %v6626
        %7849 = vmatprep.subr.bf16.mxu0 %v6623
        %7850 = vmatpush2.bf16.msra.mxu0 %v6622
        %7851 = vmatprep.subr.bf16.mxu0 %v6619
        %7852 = vmatpush2.bf16.msra.mxu0 %v6618
        %7853 = vmatprep.mubr.bf16.mxu0 %v4211
        %7854 = vmatmul.mubr.bf16.gmra.mxu0 %v4210
        %v7855 = vpop.f32.mrf.mxu0
        %v7856 = vadd.f32 %v7815, %v7855
        %v7857 = vpop.f32.mrf.mxu0
        %v7858 = vadd.f32 %v7817, %v7857
        %v7859 = vpop.f32.mrf.mxu0
        %v7860 = vpop.f32.mrf.mxu0
        %7861 = vdwg.mxu0
        %7862 = vmatprep.subr.bf16.mxu0 %v6679
        %7863 = vmatpush1.bf16.msra.mxu0 %v6678
        %7864 = vmatprep.subr.bf16.mxu0 %v6675
        %7865 = vmatpush1.bf16.msra.mxu0 %v6674
        %7866 = vmatprep.subr.bf16.mxu0 %v6671
        %7867 = vmatpush1.bf16.msra.mxu0 %v6670
        %7868 = vmatprep.subr.bf16.mxu0 %v6667
        %7869 = vmatpush1.bf16.msra.mxu0 %v6666
        %7870 = vmatprep.subr.bf16.mxu0 %v6663
        %7871 = vmatpush1.bf16.msra.mxu0 %v6662
        %7872 = vmatprep.subr.bf16.mxu0 %v6659
        %7873 = vmatpush1.bf16.msra.mxu0 %v6658
        %7874 = vmatprep.subr.bf16.mxu0 %v6655
        %7875 = vmatpush1.bf16.msra.mxu0 %v6654
        %7876 = vmatprep.subr.bf16.mxu0 %v6651
        %7877 = vmatpush1.bf16.msra.mxu0 %v6650
        %7878 = vmatprep.subr.bf16.mxu0 %v6711
        %7879 = vmatpush2.bf16.msra.mxu0 %v6710
        %7880 = vmatprep.subr.bf16.mxu0 %v6707
        %7881 = vmatpush2.bf16.msra.mxu0 %v6706
        %7882 = vmatprep.subr.bf16.mxu0 %v6703
        %7883 = vmatpush2.bf16.msra.mxu0 %v6702
        %7884 = vmatprep.subr.bf16.mxu0 %v6699
        %7885 = vmatpush2.bf16.msra.mxu0 %v6698
        %7886 = vmatprep.subr.bf16.mxu0 %v6695
        %7887 = vmatpush2.bf16.msra.mxu0 %v6694
        %7888 = vmatprep.subr.bf16.mxu0 %v6691
        %7889 = vmatpush2.bf16.msra.mxu0 %v6690
        %7890 = vmatprep.subr.bf16.mxu0 %v6687
        %7891 = vmatpush2.bf16.msra.mxu0 %v6686
        %7892 = vmatprep.subr.bf16.mxu0 %v6683
        %7893 = vmatpush2.bf16.msra.mxu0 %v6682
        %7894 = vmatprep.mubr.bf16.mxu0 %v4213
        %7895 = vmatmul.mubr.bf16.gmra.mxu0 %v4212
        %v7896 = vpop.f32.mrf.mxu0
        %v7897 = vadd.f32 %v7856, %v7896
        %v7898 = vpop.f32.mrf.mxu0
        %v7899 = vadd.f32 %v7858, %v7898
        %v7900 = vpop.f32.mrf.mxu0
        %v7901 = vpop.f32.mrf.mxu0
        %7902 = vdwg.mxu0
        %7903 = vmatprep.subr.bf16.mxu0 %v6743
        %7904 = vmatpush1.bf16.msra.mxu0 %v6742
        %7905 = vmatprep.subr.bf16.mxu0 %v6739
        %7906 = vmatpush1.bf16.msra.mxu0 %v6738
        %7907 = vmatprep.subr.bf16.mxu0 %v6735
        %7908 = vmatpush1.bf16.msra.mxu0 %v6734
        %7909 = vmatprep.subr.bf16.mxu0 %v6731
        %7910 = vmatpush1.bf16.msra.mxu0 %v6730
        %7911 = vmatprep.subr.bf16.mxu0 %v6727
        %7912 = vmatpush1.bf16.msra.mxu0 %v6726
        %7913 = vmatprep.subr.bf16.mxu0 %v6723
        %7914 = vmatpush1.bf16.msra.mxu0 %v6722
        %7915 = vmatprep.subr.bf16.mxu0 %v6719
        %7916 = vmatpush1.bf16.msra.mxu0 %v6718
        %7917 = vmatprep.subr.bf16.mxu0 %v6715
        %7918 = vmatpush1.bf16.msra.mxu0 %v6714
        %7919 = vmatprep.subr.bf16.mxu0 %v6775
        %7920 = vmatpush2.bf16.msra.mxu0 %v6774
        %7921 = vmatprep.subr.bf16.mxu0 %v6771
        %7922 = vmatpush2.bf16.msra.mxu0 %v6770
        %7923 = vmatprep.subr.bf16.mxu0 %v6767
        %7924 = vmatpush2.bf16.msra.mxu0 %v6766
        %7925 = vmatprep.subr.bf16.mxu0 %v6763
        %7926 = vmatpush2.bf16.msra.mxu0 %v6762
        %7927 = vmatprep.subr.bf16.mxu0 %v6759
        %7928 = vmatpush2.bf16.msra.mxu0 %v6758
        %7929 = vmatprep.subr.bf16.mxu0 %v6755
        %7930 = vmatpush2.bf16.msra.mxu0 %v6754
        %7931 = vmatprep.subr.bf16.mxu0 %v6751
        %7932 = vmatpush2.bf16.msra.mxu0 %v6750
        %7933 = vmatprep.subr.bf16.mxu0 %v6747
        %7934 = vmatpush2.bf16.msra.mxu0 %v6746
        %7935 = vmatprep.mubr.bf16.mxu0 %v4215
        %7936 = vmatmul.mubr.bf16.gmra.mxu0 %v4214
        %v7937 = vpop.f32.mrf.mxu0
        %v7938 = vadd.f32 %v7897, %v7937
        %v7939 = vpop.f32.mrf.mxu0
        %v7940 = vadd.f32 %v7899, %v7939
        %v7941 = vpop.f32.mrf.mxu0
        %v7942 = vpop.f32.mrf.mxu0
        %7943 = vdwg.mxu0
        %v7944 = vadd.f32 %v4196, %v7610
        %v7945 = vadd.f32 %v4197, %v7612
        %v7946 = vadd.f32 %v4198, %v7938
        %v7947 = vadd.f32 %v4199, %v7940
        %7948 = vst [vmem:[%s323] sm:$0xff] %v7944
        %7949 = vst [vmem:[%s323 + $0x8] sm:$0xff] %v7945
        %7950 = vst [vmem:[%s323 + $0x10] sm:$0xff] %v7946
        %7951 = vst [vmem:[%s323 + $0x18] sm:$0xff] %v7947
        %s7952 = sand.u32 %s164, 1
        %s7953 = scalar_lea.sflag [#allocation4], %s7952
        %s7954 = sand.u32 %s164, 1
        %s7955 = smul.addr %s7954, 32
        %s7956 = scalar_lea.vmem [#allocation11], %s7955
        // Predicated region
        $region65: #{_feed_forward_impl.1} parent=39 // pred_check
          %p7957 = pneg %p174
        $region66: #{_feed_forward_impl.1} parent=39 // pred_check_branch
          %7959 = sbr.rel (%p7957) target = $region68
        $region67: #{_feed_forward_impl.1} parent=39 // pred_region
          %s7961 = ssub.s32 512, 512
          %7962 = vsyncadd %s7953, %s7961
          %s7963 = smul.addr %s28, 4
          %s7964 = smul.addr %s7963, 128
          %s7965 = scalar_lea.hbm %s5, %s7964
          %s7967 = sshll.u32 %s7956, 4
          %s7968 = int_to_ptr.vmem [resolvable:$true] %s7967
          %7970 = dma.vmem_to_hbm [thread:$0]  %s7968, 512, %s7965, %s7953
        $region68: #{_feed_forward_impl.1} parent=39 // pred_fallthru
          _
      $region40: #{_feed_forward_impl.1} parent=5 // pred_fallthru
        _
      %p7971 = scmp.le.s32.totalorder 2, %s19
      // Predicated region
      $region69: #{_feed_forward_impl.1} parent=5 // pred_check
        %p7972 = pneg %p7971
      $region70: #{_feed_forward_impl.1} parent=5 // pred_check_branch
        %7974 = sbr.rel (%p7972) target = $region72
      $region71: #{_feed_forward_impl.1} parent=5 // pred_region
        %s7975 = ssub.s32 %s19, 2
        // Predicated region
        $region73: #{_feed_forward_impl.1} parent=71 // pred_check
          %p7976 = pneg %p180
        $region74: #{_feed_forward_impl.1} parent=71 // pred_check_branch
          %7978 = sbr.rel (%p7976) target = $region76
        $region75: #{_feed_forward_impl.1} parent=71 // pred_region
          %s7979 = sand.u32 %s165, 1
          %s7980 = scalar_lea.sflag [#allocation4], %s7979
          %s7981 = sand.u32 %s165, 1
          %s7982 = smul.addr %s7981, 32
          %s7983 = scalar_lea.vmem [#allocation11], %s7982
          %7984 = dma.done %s7980, 512
        $region76: #{_feed_forward_impl.1} parent=71 // pred_fallthru
          _
      $region72: #{_feed_forward_impl.1} parent=5 // pred_fallthru
        _
    $region6: #{_feed_forward_impl.1} parent=1 // loop_footer
      %s23 = sadd.s32 1, %s19
    $region7: #{_feed_forward_impl.1} parent=1 // loop_footer_branch
      %18 = sbr.rel target = $region3
    $region8: #{_feed_forward_impl.1} parent=1 // loop_exit
      _
    %7985 = vsyncpa [#allocation3], 1
    %s7986 = scalar_lea.sflag [#allocation3], 1
    %7987 = vsyncpa %s7986, 1
    %7988 = vsyncpa [#allocation6], 1
    %7989 = vsyncpa [#allocation9], 1
    %7990 = vsyncpa [#allocation4], 1
    %s7991 = scalar_lea.sflag [#allocation4], 1
    %7992 = vsyncpa %s7991, 1

</llo_original>
